<compile_context>
chip_gen: v7x
topology: tpu7x:2x2x1
jax: 0.10.0
libtpu: 0.0.40
codegen_flags: <defaults>
</compile_context>

<pallas_src>
import jax
import jax.numpy as jnp
import numpy as np
from jax.experimental import pallas as pl
from jax.experimental.pallas import tpu as pltpu


def _cparams():
    return pltpu.CompilerParams(
        dimension_semantics=("parallel",),
        vmem_limit_bytes=32 * 1024 * 1024,
    )


# ------------------------- fused conv + ReLU + pool -------------------------

def _conv_relu_pool_kernel(x_ref, w_ref, b_ref, o_ref):
    # x_ref: (4, TM, K) bf16 -- im2col patches for the 4 positions of each
    #        2x2 pool window; w_ref: (K, N) bf16; b_ref: (1, N) f32.
    w = w_ref[...]
    s = jnp.dot(x_ref[0], w, preferred_element_type=jnp.float32)
    for j in range(1, 4):
        s = jnp.maximum(s, jnp.dot(x_ref[j], w,
                                   preferred_element_type=jnp.float32))
    o_ref[...] = jnp.maximum(s + b_ref[...], 0.0)


def conv_relu_pool(p4, w, b, tm=512):
    """p4: [4, M, K] bf16 patches (one slab per pool-window position).
    Returns relu(conv + b) max-pooled 2x2, as [M, N] f32 rows in (b, hp, wp)
    row-major order."""
    _, M, K = p4.shape
    N = w.shape[1]
    tm = min(tm, M)
    grid = (pl.cdiv(M, tm),)
    return pl.pallas_call(
        _conv_relu_pool_kernel,
        out_shape=jax.ShapeDtypeStruct((M, N), jnp.float32),
        grid=grid,
        in_specs=[
            pl.BlockSpec((4, tm, K), lambda i: (0, i, 0)),
            pl.BlockSpec((K, N), lambda i: (0, 0)),
            pl.BlockSpec((1, N), lambda i: (0, 0)),
        ],
        out_specs=pl.BlockSpec((tm, N), lambda i: (i, 0)),
        compiler_params=_cparams(),
    )(p4, w, b)


# --------------------------- fused fc1 + fc2 head ---------------------------

def _fc_fused_kernel(x_ref, w1_ref, b1_ref, w2_ref, b2_ref, o_ref):
    h = jnp.dot(x_ref[...], w1_ref[...], preferred_element_type=jnp.float32)
    h = jnp.maximum(h + b1_ref[...], 0.0)
    y = jnp.dot(h.astype(jnp.bfloat16), w2_ref[...],
                preferred_element_type=jnp.float32)
    o_ref[...] = jnp.maximum(y + b2_ref[...], 0.0)


def fc_fused(x, w1, b1, w2, b2, tb=256):
    B, K1 = x.shape
    H = w1.shape[1]
    N = w2.shape[1]
    tb = min(tb, B)
    grid = (pl.cdiv(B, tb),)
    return pl.pallas_call(
        _fc_fused_kernel,
        out_shape=jax.ShapeDtypeStruct((B, N), jnp.float32),
        grid=grid,
        in_specs=[
            pl.BlockSpec((tb, K1), lambda i: (i, 0)),
            pl.BlockSpec((K1, H), lambda i: (0, 0)),
            pl.BlockSpec((1, H), lambda i: (0, 0)),
            pl.BlockSpec((H, N), lambda i: (0, 0)),
            pl.BlockSpec((1, N), lambda i: (0, 0)),
        ],
        out_specs=pl.BlockSpec((tb, N), lambda i: (i, 0)),
        compiler_params=_cparams(),
    )(x, w1, b1, w2, b2)


# -------------------------------- JAX glue ----------------------------------

def im2col_pool4(x, kh, kw, pad):
    """x: NHWC f32. Returns [4, B*Hp*Wp, C*kh*kw] bf16 patches, where axis 0
    indexes the 4 positions of each 2x2 pool window and K is ordered
    (cin, ki, kj) to match PyTorch OIHW weight flattening."""
    B, H, W, C = x.shape
    if pad:
        x = jnp.pad(x, ((0, 0), (pad, pad), (pad, pad), (0, 0)))
    Ho = H + 2 * pad - kh + 1
    Wo = W + 2 * pad - kw + 1
    patches = []
    for i in range(kh):
        for j in range(kw):
            patches.append(x[:, i:i + Ho, j:j + Wo, :])
    p = jnp.stack(patches, axis=-1)                    # [B, Ho, Wo, C, kh*kw]
    K = C * kh * kw
    p = p.reshape(B, Ho, Wo, K)
    Hp, Wp = Ho // 2, Wo // 2
    p = p.reshape(B, Hp, 2, Wp, 2, K)
    p4 = jnp.transpose(p, (2, 4, 0, 1, 3, 5)).reshape(4, B * Hp * Wp, K)
    return p4.astype(jnp.bfloat16)


def init_params(key):
    ks = jax.random.split(key, 8)

    def w(k, shape, fan_in):
        return jax.random.normal(k, shape, jnp.float32) / np.sqrt(fan_in)

    return {
        "conv1_w": w(ks[0], (8, 1, 5, 5), 25),        # [Cout, Cin, kh, kw]
        "conv1_b": w(ks[1], (8,), 25),
        "conv2_w": w(ks[2], (64, 8, 3, 3), 72),
        "conv2_b": w(ks[3], (64,), 72),
        "fc1_w":   w(ks[4], (512, 6 * 6 * 64 * 2), 4608),   # [out, in]
        "fc1_b":   w(ks[5], (512,), 4608),
        "fc2_w":   w(ks[6], (19, 512), 512),
        "fc2_b":   w(ks[7], (19,), 512),
    }


def prepare_params(params):
    """One-time packing: conv weights as [K, Cout] bf16, fc weights as
    [in, out] bf16, biases as [1, N] f32 (hoisted out of the forward path)."""
    return {
        "w1c": params["conv1_w"].reshape(8, 25).T.astype(jnp.bfloat16),
        "b1c": params["conv1_b"].reshape(1, 8).astype(jnp.float32),
        "w2c": params["conv2_w"].reshape(64, 72).T.astype(jnp.bfloat16),
        "b2c": params["conv2_b"].reshape(1, 64).astype(jnp.float32),
        "w1f": params["fc1_w"].T.astype(jnp.bfloat16),       # [4608, 512]
        "b1f": params["fc1_b"].reshape(1, 512).astype(jnp.float32),
        "w2f": params["fc2_w"].T.astype(jnp.bfloat16),       # [512, 19]
        "b2f": params["fc2_b"].reshape(1, 19).astype(jnp.float32),
    }


@jax.jit
def double_cnn_forward(x, pp):
    # x: [B, 1, 28, 56] (same convention as the PyTorch module)
    x = x.reshape(-1, 1, 28, 56)
    B = x.shape[0]
    xh = jnp.transpose(x, (0, 2, 3, 1))                 # NHWC [B, 28, 56, 1]
    # Shared CNN on both halves: fold halves into batch as index b*2 + half.
    halves = jnp.stack([xh[:, :, :28, :], xh[:, :, 28:, :]], axis=1)
    imgs = halves.reshape(2 * B, 28, 28, 1)

    # conv1 (5x5, pad 2) + ReLU + pool  ->  [2B, 14, 14, 8]
    p4 = im2col_pool4(imgs, 5, 5, 2)                    # [4, 2B*196, 25]
    y1 = conv_relu_pool(p4, pp["w1c"], pp["b1c"])
    y1 = y1.reshape(2 * B, 14, 14, 8)

    # conv2 (3x3, no pad) + ReLU + pool ->  [2B, 6, 6, 64]
    p4 = im2col_pool4(y1, 3, 3, 0)                      # [4, 2B*36, 72]
    y2 = conv_relu_pool(p4, pp["w2c"], pp["b2c"])
    y2 = y2.reshape(2 * B, 6, 6, 64)

    # Flatten each half in PyTorch NCHW order (C=64, H=6, W=6) and concat the
    # two halves per batch element -> [B, 4608].
    feat = jnp.transpose(y2, (0, 3, 1, 2)).reshape(B, 2 * 64 * 6 * 6)

    # Fused fc1 + ReLU + fc2 + ReLU -> [B, 19]
    return fc_fused(feat.astype(jnp.bfloat16),
                    pp["w1f"], pp["b1f"], pp["w2f"], pp["b2f"])


# ----------------------------- pure-JAX reference ---------------------------

def reference_forward(x, params):
    """Mirror of the PyTorch DoubleCNN forward with the same precision policy
    as the kernels (bf16 matmul/conv operands, f32 accumulation/elementwise)."""
    x = x.reshape(-1, 1, 28, 56)
    img1 = x[:, :, :, :28]
    img2 = x[:, :, :, 28:]

    def conv(z, w, b, pad):
        y = jax.lax.conv_general_dilated(
            z.astype(jnp.bfloat16), w.astype(jnp.bfloat16),
            window_strides=(1, 1), padding=[(pad, pad), (pad, pad)],
            dimension_numbers=("NCHW", "OIHW", "NCHW"),
            preferred_element_type=jnp.float32)
        return y + b.reshape(1, -1, 1, 1)

    def pool(z):
        Bc, C, H, W = z.shape
        return z.reshape(Bc, C, H // 2, 2, W // 2, 2).max(axis=(3, 5))

    def cnn(z):
        z = pool(jax.nn.relu(conv(z, params["conv1_w"], params["conv1_b"], 2)))
        z = pool(jax.nn.relu(conv(z, params["conv2_w"], params["conv2_b"], 0)))
        return z.reshape(z.shape[0], 64 * 6 * 6)

    feat = jnp.concatenate([cnn(img1), cnn(img2)], axis=1)        # [B, 4608]
    h = jax.nn.relu(
        jnp.dot(feat.astype(jnp.bfloat16),
                params["fc1_w"].T.astype(jnp.bfloat16),
                preferred_element_type=jnp.float32) + params["fc1_b"])
    out = jax.nn.relu(
        jnp.dot(h.astype(jnp.bfloat16),
                params["fc2_w"].T.astype(jnp.bfloat16),
                preferred_element_type=jnp.float32) + params["fc2_b"])
    return out


if __name__ == "__main__":
    key = jax.random.PRNGKey(0)
    kx, kp = jax.random.split(key)
    x = jax.random.normal(kx, (2, 1, 28, 56), jnp.float32)   # batch = 2
    params = init_params(kp)
    pp = prepare_params(params)

    out = jax.block_until_ready(double_cnn_forward(x, pp))
    assert out.shape == (2, 19)

    ref = reference_forward(x, params)
    np.testing.assert_allclose(np.asarray(out), np.asarray(ref),
                               rtol=5e-3, atol=5e-3)
    print("KERNEL_OK")
</pallas_src>

<mosaic_0001>
module attributes {stable_mosaic.version = 11 : i64} {
  func.func @_conv_relu_pool_kernel(%arg0: i32, %arg1: memref<4x512x25xbf16, #tpu.memory_space<vmem>>, %arg2: memref<25x8xbf16, #tpu.memory_space<vmem>>, %arg3: memref<1x8xf32, #tpu.memory_space<vmem>>, %arg4: memref<512x8xf32, #tpu.memory_space<vmem>>) attributes {dimension_semantics = [#tpu.dimension_semantics<parallel>], iteration_bounds = array<i64: 2>, scalar_prefetch = 0 : i64, scratch_operands = 0 : i64, tpu.core_type = #tpu.core_type<tc>, window_params = [{transform_indices = @transform_0, window_bounds = array<i64: 4, 512, 25>}, {pipeline_mode = #tpu.pipeline_mode<synchronous>, transform_indices = @transform_1, window_bounds = array<i64: 25, 8>}, {pipeline_mode = #tpu.pipeline_mode<synchronous>, transform_indices = @transform_2, window_bounds = array<i64: 1, 8>}, {transform_indices = @transform_3, window_bounds = array<i64: 512, 8>}]} {
    %c0 = arith.constant 0 : index
    %c0_0 = arith.constant 0 : index
    %0 = vector.load %arg2[%c0, %c0_0] : memref<25x8xbf16, #tpu.memory_space<vmem>>, vector<25x8xbf16>
    %c0_1 = arith.constant 0 : index
    %c0_2 = arith.constant 0 : index
    %c0_3 = arith.constant 0 : index
    %1 = vector.load %arg1[%c0_1, %c0_2, %c0_3] : memref<4x512x25xbf16, #tpu.memory_space<vmem>>, vector<1x512x25xbf16>
    %2 = vector.shape_cast %1 : vector<1x512x25xbf16> to vector<512x25xbf16>
    %cst = arith.constant dense<0.000000e+00> : vector<512x8xf32>
    %3 = tpu.matmul %2, %0, %cst {dimension_numbers = #tpu.dot_dimension_numbers<[1], [0], [0], [1], [0, 0, 1, 1], [], []>} : vector<512x25xbf16>, vector<25x8xbf16>, vector<512x8xf32> -> vector<512x8xf32>
    %c1 = arith.constant 1 : index
    %c0_4 = arith.constant 0 : index
    %c0_5 = arith.constant 0 : index
    %4 = vector.load %arg1[%c1, %c0_4, %c0_5] : memref<4x512x25xbf16, #tpu.memory_space<vmem>>, vector<1x512x25xbf16>
    %5 = vector.shape_cast %4 : vector<1x512x25xbf16> to vector<512x25xbf16>
    %cst_6 = arith.constant dense<0.000000e+00> : vector<512x8xf32>
    %6 = tpu.matmul %5, %0, %cst_6 {dimension_numbers = #tpu.dot_dimension_numbers<[1], [0], [0], [1], [0, 0, 1, 1], [], []>} : vector<512x25xbf16>, vector<25x8xbf16>, vector<512x8xf32> -> vector<512x8xf32>
    %7 = arith.maximumf %3, %6 : vector<512x8xf32>
    %c2 = arith.constant 2 : index
    %c0_7 = arith.constant 0 : index
    %c0_8 = arith.constant 0 : index
    %8 = vector.load %arg1[%c2, %c0_7, %c0_8] : memref<4x512x25xbf16, #tpu.memory_space<vmem>>, vector<1x512x25xbf16>
    %9 = vector.shape_cast %8 : vector<1x512x25xbf16> to vector<512x25xbf16>
    %cst_9 = arith.constant dense<0.000000e+00> : vector<512x8xf32>
    %10 = tpu.matmul %9, %0, %cst_9 {dimension_numbers = #tpu.dot_dimension_numbers<[1], [0], [0], [1], [0, 0, 1, 1], [], []>} : vector<512x25xbf16>, vector<25x8xbf16>, vector<512x8xf32> -> vector<512x8xf32>
    %11 = arith.maximumf %7, %10 : vector<512x8xf32>
    %c3 = arith.constant 3 : index
    %c0_10 = arith.constant 0 : index
    %c0_11 = arith.constant 0 : index
    %12 = vector.load %arg1[%c3, %c0_10, %c0_11] : memref<4x512x25xbf16, #tpu.memory_space<vmem>>, vector<1x512x25xbf16>
    %13 = vector.shape_cast %12 : vector<1x512x25xbf16> to vector<512x25xbf16>
    %cst_12 = arith.constant dense<0.000000e+00> : vector<512x8xf32>
    %14 = tpu.matmul %13, %0, %cst_12 {dimension_numbers = #tpu.dot_dimension_numbers<[1], [0], [0], [1], [0, 0, 1, 1], [], []>} : vector<512x25xbf16>, vector<25x8xbf16>, vector<512x8xf32> -> vector<512x8xf32>
    %15 = arith.maximumf %11, %14 : vector<512x8xf32>
    %c0_13 = arith.constant 0 : index
    %c0_14 = arith.constant 0 : index
    %16 = vector.load %arg3[%c0_13, %c0_14] : memref<1x8xf32, #tpu.memory_space<vmem>>, vector<1x8xf32>
    %17 = vector.broadcast %16 : vector<1x8xf32> to vector<512x8xf32>
    %18 = arith.addf %15, %17 : vector<512x8xf32>
    %cst_15 = arith.constant 0.000000e+00 : f32
    %19 = vector.broadcast %cst_15 : f32 to vector<512x8xf32>
    %20 = arith.maximumf %18, %19 : vector<512x8xf32>
    %c0_16 = arith.constant 0 : index
    %c0_17 = arith.constant 0 : index
    %21 = vector.load %arg4[%c0_16, %c0_17] : memref<512x8xf32, #tpu.memory_space<vmem>>, vector<512x8xf32>
    tpu.vector_store %arg4[%c0_16, %c0_17], %20 {strides = array<i32>} : memref<512x8xf32, #tpu.memory_space<vmem>>, vector<512x8xf32>,
    return
  }
  func.func @transform_0(%arg0: i32) -> (i32, i32, i32) {
    %c0_i32 = arith.constant 0 : i32
    %c0_i32_0 = arith.constant 0 : i32
    %c0_i32_1 = arith.constant 0 : i32
    return %c0_i32, %arg0, %c0_i32_0 : i32, i32, i32
  }
  func.func @transform_1(%arg0: i32) -> (i32, i32) {
    %c0_i32 = arith.constant 0 : i32
    %c0_i32_0 = arith.constant 0 : i32
    %c0_i32_1 = arith.constant 0 : i32
    return %c0_i32, %c0_i32_0 : i32, i32
  }
  func.func @transform_2(%arg0: i32) -> (i32, i32) {
    %c0_i32 = arith.constant 0 : i32
    %c0_i32_0 = arith.constant 0 : i32
    %c0_i32_1 = arith.constant 0 : i32
    return %c0_i32, %c0_i32_0 : i32, i32
  }
  func.func @transform_3(%arg0: i32) -> (i32, i32) {
    %c0_i32 = arith.constant 0 : i32
    %c0_i32_0 = arith.constant 0 : i32
    return %arg0, %c0_i32 : i32, i32
  }
}

module attributes {stable_mosaic.version = 11 : i64} {
  func.func @_conv_relu_pool_kernel(%arg0: i32, %arg1: memref<4x144x72xbf16, #tpu.memory_space<vmem>>, %arg2: memref<72x64xbf16, #tpu.memory_space<vmem>>, %arg3: memref<1x64xf32, #tpu.memory_space<vmem>>, %arg4: memref<144x64xf32, #tpu.memory_space<vmem>>) attributes {dimension_semantics = [#tpu.dimension_semantics<parallel>], iteration_bounds = array<i64: 1>, scalar_prefetch = 0 : i64, scratch_operands = 0 : i64, tpu.core_type = #tpu.core_type<tc>, window_params = [{transform_indices = @transform_0, window_bounds = array<i64: 4, 144, 72>}, {pipeline_mode = #tpu.pipeline_mode<synchronous>, transform_indices = @transform_1, window_bounds = array<i64: 72, 64>}, {pipeline_mode = #tpu.pipeline_mode<synchronous>, transform_indices = @transform_2, window_bounds = array<i64: 1, 64>}, {transform_indices = @transform_3, window_bounds = array<i64: 144, 64>}]} {
    %c0 = arith.constant 0 : index
    %c0_0 = arith.constant 0 : index
    %0 = vector.load %arg2[%c0, %c0_0] : memref<72x64xbf16, #tpu.memory_space<vmem>>, vector<72x64xbf16>
    %c0_1 = arith.constant 0 : index
    %c0_2 = arith.constant 0 : index
    %c0_3 = arith.constant 0 : index
    %1 = vector.load %arg1[%c0_1, %c0_2, %c0_3] : memref<4x144x72xbf16, #tpu.memory_space<vmem>>, vector<1x144x72xbf16>
    %2 = vector.shape_cast %1 : vector<1x144x72xbf16> to vector<144x72xbf16>
    %cst = arith.constant dense<0.000000e+00> : vector<144x64xf32>
    %3 = tpu.matmul %2, %0, %cst {dimension_numbers = #tpu.dot_dimension_numbers<[1], [0], [0], [1], [0, 0, 1, 1], [], []>} : vector<144x72xbf16>, vector<72x64xbf16>, vector<144x64xf32> -> vector<144x64xf32>
    %c1 = arith.constant 1 : index
    %c0_4 = arith.constant 0 : index
    %c0_5 = arith.constant 0 : index
    %4 = vector.load %arg1[%c1, %c0_4, %c0_5] : memref<4x144x72xbf16, #tpu.memory_space<vmem>>, vector<1x144x72xbf16>
    %5 = vector.shape_cast %4 : vector<1x144x72xbf16> to vector<144x72xbf16>
    %cst_6 = arith.constant dense<0.000000e+00> : vector<144x64xf32>
    %6 = tpu.matmul %5, %0, %cst_6 {dimension_numbers = #tpu.dot_dimension_numbers<[1], [0], [0], [1], [0, 0, 1, 1], [], []>} : vector<144x72xbf16>, vector<72x64xbf16>, vector<144x64xf32> -> vector<144x64xf32>
    %7 = arith.maximumf %3, %6 : vector<144x64xf32>
    %c2 = arith.constant 2 : index
    %c0_7 = arith.constant 0 : index
    %c0_8 = arith.constant 0 : index
    %8 = vector.load %arg1[%c2, %c0_7, %c0_8] : memref<4x144x72xbf16, #tpu.memory_space<vmem>>, vector<1x144x72xbf16>
    %9 = vector.shape_cast %8 : vector<1x144x72xbf16> to vector<144x72xbf16>
    %cst_9 = arith.constant dense<0.000000e+00> : vector<144x64xf32>
    %10 = tpu.matmul %9, %0, %cst_9 {dimension_numbers = #tpu.dot_dimension_numbers<[1], [0], [0], [1], [0, 0, 1, 1], [], []>} : vector<144x72xbf16>, vector<72x64xbf16>, vector<144x64xf32> -> vector<144x64xf32>
    %11 = arith.maximumf %7, %10 : vector<144x64xf32>
    %c3 = arith.constant 3 : index
    %c0_10 = arith.constant 0 : index
    %c0_11 = arith.constant 0 : index
    %12 = vector.load %arg1[%c3, %c0_10, %c0_11] : memref<4x144x72xbf16, #tpu.memory_space<vmem>>, vector<1x144x72xbf16>
    %13 = vector.shape_cast %12 : vector<1x144x72xbf16> to vector<144x72xbf16>
    %cst_12 = arith.constant dense<0.000000e+00> : vector<144x64xf32>
    %14 = tpu.matmul %13, %0, %cst_12 {dimension_numbers = #tpu.dot_dimension_numbers<[1], [0], [0], [1], [0, 0, 1, 1], [], []>} : vector<144x72xbf16>, vector<72x64xbf16>, vector<144x64xf32> -> vector<144x64xf32>
    %15 = arith.maximumf %11, %14 : vector<144x64xf32>
    %c0_13 = arith.constant 0 : index
    %c0_14 = arith.constant 0 : index
    %16 = vector.load %arg3[%c0_13, %c0_14] : memref<1x64xf32, #tpu.memory_space<vmem>>, vector<1x64xf32>
    %17 = vector.broadcast %16 : vector<1x64xf32> to vector<144x64xf32>
    %18 = arith.addf %15, %17 : vector<144x64xf32>
    %cst_15 = arith.constant 0.000000e+00 : f32
    %19 = vector.broadcast %cst_15 : f32 to vector<144x64xf32>
    %20 = arith.maximumf %18, %19 : vector<144x64xf32>
    %c0_16 = arith.constant 0 : index
    %c0_17 = arith.constant 0 : index
    %21 = vector.load %arg4[%c0_16, %c0_17] : memref<144x64xf32, #tpu.memory_space<vmem>>, vector<144x64xf32>
    tpu.vector_store %arg4[%c0_16, %c0_17], %20 {strides = array<i32>} : memref<144x64xf32, #tpu.memory_space<vmem>>, vector<144x64xf32>,
    return
  }
  func.func @transform_0(%arg0: i32) -> (i32, i32, i32) {
    %c0_i32 = arith.constant 0 : i32
    %c0_i32_0 = arith.constant 0 : i32
    %c0_i32_1 = arith.constant 0 : i32
    return %c0_i32, %arg0, %c0_i32_0 : i32, i32, i32
  }
  func.func @transform_1(%arg0: i32) -> (i32, i32) {
    %c0_i32 = arith.constant 0 : i32
    %c0_i32_0 = arith.constant 0 : i32
    %c0_i32_1 = arith.constant 0 : i32
    return %c0_i32, %c0_i32_0 : i32, i32
  }
  func.func @transform_2(%arg0: i32) -> (i32, i32) {
    %c0_i32 = arith.constant 0 : i32
    %c0_i32_0 = arith.constant 0 : i32
    %c0_i32_1 = arith.constant 0 : i32
    return %c0_i32, %c0_i32_0 : i32, i32
  }
  func.func @transform_3(%arg0: i32) -> (i32, i32) {
    %c0_i32 = arith.constant 0 : i32
    %c0_i32_0 = arith.constant 0 : i32
    return %arg0, %c0_i32 : i32, i32
  }
}

module attributes {stable_mosaic.version = 11 : i64} {
  func.func @_fc_fused_kernel(%arg0: i32, %arg1: memref<2x4608xbf16, #tpu.memory_space<vmem>>, %arg2: memref<4608x512xbf16, #tpu.memory_space<vmem>>, %arg3: memref<1x512xf32, #tpu.memory_space<vmem>>, %arg4: memref<512x19xbf16, #tpu.memory_space<vmem>>, %arg5: memref<1x19xf32, #tpu.memory_space<vmem>>, %arg6: memref<2x19xf32, #tpu.memory_space<vmem>>) attributes {dimension_semantics = [#tpu.dimension_semantics<parallel>], iteration_bounds = array<i64: 1>, scalar_prefetch = 0 : i64, scratch_operands = 0 : i64, tpu.core_type = #tpu.core_type<tc>, window_params = [{transform_indices = @transform_0, window_bounds = array<i64: 2, 4608>}, {pipeline_mode = #tpu.pipeline_mode<synchronous>, transform_indices = @transform_1, window_bounds = array<i64: 4608, 512>}, {pipeline_mode = #tpu.pipeline_mode<synchronous>, transform_indices = @transform_2, window_bounds = array<i64: 1, 512>}, {pipeline_mode = #tpu.pipeline_mode<synchronous>, transform_indices = @transform_3, window_bounds = array<i64: 512, 19>}, {pipeline_mode = #tpu.pipeline_mode<synchronous>, transform_indices = @transform_4, window_bounds = array<i64: 1, 19>}, {transform_indices = @transform_5, window_bounds = array<i64: 2, 19>}]} {
    %c0 = arith.constant 0 : index
    %c0_0 = arith.constant 0 : index
    %0 = vector.load %arg1[%c0, %c0_0] : memref<2x4608xbf16, #tpu.memory_space<vmem>>, vector<2x4608xbf16>
    %c0_1 = arith.constant 0 : index
    %c0_2 = arith.constant 0 : index
    %1 = vector.load %arg2[%c0_1, %c0_2] : memref<4608x512xbf16, #tpu.memory_space<vmem>>, vector<4608x512xbf16>
    %cst = arith.constant dense<0.000000e+00> : vector<2x512xf32>
    %2 = tpu.matmul %0, %1, %cst {dimension_numbers = #tpu.dot_dimension_numbers<[1], [0], [0], [1], [0, 0, 1, 1], [], []>} : vector<2x4608xbf16>, vector<4608x512xbf16>, vector<2x512xf32> -> vector<2x512xf32>
    %c0_3 = arith.constant 0 : index
    %c0_4 = arith.constant 0 : index
    %3 = vector.load %arg3[%c0_3, %c0_4] : memref<1x512xf32, #tpu.memory_space<vmem>>, vector<1x512xf32>
    %4 = vector.broadcast %3 : vector<1x512xf32> to vector<2x512xf32>
    %5 = arith.addf %2, %4 : vector<2x512xf32>
    %cst_5 = arith.constant 0.000000e+00 : f32
    %6 = vector.broadcast %cst_5 : f32 to vector<2x512xf32>
    %7 = arith.maximumf %5, %6 : vector<2x512xf32>
    %8 = arith.truncf %7 : vector<2x512xf32> to vector<2x512xbf16>
    %c0_6 = arith.constant 0 : index
    %c0_7 = arith.constant 0 : index
    %9 = vector.load %arg4[%c0_6, %c0_7] : memref<512x19xbf16, #tpu.memory_space<vmem>>, vector<512x19xbf16>
    %cst_8 = arith.constant dense<0.000000e+00> : vector<2x19xf32>
    %10 = tpu.matmul %8, %9, %cst_8 {dimension_numbers = #tpu.dot_dimension_numbers<[1], [0], [0], [1], [0, 0, 1, 1], [], []>} : vector<2x512xbf16>, vector<512x19xbf16>, vector<2x19xf32> -> vector<2x19xf32>
    %c0_9 = arith.constant 0 : index
    %c0_10 = arith.constant 0 : index
    %11 = vector.load %arg5[%c0_9, %c0_10] : memref<1x19xf32, #tpu.memory_space<vmem>>, vector<1x19xf32>
    %12 = vector.broadcast %11 : vector<1x19xf32> to vector<2x19xf32>
    %13 = arith.addf %10, %12 : vector<2x19xf32>
    %cst_11 = arith.constant 0.000000e+00 : f32
    %14 = vector.broadcast %cst_11 : f32 to vector<2x19xf32>
    %15 = arith.maximumf %13, %14 : vector<2x19xf32>
    %c0_12 = arith.constant 0 : index
    %c0_13 = arith.constant 0 : index
    %16 = vector.load %arg6[%c0_12, %c0_13] : memref<2x19xf32, #tpu.memory_space<vmem>>, vector<2x19xf32>
    tpu.vector_store %arg6[%c0_12, %c0_13], %15 {strides = array<i32>} : memref<2x19xf32, #tpu.memory_space<vmem>>, vector<2x19xf32>,
    return
  }
  func.func @transform_0(%arg0: i32) -> (i32, i32) {
    %c0_i32 = arith.constant 0 : i32
    %c0_i32_0 = arith.constant 0 : i32
    return %arg0, %c0_i32 : i32, i32
  }
  func.func @transform_1(%arg0: i32) -> (i32, i32) {
    %c0_i32 = arith.constant 0 : i32
    %c0_i32_0 = arith.constant 0 : i32
    %c0_i32_1 = arith.constant 0 : i32
    return %c0_i32, %c0_i32_0 : i32, i32
  }
  func.func @transform_2(%arg0: i32) -> (i32, i32) {
    %c0_i32 = arith.constant 0 : i32
    %c0_i32_0 = arith.constant 0 : i32
    %c0_i32_1 = arith.constant 0 : i32
    return %c0_i32, %c0_i32_0 : i32, i32
  }
  func.func @transform_3(%arg0: i32) -> (i32, i32) {
    %c0_i32 = arith.constant 0 : i32
    %c0_i32_0 = arith.constant 0 : i32
    %c0_i32_1 = arith.constant 0 : i32
    return %c0_i32, %c0_i32_0 : i32, i32
  }
  func.func @transform_4(%arg0: i32) -> (i32, i32) {
    %c0_i32 = arith.constant 0 : i32
    %c0_i32_0 = arith.constant 0 : i32
    %c0_i32_1 = arith.constant 0 : i32
    return %c0_i32, %c0_i32_0 : i32, i32
  }
  func.func @transform_5(%arg0: i32) -> (i32, i32) {
    %c0_i32 = arith.constant 0 : i32
    %c0_i32_0 = arith.constant 0 : i32
    return %arg0, %c0_i32 : i32, i32
  }
}

</mosaic_0001>

<llo_original>
// kernel: double_cnn_forward.3
$region0: #{double_cnn_forward.3}
  #allocation0 [shape = 'u32[]', space=smem, size = 0x4, offset = 0x4, fixed_abs, tag = 'smem constant byte address 0x4 - core index']
  #allocation1 [shape = 'u32[144,128]{1,0:T(1,128)}', space=vmem, size = 0x12000, scoped, tag = 'internal scratch']
  %s0 = inlined_call_operand.vmem [shape: bf16[4,784,25], index: 0, kind: input, shape index: {}]
  %s1 = inlined_call_operand.vmem [shape: bf16[25,8], index: 1, kind: input, shape index: {}]
  %s2 = inlined_call_operand.vmem [shape: f32[1,8], index: 2, kind: input, shape index: {}]
  %s3 = inlined_call_operand.vmem [shape: f32[784,8], index: 3, kind: output, shape index: {}]
  %s4 = sld [smem:[#allocation0]]
  $region155: #{double_cnn_forward.3} parent=0
    _
  %s6 = ssub.s32 1, %s4
  %s7 = scalar_select 0, %s6, %s4
  $region1: #{double_cnn_forward.3} parent=0
    #allocation2 [shape = 'u8[1048576]{0}', space=vmem, size = 0x100000, scoped, tag = 'input window, operand 0']
    #allocation3 [shape = 'u8[524288]{0}', space=vmem, size = 0x80000, scoped, tag = 'output window, operand 0']
    loop: start=0, step=1, limit=4
    $region2: #{double_cnn_forward.3} parent=1 // loop_pre_header
      _
    $region3: #{double_cnn_forward.3} parent=1 // loop_header
      %s9 = sphi 0, %s13
      %p10 = scmp.ge.s32.totalorder %s9, 4
      %s19 = sphi 0, %s21
      %s22 = sphi 0, %s19
      %s23 = sphi 0, %s22
      %s39 = sphi 0, %s23
      %s43 = sphi 0, %s43
      %s45 = sphi 0, %s43
      %s46 = sphi 0, %s45
      %s60 = sphi 0, %s46
      %s64 = sphi 0, %s64
      %s66 = sphi 0, %s64
      %s67 = sphi 0, %s66
      %s81 = sphi 0, %s67
      %s87 = sphi 0, %s89
      %s90 = sphi 0, %s87
      %s91 = sphi 0, %s90
      %s107 = sphi 0, %s91
    $region4: #{double_cnn_forward.3} parent=1 // loop_header_branch
      %12 = sbr.rel (%p10) target = $region8
    $region5: #{double_cnn_forward.3} parent=1 // loop_body
      %s14 = ssub.s32 %s9, 1
      %s15 = ssub.s32 %s9, 2
      %s16 = sadd.s32 %s9, 1
      %s17 = ssub.s32 %s9, %s16
      %p18 = scmp.eq.s32.totalorder %s17, 0
      %s20 = sadd.s32 %s19, 1
      %s21 = scalar_select %p18, %s19, %s20
      %p24 = pneg %p18
      %p25 = scmp.eq.s32.totalorder %s9, 1
      %p26 = por %p24, %p25
      %p27 = scmp.ne.s32.totalorder %s19, %s22
      %p28 = scmp.eq.s32.totalorder %s9, 0
      %p29 = por %p27, %p28
      %p30 = scmp.ne.s32.totalorder %s19, %s22
      %p31 = scmp.eq.s32.totalorder %s14, 1
      %p32 = por %p30, %p31
      %p33 = scmp.ne.s32.totalorder %s22, %s23
      %p34 = scmp.eq.s32.totalorder %s14, 0
      %p35 = por %p33, %p34
      %p36 = scmp.ne.s32.totalorder %s22, %s23
      %p37 = scmp.eq.s32.totalorder %s15, 1
      %p38 = por %p36, %p37
      %p40 = scmp.ne.s32.totalorder %s23, %s39
      %p41 = scmp.eq.s32.totalorder %s15, 0
      %p42 = por %p40, %p41
      %s44 = sadd.s32 %s43, 1
      %p47 = scmp.eq.s32.totalorder %s9, 1
      %p48 = scmp.ne.s32.totalorder %s43, %s45
      %p49 = scmp.eq.s32.totalorder %s9, 0
      %p50 = por %p48, %p49
      %p51 = scmp.ne.s32.totalorder %s43, %s45
      %p52 = scmp.eq.s32.totalorder %s14, 1
      %p53 = por %p51, %p52
      %p54 = scmp.ne.s32.totalorder %s45, %s46
      %p55 = scmp.eq.s32.totalorder %s14, 0
      %p56 = por %p54, %p55
      %p57 = scmp.ne.s32.totalorder %s45, %s46
      %p58 = scmp.eq.s32.totalorder %s15, 1
      %p59 = por %p57, %p58
      %p61 = scmp.ne.s32.totalorder %s46, %s60
      %p62 = scmp.eq.s32.totalorder %s15, 0
      %p63 = por %p61, %p62
      %s65 = sadd.s32 %s64, 1
      %p68 = scmp.eq.s32.totalorder %s9, 1
      %p69 = scmp.ne.s32.totalorder %s64, %s66
      %p70 = scmp.eq.s32.totalorder %s9, 0
      %p71 = por %p69, %p70
      %p72 = scmp.ne.s32.totalorder %s64, %s66
      %p73 = scmp.eq.s32.totalorder %s14, 1
      %p74 = por %p72, %p73
      %p75 = scmp.ne.s32.totalorder %s66, %s67
      %p76 = scmp.eq.s32.totalorder %s14, 0
      %p77 = por %p75, %p76
      %p78 = scmp.ne.s32.totalorder %s66, %s67
      %p79 = scmp.eq.s32.totalorder %s15, 1
      %p80 = por %p78, %p79
      %p82 = scmp.ne.s32.totalorder %s67, %s81
      %p83 = scmp.eq.s32.totalorder %s15, 0
      %p84 = por %p82, %p83
      %s85 = ssub.s32 %s9, %s16
      %p86 = scmp.eq.s32.totalorder %s85, 0
      %s88 = sadd.s32 %s87, 1
      %s89 = scalar_select %p86, %s87, %s88
      %p92 = pneg %p86
      %p93 = scmp.eq.s32.totalorder %s9, 1
      %p94 = por %p92, %p93
      %p95 = scmp.ne.s32.totalorder %s87, %s90
      %p96 = scmp.eq.s32.totalorder %s9, 0
      %p97 = por %p95, %p96
      %p98 = scmp.ne.s32.totalorder %s87, %s90
      %p99 = scmp.eq.s32.totalorder %s14, 1
      %p100 = por %p98, %p99
      %p101 = scmp.ne.s32.totalorder %s90, %s91
      %p102 = scmp.eq.s32.totalorder %s14, 0
      %p103 = por %p101, %p102
      %p104 = scmp.ne.s32.totalorder %s90, %s91
      %p105 = scmp.eq.s32.totalorder %s15, 1
      %p106 = por %p104, %p105
      %p108 = scmp.ne.s32.totalorder %s91, %s107
      %p109 = scmp.eq.s32.totalorder %s15, 0
      %p110 = por %p108, %p109
      %p111 = scmp.le.s32.totalorder 1, %s9
      %p112 = scmp.lt.s32.totalorder %s9, 3
      %p113 = pnand %p111, %p112
      %p114 = pneg %p113
      // Predicated region
      $region9: #{double_cnn_forward.3} parent=5 // pred_check
        _
      $region10: #{double_cnn_forward.3} parent=5 // pred_check_branch
        %116 = sbr.rel (%p113) target = $region12
      $region11: #{double_cnn_forward.3} parent=5 // pred_region
        %s117 = ssub.s32 %s9, 1
        // Predicated region
        $region13: #{double_cnn_forward.3} parent=11 // pred_check
          %p118 = pneg %p56
        $region14: #{double_cnn_forward.3} parent=11 // pred_check_branch
          %120 = sbr.rel (%p118) target = $region16
        $region15: #{double_cnn_forward.3} parent=11 // pred_region
          _
        $region16: #{double_cnn_forward.3} parent=11 // pred_fallthru
          _
        // Predicated region
        $region17: #{double_cnn_forward.3} parent=11 // pred_check
          %p121 = pneg %p77
        $region18: #{double_cnn_forward.3} parent=11 // pred_check_branch
          %123 = sbr.rel (%p121) target = $region20
        $region19: #{double_cnn_forward.3} parent=11 // pred_region
          _
        $region20: #{double_cnn_forward.3} parent=11 // pred_fallthru
          _
      $region12: #{double_cnn_forward.3} parent=5 // pred_fallthru
        _
      %p124 = scmp.lt.s32.totalorder %s9, 2
      // Predicated region
      $region21: #{double_cnn_forward.3} parent=5 // pred_check
        %p125 = pneg %p124
      $region22: #{double_cnn_forward.3} parent=5 // pred_check_branch
        %127 = sbr.rel (%p125) target = $region24
      $region23: #{double_cnn_forward.3} parent=5 // pred_region
        // Predicated region
        $region25: #{double_cnn_forward.3} parent=23 // pred_check
          %p128 = pneg %p29
        $region26: #{double_cnn_forward.3} parent=23 // pred_check_branch
          %130 = sbr.rel (%p128) target = $region28
        $region27: #{double_cnn_forward.3} parent=23 // pred_region
          %s131 = sand.u32 %s19, 1
          %s132 = sand.u32 %s19, 1
          %s133 = smul.addr %s132, 1024
          %s134 = scalar_lea.vmem [#allocation2], %s133
          %s135 = smul.u32 64, %s9
          %s136 = ssub.s32 98, %s135
          %p137 = scmp.lt.s32.totalorder %s136, 64
          %s138 = scalar_select %p137, %s136, 64
          %s139 = smul.u32 256, %s138
          %p140 = scmp.ne.s32.totalorder 0, %s139
          %s141 = smul.addr %s135, 4
          %s142 = scalar_lea.vmem %s0, %s141
          // Predicated region
          $region29: #{double_cnn_forward.3} parent=27 // pred_check
            %p143 = pneg %p140
          $region30: #{double_cnn_forward.3} parent=27 // pred_check_branch
            %145 = sbr.rel (%p143) target = $region32
          $region31: #{double_cnn_forward.3} parent=27 // pred_region
            // Predicated region
            $region33: #{double_cnn_forward.3} parent=31 // pred_check
              _
            $region34: #{double_cnn_forward.3} parent=31 // pred_check_branch
              %147 = sbr.rel target = $region36
            $region35: #{double_cnn_forward.3} parent=31 // pred_region
              // Predicated region
              $region55: #{double_cnn_forward.3} parent=35 // pred_check
                _
              $region56: #{double_cnn_forward.3} parent=35 // pred_check_branch
                %328 = sbr.rel (0) target = $region58
              $region57: #{double_cnn_forward.3} parent=35 // pred_region
                %s329 = sshrl.u32 %s138, 5
                // While loop
                $region59: #{double_cnn_forward.3} parent=57 // loop_pre_header
                  _
                $region60: #{double_cnn_forward.3} parent=57 // loop_header
                  %s331 = sphi 0, %s333
                  %p332 = scmp.ge.s32.totalorder %s331, %s329
                  %s336 = sphi 0, %s341
                  %s337 = sphi %s142, %s344
                  %s338 = sphi %s134, %s345
                $region61: #{double_cnn_forward.3} parent=57 // loop_header_branch
                  %335 = sbr.rel (%p332) target = $region65
                $region62: #{double_cnn_forward.3} parent=57 // loop_body
                  %s339 = sadd.s32 1, %s336
                  %p340 = scmp.ge.s32.totalorder %s339, %s329
                  %s341 = scalar_select %p340, 0, %s339
                  %s342 = smul.u32 %s341, 128
                  %s343 = smul.u32 %s341, 128
                  %s344 = scalar_lea.vmem %s142, %s342
                  %s345 = scalar_lea.vmem %s134, %s343 [#allocation2]
                $region63: #{double_cnn_forward.3} parent=57 // loop_footer
                  %s333 = sadd.s32 %s331, 1
                $region64: #{double_cnn_forward.3} parent=57 // loop_footer_branch
                  %330 = sbr.rel target = $region60
                $region65: #{double_cnn_forward.3} parent=57 // loop_exit
                  _
                %s346 = sshrl.u32 %s138, 5
                %s347 = sand.u32 %s138, 31
                %s348 = smul.u32 %s346, 32
                %s349 = smul.u32 4, %s348
                %s350 = scalar_lea.vmem %s142, %s349
                %s351 = smul.u32 4, %s348
                %s352 = scalar_lea.vmem %s134, %s351 [#allocation2]
                // While loop
                $region66: #{double_cnn_forward.3} parent=57 // loop_pre_header
                  _
                $region67: #{double_cnn_forward.3} parent=57 // loop_header
                  %s354 = sphi 0, %s356
                  %p355 = scmp.ge.s32.totalorder %s354, %s347
                  %s359 = sphi 0, %s364
                  %s360 = sphi %s350, %s367
                  %s361 = sphi %s352, %s368
                $region68: #{double_cnn_forward.3} parent=57 // loop_header_branch
                  %358 = sbr.rel (%p355) target = $region72
                $region69: #{double_cnn_forward.3} parent=57 // loop_body
                  %s362 = sadd.s32 1, %s359
                  %p363 = scmp.ge.s32.totalorder %s362, %s347
                  %s364 = scalar_select %p363, 0, %s362
                  %s365 = smul.u32 %s364, 4
                  %s366 = smul.u32 %s364, 4
                  %s367 = scalar_lea.vmem %s350, %s365
                  %s368 = scalar_lea.vmem %s352, %s366 [#allocation2]
                $region70: #{double_cnn_forward.3} parent=57 // loop_footer
                  %s356 = sadd.s32 %s354, 1
                $region71: #{double_cnn_forward.3} parent=57 // loop_footer_branch
                  %353 = sbr.rel target = $region67
                $region72: #{double_cnn_forward.3} parent=57 // loop_exit
                  _
                %s370 = sshrl.u32 %s138, 4
                // While loop
                $region73: #{double_cnn_forward.3} parent=57 // loop_pre_header
                  _
                $region74: #{double_cnn_forward.3} parent=57 // loop_header
                  %s372 = sphi 0, %s374
                  %p373 = scmp.ge.s32.totalorder %s372, %s370
                  %s377 = sphi 0, %s510
                  %s378 = sphi %s142, %s513
                  %s379 = sphi %s134, %s514
                $region75: #{double_cnn_forward.3} parent=57 // loop_header_branch
                  %376 = sbr.rel (%p373) target = $region79
                $region76: #{double_cnn_forward.3} parent=57 // loop_body
                  %v380 = vld [vmem:[%s378] sm:$0xf]
                  %381 = vst [vmem:[%s379] sm:$0xf] %v380
                  %v382 = vld [vmem:[%s378 + $0x4] sm:$0xf]
                  %383 = vst [vmem:[%s379 + $0x4] sm:$0xf] %v382
                  %v384 = vld [vmem:[%s378 + $0x8] sm:$0xf]
                  %385 = vst [vmem:[%s379 + $0x8] sm:$0xf] %v384
                  %v386 = vld [vmem:[%s378 + $0xc] sm:$0xf]
                  %387 = vst [vmem:[%s379 + $0xc] sm:$0xf] %v386
                  %v388 = vld [vmem:[%s378 + $0x10] sm:$0xf]
                  %389 = vst [vmem:[%s379 + $0x10] sm:$0xf] %v388
                  %v390 = vld [vmem:[%s378 + $0x14] sm:$0xf]
                  %391 = vst [vmem:[%s379 + $0x14] sm:$0xf] %v390
                  %v392 = vld [vmem:[%s378 + $0x18] sm:$0xf]
                  %393 = vst [vmem:[%s379 + $0x18] sm:$0xf] %v392
                  %v394 = vld [vmem:[%s378 + $0x1c] sm:$0xf]
                  %395 = vst [vmem:[%s379 + $0x1c] sm:$0xf] %v394
                  %v396 = vld [vmem:[%s378 + $0x20] sm:$0xf]
                  %397 = vst [vmem:[%s379 + $0x20] sm:$0xf] %v396
                  %v398 = vld [vmem:[%s378 + $0x24] sm:$0xf]
                  %399 = vst [vmem:[%s379 + $0x24] sm:$0xf] %v398
                  %v400 = vld [vmem:[%s378 + $0x28] sm:$0xf]
                  %401 = vst [vmem:[%s379 + $0x28] sm:$0xf] %v400
                  %v402 = vld [vmem:[%s378 + $0x2c] sm:$0xf]
                  %403 = vst [vmem:[%s379 + $0x2c] sm:$0xf] %v402
                  %v404 = vld [vmem:[%s378 + $0x30] sm:$0xf]
                  %405 = vst [vmem:[%s379 + $0x30] sm:$0xf] %v404
                  %v406 = vld [vmem:[%s378 + $0x34] sm:$0xf]
                  %407 = vst [vmem:[%s379 + $0x34] sm:$0xf] %v406
                  %v408 = vld [vmem:[%s378 + $0x38] sm:$0xf]
                  %409 = vst [vmem:[%s379 + $0x38] sm:$0xf] %v408
                  %v410 = vld [vmem:[%s378 + $0x3c] sm:$0xf]
                  %411 = vst [vmem:[%s379 + $0x3c] sm:$0xf] %v410
                  %v412 = vld [vmem:[%s378 + $0x188] sm:$0xf]
                  %413 = vst [vmem:[%s379 + $0x100] sm:$0xf] %v412
                  %v414 = vld [vmem:[%s378 + $0x18c] sm:$0xf]
                  %415 = vst [vmem:[%s379 + $0x104] sm:$0xf] %v414
                  %v416 = vld [vmem:[%s378 + $0x190] sm:$0xf]
                  %417 = vst [vmem:[%s379 + $0x108] sm:$0xf] %v416
                  %v418 = vld [vmem:[%s378 + $0x194] sm:$0xf]
                  %419 = vst [vmem:[%s379 + $0x10c] sm:$0xf] %v418
                  %v420 = vld [vmem:[%s378 + $0x198] sm:$0xf]
                  %421 = vst [vmem:[%s379 + $0x110] sm:$0xf] %v420
                  %v422 = vld [vmem:[%s378 + $0x19c] sm:$0xf]
                  %423 = vst [vmem:[%s379 + $0x114] sm:$0xf] %v422
                  %v424 = vld [vmem:[%s378 + $0x1a0] sm:$0xf]
                  %425 = vst [vmem:[%s379 + $0x118] sm:$0xf] %v424
                  %v426 = vld [vmem:[%s378 + $0x1a4] sm:$0xf]
                  %427 = vst [vmem:[%s379 + $0x11c] sm:$0xf] %v426
                  %v428 = vld [vmem:[%s378 + $0x1a8] sm:$0xf]
                  %429 = vst [vmem:[%s379 + $0x120] sm:$0xf] %v428
                  %v430 = vld [vmem:[%s378 + $0x1ac] sm:$0xf]
                  %431 = vst [vmem:[%s379 + $0x124] sm:$0xf] %v430
                  %v432 = vld [vmem:[%s378 + $0x1b0] sm:$0xf]
                  %433 = vst [vmem:[%s379 + $0x128] sm:$0xf] %v432
                  %v434 = vld [vmem:[%s378 + $0x1b4] sm:$0xf]
                  %435 = vst [vmem:[%s379 + $0x12c] sm:$0xf] %v434
                  %v436 = vld [vmem:[%s378 + $0x1b8] sm:$0xf]
                  %437 = vst [vmem:[%s379 + $0x130] sm:$0xf] %v436
                  %v438 = vld [vmem:[%s378 + $0x1bc] sm:$0xf]
                  %439 = vst [vmem:[%s379 + $0x134] sm:$0xf] %v438
                  %v440 = vld [vmem:[%s378 + $0x1c0] sm:$0xf]
                  %441 = vst [vmem:[%s379 + $0x138] sm:$0xf] %v440
                  %v442 = vld [vmem:[%s378 + $0x1c4] sm:$0xf]
                  %443 = vst [vmem:[%s379 + $0x13c] sm:$0xf] %v442
                  %v444 = vld [vmem:[%s378 + $0x310] sm:$0xf]
                  %445 = vst [vmem:[%s379 + $0x200] sm:$0xf] %v444
                  %v446 = vld [vmem:[%s378 + $0x314] sm:$0xf]
                  %447 = vst [vmem:[%s379 + $0x204] sm:$0xf] %v446
                  %v448 = vld [vmem:[%s378 + $0x318] sm:$0xf]
                  %449 = vst [vmem:[%s379 + $0x208] sm:$0xf] %v448
                  %v450 = vld [vmem:[%s378 + $0x31c] sm:$0xf]
                  %451 = vst [vmem:[%s379 + $0x20c] sm:$0xf] %v450
                  %v452 = vld [vmem:[%s378 + $0x320] sm:$0xf]
                  %453 = vst [vmem:[%s379 + $0x210] sm:$0xf] %v452
                  %v454 = vld [vmem:[%s378 + $0x324] sm:$0xf]
                  %455 = vst [vmem:[%s379 + $0x214] sm:$0xf] %v454
                  %v456 = vld [vmem:[%s378 + $0x328] sm:$0xf]
                  %457 = vst [vmem:[%s379 + $0x218] sm:$0xf] %v456
                  %v458 = vld [vmem:[%s378 + $0x32c] sm:$0xf]
                  %459 = vst [vmem:[%s379 + $0x21c] sm:$0xf] %v458
                  %v460 = vld [vmem:[%s378 + $0x330] sm:$0xf]
                  %461 = vst [vmem:[%s379 + $0x220] sm:$0xf] %v460
                  %v462 = vld [vmem:[%s378 + $0x334] sm:$0xf]
                  %463 = vst [vmem:[%s379 + $0x224] sm:$0xf] %v462
                  %v464 = vld [vmem:[%s378 + $0x338] sm:$0xf]
                  %465 = vst [vmem:[%s379 + $0x228] sm:$0xf] %v464
                  %v466 = vld [vmem:[%s378 + $0x33c] sm:$0xf]
                  %467 = vst [vmem:[%s379 + $0x22c] sm:$0xf] %v466
                  %v468 = vld [vmem:[%s378 + $0x340] sm:$0xf]
                  %469 = vst [vmem:[%s379 + $0x230] sm:$0xf] %v468
                  %v470 = vld [vmem:[%s378 + $0x344] sm:$0xf]
                  %471 = vst [vmem:[%s379 + $0x234] sm:$0xf] %v470
                  %v472 = vld [vmem:[%s378 + $0x348] sm:$0xf]
                  %473 = vst [vmem:[%s379 + $0x238] sm:$0xf] %v472
                  %v474 = vld [vmem:[%s378 + $0x34c] sm:$0xf]
                  %475 = vst [vmem:[%s379 + $0x23c] sm:$0xf] %v474
                  %v476 = vld [vmem:[%s378 + $0x498] sm:$0xf]
                  %477 = vst [vmem:[%s379 + $0x300] sm:$0xf] %v476
                  %v478 = vld [vmem:[%s378 + $0x49c] sm:$0xf]
                  %479 = vst [vmem:[%s379 + $0x304] sm:$0xf] %v478
                  %v480 = vld [vmem:[%s378 + $0x4a0] sm:$0xf]
                  %481 = vst [vmem:[%s379 + $0x308] sm:$0xf] %v480
                  %v482 = vld [vmem:[%s378 + $0x4a4] sm:$0xf]
                  %483 = vst [vmem:[%s379 + $0x30c] sm:$0xf] %v482
                  %v484 = vld [vmem:[%s378 + $0x4a8] sm:$0xf]
                  %485 = vst [vmem:[%s379 + $0x310] sm:$0xf] %v484
                  %v486 = vld [vmem:[%s378 + $0x4ac] sm:$0xf]
                  %487 = vst [vmem:[%s379 + $0x314] sm:$0xf] %v486
                  %v488 = vld [vmem:[%s378 + $0x4b0] sm:$0xf]
                  %489 = vst [vmem:[%s379 + $0x318] sm:$0xf] %v488
                  %v490 = vld [vmem:[%s378 + $0x4b4] sm:$0xf]
                  %491 = vst [vmem:[%s379 + $0x31c] sm:$0xf] %v490
                  %v492 = vld [vmem:[%s378 + $0x4b8] sm:$0xf]
                  %493 = vst [vmem:[%s379 + $0x320] sm:$0xf] %v492
                  %v494 = vld [vmem:[%s378 + $0x4bc] sm:$0xf]
                  %495 = vst [vmem:[%s379 + $0x324] sm:$0xf] %v494
                  %v496 = vld [vmem:[%s378 + $0x4c0] sm:$0xf]
                  %497 = vst [vmem:[%s379 + $0x328] sm:$0xf] %v496
                  %v498 = vld [vmem:[%s378 + $0x4c4] sm:$0xf]
                  %499 = vst [vmem:[%s379 + $0x32c] sm:$0xf] %v498
                  %v500 = vld [vmem:[%s378 + $0x4c8] sm:$0xf]
                  %501 = vst [vmem:[%s379 + $0x330] sm:$0xf] %v500
                  %v502 = vld [vmem:[%s378 + $0x4cc] sm:$0xf]
                  %503 = vst [vmem:[%s379 + $0x334] sm:$0xf] %v502
                  %v504 = vld [vmem:[%s378 + $0x4d0] sm:$0xf]
                  %505 = vst [vmem:[%s379 + $0x338] sm:$0xf] %v504
                  %v506 = vld [vmem:[%s378 + $0x4d4] sm:$0xf]
                  %507 = vst [vmem:[%s379 + $0x33c] sm:$0xf] %v506
                  %s508 = sadd.s32 1, %s377
                  %p509 = scmp.ge.s32.totalorder %s508, %s370
                  %s510 = scalar_select %p509, 0, %s508
                  %s511 = smul.u32 %s510, 64
                  %s512 = smul.u32 %s510, 64
                  %s513 = scalar_lea.vmem %s142, %s511
                  %s514 = scalar_lea.vmem %s134, %s512 [#allocation2]
                $region77: #{double_cnn_forward.3} parent=57 // loop_footer
                  %s374 = sadd.s32 %s372, 1
                $region78: #{double_cnn_forward.3} parent=57 // loop_footer_branch
                  %371 = sbr.rel target = $region74
                $region79: #{double_cnn_forward.3} parent=57 // loop_exit
                  _
                %s515 = sshrl.u32 %s138, 4
                %s516 = sand.u32 %s138, 15
                %s517 = smul.u32 %s515, 16
                %s518 = smul.u32 4, %s517
                %s519 = scalar_lea.vmem %s142, %s518
                %s520 = smul.u32 4, %s517
                %s521 = scalar_lea.vmem %s134, %s520 [#allocation2]
                // While loop
                $region80: #{double_cnn_forward.3} parent=57 // loop_pre_header
                  _
                $region81: #{double_cnn_forward.3} parent=57 // loop_header
                  %s523 = sphi 0, %s525
                  %p524 = scmp.ge.s32.totalorder %s523, %s516
                  %s528 = sphi 0, %s541
                  %s529 = sphi %s519, %s544
                  %s530 = sphi %s521, %s545
                $region82: #{double_cnn_forward.3} parent=57 // loop_header_branch
                  %527 = sbr.rel (%p524) target = $region86
                $region83: #{double_cnn_forward.3} parent=57 // loop_body
                  %v531 = vld [vmem:[%s529] sm:$0xf]
                  %532 = vst [vmem:[%s530] sm:$0xf] %v531
                  %v533 = vld [vmem:[%s529 + $0x188] sm:$0xf]
                  %534 = vst [vmem:[%s530 + $0x100] sm:$0xf] %v533
                  %v535 = vld [vmem:[%s529 + $0x310] sm:$0xf]
                  %536 = vst [vmem:[%s530 + $0x200] sm:$0xf] %v535
                  %v537 = vld [vmem:[%s529 + $0x498] sm:$0xf]
                  %538 = vst [vmem:[%s530 + $0x300] sm:$0xf] %v537
                  %s539 = sadd.s32 1, %s528
                  %p540 = scmp.ge.s32.totalorder %s539, %s516
                  %s541 = scalar_select %p540, 0, %s539
                  %s542 = smul.u32 %s541, 4
                  %s543 = smul.u32 %s541, 4
                  %s544 = scalar_lea.vmem %s519, %s542
                  %s545 = scalar_lea.vmem %s521, %s543 [#allocation2]
                $region84: #{double_cnn_forward.3} parent=57 // loop_footer
                  %s525 = sadd.s32 %s523, 1
                $region85: #{double_cnn_forward.3} parent=57 // loop_footer_branch
                  %522 = sbr.rel target = $region81
                $region86: #{double_cnn_forward.3} parent=57 // loop_exit
                  _
              $region58: #{double_cnn_forward.3} parent=35 // pred_fallthru
                _
            $region36: #{double_cnn_forward.3} parent=31 // pred_fallthru
              _
            // Predicated region
            $region37: #{double_cnn_forward.3} parent=31 // pred_check
              _
            $region38: #{double_cnn_forward.3} parent=31 // pred_check_branch
              %149 = sbr.rel (0) target = $region40
            $region39: #{double_cnn_forward.3} parent=31 // pred_region
              %s151 = sshrl.u32 %s138, 4
              // While loop
              $region41: #{double_cnn_forward.3} parent=39 // loop_pre_header
                _
              $region42: #{double_cnn_forward.3} parent=39 // loop_header
                %s153 = sphi 0, %s155
                %p154 = scmp.ge.s32.totalorder %s153, %s151
                %s158 = sphi 0, %s291
                %s159 = sphi %s142, %s294
                %s160 = sphi %s134, %s295
              $region43: #{double_cnn_forward.3} parent=39 // loop_header_branch
                %157 = sbr.rel (%p154) target = $region47
              $region44: #{double_cnn_forward.3} parent=39 // loop_body
                %v161 = vld [vmem:[%s159] sm:$0xf]
                %162 = vst [vmem:[%s160] sm:$0xf] %v161
                %v163 = vld [vmem:[%s159 + $0x4] sm:$0xf]
                %164 = vst [vmem:[%s160 + $0x4] sm:$0xf] %v163
                %v165 = vld [vmem:[%s159 + $0x8] sm:$0xf]
                %166 = vst [vmem:[%s160 + $0x8] sm:$0xf] %v165
                %v167 = vld [vmem:[%s159 + $0xc] sm:$0xf]
                %168 = vst [vmem:[%s160 + $0xc] sm:$0xf] %v167
                %v169 = vld [vmem:[%s159 + $0x10] sm:$0xf]
                %170 = vst [vmem:[%s160 + $0x10] sm:$0xf] %v169
                %v171 = vld [vmem:[%s159 + $0x14] sm:$0xf]
                %172 = vst [vmem:[%s160 + $0x14] sm:$0xf] %v171
                %v173 = vld [vmem:[%s159 + $0x18] sm:$0xf]
                %174 = vst [vmem:[%s160 + $0x18] sm:$0xf] %v173
                %v175 = vld [vmem:[%s159 + $0x1c] sm:$0xf]
                %176 = vst [vmem:[%s160 + $0x1c] sm:$0xf] %v175
                %v177 = vld [vmem:[%s159 + $0x20] sm:$0xf]
                %178 = vst [vmem:[%s160 + $0x20] sm:$0xf] %v177
                %v179 = vld [vmem:[%s159 + $0x24] sm:$0xf]
                %180 = vst [vmem:[%s160 + $0x24] sm:$0xf] %v179
                %v181 = vld [vmem:[%s159 + $0x28] sm:$0xf]
                %182 = vst [vmem:[%s160 + $0x28] sm:$0xf] %v181
                %v183 = vld [vmem:[%s159 + $0x2c] sm:$0xf]
                %184 = vst [vmem:[%s160 + $0x2c] sm:$0xf] %v183
                %v185 = vld [vmem:[%s159 + $0x30] sm:$0xf]
                %186 = vst [vmem:[%s160 + $0x30] sm:$0xf] %v185
                %v187 = vld [vmem:[%s159 + $0x34] sm:$0xf]
                %188 = vst [vmem:[%s160 + $0x34] sm:$0xf] %v187
                %v189 = vld [vmem:[%s159 + $0x38] sm:$0xf]
                %190 = vst [vmem:[%s160 + $0x38] sm:$0xf] %v189
                %v191 = vld [vmem:[%s159 + $0x3c] sm:$0xf]
                %192 = vst [vmem:[%s160 + $0x3c] sm:$0xf] %v191
                %v193 = vld [vmem:[%s159 + $0x188] sm:$0xf]
                %194 = vst [vmem:[%s160 + $0x100] sm:$0xf] %v193
                %v195 = vld [vmem:[%s159 + $0x18c] sm:$0xf]
                %196 = vst [vmem:[%s160 + $0x104] sm:$0xf] %v195
                %v197 = vld [vmem:[%s159 + $0x190] sm:$0xf]
                %198 = vst [vmem:[%s160 + $0x108] sm:$0xf] %v197
                %v199 = vld [vmem:[%s159 + $0x194] sm:$0xf]
                %200 = vst [vmem:[%s160 + $0x10c] sm:$0xf] %v199
                %v201 = vld [vmem:[%s159 + $0x198] sm:$0xf]
                %202 = vst [vmem:[%s160 + $0x110] sm:$0xf] %v201
                %v203 = vld [vmem:[%s159 + $0x19c] sm:$0xf]
                %204 = vst [vmem:[%s160 + $0x114] sm:$0xf] %v203
                %v205 = vld [vmem:[%s159 + $0x1a0] sm:$0xf]
                %206 = vst [vmem:[%s160 + $0x118] sm:$0xf] %v205
                %v207 = vld [vmem:[%s159 + $0x1a4] sm:$0xf]
                %208 = vst [vmem:[%s160 + $0x11c] sm:$0xf] %v207
                %v209 = vld [vmem:[%s159 + $0x1a8] sm:$0xf]
                %210 = vst [vmem:[%s160 + $0x120] sm:$0xf] %v209
                %v211 = vld [vmem:[%s159 + $0x1ac] sm:$0xf]
                %212 = vst [vmem:[%s160 + $0x124] sm:$0xf] %v211
                %v213 = vld [vmem:[%s159 + $0x1b0] sm:$0xf]
                %214 = vst [vmem:[%s160 + $0x128] sm:$0xf] %v213
                %v215 = vld [vmem:[%s159 + $0x1b4] sm:$0xf]
                %216 = vst [vmem:[%s160 + $0x12c] sm:$0xf] %v215
                %v217 = vld [vmem:[%s159 + $0x1b8] sm:$0xf]
                %218 = vst [vmem:[%s160 + $0x130] sm:$0xf] %v217
                %v219 = vld [vmem:[%s159 + $0x1bc] sm:$0xf]
                %220 = vst [vmem:[%s160 + $0x134] sm:$0xf] %v219
                %v221 = vld [vmem:[%s159 + $0x1c0] sm:$0xf]
                %222 = vst [vmem:[%s160 + $0x138] sm:$0xf] %v221
                %v223 = vld [vmem:[%s159 + $0x1c4] sm:$0xf]
                %224 = vst [vmem:[%s160 + $0x13c] sm:$0xf] %v223
                %v225 = vld [vmem:[%s159 + $0x310] sm:$0xf]
                %226 = vst [vmem:[%s160 + $0x200] sm:$0xf] %v225
                %v227 = vld [vmem:[%s159 + $0x314] sm:$0xf]
                %228 = vst [vmem:[%s160 + $0x204] sm:$0xf] %v227
                %v229 = vld [vmem:[%s159 + $0x318] sm:$0xf]
                %230 = vst [vmem:[%s160 + $0x208] sm:$0xf] %v229
                %v231 = vld [vmem:[%s159 + $0x31c] sm:$0xf]
                %232 = vst [vmem:[%s160 + $0x20c] sm:$0xf] %v231
                %v233 = vld [vmem:[%s159 + $0x320] sm:$0xf]
                %234 = vst [vmem:[%s160 + $0x210] sm:$0xf] %v233
                %v235 = vld [vmem:[%s159 + $0x324] sm:$0xf]
                %236 = vst [vmem:[%s160 + $0x214] sm:$0xf] %v235
                %v237 = vld [vmem:[%s159 + $0x328] sm:$0xf]
                %238 = vst [vmem:[%s160 + $0x218] sm:$0xf] %v237
                %v239 = vld [vmem:[%s159 + $0x32c] sm:$0xf]
                %240 = vst [vmem:[%s160 + $0x21c] sm:$0xf] %v239
                %v241 = vld [vmem:[%s159 + $0x330] sm:$0xf]
                %242 = vst [vmem:[%s160 + $0x220] sm:$0xf] %v241
                %v243 = vld [vmem:[%s159 + $0x334] sm:$0xf]
                %244 = vst [vmem:[%s160 + $0x224] sm:$0xf] %v243
                %v245 = vld [vmem:[%s159 + $0x338] sm:$0xf]
                %246 = vst [vmem:[%s160 + $0x228] sm:$0xf] %v245
                %v247 = vld [vmem:[%s159 + $0x33c] sm:$0xf]
                %248 = vst [vmem:[%s160 + $0x22c] sm:$0xf] %v247
                %v249 = vld [vmem:[%s159 + $0x340] sm:$0xf]
                %250 = vst [vmem:[%s160 + $0x230] sm:$0xf] %v249
                %v251 = vld [vmem:[%s159 + $0x344] sm:$0xf]
                %252 = vst [vmem:[%s160 + $0x234] sm:$0xf] %v251
                %v253 = vld [vmem:[%s159 + $0x348] sm:$0xf]
                %254 = vst [vmem:[%s160 + $0x238] sm:$0xf] %v253
                %v255 = vld [vmem:[%s159 + $0x34c] sm:$0xf]
                %256 = vst [vmem:[%s160 + $0x23c] sm:$0xf] %v255
                %v257 = vld [vmem:[%s159 + $0x498] sm:$0xf]
                %258 = vst [vmem:[%s160 + $0x300] sm:$0xf] %v257
                %v259 = vld [vmem:[%s159 + $0x49c] sm:$0xf]
                %260 = vst [vmem:[%s160 + $0x304] sm:$0xf] %v259
                %v261 = vld [vmem:[%s159 + $0x4a0] sm:$0xf]
                %262 = vst [vmem:[%s160 + $0x308] sm:$0xf] %v261
                %v263 = vld [vmem:[%s159 + $0x4a4] sm:$0xf]
                %264 = vst [vmem:[%s160 + $0x30c] sm:$0xf] %v263
                %v265 = vld [vmem:[%s159 + $0x4a8] sm:$0xf]
                %266 = vst [vmem:[%s160 + $0x310] sm:$0xf] %v265
                %v267 = vld [vmem:[%s159 + $0x4ac] sm:$0xf]
                %268 = vst [vmem:[%s160 + $0x314] sm:$0xf] %v267
                %v269 = vld [vmem:[%s159 + $0x4b0] sm:$0xf]
                %270 = vst [vmem:[%s160 + $0x318] sm:$0xf] %v269
                %v271 = vld [vmem:[%s159 + $0x4b4] sm:$0xf]
                %272 = vst [vmem:[%s160 + $0x31c] sm:$0xf] %v271
                %v273 = vld [vmem:[%s159 + $0x4b8] sm:$0xf]
                %274 = vst [vmem:[%s160 + $0x320] sm:$0xf] %v273
                %v275 = vld [vmem:[%s159 + $0x4bc] sm:$0xf]
                %276 = vst [vmem:[%s160 + $0x324] sm:$0xf] %v275
                %v277 = vld [vmem:[%s159 + $0x4c0] sm:$0xf]
                %278 = vst [vmem:[%s160 + $0x328] sm:$0xf] %v277
                %v279 = vld [vmem:[%s159 + $0x4c4] sm:$0xf]
                %280 = vst [vmem:[%s160 + $0x32c] sm:$0xf] %v279
                %v281 = vld [vmem:[%s159 + $0x4c8] sm:$0xf]
                %282 = vst [vmem:[%s160 + $0x330] sm:$0xf] %v281
                %v283 = vld [vmem:[%s159 + $0x4cc] sm:$0xf]
                %284 = vst [vmem:[%s160 + $0x334] sm:$0xf] %v283
                %v285 = vld [vmem:[%s159 + $0x4d0] sm:$0xf]
                %286 = vst [vmem:[%s160 + $0x338] sm:$0xf] %v285
                %v287 = vld [vmem:[%s159 + $0x4d4] sm:$0xf]
                %288 = vst [vmem:[%s160 + $0x33c] sm:$0xf] %v287
                %s289 = sadd.s32 1, %s158
                %p290 = scmp.ge.s32.totalorder %s289, %s151
                %s291 = scalar_select %p290, 0, %s289
                %s292 = smul.u32 %s291, 64
                %s293 = smul.u32 %s291, 64
                %s294 = scalar_lea.vmem %s142, %s292
                %s295 = scalar_lea.vmem %s134, %s293 [#allocation2]
              $region45: #{double_cnn_forward.3} parent=39 // loop_footer
                %s155 = sadd.s32 %s153, 1
              $region46: #{double_cnn_forward.3} parent=39 // loop_footer_branch
                %152 = sbr.rel target = $region42
              $region47: #{double_cnn_forward.3} parent=39 // loop_exit
                _
              %s296 = sshrl.u32 %s138, 4
              %s297 = sand.u32 %s138, 15
              %s298 = smul.u32 %s296, 16
              %s299 = smul.u32 4, %s298
              %s300 = scalar_lea.vmem %s142, %s299
              %s301 = smul.u32 4, %s298
              %s302 = scalar_lea.vmem %s134, %s301 [#allocation2]
              // While loop
              $region48: #{double_cnn_forward.3} parent=39 // loop_pre_header
                _
              $region49: #{double_cnn_forward.3} parent=39 // loop_header
                %s304 = sphi 0, %s306
                %p305 = scmp.ge.s32.totalorder %s304, %s297
                %s309 = sphi 0, %s322
                %s310 = sphi %s300, %s325
                %s311 = sphi %s302, %s326
              $region50: #{double_cnn_forward.3} parent=39 // loop_header_branch
                %308 = sbr.rel (%p305) target = $region54
              $region51: #{double_cnn_forward.3} parent=39 // loop_body
                %v312 = vld [vmem:[%s310] sm:$0xf]
                %313 = vst [vmem:[%s311] sm:$0xf] %v312
                %v314 = vld [vmem:[%s310 + $0x188] sm:$0xf]
                %315 = vst [vmem:[%s311 + $0x100] sm:$0xf] %v314
                %v316 = vld [vmem:[%s310 + $0x310] sm:$0xf]
                %317 = vst [vmem:[%s311 + $0x200] sm:$0xf] %v316
                %v318 = vld [vmem:[%s310 + $0x498] sm:$0xf]
                %319 = vst [vmem:[%s311 + $0x300] sm:$0xf] %v318
                %s320 = sadd.s32 1, %s309
                %p321 = scmp.ge.s32.totalorder %s320, %s297
                %s322 = scalar_select %p321, 0, %s320
                %s323 = smul.u32 %s322, 4
                %s324 = smul.u32 %s322, 4
                %s325 = scalar_lea.vmem %s300, %s323
                %s326 = scalar_lea.vmem %s302, %s324 [#allocation2]
              $region52: #{double_cnn_forward.3} parent=39 // loop_footer
                %s306 = sadd.s32 %s304, 1
              $region53: #{double_cnn_forward.3} parent=39 // loop_footer_branch
                %303 = sbr.rel target = $region49
              $region54: #{double_cnn_forward.3} parent=39 // loop_exit
                _
            $region40: #{double_cnn_forward.3} parent=31 // pred_fallthru
              _
          $region32: #{double_cnn_forward.3} parent=27 // pred_fallthru
            _
          %546 = vnop
        $region28: #{double_cnn_forward.3} parent=23 // pred_fallthru
          _
      $region24: #{double_cnn_forward.3} parent=5 // pred_fallthru
        _
      %p547 = scmp.le.s32.totalorder 1, %s9
      %p548 = scmp.lt.s32.totalorder %s9, 3
      %p549 = pnand %p547, %p548
      %p550 = pneg %p549
      // Predicated region
      $region87: #{double_cnn_forward.3} parent=5 // pred_check
        _
      $region88: #{double_cnn_forward.3} parent=5 // pred_check_branch
        %552 = sbr.rel (%p549) target = $region90
      $region89: #{double_cnn_forward.3} parent=5 // pred_region
        %s553 = ssub.s32 %s9, 1
        %s554 = sand.u32 %s22, 1
        %s555 = sand.u32 %s22, 1
        %s556 = smul.addr %s555, 1024
        %s557 = scalar_lea.vmem [#allocation2], %s556
        // Predicated region
        $region91: #{double_cnn_forward.3} parent=89 // pred_check
          %p558 = pneg %p35
        $region92: #{double_cnn_forward.3} parent=89 // pred_check_branch
          %560 = sbr.rel (%p558) target = $region94
        $region93: #{double_cnn_forward.3} parent=89 // pred_region
          _
        $region94: #{double_cnn_forward.3} parent=89 // pred_fallthru
          _
        %s561 = sand.u32 %s22, 1
        %s562 = sand.u32 %s22, 1
        %s563 = smul.addr %s562, 1024
        %s564 = scalar_lea.vmem [#allocation2], %s563
        %p565 = pneg %p35
        %p566 = pneg %p32
        %p567 = pneg %p56
        %p568 = pneg %p53
        %p569 = pneg %p77
        %p570 = pneg %p74
        %p571 = pneg %p103
        %p572 = pneg %p100
        %s573 = sand.u32 %s90, 1
        %s574 = sand.u32 %s90, 1
        %s575 = smul.addr %s574, 512
        %s576 = scalar_lea.vmem [#allocation3], %s575
        %s577 = smul.u32 64, %s14
        %s578 = ssub.s32 98, %s577
        %p579 = scmp.lt.s32.totalorder %s578, 64
        %s580 = scalar_select %p579, %s578, 64
        %s581 = smul.u32 256, %s580
        %s582 = smul.u32 64, %s14
        %s583 = ssub.s32 98, %s582
        %p584 = scmp.lt.s32.totalorder %s583, 64
        %s585 = scalar_select %p584, %s583, 64
        %s586 = smul.u32 128, %s585
        %v588 = vld [vmem:[%s1] sm:$0xf]
        %v589 = vld [vmem:[%s1 + $0x4] sm:$0xf]
        %v590 = vld [vmem:[%s1 + $0x8] sm:$0xf]
        %v591 = vld [vmem:[%s1 + $0xc] sm:$0x1]
        %v592 = vld [vmem:[%s557] sm:$0xf]
        %v593 = vld [vmem:[%s557 + $0x4] sm:$0xf]
        %v594 = vld [vmem:[%s557 + $0x8] sm:$0xf]
        %v595 = vld [vmem:[%s557 + $0xc] sm:$0xf]
        %v596 = vld [vmem:[%s557 + $0x10] sm:$0xf]
        %v597 = vld [vmem:[%s557 + $0x14] sm:$0xf]
        %v598 = vld [vmem:[%s557 + $0x18] sm:$0xf]
        %v599 = vld [vmem:[%s557 + $0x1c] sm:$0xf]
        %v600 = vld [vmem:[%s557 + $0x20] sm:$0xf]
        %v601 = vld [vmem:[%s557 + $0x24] sm:$0xf]
        %v602 = vld [vmem:[%s557 + $0x28] sm:$0xf]
        %v603 = vld [vmem:[%s557 + $0x2c] sm:$0xf]
        %v604 = vld [vmem:[%s557 + $0x30] sm:$0xf]
        %v605 = vld [vmem:[%s557 + $0x34] sm:$0xf]
        %v606 = vld [vmem:[%s557 + $0x38] sm:$0xf]
        %v607 = vld [vmem:[%s557 + $0x3c] sm:$0xf]
        %v608 = vld [vmem:[%s557 + $0x40] sm:$0xf]
        %v609 = vld [vmem:[%s557 + $0x44] sm:$0xf]
        %v610 = vld [vmem:[%s557 + $0x48] sm:$0xf]
        %v611 = vld [vmem:[%s557 + $0x4c] sm:$0xf]
        %v612 = vld [vmem:[%s557 + $0x50] sm:$0xf]
        %v613 = vld [vmem:[%s557 + $0x54] sm:$0xf]
        %v614 = vld [vmem:[%s557 + $0x58] sm:$0xf]
        %v615 = vld [vmem:[%s557 + $0x5c] sm:$0xf]
        %v616 = vld [vmem:[%s557 + $0x60] sm:$0xf]
        %v617 = vld [vmem:[%s557 + $0x64] sm:$0xf]
        %v618 = vld [vmem:[%s557 + $0x68] sm:$0xf]
        %v619 = vld [vmem:[%s557 + $0x6c] sm:$0xf]
        %v620 = vld [vmem:[%s557 + $0x70] sm:$0xf]
        %v621 = vld [vmem:[%s557 + $0x74] sm:$0xf]
        %v622 = vld [vmem:[%s557 + $0x78] sm:$0xf]
        %v623 = vld [vmem:[%s557 + $0x7c] sm:$0xf]
        %v624 = vld [vmem:[%s557 + $0x80] sm:$0xf]
        %v625 = vld [vmem:[%s557 + $0x84] sm:$0xf]
        %v626 = vld [vmem:[%s557 + $0x88] sm:$0xf]
        %v627 = vld [vmem:[%s557 + $0x8c] sm:$0xf]
        %v628 = vld [vmem:[%s557 + $0x90] sm:$0xf]
        %v629 = vld [vmem:[%s557 + $0x94] sm:$0xf]
        %v630 = vld [vmem:[%s557 + $0x98] sm:$0xf]
        %v631 = vld [vmem:[%s557 + $0x9c] sm:$0xf]
        %v632 = vld [vmem:[%s557 + $0xa0] sm:$0xf]
        %v633 = vld [vmem:[%s557 + $0xa4] sm:$0xf]
        %v634 = vld [vmem:[%s557 + $0xa8] sm:$0xf]
        %v635 = vld [vmem:[%s557 + $0xac] sm:$0xf]
        %v636 = vld [vmem:[%s557 + $0xb0] sm:$0xf]
        %v637 = vld [vmem:[%s557 + $0xb4] sm:$0xf]
        %v638 = vld [vmem:[%s557 + $0xb8] sm:$0xf]
        %v639 = vld [vmem:[%s557 + $0xbc] sm:$0xf]
        %v640 = vld [vmem:[%s557 + $0xc0] sm:$0xf]
        %v641 = vld [vmem:[%s557 + $0xc4] sm:$0xf]
        %v642 = vld [vmem:[%s557 + $0xc8] sm:$0xf]
        %v643 = vld [vmem:[%s557 + $0xcc] sm:$0xf]
        %v644 = vld [vmem:[%s557 + $0xd0] sm:$0xf]
        %v645 = vld [vmem:[%s557 + $0xd4] sm:$0xf]
        %v646 = vld [vmem:[%s557 + $0xd8] sm:$0xf]
        %v647 = vld [vmem:[%s557 + $0xdc] sm:$0xf]
        %v648 = vld [vmem:[%s557 + $0xe0] sm:$0xf]
        %v649 = vld [vmem:[%s557 + $0xe4] sm:$0xf]
        %v650 = vld [vmem:[%s557 + $0xe8] sm:$0xf]
        %v651 = vld [vmem:[%s557 + $0xec] sm:$0xf]
        %v652 = vld [vmem:[%s557 + $0xf0] sm:$0xf]
        %v653 = vld [vmem:[%s557 + $0xf4] sm:$0xf]
        %v654 = vld [vmem:[%s557 + $0xf8] sm:$0xf]
        %v655 = vld [vmem:[%s557 + $0xfc] sm:$0xf]
        %v720 = vunpack.c.l.b16 %v592
        %v721 = vunpack.c.l.b16 %v593
        %v722 = vunpack.c.l.b16 %v594
        %v723 = vunpack.c.l.b16 %v595
        %v724 = vunpack.c.l.b16 %v596
        %v725 = vunpack.c.l.b16 %v597
        %v726 = vunpack.c.l.b16 %v598
        %v727 = vunpack.c.l.b16 %v599
        %v728 = vunpack.c.l.b16 %v600
        %v729 = vunpack.c.l.b16 %v601
        %v730 = vunpack.c.l.b16 %v602
        %v731 = vunpack.c.l.b16 %v603
        %v732 = vunpack.c.l.b16 %v604
        %v733 = vunpack.c.l.b16 %v605
        %v734 = vunpack.c.l.b16 %v606
        %v735 = vunpack.c.l.b16 %v607
        %v736 = vunpack.c.l.b16 %v608
        %v737 = vunpack.c.l.b16 %v609
        %v738 = vunpack.c.l.b16 %v610
        %v739 = vunpack.c.l.b16 %v611
        %v740 = vunpack.c.l.b16 %v612
        %v741 = vunpack.c.l.b16 %v613
        %v742 = vunpack.c.l.b16 %v614
        %v743 = vunpack.c.l.b16 %v615
        %v744 = vunpack.c.l.b16 %v616
        %v745 = vunpack.c.l.b16 %v617
        %v746 = vunpack.c.l.b16 %v618
        %v747 = vunpack.c.l.b16 %v619
        %v748 = vunpack.c.l.b16 %v620
        %v749 = vunpack.c.l.b16 %v621
        %v750 = vunpack.c.l.b16 %v622
        %v751 = vunpack.c.l.b16 %v623
        %v752 = vunpack.c.l.b16 %v624
        %v753 = vunpack.c.l.b16 %v625
        %v754 = vunpack.c.l.b16 %v626
        %v755 = vunpack.c.l.b16 %v627
        %v756 = vunpack.c.l.b16 %v628
        %v757 = vunpack.c.l.b16 %v629
        %v758 = vunpack.c.l.b16 %v630
        %v759 = vunpack.c.l.b16 %v631
        %v760 = vunpack.c.l.b16 %v632
        %v761 = vunpack.c.l.b16 %v633
        %v762 = vunpack.c.l.b16 %v634
        %v763 = vunpack.c.l.b16 %v635
        %v764 = vunpack.c.l.b16 %v636
        %v765 = vunpack.c.l.b16 %v637
        %v766 = vunpack.c.l.b16 %v638
        %v767 = vunpack.c.l.b16 %v639
        %v768 = vunpack.c.l.b16 %v640
        %v769 = vunpack.c.l.b16 %v641
        %v770 = vunpack.c.l.b16 %v642
        %v771 = vunpack.c.l.b16 %v643
        %v772 = vunpack.c.l.b16 %v644
        %v773 = vunpack.c.l.b16 %v645
        %v774 = vunpack.c.l.b16 %v646
        %v775 = vunpack.c.l.b16 %v647
        %v776 = vunpack.c.l.b16 %v648
        %v777 = vunpack.c.l.b16 %v649
        %v778 = vunpack.c.l.b16 %v650
        %v779 = vunpack.c.l.b16 %v651
        %v780 = vunpack.c.l.b16 %v652
        %v781 = vunpack.c.l.b16 %v653
        %v782 = vunpack.c.l.b16 %v654
        %v783 = vunpack.c.l.b16 %v655
        %v784 = vpack.c.b16 %v721, %v720
        %v785 = vpack.c.b16 %v723, %v722
        %v786 = vpack.c.b16 %v725, %v724
        %v787 = vpack.c.b16 %v727, %v726
        %v788 = vpack.c.b16 %v729, %v728
        %v789 = vpack.c.b16 %v731, %v730
        %v790 = vpack.c.b16 %v733, %v732
        %v791 = vpack.c.b16 %v735, %v734
        %v792 = vpack.c.b16 %v737, %v736
        %v793 = vpack.c.b16 %v739, %v738
        %v794 = vpack.c.b16 %v741, %v740
        %v795 = vpack.c.b16 %v743, %v742
        %v796 = vpack.c.b16 %v745, %v744
        %v797 = vpack.c.b16 %v747, %v746
        %v798 = vpack.c.b16 %v749, %v748
        %v799 = vpack.c.b16 %v751, %v750
        %v800 = vpack.c.b16 %v753, %v752
        %v801 = vpack.c.b16 %v755, %v754
        %v802 = vpack.c.b16 %v757, %v756
        %v803 = vpack.c.b16 %v759, %v758
        %v804 = vpack.c.b16 %v761, %v760
        %v805 = vpack.c.b16 %v763, %v762
        %v806 = vpack.c.b16 %v765, %v764
        %v807 = vpack.c.b16 %v767, %v766
        %v808 = vpack.c.b16 %v769, %v768
        %v809 = vpack.c.b16 %v771, %v770
        %v810 = vpack.c.b16 %v773, %v772
        %v811 = vpack.c.b16 %v775, %v774
        %v812 = vpack.c.b16 %v777, %v776
        %v813 = vpack.c.b16 %v779, %v778
        %v814 = vpack.c.b16 %v781, %v780
        %v815 = vpack.c.b16 %v783, %v782
        %v820 = vunpack.c.l.b16 %v588
        %v821 = vunpack.c.l.b16 %v589
        %v822 = vunpack.c.l.b16 %v590
        %v823 = vunpack.c.l.b16 %v591
        %v824 = vpack.c.b16 %v821, %v820
        %v825 = vpack.c.b16 %v823, %v822
        %vm827 = vcmask 203776
        %v829 = vsel %vm827, %v784, 0
        %v832 = vsel %vm827, %v785, 0
        %v835 = vsel %vm827, %v786, 0
        %v838 = vsel %vm827, %v787, 0
        %v841 = vsel %vm827, %v788, 0
        %v844 = vsel %vm827, %v789, 0
        %v847 = vsel %vm827, %v790, 0
        %v850 = vsel %vm827, %v791, 0
        %v853 = vsel %vm827, %v792, 0
        %v856 = vsel %vm827, %v793, 0
        %v859 = vsel %vm827, %v794, 0
        %v862 = vsel %vm827, %v795, 0
        %v865 = vsel %vm827, %v796, 0
        %v868 = vsel %vm827, %v797, 0
        %v871 = vsel %vm827, %v798, 0
        %v874 = vsel %vm827, %v799, 0
        %v877 = vsel %vm827, %v800, 0
        %v880 = vsel %vm827, %v801, 0
        %v883 = vsel %vm827, %v802, 0
        %v886 = vsel %vm827, %v803, 0
        %v889 = vsel %vm827, %v804, 0
        %v892 = vsel %vm827, %v805, 0
        %v895 = vsel %vm827, %v806, 0
        %v898 = vsel %vm827, %v807, 0
        %v901 = vsel %vm827, %v808, 0
        %v904 = vsel %vm827, %v809, 0
        %v907 = vsel %vm827, %v810, 0
        %v910 = vsel %vm827, %v811, 0
        %v913 = vsel %vm827, %v812, 0
        %v916 = vsel %vm827, %v813, 0
        %v919 = vsel %vm827, %v814, 0
        %v922 = vsel %vm827, %v815, 0
        %vm924 = vcmask 1043456
        %vm925 = vcmask 1044480
        %v926 = vsel %vm924, 4294967295, 65535
        %v927 = vsel %vm925, %v926, 0
        %v929 = vand.u32 %v825, %v927
        %931 = vmatprep.subr.bf16.mxu0 0
        %932 = vmatpush1.bf16.msra.mxu0 %v824
        %933 = vmatprep.subr.bf16.mxu0 0
        %934 = vmatpush1.bf16.msra.mxu0 %v929
        %935 = vmatprep.subr.bf16.mxu0 0
        %936 = vmatpush1.bf16.msra.mxu0 0
        %937 = vmatprep.subr.bf16.mxu0 0
        %938 = vmatpush1.bf16.msra.mxu0 0
        %939 = vmatprep.subr.bf16.mxu0 0
        %940 = vmatpush1.bf16.msra.mxu0 0
        %941 = vmatprep.subr.bf16.mxu0 0
        %942 = vmatpush1.bf16.msra.mxu0 0
        %943 = vmatprep.subr.bf16.mxu0 0
        %944 = vmatpush1.bf16.msra.mxu0 0
        %945 = vmatprep.subr.bf16.mxu0 0
        %946 = vmatpush1.bf16.msra.mxu0 0
        %947 = vmatprep.subr.bf16.mxu0 0
        %948 = vmatpush1.bf16.msra.mxu0 0
        %949 = vmatprep.subr.bf16.mxu0 0
        %950 = vmatpush1.bf16.msra.mxu0 0
        %951 = vmatprep.subr.bf16.mxu0 0
        %952 = vmatpush1.bf16.msra.mxu0 0
        %953 = vmatprep.subr.bf16.mxu0 0
        %954 = vmatpush1.bf16.msra.mxu0 0
        %955 = vmatprep.subr.bf16.mxu0 0
        %956 = vmatpush1.bf16.msra.mxu0 0
        %957 = vmatprep.subr.bf16.mxu0 0
        %958 = vmatpush1.bf16.msra.mxu0 0
        %959 = vmatprep.subr.bf16.mxu0 0
        %960 = vmatpush1.bf16.msra.mxu0 0
        %961 = vmatprep.subr.bf16.mxu0 0
        %962 = vmatpush1.bf16.msra.mxu0 0
        %963 = vmatprep.mubr.bf16.mxu0 0
        %964 = vmatmul.mubr.bf16.gmra.mrb[0].mxu0 %v829
        %v965 = vpop.f32.mrb[0].mxu0
        %v966 = vadd.f32 0.0, %v965
        %v967 = vpop.f32.mrb[0].mxu0
        %v968 = vpop.f32.mrb[0].mxu0
        %v969 = vadd.f32 0.0, %v968
        %v970 = vpop.f32.mrb[0].mxu0
        %971 = vmatprep.mubr.bf16.mxu0 0
        %972 = vmatmul.mubr.bf16.gmra.mrb[0].mxu0 %v832
        %v973 = vpop.f32.mrb[0].mxu0
        %v974 = vadd.f32 0.0, %v973
        %v975 = vpop.f32.mrb[0].mxu0
        %v976 = vpop.f32.mrb[0].mxu0
        %v977 = vadd.f32 0.0, %v976
        %v978 = vpop.f32.mrb[0].mxu0
        %979 = vmatprep.mubr.bf16.mxu0 0
        %980 = vmatmul.mubr.bf16.gmra.mrb[0].mxu0 %v835
        %v981 = vpop.f32.mrb[0].mxu0
        %v982 = vadd.f32 0.0, %v981
        %v983 = vpop.f32.mrb[0].mxu0
        %v984 = vpop.f32.mrb[0].mxu0
        %v985 = vadd.f32 0.0, %v984
        %v986 = vpop.f32.mrb[0].mxu0
        %987 = vmatprep.mubr.bf16.mxu0 0
        %988 = vmatmul.mubr.bf16.gmra.mrb[0].mxu0 %v838
        %v989 = vpop.f32.mrb[0].mxu0
        %v990 = vadd.f32 0.0, %v989
        %v991 = vpop.f32.mrb[0].mxu0
        %v992 = vpop.f32.mrb[0].mxu0
        %v993 = vadd.f32 0.0, %v992
        %v994 = vpop.f32.mrb[0].mxu0
        %995 = vmatprep.mubr.bf16.mxu0 0
        %996 = vmatmul.mubr.bf16.gmra.mrb[0].mxu0 %v841
        %v997 = vpop.f32.mrb[0].mxu0
        %v998 = vadd.f32 0.0, %v997
        %v999 = vpop.f32.mrb[0].mxu0
        %v1000 = vpop.f32.mrb[0].mxu0
        %v1001 = vadd.f32 0.0, %v1000
        %v1002 = vpop.f32.mrb[0].mxu0
        %1003 = vmatprep.mubr.bf16.mxu0 0
        %1004 = vmatmul.mubr.bf16.gmra.mrb[0].mxu0 %v844
        %v1005 = vpop.f32.mrb[0].mxu0
        %v1006 = vadd.f32 0.0, %v1005
        %v1007 = vpop.f32.mrb[0].mxu0
        %v1008 = vpop.f32.mrb[0].mxu0
        %v1009 = vadd.f32 0.0, %v1008
        %v1010 = vpop.f32.mrb[0].mxu0
        %1011 = vmatprep.mubr.bf16.mxu0 0
        %1012 = vmatmul.mubr.bf16.gmra.mrb[0].mxu0 %v847
        %v1013 = vpop.f32.mrb[0].mxu0
        %v1014 = vadd.f32 0.0, %v1013
        %v1015 = vpop.f32.mrb[0].mxu0
        %v1016 = vpop.f32.mrb[0].mxu0
        %v1017 = vadd.f32 0.0, %v1016
        %v1018 = vpop.f32.mrb[0].mxu0
        %1019 = vmatprep.mubr.bf16.mxu0 0
        %1020 = vmatmul.mubr.bf16.gmra.mrb[0].mxu0 %v850
        %v1021 = vpop.f32.mrb[0].mxu0
        %v1022 = vadd.f32 0.0, %v1021
        %v1023 = vpop.f32.mrb[0].mxu0
        %v1024 = vpop.f32.mrb[0].mxu0
        %v1025 = vadd.f32 0.0, %v1024
        %v1026 = vpop.f32.mrb[0].mxu0
        %1027 = vmatprep.mubr.bf16.mxu0 0
        %1028 = vmatmul.mubr.bf16.gmra.mrb[0].mxu0 %v853
        %v1029 = vpop.f32.mrb[0].mxu0
        %v1030 = vadd.f32 0.0, %v1029
        %v1031 = vpop.f32.mrb[0].mxu0
        %v1032 = vpop.f32.mrb[0].mxu0
        %v1033 = vadd.f32 0.0, %v1032
        %v1034 = vpop.f32.mrb[0].mxu0
        %1035 = vmatprep.mubr.bf16.mxu0 0
        %1036 = vmatmul.mubr.bf16.gmra.mrb[0].mxu0 %v856
        %v1037 = vpop.f32.mrb[0].mxu0
        %v1038 = vadd.f32 0.0, %v1037
        %v1039 = vpop.f32.mrb[0].mxu0
        %v1040 = vpop.f32.mrb[0].mxu0
        %v1041 = vadd.f32 0.0, %v1040
        %v1042 = vpop.f32.mrb[0].mxu0
        %1043 = vmatprep.mubr.bf16.mxu0 0
        %1044 = vmatmul.mubr.bf16.gmra.mrb[0].mxu0 %v859
        %v1045 = vpop.f32.mrb[0].mxu0
        %v1046 = vadd.f32 0.0, %v1045
        %v1047 = vpop.f32.mrb[0].mxu0
        %v1048 = vpop.f32.mrb[0].mxu0
        %v1049 = vadd.f32 0.0, %v1048
        %v1050 = vpop.f32.mrb[0].mxu0
        %1051 = vmatprep.mubr.bf16.mxu0 0
        %1052 = vmatmul.mubr.bf16.gmra.mrb[0].mxu0 %v862
        %v1053 = vpop.f32.mrb[0].mxu0
        %v1054 = vadd.f32 0.0, %v1053
        %v1055 = vpop.f32.mrb[0].mxu0
        %v1056 = vpop.f32.mrb[0].mxu0
        %v1057 = vadd.f32 0.0, %v1056
        %v1058 = vpop.f32.mrb[0].mxu0
        %1059 = vmatprep.mubr.bf16.mxu0 0
        %1060 = vmatmul.mubr.bf16.gmra.mrb[0].mxu0 %v865
        %v1061 = vpop.f32.mrb[0].mxu0
        %v1062 = vadd.f32 0.0, %v1061
        %v1063 = vpop.f32.mrb[0].mxu0
        %v1064 = vpop.f32.mrb[0].mxu0
        %v1065 = vadd.f32 0.0, %v1064
        %v1066 = vpop.f32.mrb[0].mxu0
        %1067 = vmatprep.mubr.bf16.mxu0 0
        %1068 = vmatmul.mubr.bf16.gmra.mrb[0].mxu0 %v868
        %v1069 = vpop.f32.mrb[0].mxu0
        %v1070 = vadd.f32 0.0, %v1069
        %v1071 = vpop.f32.mrb[0].mxu0
        %v1072 = vpop.f32.mrb[0].mxu0
        %v1073 = vadd.f32 0.0, %v1072
        %v1074 = vpop.f32.mrb[0].mxu0
        %1075 = vmatprep.mubr.bf16.mxu0 0
        %1076 = vmatmul.mubr.bf16.gmra.mrb[0].mxu0 %v871
        %v1077 = vpop.f32.mrb[0].mxu0
        %v1078 = vadd.f32 0.0, %v1077
        %v1079 = vpop.f32.mrb[0].mxu0
        %v1080 = vpop.f32.mrb[0].mxu0
        %v1081 = vadd.f32 0.0, %v1080
        %v1082 = vpop.f32.mrb[0].mxu0
        %1083 = vmatprep.mubr.bf16.mxu0 0
        %1084 = vmatmul.mubr.bf16.gmra.mrb[0].mxu0 %v874
        %v1085 = vpop.f32.mrb[0].mxu0
        %v1086 = vadd.f32 0.0, %v1085
        %v1087 = vpop.f32.mrb[0].mxu0
        %v1088 = vpop.f32.mrb[0].mxu0
        %v1089 = vadd.f32 0.0, %v1088
        %v1090 = vpop.f32.mrb[0].mxu0
        %1091 = vmatprep.mubr.bf16.mxu0 0
        %1092 = vmatmul.mubr.bf16.gmra.mrb[0].mxu0 %v877
        %v1093 = vpop.f32.mrb[0].mxu0
        %v1094 = vadd.f32 0.0, %v1093
        %v1095 = vpop.f32.mrb[0].mxu0
        %v1096 = vpop.f32.mrb[0].mxu0
        %v1097 = vadd.f32 0.0, %v1096
        %v1098 = vpop.f32.mrb[0].mxu0
        %1099 = vmatprep.mubr.bf16.mxu0 0
        %1100 = vmatmul.mubr.bf16.gmra.mrb[0].mxu0 %v880
        %v1101 = vpop.f32.mrb[0].mxu0
        %v1102 = vadd.f32 0.0, %v1101
        %v1103 = vpop.f32.mrb[0].mxu0
        %v1104 = vpop.f32.mrb[0].mxu0
        %v1105 = vadd.f32 0.0, %v1104
        %v1106 = vpop.f32.mrb[0].mxu0
        %1107 = vmatprep.mubr.bf16.mxu0 0
        %1108 = vmatmul.mubr.bf16.gmra.mrb[0].mxu0 %v883
        %v1109 = vpop.f32.mrb[0].mxu0
        %v1110 = vadd.f32 0.0, %v1109
        %v1111 = vpop.f32.mrb[0].mxu0
        %v1112 = vpop.f32.mrb[0].mxu0
        %v1113 = vadd.f32 0.0, %v1112
        %v1114 = vpop.f32.mrb[0].mxu0
        %1115 = vmatprep.mubr.bf16.mxu0 0
        %1116 = vmatmul.mubr.bf16.gmra.mrb[0].mxu0 %v886
        %v1117 = vpop.f32.mrb[0].mxu0
        %v1118 = vadd.f32 0.0, %v1117
        %v1119 = vpop.f32.mrb[0].mxu0
        %v1120 = vpop.f32.mrb[0].mxu0
        %v1121 = vadd.f32 0.0, %v1120
        %v1122 = vpop.f32.mrb[0].mxu0
        %1123 = vmatprep.mubr.bf16.mxu0 0
        %1124 = vmatmul.mubr.bf16.gmra.mrb[0].mxu0 %v889
        %v1125 = vpop.f32.mrb[0].mxu0
        %v1126 = vadd.f32 0.0, %v1125
        %v1127 = vpop.f32.mrb[0].mxu0
        %v1128 = vpop.f32.mrb[0].mxu0
        %v1129 = vadd.f32 0.0, %v1128
        %v1130 = vpop.f32.mrb[0].mxu0
        %1131 = vmatprep.mubr.bf16.mxu0 0
        %1132 = vmatmul.mubr.bf16.gmra.mrb[0].mxu0 %v892
        %v1133 = vpop.f32.mrb[0].mxu0
        %v1134 = vadd.f32 0.0, %v1133
        %v1135 = vpop.f32.mrb[0].mxu0
        %v1136 = vpop.f32.mrb[0].mxu0
        %v1137 = vadd.f32 0.0, %v1136
        %v1138 = vpop.f32.mrb[0].mxu0
        %1139 = vmatprep.mubr.bf16.mxu0 0
        %1140 = vmatmul.mubr.bf16.gmra.mrb[0].mxu0 %v895
        %v1141 = vpop.f32.mrb[0].mxu0
        %v1142 = vadd.f32 0.0, %v1141
        %v1143 = vpop.f32.mrb[0].mxu0
        %v1144 = vpop.f32.mrb[0].mxu0
        %v1145 = vadd.f32 0.0, %v1144
        %v1146 = vpop.f32.mrb[0].mxu0
        %1147 = vmatprep.mubr.bf16.mxu0 0
        %1148 = vmatmul.mubr.bf16.gmra.mrb[0].mxu0 %v898
        %v1149 = vpop.f32.mrb[0].mxu0
        %v1150 = vadd.f32 0.0, %v1149
        %v1151 = vpop.f32.mrb[0].mxu0
        %v1152 = vpop.f32.mrb[0].mxu0
        %v1153 = vadd.f32 0.0, %v1152
        %v1154 = vpop.f32.mrb[0].mxu0
        %1155 = vmatprep.mubr.bf16.mxu0 0
        %1156 = vmatmul.mubr.bf16.gmra.mrb[0].mxu0 %v901
        %v1157 = vpop.f32.mrb[0].mxu0
        %v1158 = vadd.f32 0.0, %v1157
        %v1159 = vpop.f32.mrb[0].mxu0
        %v1160 = vpop.f32.mrb[0].mxu0
        %v1161 = vadd.f32 0.0, %v1160
        %v1162 = vpop.f32.mrb[0].mxu0
        %1163 = vmatprep.mubr.bf16.mxu0 0
        %1164 = vmatmul.mubr.bf16.gmra.mrb[0].mxu0 %v904
        %v1165 = vpop.f32.mrb[0].mxu0
        %v1166 = vadd.f32 0.0, %v1165
        %v1167 = vpop.f32.mrb[0].mxu0
        %v1168 = vpop.f32.mrb[0].mxu0
        %v1169 = vadd.f32 0.0, %v1168
        %v1170 = vpop.f32.mrb[0].mxu0
        %1171 = vmatprep.mubr.bf16.mxu0 0
        %1172 = vmatmul.mubr.bf16.gmra.mrb[0].mxu0 %v907
        %v1173 = vpop.f32.mrb[0].mxu0
        %v1174 = vadd.f32 0.0, %v1173
        %v1175 = vpop.f32.mrb[0].mxu0
        %v1176 = vpop.f32.mrb[0].mxu0
        %v1177 = vadd.f32 0.0, %v1176
        %v1178 = vpop.f32.mrb[0].mxu0
        %1179 = vmatprep.mubr.bf16.mxu0 0
        %1180 = vmatmul.mubr.bf16.gmra.mrb[0].mxu0 %v910
        %v1181 = vpop.f32.mrb[0].mxu0
        %v1182 = vadd.f32 0.0, %v1181
        %v1183 = vpop.f32.mrb[0].mxu0
        %v1184 = vpop.f32.mrb[0].mxu0
        %v1185 = vadd.f32 0.0, %v1184
        %v1186 = vpop.f32.mrb[0].mxu0
        %1187 = vmatprep.mubr.bf16.mxu0 0
        %1188 = vmatmul.mubr.bf16.gmra.mrb[0].mxu0 %v913
        %v1189 = vpop.f32.mrb[0].mxu0
        %v1190 = vadd.f32 0.0, %v1189
        %v1191 = vpop.f32.mrb[0].mxu0
        %v1192 = vpop.f32.mrb[0].mxu0
        %v1193 = vadd.f32 0.0, %v1192
        %v1194 = vpop.f32.mrb[0].mxu0
        %1195 = vmatprep.mubr.bf16.mxu0 0
        %1196 = vmatmul.mubr.bf16.gmra.mrb[0].mxu0 %v916
        %v1197 = vpop.f32.mrb[0].mxu0
        %v1198 = vadd.f32 0.0, %v1197
        %v1199 = vpop.f32.mrb[0].mxu0
        %v1200 = vpop.f32.mrb[0].mxu0
        %v1201 = vadd.f32 0.0, %v1200
        %v1202 = vpop.f32.mrb[0].mxu0
        %1203 = vmatprep.mubr.bf16.mxu0 0
        %1204 = vmatmul.mubr.bf16.gmra.mrb[0].mxu0 %v919
        %v1205 = vpop.f32.mrb[0].mxu0
        %v1206 = vadd.f32 0.0, %v1205
        %v1207 = vpop.f32.mrb[0].mxu0
        %v1208 = vpop.f32.mrb[0].mxu0
        %v1209 = vadd.f32 0.0, %v1208
        %v1210 = vpop.f32.mrb[0].mxu0
        %1211 = vmatprep.mubr.bf16.mxu0 0
        %1212 = vmatmul.mubr.bf16.gmra.mrb[0].mxu0 %v922
        %v1213 = vpop.f32.mrb[0].mxu0
        %v1214 = vadd.f32 0.0, %v1213
        %v1215 = vpop.f32.mrb[0].mxu0
        %v1216 = vpop.f32.mrb[0].mxu0
        %v1217 = vadd.f32 0.0, %v1216
        %v1218 = vpop.f32.mrb[0].mxu0
        %1219 = vdwg.mxu0
        %s1220 = scalar_lea.vmem %s557, 256 [#allocation2]
        %v1221 = vld [vmem:[%s1220] sm:$0xf]
        %v1222 = vld [vmem:[%s1220 + $0x4] sm:$0xf]
        %v1223 = vld [vmem:[%s1220 + $0x8] sm:$0xf]
        %v1224 = vld [vmem:[%s1220 + $0xc] sm:$0xf]
        %v1225 = vld [vmem:[%s1220 + $0x10] sm:$0xf]
        %v1226 = vld [vmem:[%s1220 + $0x14] sm:$0xf]
        %v1227 = vld [vmem:[%s1220 + $0x18] sm:$0xf]
        %v1228 = vld [vmem:[%s1220 + $0x1c] sm:$0xf]
        %v1229 = vld [vmem:[%s1220 + $0x20] sm:$0xf]
        %v1230 = vld [vmem:[%s1220 + $0x24] sm:$0xf]
        %v1231 = vld [vmem:[%s1220 + $0x28] sm:$0xf]
        %v1232 = vld [vmem:[%s1220 + $0x2c] sm:$0xf]
        %v1233 = vld [vmem:[%s1220 + $0x30] sm:$0xf]
        %v1234 = vld [vmem:[%s1220 + $0x34] sm:$0xf]
        %v1235 = vld [vmem:[%s1220 + $0x38] sm:$0xf]
        %v1236 = vld [vmem:[%s1220 + $0x3c] sm:$0xf]
        %v1237 = vld [vmem:[%s1220 + $0x40] sm:$0xf]
        %v1238 = vld [vmem:[%s1220 + $0x44] sm:$0xf]
        %v1239 = vld [vmem:[%s1220 + $0x48] sm:$0xf]
        %v1240 = vld [vmem:[%s1220 + $0x4c] sm:$0xf]
        %v1241 = vld [vmem:[%s1220 + $0x50] sm:$0xf]
        %v1242 = vld [vmem:[%s1220 + $0x54] sm:$0xf]
        %v1243 = vld [vmem:[%s1220 + $0x58] sm:$0xf]
        %v1244 = vld [vmem:[%s1220 + $0x5c] sm:$0xf]
        %v1245 = vld [vmem:[%s1220 + $0x60] sm:$0xf]
        %v1246 = vld [vmem:[%s1220 + $0x64] sm:$0xf]
        %v1247 = vld [vmem:[%s1220 + $0x68] sm:$0xf]
        %v1248 = vld [vmem:[%s1220 + $0x6c] sm:$0xf]
        %v1249 = vld [vmem:[%s1220 + $0x70] sm:$0xf]
        %v1250 = vld [vmem:[%s1220 + $0x74] sm:$0xf]
        %v1251 = vld [vmem:[%s1220 + $0x78] sm:$0xf]
        %v1252 = vld [vmem:[%s1220 + $0x7c] sm:$0xf]
        %v1253 = vld [vmem:[%s1220 + $0x80] sm:$0xf]
        %v1254 = vld [vmem:[%s1220 + $0x84] sm:$0xf]
        %v1255 = vld [vmem:[%s1220 + $0x88] sm:$0xf]
        %v1256 = vld [vmem:[%s1220 + $0x8c] sm:$0xf]
        %v1257 = vld [vmem:[%s1220 + $0x90] sm:$0xf]
        %v1258 = vld [vmem:[%s1220 + $0x94] sm:$0xf]
        %v1259 = vld [vmem:[%s1220 + $0x98] sm:$0xf]
        %v1260 = vld [vmem:[%s1220 + $0x9c] sm:$0xf]
        %v1261 = vld [vmem:[%s1220 + $0xa0] sm:$0xf]
        %v1262 = vld [vmem:[%s1220 + $0xa4] sm:$0xf]
        %v1263 = vld [vmem:[%s1220 + $0xa8] sm:$0xf]
        %v1264 = vld [vmem:[%s1220 + $0xac] sm:$0xf]
        %v1265 = vld [vmem:[%s1220 + $0xb0] sm:$0xf]
        %v1266 = vld [vmem:[%s1220 + $0xb4] sm:$0xf]
        %v1267 = vld [vmem:[%s1220 + $0xb8] sm:$0xf]
        %v1268 = vld [vmem:[%s1220 + $0xbc] sm:$0xf]
        %v1269 = vld [vmem:[%s1220 + $0xc0] sm:$0xf]
        %v1270 = vld [vmem:[%s1220 + $0xc4] sm:$0xf]
        %v1271 = vld [vmem:[%s1220 + $0xc8] sm:$0xf]
        %v1272 = vld [vmem:[%s1220 + $0xcc] sm:$0xf]
        %v1273 = vld [vmem:[%s1220 + $0xd0] sm:$0xf]
        %v1274 = vld [vmem:[%s1220 + $0xd4] sm:$0xf]
        %v1275 = vld [vmem:[%s1220 + $0xd8] sm:$0xf]
        %v1276 = vld [vmem:[%s1220 + $0xdc] sm:$0xf]
        %v1277 = vld [vmem:[%s1220 + $0xe0] sm:$0xf]
        %v1278 = vld [vmem:[%s1220 + $0xe4] sm:$0xf]
        %v1279 = vld [vmem:[%s1220 + $0xe8] sm:$0xf]
        %v1280 = vld [vmem:[%s1220 + $0xec] sm:$0xf]
        %v1281 = vld [vmem:[%s1220 + $0xf0] sm:$0xf]
        %v1282 = vld [vmem:[%s1220 + $0xf4] sm:$0xf]
        %v1283 = vld [vmem:[%s1220 + $0xf8] sm:$0xf]
        %v1284 = vld [vmem:[%s1220 + $0xfc] sm:$0xf]
        %v1349 = vunpack.c.l.b16 %v1221
        %v1350 = vunpack.c.l.b16 %v1222
        %v1351 = vunpack.c.l.b16 %v1223
        %v1352 = vunpack.c.l.b16 %v1224
        %v1353 = vunpack.c.l.b16 %v1225
        %v1354 = vunpack.c.l.b16 %v1226
        %v1355 = vunpack.c.l.b16 %v1227
        %v1356 = vunpack.c.l.b16 %v1228
        %v1357 = vunpack.c.l.b16 %v1229
        %v1358 = vunpack.c.l.b16 %v1230
        %v1359 = vunpack.c.l.b16 %v1231
        %v1360 = vunpack.c.l.b16 %v1232
        %v1361 = vunpack.c.l.b16 %v1233
        %v1362 = vunpack.c.l.b16 %v1234
        %v1363 = vunpack.c.l.b16 %v1235
        %v1364 = vunpack.c.l.b16 %v1236
        %v1365 = vunpack.c.l.b16 %v1237
        %v1366 = vunpack.c.l.b16 %v1238
        %v1367 = vunpack.c.l.b16 %v1239
        %v1368 = vunpack.c.l.b16 %v1240
        %v1369 = vunpack.c.l.b16 %v1241
        %v1370 = vunpack.c.l.b16 %v1242
        %v1371 = vunpack.c.l.b16 %v1243
        %v1372 = vunpack.c.l.b16 %v1244
        %v1373 = vunpack.c.l.b16 %v1245
        %v1374 = vunpack.c.l.b16 %v1246
        %v1375 = vunpack.c.l.b16 %v1247
        %v1376 = vunpack.c.l.b16 %v1248
        %v1377 = vunpack.c.l.b16 %v1249
        %v1378 = vunpack.c.l.b16 %v1250
        %v1379 = vunpack.c.l.b16 %v1251
        %v1380 = vunpack.c.l.b16 %v1252
        %v1381 = vunpack.c.l.b16 %v1253
        %v1382 = vunpack.c.l.b16 %v1254
        %v1383 = vunpack.c.l.b16 %v1255
        %v1384 = vunpack.c.l.b16 %v1256
        %v1385 = vunpack.c.l.b16 %v1257
        %v1386 = vunpack.c.l.b16 %v1258
        %v1387 = vunpack.c.l.b16 %v1259
        %v1388 = vunpack.c.l.b16 %v1260
        %v1389 = vunpack.c.l.b16 %v1261
        %v1390 = vunpack.c.l.b16 %v1262
        %v1391 = vunpack.c.l.b16 %v1263
        %v1392 = vunpack.c.l.b16 %v1264
        %v1393 = vunpack.c.l.b16 %v1265
        %v1394 = vunpack.c.l.b16 %v1266
        %v1395 = vunpack.c.l.b16 %v1267
        %v1396 = vunpack.c.l.b16 %v1268
        %v1397 = vunpack.c.l.b16 %v1269
        %v1398 = vunpack.c.l.b16 %v1270
        %v1399 = vunpack.c.l.b16 %v1271
        %v1400 = vunpack.c.l.b16 %v1272
        %v1401 = vunpack.c.l.b16 %v1273
        %v1402 = vunpack.c.l.b16 %v1274
        %v1403 = vunpack.c.l.b16 %v1275
        %v1404 = vunpack.c.l.b16 %v1276
        %v1405 = vunpack.c.l.b16 %v1277
        %v1406 = vunpack.c.l.b16 %v1278
        %v1407 = vunpack.c.l.b16 %v1279
        %v1408 = vunpack.c.l.b16 %v1280
        %v1409 = vunpack.c.l.b16 %v1281
        %v1410 = vunpack.c.l.b16 %v1282
        %v1411 = vunpack.c.l.b16 %v1283
        %v1412 = vunpack.c.l.b16 %v1284
        %v1413 = vpack.c.b16 %v1350, %v1349
        %v1414 = vpack.c.b16 %v1352, %v1351
        %v1415 = vpack.c.b16 %v1354, %v1353
        %v1416 = vpack.c.b16 %v1356, %v1355
        %v1417 = vpack.c.b16 %v1358, %v1357
        %v1418 = vpack.c.b16 %v1360, %v1359
        %v1419 = vpack.c.b16 %v1362, %v1361
        %v1420 = vpack.c.b16 %v1364, %v1363
        %v1421 = vpack.c.b16 %v1366, %v1365
        %v1422 = vpack.c.b16 %v1368, %v1367
        %v1423 = vpack.c.b16 %v1370, %v1369
        %v1424 = vpack.c.b16 %v1372, %v1371
        %v1425 = vpack.c.b16 %v1374, %v1373
        %v1426 = vpack.c.b16 %v1376, %v1375
        %v1427 = vpack.c.b16 %v1378, %v1377
        %v1428 = vpack.c.b16 %v1380, %v1379
        %v1429 = vpack.c.b16 %v1382, %v1381
        %v1430 = vpack.c.b16 %v1384, %v1383
        %v1431 = vpack.c.b16 %v1386, %v1385
        %v1432 = vpack.c.b16 %v1388, %v1387
        %v1433 = vpack.c.b16 %v1390, %v1389
        %v1434 = vpack.c.b16 %v1392, %v1391
        %v1435 = vpack.c.b16 %v1394, %v1393
        %v1436 = vpack.c.b16 %v1396, %v1395
        %v1437 = vpack.c.b16 %v1398, %v1397
        %v1438 = vpack.c.b16 %v1400, %v1399
        %v1439 = vpack.c.b16 %v1402, %v1401
        %v1440 = vpack.c.b16 %v1404, %v1403
        %v1441 = vpack.c.b16 %v1406, %v1405
        %v1442 = vpack.c.b16 %v1408, %v1407
        %v1443 = vpack.c.b16 %v1410, %v1409
        %v1444 = vpack.c.b16 %v1412, %v1411
        %v1446 = vsel %vm827, %v1413, 0
        %v1449 = vsel %vm827, %v1414, 0
        %v1452 = vsel %vm827, %v1415, 0
        %v1455 = vsel %vm827, %v1416, 0
        %v1458 = vsel %vm827, %v1417, 0
        %v1461 = vsel %vm827, %v1418, 0
        %v1464 = vsel %vm827, %v1419, 0
        %v1467 = vsel %vm827, %v1420, 0
        %v1470 = vsel %vm827, %v1421, 0
        %v1473 = vsel %vm827, %v1422, 0
        %v1476 = vsel %vm827, %v1423, 0
        %v1479 = vsel %vm827, %v1424, 0
        %v1482 = vsel %vm827, %v1425, 0
        %v1485 = vsel %vm827, %v1426, 0
        %v1488 = vsel %vm827, %v1427, 0
        %v1491 = vsel %vm827, %v1428, 0
        %v1494 = vsel %vm827, %v1429, 0
        %v1497 = vsel %vm827, %v1430, 0
        %v1500 = vsel %vm827, %v1431, 0
        %v1503 = vsel %vm827, %v1432, 0
        %v1506 = vsel %vm827, %v1433, 0
        %v1509 = vsel %vm827, %v1434, 0
        %v1512 = vsel %vm827, %v1435, 0
        %v1515 = vsel %vm827, %v1436, 0
        %v1518 = vsel %vm827, %v1437, 0
        %v1521 = vsel %vm827, %v1438, 0
        %v1524 = vsel %vm827, %v1439, 0
        %v1527 = vsel %vm827, %v1440, 0
        %v1530 = vsel %vm827, %v1441, 0
        %v1533 = vsel %vm827, %v1442, 0
        %v1536 = vsel %vm827, %v1443, 0
        %v1539 = vsel %vm827, %v1444, 0
        %1541 = vmatprep.subr.bf16.mxu0 0
        %1542 = vmatpush1.bf16.msra.mxu0 %v824
        %1543 = vmatprep.subr.bf16.mxu0 0
        %1544 = vmatpush1.bf16.msra.mxu0 %v929
        %1545 = vmatprep.subr.bf16.mxu0 0
        %1546 = vmatpush1.bf16.msra.mxu0 0
        %1547 = vmatprep.subr.bf16.mxu0 0
        %1548 = vmatpush1.bf16.msra.mxu0 0
        %1549 = vmatprep.subr.bf16.mxu0 0
        %1550 = vmatpush1.bf16.msra.mxu0 0
        %1551 = vmatprep.subr.bf16.mxu0 0
        %1552 = vmatpush1.bf16.msra.mxu0 0
        %1553 = vmatprep.subr.bf16.mxu0 0
        %1554 = vmatpush1.bf16.msra.mxu0 0
        %1555 = vmatprep.subr.bf16.mxu0 0
        %1556 = vmatpush1.bf16.msra.mxu0 0
        %1557 = vmatprep.subr.bf16.mxu0 0
        %1558 = vmatpush1.bf16.msra.mxu0 0
        %1559 = vmatprep.subr.bf16.mxu0 0
        %1560 = vmatpush1.bf16.msra.mxu0 0
        %1561 = vmatprep.subr.bf16.mxu0 0
        %1562 = vmatpush1.bf16.msra.mxu0 0
        %1563 = vmatprep.subr.bf16.mxu0 0
        %1564 = vmatpush1.bf16.msra.mxu0 0
        %1565 = vmatprep.subr.bf16.mxu0 0
        %1566 = vmatpush1.bf16.msra.mxu0 0
        %1567 = vmatprep.subr.bf16.mxu0 0
        %1568 = vmatpush1.bf16.msra.mxu0 0
        %1569 = vmatprep.subr.bf16.mxu0 0
        %1570 = vmatpush1.bf16.msra.mxu0 0
        %1571 = vmatprep.subr.bf16.mxu0 0
        %1572 = vmatpush1.bf16.msra.mxu0 0
        %1573 = vmatprep.mubr.bf16.mxu0 0
        %1574 = vmatmul.mubr.bf16.gmra.mrb[0].mxu0 %v1446
        %v1575 = vpop.f32.mrb[0].mxu0
        %v1576 = vadd.f32 0.0, %v1575
        %v1577 = vpop.f32.mrb[0].mxu0
        %v1578 = vpop.f32.mrb[0].mxu0
        %v1579 = vadd.f32 0.0, %v1578
        %v1580 = vpop.f32.mrb[0].mxu0
        %1581 = vmatprep.mubr.bf16.mxu0 0
        %1582 = vmatmul.mubr.bf16.gmra.mrb[0].mxu0 %v1449
        %v1583 = vpop.f32.mrb[0].mxu0
        %v1584 = vadd.f32 0.0, %v1583
        %v1585 = vpop.f32.mrb[0].mxu0
        %v1586 = vpop.f32.mrb[0].mxu0
        %v1587 = vadd.f32 0.0, %v1586
        %v1588 = vpop.f32.mrb[0].mxu0
        %1589 = vmatprep.mubr.bf16.mxu0 0
        %1590 = vmatmul.mubr.bf16.gmra.mrb[0].mxu0 %v1452
        %v1591 = vpop.f32.mrb[0].mxu0
        %v1592 = vadd.f32 0.0, %v1591
        %v1593 = vpop.f32.mrb[0].mxu0
        %v1594 = vpop.f32.mrb[0].mxu0
        %v1595 = vadd.f32 0.0, %v1594
        %v1596 = vpop.f32.mrb[0].mxu0
        %1597 = vmatprep.mubr.bf16.mxu0 0
        %1598 = vmatmul.mubr.bf16.gmra.mrb[0].mxu0 %v1455
        %v1599 = vpop.f32.mrb[0].mxu0
        %v1600 = vadd.f32 0.0, %v1599
        %v1601 = vpop.f32.mrb[0].mxu0
        %v1602 = vpop.f32.mrb[0].mxu0
        %v1603 = vadd.f32 0.0, %v1602
        %v1604 = vpop.f32.mrb[0].mxu0
        %1605 = vmatprep.mubr.bf16.mxu0 0
        %1606 = vmatmul.mubr.bf16.gmra.mrb[0].mxu0 %v1458
        %v1607 = vpop.f32.mrb[0].mxu0
        %v1608 = vadd.f32 0.0, %v1607
        %v1609 = vpop.f32.mrb[0].mxu0
        %v1610 = vpop.f32.mrb[0].mxu0
        %v1611 = vadd.f32 0.0, %v1610
        %v1612 = vpop.f32.mrb[0].mxu0
        %1613 = vmatprep.mubr.bf16.mxu0 0
        %1614 = vmatmul.mubr.bf16.gmra.mrb[0].mxu0 %v1461
        %v1615 = vpop.f32.mrb[0].mxu0
        %v1616 = vadd.f32 0.0, %v1615
        %v1617 = vpop.f32.mrb[0].mxu0
        %v1618 = vpop.f32.mrb[0].mxu0
        %v1619 = vadd.f32 0.0, %v1618
        %v1620 = vpop.f32.mrb[0].mxu0
        %1621 = vmatprep.mubr.bf16.mxu0 0
        %1622 = vmatmul.mubr.bf16.gmra.mrb[0].mxu0 %v1464
        %v1623 = vpop.f32.mrb[0].mxu0
        %v1624 = vadd.f32 0.0, %v1623
        %v1625 = vpop.f32.mrb[0].mxu0
        %v1626 = vpop.f32.mrb[0].mxu0
        %v1627 = vadd.f32 0.0, %v1626
        %v1628 = vpop.f32.mrb[0].mxu0
        %1629 = vmatprep.mubr.bf16.mxu0 0
        %1630 = vmatmul.mubr.bf16.gmra.mrb[0].mxu0 %v1467
        %v1631 = vpop.f32.mrb[0].mxu0
        %v1632 = vadd.f32 0.0, %v1631
        %v1633 = vpop.f32.mrb[0].mxu0
        %v1634 = vpop.f32.mrb[0].mxu0
        %v1635 = vadd.f32 0.0, %v1634
        %v1636 = vpop.f32.mrb[0].mxu0
        %1637 = vmatprep.mubr.bf16.mxu0 0
        %1638 = vmatmul.mubr.bf16.gmra.mrb[0].mxu0 %v1470
        %v1639 = vpop.f32.mrb[0].mxu0
        %v1640 = vadd.f32 0.0, %v1639
        %v1641 = vpop.f32.mrb[0].mxu0
        %v1642 = vpop.f32.mrb[0].mxu0
        %v1643 = vadd.f32 0.0, %v1642
        %v1644 = vpop.f32.mrb[0].mxu0
        %1645 = vmatprep.mubr.bf16.mxu0 0
        %1646 = vmatmul.mubr.bf16.gmra.mrb[0].mxu0 %v1473
        %v1647 = vpop.f32.mrb[0].mxu0
        %v1648 = vadd.f32 0.0, %v1647
        %v1649 = vpop.f32.mrb[0].mxu0
        %v1650 = vpop.f32.mrb[0].mxu0
        %v1651 = vadd.f32 0.0, %v1650
        %v1652 = vpop.f32.mrb[0].mxu0
        %1653 = vmatprep.mubr.bf16.mxu0 0
        %1654 = vmatmul.mubr.bf16.gmra.mrb[0].mxu0 %v1476
        %v1655 = vpop.f32.mrb[0].mxu0
        %v1656 = vadd.f32 0.0, %v1655
        %v1657 = vpop.f32.mrb[0].mxu0
        %v1658 = vpop.f32.mrb[0].mxu0
        %v1659 = vadd.f32 0.0, %v1658
        %v1660 = vpop.f32.mrb[0].mxu0
        %1661 = vmatprep.mubr.bf16.mxu0 0
        %1662 = vmatmul.mubr.bf16.gmra.mrb[0].mxu0 %v1479
        %v1663 = vpop.f32.mrb[0].mxu0
        %v1664 = vadd.f32 0.0, %v1663
        %v1665 = vpop.f32.mrb[0].mxu0
        %v1666 = vpop.f32.mrb[0].mxu0
        %v1667 = vadd.f32 0.0, %v1666
        %v1668 = vpop.f32.mrb[0].mxu0
        %1669 = vmatprep.mubr.bf16.mxu0 0
        %1670 = vmatmul.mubr.bf16.gmra.mrb[0].mxu0 %v1482
        %v1671 = vpop.f32.mrb[0].mxu0
        %v1672 = vadd.f32 0.0, %v1671
        %v1673 = vpop.f32.mrb[0].mxu0
        %v1674 = vpop.f32.mrb[0].mxu0
        %v1675 = vadd.f32 0.0, %v1674
        %v1676 = vpop.f32.mrb[0].mxu0
        %1677 = vmatprep.mubr.bf16.mxu0 0
        %1678 = vmatmul.mubr.bf16.gmra.mrb[0].mxu0 %v1485
        %v1679 = vpop.f32.mrb[0].mxu0
        %v1680 = vadd.f32 0.0, %v1679
        %v1681 = vpop.f32.mrb[0].mxu0
        %v1682 = vpop.f32.mrb[0].mxu0
        %v1683 = vadd.f32 0.0, %v1682
        %v1684 = vpop.f32.mrb[0].mxu0
        %1685 = vmatprep.mubr.bf16.mxu0 0
        %1686 = vmatmul.mubr.bf16.gmra.mrb[0].mxu0 %v1488
        %v1687 = vpop.f32.mrb[0].mxu0
        %v1688 = vadd.f32 0.0, %v1687
        %v1689 = vpop.f32.mrb[0].mxu0
        %v1690 = vpop.f32.mrb[0].mxu0
        %v1691 = vadd.f32 0.0, %v1690
        %v1692 = vpop.f32.mrb[0].mxu0
        %1693 = vmatprep.mubr.bf16.mxu0 0
        %1694 = vmatmul.mubr.bf16.gmra.mrb[0].mxu0 %v1491
        %v1695 = vpop.f32.mrb[0].mxu0
        %v1696 = vadd.f32 0.0, %v1695
        %v1697 = vpop.f32.mrb[0].mxu0
        %v1698 = vpop.f32.mrb[0].mxu0
        %v1699 = vadd.f32 0.0, %v1698
        %v1700 = vpop.f32.mrb[0].mxu0
        %1701 = vmatprep.mubr.bf16.mxu0 0
        %1702 = vmatmul.mubr.bf16.gmra.mrb[0].mxu0 %v1494
        %v1703 = vpop.f32.mrb[0].mxu0
        %v1704 = vadd.f32 0.0, %v1703
        %v1705 = vpop.f32.mrb[0].mxu0
        %v1706 = vpop.f32.mrb[0].mxu0
        %v1707 = vadd.f32 0.0, %v1706
        %v1708 = vpop.f32.mrb[0].mxu0
        %1709 = vmatprep.mubr.bf16.mxu0 0
        %1710 = vmatmul.mubr.bf16.gmra.mrb[0].mxu0 %v1497
        %v1711 = vpop.f32.mrb[0].mxu0
        %v1712 = vadd.f32 0.0, %v1711
        %v1713 = vpop.f32.mrb[0].mxu0
        %v1714 = vpop.f32.mrb[0].mxu0
        %v1715 = vadd.f32 0.0, %v1714
        %v1716 = vpop.f32.mrb[0].mxu0
        %1717 = vmatprep.mubr.bf16.mxu0 0
        %1718 = vmatmul.mubr.bf16.gmra.mrb[0].mxu0 %v1500
        %v1719 = vpop.f32.mrb[0].mxu0
        %v1720 = vadd.f32 0.0, %v1719
        %v1721 = vpop.f32.mrb[0].mxu0
        %v1722 = vpop.f32.mrb[0].mxu0
        %v1723 = vadd.f32 0.0, %v1722
        %v1724 = vpop.f32.mrb[0].mxu0
        %1725 = vmatprep.mubr.bf16.mxu0 0
        %1726 = vmatmul.mubr.bf16.gmra.mrb[0].mxu0 %v1503
        %v1727 = vpop.f32.mrb[0].mxu0
        %v1728 = vadd.f32 0.0, %v1727
        %v1729 = vpop.f32.mrb[0].mxu0
        %v1730 = vpop.f32.mrb[0].mxu0
        %v1731 = vadd.f32 0.0, %v1730
        %v1732 = vpop.f32.mrb[0].mxu0
        %1733 = vmatprep.mubr.bf16.mxu0 0
        %1734 = vmatmul.mubr.bf16.gmra.mrb[0].mxu0 %v1506
        %v1735 = vpop.f32.mrb[0].mxu0
        %v1736 = vadd.f32 0.0, %v1735
        %v1737 = vpop.f32.mrb[0].mxu0
        %v1738 = vpop.f32.mrb[0].mxu0
        %v1739 = vadd.f32 0.0, %v1738
        %v1740 = vpop.f32.mrb[0].mxu0
        %1741 = vmatprep.mubr.bf16.mxu0 0
        %1742 = vmatmul.mubr.bf16.gmra.mrb[0].mxu0 %v1509
        %v1743 = vpop.f32.mrb[0].mxu0
        %v1744 = vadd.f32 0.0, %v1743
        %v1745 = vpop.f32.mrb[0].mxu0
        %v1746 = vpop.f32.mrb[0].mxu0
        %v1747 = vadd.f32 0.0, %v1746
        %v1748 = vpop.f32.mrb[0].mxu0
        %1749 = vmatprep.mubr.bf16.mxu0 0
        %1750 = vmatmul.mubr.bf16.gmra.mrb[0].mxu0 %v1512
        %v1751 = vpop.f32.mrb[0].mxu0
        %v1752 = vadd.f32 0.0, %v1751
        %v1753 = vpop.f32.mrb[0].mxu0
        %v1754 = vpop.f32.mrb[0].mxu0
        %v1755 = vadd.f32 0.0, %v1754
        %v1756 = vpop.f32.mrb[0].mxu0
        %1757 = vmatprep.mubr.bf16.mxu0 0
        %1758 = vmatmul.mubr.bf16.gmra.mrb[0].mxu0 %v1515
        %v1759 = vpop.f32.mrb[0].mxu0
        %v1760 = vadd.f32 0.0, %v1759
        %v1761 = vpop.f32.mrb[0].mxu0
        %v1762 = vpop.f32.mrb[0].mxu0
        %v1763 = vadd.f32 0.0, %v1762
        %v1764 = vpop.f32.mrb[0].mxu0
        %1765 = vmatprep.mubr.bf16.mxu0 0
        %1766 = vmatmul.mubr.bf16.gmra.mrb[0].mxu0 %v1518
        %v1767 = vpop.f32.mrb[0].mxu0
        %v1768 = vadd.f32 0.0, %v1767
        %v1769 = vpop.f32.mrb[0].mxu0
        %v1770 = vpop.f32.mrb[0].mxu0
        %v1771 = vadd.f32 0.0, %v1770
        %v1772 = vpop.f32.mrb[0].mxu0
        %1773 = vmatprep.mubr.bf16.mxu0 0
        %1774 = vmatmul.mubr.bf16.gmra.mrb[0].mxu0 %v1521
        %v1775 = vpop.f32.mrb[0].mxu0
        %v1776 = vadd.f32 0.0, %v1775
        %v1777 = vpop.f32.mrb[0].mxu0
        %v1778 = vpop.f32.mrb[0].mxu0
        %v1779 = vadd.f32 0.0, %v1778
        %v1780 = vpop.f32.mrb[0].mxu0
        %1781 = vmatprep.mubr.bf16.mxu0 0
        %1782 = vmatmul.mubr.bf16.gmra.mrb[0].mxu0 %v1524
        %v1783 = vpop.f32.mrb[0].mxu0
        %v1784 = vadd.f32 0.0, %v1783
        %v1785 = vpop.f32.mrb[0].mxu0
        %v1786 = vpop.f32.mrb[0].mxu0
        %v1787 = vadd.f32 0.0, %v1786
        %v1788 = vpop.f32.mrb[0].mxu0
        %1789 = vmatprep.mubr.bf16.mxu0 0
        %1790 = vmatmul.mubr.bf16.gmra.mrb[0].mxu0 %v1527
        %v1791 = vpop.f32.mrb[0].mxu0
        %v1792 = vadd.f32 0.0, %v1791
        %v1793 = vpop.f32.mrb[0].mxu0
        %v1794 = vpop.f32.mrb[0].mxu0
        %v1795 = vadd.f32 0.0, %v1794
        %v1796 = vpop.f32.mrb[0].mxu0
        %1797 = vmatprep.mubr.bf16.mxu0 0
        %1798 = vmatmul.mubr.bf16.gmra.mrb[0].mxu0 %v1530
        %v1799 = vpop.f32.mrb[0].mxu0
        %v1800 = vadd.f32 0.0, %v1799
        %v1801 = vpop.f32.mrb[0].mxu0
        %v1802 = vpop.f32.mrb[0].mxu0
        %v1803 = vadd.f32 0.0, %v1802
        %v1804 = vpop.f32.mrb[0].mxu0
        %1805 = vmatprep.mubr.bf16.mxu0 0
        %1806 = vmatmul.mubr.bf16.gmra.mrb[0].mxu0 %v1533
        %v1807 = vpop.f32.mrb[0].mxu0
        %v1808 = vadd.f32 0.0, %v1807
        %v1809 = vpop.f32.mrb[0].mxu0
        %v1810 = vpop.f32.mrb[0].mxu0
        %v1811 = vadd.f32 0.0, %v1810
        %v1812 = vpop.f32.mrb[0].mxu0
        %1813 = vmatprep.mubr.bf16.mxu0 0
        %1814 = vmatmul.mubr.bf16.gmra.mrb[0].mxu0 %v1536
        %v1815 = vpop.f32.mrb[0].mxu0
        %v1816 = vadd.f32 0.0, %v1815
        %v1817 = vpop.f32.mrb[0].mxu0
        %v1818 = vpop.f32.mrb[0].mxu0
        %v1819 = vadd.f32 0.0, %v1818
        %v1820 = vpop.f32.mrb[0].mxu0
        %1821 = vmatprep.mubr.bf16.mxu0 0
        %1822 = vmatmul.mubr.bf16.gmra.mrb[0].mxu0 %v1539
        %v1823 = vpop.f32.mrb[0].mxu0
        %v1824 = vadd.f32 0.0, %v1823
        %v1825 = vpop.f32.mrb[0].mxu0
        %v1826 = vpop.f32.mrb[0].mxu0
        %v1827 = vadd.f32 0.0, %v1826
        %v1828 = vpop.f32.mrb[0].mxu0
        %1829 = vdwg.mxu0
        %v1830 = vmax.f32 %v966, %v1576
        %v1831 = vmax.f32 %v969, %v1579
        %v1832 = vmax.f32 %v974, %v1584
        %v1833 = vmax.f32 %v977, %v1587
        %v1834 = vmax.f32 %v982, %v1592
        %v1835 = vmax.f32 %v985, %v1595
        %v1836 = vmax.f32 %v990, %v1600
        %v1837 = vmax.f32 %v993, %v1603
        %v1838 = vmax.f32 %v998, %v1608
        %v1839 = vmax.f32 %v1001, %v1611
        %v1840 = vmax.f32 %v1006, %v1616
        %v1841 = vmax.f32 %v1009, %v1619
        %v1842 = vmax.f32 %v1014, %v1624
        %v1843 = vmax.f32 %v1017, %v1627
        %v1844 = vmax.f32 %v1022, %v1632
        %v1845 = vmax.f32 %v1025, %v1635
        %v1846 = vmax.f32 %v1030, %v1640
        %v1847 = vmax.f32 %v1033, %v1643
        %v1848 = vmax.f32 %v1038, %v1648
        %v1849 = vmax.f32 %v1041, %v1651
        %v1850 = vmax.f32 %v1046, %v1656
        %v1851 = vmax.f32 %v1049, %v1659
        %v1852 = vmax.f32 %v1054, %v1664
        %v1853 = vmax.f32 %v1057, %v1667
        %v1854 = vmax.f32 %v1062, %v1672
        %v1855 = vmax.f32 %v1065, %v1675
        %v1856 = vmax.f32 %v1070, %v1680
        %v1857 = vmax.f32 %v1073, %v1683
        %v1858 = vmax.f32 %v1078, %v1688
        %v1859 = vmax.f32 %v1081, %v1691
        %v1860 = vmax.f32 %v1086, %v1696
        %v1861 = vmax.f32 %v1089, %v1699
        %v1862 = vmax.f32 %v1094, %v1704
        %v1863 = vmax.f32 %v1097, %v1707
        %v1864 = vmax.f32 %v1102, %v1712
        %v1865 = vmax.f32 %v1105, %v1715
        %v1866 = vmax.f32 %v1110, %v1720
        %v1867 = vmax.f32 %v1113, %v1723
        %v1868 = vmax.f32 %v1118, %v1728
        %v1869 = vmax.f32 %v1121, %v1731
        %v1870 = vmax.f32 %v1126, %v1736
        %v1871 = vmax.f32 %v1129, %v1739
        %v1872 = vmax.f32 %v1134, %v1744
        %v1873 = vmax.f32 %v1137, %v1747
        %v1874 = vmax.f32 %v1142, %v1752
        %v1875 = vmax.f32 %v1145, %v1755
        %v1876 = vmax.f32 %v1150, %v1760
        %v1877 = vmax.f32 %v1153, %v1763
        %v1878 = vmax.f32 %v1158, %v1768
        %v1879 = vmax.f32 %v1161, %v1771
        %v1880 = vmax.f32 %v1166, %v1776
        %v1881 = vmax.f32 %v1169, %v1779
        %v1882 = vmax.f32 %v1174, %v1784
        %v1883 = vmax.f32 %v1177, %v1787
        %v1884 = vmax.f32 %v1182, %v1792
        %v1885 = vmax.f32 %v1185, %v1795
        %v1886 = vmax.f32 %v1190, %v1800
        %v1887 = vmax.f32 %v1193, %v1803
        %v1888 = vmax.f32 %v1198, %v1808
        %v1889 = vmax.f32 %v1201, %v1811
        %v1890 = vmax.f32 %v1206, %v1816
        %v1891 = vmax.f32 %v1209, %v1819
        %v1892 = vmax.f32 %v1214, %v1824
        %v1893 = vmax.f32 %v1217, %v1827
        %s1894 = scalar_lea.vmem %s557, 512 [#allocation2]
        %v1895 = vld [vmem:[%s1894] sm:$0xf]
        %v1896 = vld [vmem:[%s1894 + $0x4] sm:$0xf]
        %v1897 = vld [vmem:[%s1894 + $0x8] sm:$0xf]
        %v1898 = vld [vmem:[%s1894 + $0xc] sm:$0xf]
        %v1899 = vld [vmem:[%s1894 + $0x10] sm:$0xf]
        %v1900 = vld [vmem:[%s1894 + $0x14] sm:$0xf]
        %v1901 = vld [vmem:[%s1894 + $0x18] sm:$0xf]
        %v1902 = vld [vmem:[%s1894 + $0x1c] sm:$0xf]
        %v1903 = vld [vmem:[%s1894 + $0x20] sm:$0xf]
        %v1904 = vld [vmem:[%s1894 + $0x24] sm:$0xf]
        %v1905 = vld [vmem:[%s1894 + $0x28] sm:$0xf]
        %v1906 = vld [vmem:[%s1894 + $0x2c] sm:$0xf]
        %v1907 = vld [vmem:[%s1894 + $0x30] sm:$0xf]
        %v1908 = vld [vmem:[%s1894 + $0x34] sm:$0xf]
        %v1909 = vld [vmem:[%s1894 + $0x38] sm:$0xf]
        %v1910 = vld [vmem:[%s1894 + $0x3c] sm:$0xf]
        %v1911 = vld [vmem:[%s1894 + $0x40] sm:$0xf]
        %v1912 = vld [vmem:[%s1894 + $0x44] sm:$0xf]
        %v1913 = vld [vmem:[%s1894 + $0x48] sm:$0xf]
        %v1914 = vld [vmem:[%s1894 + $0x4c] sm:$0xf]
        %v1915 = vld [vmem:[%s1894 + $0x50] sm:$0xf]
        %v1916 = vld [vmem:[%s1894 + $0x54] sm:$0xf]
        %v1917 = vld [vmem:[%s1894 + $0x58] sm:$0xf]
        %v1918 = vld [vmem:[%s1894 + $0x5c] sm:$0xf]
        %v1919 = vld [vmem:[%s1894 + $0x60] sm:$0xf]
        %v1920 = vld [vmem:[%s1894 + $0x64] sm:$0xf]
        %v1921 = vld [vmem:[%s1894 + $0x68] sm:$0xf]
        %v1922 = vld [vmem:[%s1894 + $0x6c] sm:$0xf]
        %v1923 = vld [vmem:[%s1894 + $0x70] sm:$0xf]
        %v1924 = vld [vmem:[%s1894 + $0x74] sm:$0xf]
        %v1925 = vld [vmem:[%s1894 + $0x78] sm:$0xf]
        %v1926 = vld [vmem:[%s1894 + $0x7c] sm:$0xf]
        %v1927 = vld [vmem:[%s1894 + $0x80] sm:$0xf]
        %v1928 = vld [vmem:[%s1894 + $0x84] sm:$0xf]
        %v1929 = vld [vmem:[%s1894 + $0x88] sm:$0xf]
        %v1930 = vld [vmem:[%s1894 + $0x8c] sm:$0xf]
        %v1931 = vld [vmem:[%s1894 + $0x90] sm:$0xf]
        %v1932 = vld [vmem:[%s1894 + $0x94] sm:$0xf]
        %v1933 = vld [vmem:[%s1894 + $0x98] sm:$0xf]
        %v1934 = vld [vmem:[%s1894 + $0x9c] sm:$0xf]
        %v1935 = vld [vmem:[%s1894 + $0xa0] sm:$0xf]
        %v1936 = vld [vmem:[%s1894 + $0xa4] sm:$0xf]
        %v1937 = vld [vmem:[%s1894 + $0xa8] sm:$0xf]
        %v1938 = vld [vmem:[%s1894 + $0xac] sm:$0xf]
        %v1939 = vld [vmem:[%s1894 + $0xb0] sm:$0xf]
        %v1940 = vld [vmem:[%s1894 + $0xb4] sm:$0xf]
        %v1941 = vld [vmem:[%s1894 + $0xb8] sm:$0xf]
        %v1942 = vld [vmem:[%s1894 + $0xbc] sm:$0xf]
        %v1943 = vld [vmem:[%s1894 + $0xc0] sm:$0xf]
        %v1944 = vld [vmem:[%s1894 + $0xc4] sm:$0xf]
        %v1945 = vld [vmem:[%s1894 + $0xc8] sm:$0xf]
        %v1946 = vld [vmem:[%s1894 + $0xcc] sm:$0xf]
        %v1947 = vld [vmem:[%s1894 + $0xd0] sm:$0xf]
        %v1948 = vld [vmem:[%s1894 + $0xd4] sm:$0xf]
        %v1949 = vld [vmem:[%s1894 + $0xd8] sm:$0xf]
        %v1950 = vld [vmem:[%s1894 + $0xdc] sm:$0xf]
        %v1951 = vld [vmem:[%s1894 + $0xe0] sm:$0xf]
        %v1952 = vld [vmem:[%s1894 + $0xe4] sm:$0xf]
        %v1953 = vld [vmem:[%s1894 + $0xe8] sm:$0xf]
        %v1954 = vld [vmem:[%s1894 + $0xec] sm:$0xf]
        %v1955 = vld [vmem:[%s1894 + $0xf0] sm:$0xf]
        %v1956 = vld [vmem:[%s1894 + $0xf4] sm:$0xf]
        %v1957 = vld [vmem:[%s1894 + $0xf8] sm:$0xf]
        %v1958 = vld [vmem:[%s1894 + $0xfc] sm:$0xf]
        %v2023 = vunpack.c.l.b16 %v1895
        %v2024 = vunpack.c.l.b16 %v1896
        %v2025 = vunpack.c.l.b16 %v1897
        %v2026 = vunpack.c.l.b16 %v1898
        %v2027 = vunpack.c.l.b16 %v1899
        %v2028 = vunpack.c.l.b16 %v1900
        %v2029 = vunpack.c.l.b16 %v1901
        %v2030 = vunpack.c.l.b16 %v1902
        %v2031 = vunpack.c.l.b16 %v1903
        %v2032 = vunpack.c.l.b16 %v1904
        %v2033 = vunpack.c.l.b16 %v1905
        %v2034 = vunpack.c.l.b16 %v1906
        %v2035 = vunpack.c.l.b16 %v1907
        %v2036 = vunpack.c.l.b16 %v1908
        %v2037 = vunpack.c.l.b16 %v1909
        %v2038 = vunpack.c.l.b16 %v1910
        %v2039 = vunpack.c.l.b16 %v1911
        %v2040 = vunpack.c.l.b16 %v1912
        %v2041 = vunpack.c.l.b16 %v1913
        %v2042 = vunpack.c.l.b16 %v1914
        %v2043 = vunpack.c.l.b16 %v1915
        %v2044 = vunpack.c.l.b16 %v1916
        %v2045 = vunpack.c.l.b16 %v1917
        %v2046 = vunpack.c.l.b16 %v1918
        %v2047 = vunpack.c.l.b16 %v1919
        %v2048 = vunpack.c.l.b16 %v1920
        %v2049 = vunpack.c.l.b16 %v1921
        %v2050 = vunpack.c.l.b16 %v1922
        %v2051 = vunpack.c.l.b16 %v1923
        %v2052 = vunpack.c.l.b16 %v1924
        %v2053 = vunpack.c.l.b16 %v1925
        %v2054 = vunpack.c.l.b16 %v1926
        %v2055 = vunpack.c.l.b16 %v1927
        %v2056 = vunpack.c.l.b16 %v1928
        %v2057 = vunpack.c.l.b16 %v1929
        %v2058 = vunpack.c.l.b16 %v1930
        %v2059 = vunpack.c.l.b16 %v1931
        %v2060 = vunpack.c.l.b16 %v1932
        %v2061 = vunpack.c.l.b16 %v1933
        %v2062 = vunpack.c.l.b16 %v1934
        %v2063 = vunpack.c.l.b16 %v1935
        %v2064 = vunpack.c.l.b16 %v1936
        %v2065 = vunpack.c.l.b16 %v1937
        %v2066 = vunpack.c.l.b16 %v1938
        %v2067 = vunpack.c.l.b16 %v1939
        %v2068 = vunpack.c.l.b16 %v1940
        %v2069 = vunpack.c.l.b16 %v1941
        %v2070 = vunpack.c.l.b16 %v1942
        %v2071 = vunpack.c.l.b16 %v1943
        %v2072 = vunpack.c.l.b16 %v1944
        %v2073 = vunpack.c.l.b16 %v1945
        %v2074 = vunpack.c.l.b16 %v1946
        %v2075 = vunpack.c.l.b16 %v1947
        %v2076 = vunpack.c.l.b16 %v1948
        %v2077 = vunpack.c.l.b16 %v1949
        %v2078 = vunpack.c.l.b16 %v1950
        %v2079 = vunpack.c.l.b16 %v1951
        %v2080 = vunpack.c.l.b16 %v1952
        %v2081 = vunpack.c.l.b16 %v1953
        %v2082 = vunpack.c.l.b16 %v1954
        %v2083 = vunpack.c.l.b16 %v1955
        %v2084 = vunpack.c.l.b16 %v1956
        %v2085 = vunpack.c.l.b16 %v1957
        %v2086 = vunpack.c.l.b16 %v1958
        %v2087 = vpack.c.b16 %v2024, %v2023
        %v2088 = vpack.c.b16 %v2026, %v2025
        %v2089 = vpack.c.b16 %v2028, %v2027
        %v2090 = vpack.c.b16 %v2030, %v2029
        %v2091 = vpack.c.b16 %v2032, %v2031
        %v2092 = vpack.c.b16 %v2034, %v2033
        %v2093 = vpack.c.b16 %v2036, %v2035
        %v2094 = vpack.c.b16 %v2038, %v2037
        %v2095 = vpack.c.b16 %v2040, %v2039
        %v2096 = vpack.c.b16 %v2042, %v2041
        %v2097 = vpack.c.b16 %v2044, %v2043
        %v2098 = vpack.c.b16 %v2046, %v2045
        %v2099 = vpack.c.b16 %v2048, %v2047
        %v2100 = vpack.c.b16 %v2050, %v2049
        %v2101 = vpack.c.b16 %v2052, %v2051
        %v2102 = vpack.c.b16 %v2054, %v2053
        %v2103 = vpack.c.b16 %v2056, %v2055
        %v2104 = vpack.c.b16 %v2058, %v2057
        %v2105 = vpack.c.b16 %v2060, %v2059
        %v2106 = vpack.c.b16 %v2062, %v2061
        %v2107 = vpack.c.b16 %v2064, %v2063
        %v2108 = vpack.c.b16 %v2066, %v2065
        %v2109 = vpack.c.b16 %v2068, %v2067
        %v2110 = vpack.c.b16 %v2070, %v2069
        %v2111 = vpack.c.b16 %v2072, %v2071
        %v2112 = vpack.c.b16 %v2074, %v2073
        %v2113 = vpack.c.b16 %v2076, %v2075
        %v2114 = vpack.c.b16 %v2078, %v2077
        %v2115 = vpack.c.b16 %v2080, %v2079
        %v2116 = vpack.c.b16 %v2082, %v2081
        %v2117 = vpack.c.b16 %v2084, %v2083
        %v2118 = vpack.c.b16 %v2086, %v2085
        %v2120 = vsel %vm827, %v2087, 0
        %v2123 = vsel %vm827, %v2088, 0
        %v2126 = vsel %vm827, %v2089, 0
        %v2129 = vsel %vm827, %v2090, 0
        %v2132 = vsel %vm827, %v2091, 0
        %v2135 = vsel %vm827, %v2092, 0
        %v2138 = vsel %vm827, %v2093, 0
        %v2141 = vsel %vm827, %v2094, 0
        %v2144 = vsel %vm827, %v2095, 0
        %v2147 = vsel %vm827, %v2096, 0
        %v2150 = vsel %vm827, %v2097, 0
        %v2153 = vsel %vm827, %v2098, 0
        %v2156 = vsel %vm827, %v2099, 0
        %v2159 = vsel %vm827, %v2100, 0
        %v2162 = vsel %vm827, %v2101, 0
        %v2165 = vsel %vm827, %v2102, 0
        %v2168 = vsel %vm827, %v2103, 0
        %v2171 = vsel %vm827, %v2104, 0
        %v2174 = vsel %vm827, %v2105, 0
        %v2177 = vsel %vm827, %v2106, 0
        %v2180 = vsel %vm827, %v2107, 0
        %v2183 = vsel %vm827, %v2108, 0
        %v2186 = vsel %vm827, %v2109, 0
        %v2189 = vsel %vm827, %v2110, 0
        %v2192 = vsel %vm827, %v2111, 0
        %v2195 = vsel %vm827, %v2112, 0
        %v2198 = vsel %vm827, %v2113, 0
        %v2201 = vsel %vm827, %v2114, 0
        %v2204 = vsel %vm827, %v2115, 0
        %v2207 = vsel %vm827, %v2116, 0
        %v2210 = vsel %vm827, %v2117, 0
        %v2213 = vsel %vm827, %v2118, 0
        %2215 = vmatprep.subr.bf16.mxu0 0
        %2216 = vmatpush1.bf16.msra.mxu0 %v824
        %2217 = vmatprep.subr.bf16.mxu0 0
        %2218 = vmatpush1.bf16.msra.mxu0 %v929
        %2219 = vmatprep.subr.bf16.mxu0 0
        %2220 = vmatpush1.bf16.msra.mxu0 0
        %2221 = vmatprep.subr.bf16.mxu0 0
        %2222 = vmatpush1.bf16.msra.mxu0 0
        %2223 = vmatprep.subr.bf16.mxu0 0
        %2224 = vmatpush1.bf16.msra.mxu0 0
        %2225 = vmatprep.subr.bf16.mxu0 0
        %2226 = vmatpush1.bf16.msra.mxu0 0
        %2227 = vmatprep.subr.bf16.mxu0 0
        %2228 = vmatpush1.bf16.msra.mxu0 0
        %2229 = vmatprep.subr.bf16.mxu0 0
        %2230 = vmatpush1.bf16.msra.mxu0 0
        %2231 = vmatprep.subr.bf16.mxu0 0
        %2232 = vmatpush1.bf16.msra.mxu0 0
        %2233 = vmatprep.subr.bf16.mxu0 0
        %2234 = vmatpush1.bf16.msra.mxu0 0
        %2235 = vmatprep.subr.bf16.mxu0 0
        %2236 = vmatpush1.bf16.msra.mxu0 0
        %2237 = vmatprep.subr.bf16.mxu0 0
        %2238 = vmatpush1.bf16.msra.mxu0 0
        %2239 = vmatprep.subr.bf16.mxu0 0
        %2240 = vmatpush1.bf16.msra.mxu0 0
        %2241 = vmatprep.subr.bf16.mxu0 0
        %2242 = vmatpush1.bf16.msra.mxu0 0
        %2243 = vmatprep.subr.bf16.mxu0 0
        %2244 = vmatpush1.bf16.msra.mxu0 0
        %2245 = vmatprep.subr.bf16.mxu0 0
        %2246 = vmatpush1.bf16.msra.mxu0 0
        %2247 = vmatprep.mubr.bf16.mxu0 0
        %2248 = vmatmul.mubr.bf16.gmra.mrb[0].mxu0 %v2120
        %v2249 = vpop.f32.mrb[0].mxu0
        %v2250 = vadd.f32 0.0, %v2249
        %v2251 = vpop.f32.mrb[0].mxu0
        %v2252 = vpop.f32.mrb[0].mxu0
        %v2253 = vadd.f32 0.0, %v2252
        %v2254 = vpop.f32.mrb[0].mxu0
        %2255 = vmatprep.mubr.bf16.mxu0 0
        %2256 = vmatmul.mubr.bf16.gmra.mrb[0].mxu0 %v2123
        %v2257 = vpop.f32.mrb[0].mxu0
        %v2258 = vadd.f32 0.0, %v2257
        %v2259 = vpop.f32.mrb[0].mxu0
        %v2260 = vpop.f32.mrb[0].mxu0
        %v2261 = vadd.f32 0.0, %v2260
        %v2262 = vpop.f32.mrb[0].mxu0
        %2263 = vmatprep.mubr.bf16.mxu0 0
        %2264 = vmatmul.mubr.bf16.gmra.mrb[0].mxu0 %v2126
        %v2265 = vpop.f32.mrb[0].mxu0
        %v2266 = vadd.f32 0.0, %v2265
        %v2267 = vpop.f32.mrb[0].mxu0
        %v2268 = vpop.f32.mrb[0].mxu0
        %v2269 = vadd.f32 0.0, %v2268
        %v2270 = vpop.f32.mrb[0].mxu0
        %2271 = vmatprep.mubr.bf16.mxu0 0
        %2272 = vmatmul.mubr.bf16.gmra.mrb[0].mxu0 %v2129
        %v2273 = vpop.f32.mrb[0].mxu0
        %v2274 = vadd.f32 0.0, %v2273
        %v2275 = vpop.f32.mrb[0].mxu0
        %v2276 = vpop.f32.mrb[0].mxu0
        %v2277 = vadd.f32 0.0, %v2276
        %v2278 = vpop.f32.mrb[0].mxu0
        %2279 = vmatprep.mubr.bf16.mxu0 0
        %2280 = vmatmul.mubr.bf16.gmra.mrb[0].mxu0 %v2132
        %v2281 = vpop.f32.mrb[0].mxu0
        %v2282 = vadd.f32 0.0, %v2281
        %v2283 = vpop.f32.mrb[0].mxu0
        %v2284 = vpop.f32.mrb[0].mxu0
        %v2285 = vadd.f32 0.0, %v2284
        %v2286 = vpop.f32.mrb[0].mxu0
        %2287 = vmatprep.mubr.bf16.mxu0 0
        %2288 = vmatmul.mubr.bf16.gmra.mrb[0].mxu0 %v2135
        %v2289 = vpop.f32.mrb[0].mxu0
        %v2290 = vadd.f32 0.0, %v2289
        %v2291 = vpop.f32.mrb[0].mxu0
        %v2292 = vpop.f32.mrb[0].mxu0
        %v2293 = vadd.f32 0.0, %v2292
        %v2294 = vpop.f32.mrb[0].mxu0
        %2295 = vmatprep.mubr.bf16.mxu0 0
        %2296 = vmatmul.mubr.bf16.gmra.mrb[0].mxu0 %v2138
        %v2297 = vpop.f32.mrb[0].mxu0
        %v2298 = vadd.f32 0.0, %v2297
        %v2299 = vpop.f32.mrb[0].mxu0
        %v2300 = vpop.f32.mrb[0].mxu0
        %v2301 = vadd.f32 0.0, %v2300
        %v2302 = vpop.f32.mrb[0].mxu0
        %2303 = vmatprep.mubr.bf16.mxu0 0
        %2304 = vmatmul.mubr.bf16.gmra.mrb[0].mxu0 %v2141
        %v2305 = vpop.f32.mrb[0].mxu0
        %v2306 = vadd.f32 0.0, %v2305
        %v2307 = vpop.f32.mrb[0].mxu0
        %v2308 = vpop.f32.mrb[0].mxu0
        %v2309 = vadd.f32 0.0, %v2308
        %v2310 = vpop.f32.mrb[0].mxu0
        %2311 = vmatprep.mubr.bf16.mxu0 0
        %2312 = vmatmul.mubr.bf16.gmra.mrb[0].mxu0 %v2144
        %v2313 = vpop.f32.mrb[0].mxu0
        %v2314 = vadd.f32 0.0, %v2313
        %v2315 = vpop.f32.mrb[0].mxu0
        %v2316 = vpop.f32.mrb[0].mxu0
        %v2317 = vadd.f32 0.0, %v2316
        %v2318 = vpop.f32.mrb[0].mxu0
        %2319 = vmatprep.mubr.bf16.mxu0 0
        %2320 = vmatmul.mubr.bf16.gmra.mrb[0].mxu0 %v2147
        %v2321 = vpop.f32.mrb[0].mxu0
        %v2322 = vadd.f32 0.0, %v2321
        %v2323 = vpop.f32.mrb[0].mxu0
        %v2324 = vpop.f32.mrb[0].mxu0
        %v2325 = vadd.f32 0.0, %v2324
        %v2326 = vpop.f32.mrb[0].mxu0
        %2327 = vmatprep.mubr.bf16.mxu0 0
        %2328 = vmatmul.mubr.bf16.gmra.mrb[0].mxu0 %v2150
        %v2329 = vpop.f32.mrb[0].mxu0
        %v2330 = vadd.f32 0.0, %v2329
        %v2331 = vpop.f32.mrb[0].mxu0
        %v2332 = vpop.f32.mrb[0].mxu0
        %v2333 = vadd.f32 0.0, %v2332
        %v2334 = vpop.f32.mrb[0].mxu0
        %2335 = vmatprep.mubr.bf16.mxu0 0
        %2336 = vmatmul.mubr.bf16.gmra.mrb[0].mxu0 %v2153
        %v2337 = vpop.f32.mrb[0].mxu0
        %v2338 = vadd.f32 0.0, %v2337
        %v2339 = vpop.f32.mrb[0].mxu0
        %v2340 = vpop.f32.mrb[0].mxu0
        %v2341 = vadd.f32 0.0, %v2340
        %v2342 = vpop.f32.mrb[0].mxu0
        %2343 = vmatprep.mubr.bf16.mxu0 0
        %2344 = vmatmul.mubr.bf16.gmra.mrb[0].mxu0 %v2156
        %v2345 = vpop.f32.mrb[0].mxu0
        %v2346 = vadd.f32 0.0, %v2345
        %v2347 = vpop.f32.mrb[0].mxu0
        %v2348 = vpop.f32.mrb[0].mxu0
        %v2349 = vadd.f32 0.0, %v2348
        %v2350 = vpop.f32.mrb[0].mxu0
        %2351 = vmatprep.mubr.bf16.mxu0 0
        %2352 = vmatmul.mubr.bf16.gmra.mrb[0].mxu0 %v2159
        %v2353 = vpop.f32.mrb[0].mxu0
        %v2354 = vadd.f32 0.0, %v2353
        %v2355 = vpop.f32.mrb[0].mxu0
        %v2356 = vpop.f32.mrb[0].mxu0
        %v2357 = vadd.f32 0.0, %v2356
        %v2358 = vpop.f32.mrb[0].mxu0
        %2359 = vmatprep.mubr.bf16.mxu0 0
        %2360 = vmatmul.mubr.bf16.gmra.mrb[0].mxu0 %v2162
        %v2361 = vpop.f32.mrb[0].mxu0
        %v2362 = vadd.f32 0.0, %v2361
        %v2363 = vpop.f32.mrb[0].mxu0
        %v2364 = vpop.f32.mrb[0].mxu0
        %v2365 = vadd.f32 0.0, %v2364
        %v2366 = vpop.f32.mrb[0].mxu0
        %2367 = vmatprep.mubr.bf16.mxu0 0
        %2368 = vmatmul.mubr.bf16.gmra.mrb[0].mxu0 %v2165
        %v2369 = vpop.f32.mrb[0].mxu0
        %v2370 = vadd.f32 0.0, %v2369
        %v2371 = vpop.f32.mrb[0].mxu0
        %v2372 = vpop.f32.mrb[0].mxu0
        %v2373 = vadd.f32 0.0, %v2372
        %v2374 = vpop.f32.mrb[0].mxu0
        %2375 = vmatprep.mubr.bf16.mxu0 0
        %2376 = vmatmul.mubr.bf16.gmra.mrb[0].mxu0 %v2168
        %v2377 = vpop.f32.mrb[0].mxu0
        %v2378 = vadd.f32 0.0, %v2377
        %v2379 = vpop.f32.mrb[0].mxu0
        %v2380 = vpop.f32.mrb[0].mxu0
        %v2381 = vadd.f32 0.0, %v2380
        %v2382 = vpop.f32.mrb[0].mxu0
        %2383 = vmatprep.mubr.bf16.mxu0 0
        %2384 = vmatmul.mubr.bf16.gmra.mrb[0].mxu0 %v2171
        %v2385 = vpop.f32.mrb[0].mxu0
        %v2386 = vadd.f32 0.0, %v2385
        %v2387 = vpop.f32.mrb[0].mxu0
        %v2388 = vpop.f32.mrb[0].mxu0
        %v2389 = vadd.f32 0.0, %v2388
        %v2390 = vpop.f32.mrb[0].mxu0
        %2391 = vmatprep.mubr.bf16.mxu0 0
        %2392 = vmatmul.mubr.bf16.gmra.mrb[0].mxu0 %v2174
        %v2393 = vpop.f32.mrb[0].mxu0
        %v2394 = vadd.f32 0.0, %v2393
        %v2395 = vpop.f32.mrb[0].mxu0
        %v2396 = vpop.f32.mrb[0].mxu0
        %v2397 = vadd.f32 0.0, %v2396
        %v2398 = vpop.f32.mrb[0].mxu0
        %2399 = vmatprep.mubr.bf16.mxu0 0
        %2400 = vmatmul.mubr.bf16.gmra.mrb[0].mxu0 %v2177
        %v2401 = vpop.f32.mrb[0].mxu0
        %v2402 = vadd.f32 0.0, %v2401
        %v2403 = vpop.f32.mrb[0].mxu0
        %v2404 = vpop.f32.mrb[0].mxu0
        %v2405 = vadd.f32 0.0, %v2404
        %v2406 = vpop.f32.mrb[0].mxu0
        %2407 = vmatprep.mubr.bf16.mxu0 0
        %2408 = vmatmul.mubr.bf16.gmra.mrb[0].mxu0 %v2180
        %v2409 = vpop.f32.mrb[0].mxu0
        %v2410 = vadd.f32 0.0, %v2409
        %v2411 = vpop.f32.mrb[0].mxu0
        %v2412 = vpop.f32.mrb[0].mxu0
        %v2413 = vadd.f32 0.0, %v2412
        %v2414 = vpop.f32.mrb[0].mxu0
        %2415 = vmatprep.mubr.bf16.mxu0 0
        %2416 = vmatmul.mubr.bf16.gmra.mrb[0].mxu0 %v2183
        %v2417 = vpop.f32.mrb[0].mxu0
        %v2418 = vadd.f32 0.0, %v2417
        %v2419 = vpop.f32.mrb[0].mxu0
        %v2420 = vpop.f32.mrb[0].mxu0
        %v2421 = vadd.f32 0.0, %v2420
        %v2422 = vpop.f32.mrb[0].mxu0
        %2423 = vmatprep.mubr.bf16.mxu0 0
        %2424 = vmatmul.mubr.bf16.gmra.mrb[0].mxu0 %v2186
        %v2425 = vpop.f32.mrb[0].mxu0
        %v2426 = vadd.f32 0.0, %v2425
        %v2427 = vpop.f32.mrb[0].mxu0
        %v2428 = vpop.f32.mrb[0].mxu0
        %v2429 = vadd.f32 0.0, %v2428
        %v2430 = vpop.f32.mrb[0].mxu0
        %2431 = vmatprep.mubr.bf16.mxu0 0
        %2432 = vmatmul.mubr.bf16.gmra.mrb[0].mxu0 %v2189
        %v2433 = vpop.f32.mrb[0].mxu0
        %v2434 = vadd.f32 0.0, %v2433
        %v2435 = vpop.f32.mrb[0].mxu0
        %v2436 = vpop.f32.mrb[0].mxu0
        %v2437 = vadd.f32 0.0, %v2436
        %v2438 = vpop.f32.mrb[0].mxu0
        %2439 = vmatprep.mubr.bf16.mxu0 0
        %2440 = vmatmul.mubr.bf16.gmra.mrb[0].mxu0 %v2192
        %v2441 = vpop.f32.mrb[0].mxu0
        %v2442 = vadd.f32 0.0, %v2441
        %v2443 = vpop.f32.mrb[0].mxu0
        %v2444 = vpop.f32.mrb[0].mxu0
        %v2445 = vadd.f32 0.0, %v2444
        %v2446 = vpop.f32.mrb[0].mxu0
        %2447 = vmatprep.mubr.bf16.mxu0 0
        %2448 = vmatmul.mubr.bf16.gmra.mrb[0].mxu0 %v2195
        %v2449 = vpop.f32.mrb[0].mxu0
        %v2450 = vadd.f32 0.0, %v2449
        %v2451 = vpop.f32.mrb[0].mxu0
        %v2452 = vpop.f32.mrb[0].mxu0
        %v2453 = vadd.f32 0.0, %v2452
        %v2454 = vpop.f32.mrb[0].mxu0
        %2455 = vmatprep.mubr.bf16.mxu0 0
        %2456 = vmatmul.mubr.bf16.gmra.mrb[0].mxu0 %v2198
        %v2457 = vpop.f32.mrb[0].mxu0
        %v2458 = vadd.f32 0.0, %v2457
        %v2459 = vpop.f32.mrb[0].mxu0
        %v2460 = vpop.f32.mrb[0].mxu0
        %v2461 = vadd.f32 0.0, %v2460
        %v2462 = vpop.f32.mrb[0].mxu0
        %2463 = vmatprep.mubr.bf16.mxu0 0
        %2464 = vmatmul.mubr.bf16.gmra.mrb[0].mxu0 %v2201
        %v2465 = vpop.f32.mrb[0].mxu0
        %v2466 = vadd.f32 0.0, %v2465
        %v2467 = vpop.f32.mrb[0].mxu0
        %v2468 = vpop.f32.mrb[0].mxu0
        %v2469 = vadd.f32 0.0, %v2468
        %v2470 = vpop.f32.mrb[0].mxu0
        %2471 = vmatprep.mubr.bf16.mxu0 0
        %2472 = vmatmul.mubr.bf16.gmra.mrb[0].mxu0 %v2204
        %v2473 = vpop.f32.mrb[0].mxu0
        %v2474 = vadd.f32 0.0, %v2473
        %v2475 = vpop.f32.mrb[0].mxu0
        %v2476 = vpop.f32.mrb[0].mxu0
        %v2477 = vadd.f32 0.0, %v2476
        %v2478 = vpop.f32.mrb[0].mxu0
        %2479 = vmatprep.mubr.bf16.mxu0 0
        %2480 = vmatmul.mubr.bf16.gmra.mrb[0].mxu0 %v2207
        %v2481 = vpop.f32.mrb[0].mxu0
        %v2482 = vadd.f32 0.0, %v2481
        %v2483 = vpop.f32.mrb[0].mxu0
        %v2484 = vpop.f32.mrb[0].mxu0
        %v2485 = vadd.f32 0.0, %v2484
        %v2486 = vpop.f32.mrb[0].mxu0
        %2487 = vmatprep.mubr.bf16.mxu0 0
        %2488 = vmatmul.mubr.bf16.gmra.mrb[0].mxu0 %v2210
        %v2489 = vpop.f32.mrb[0].mxu0
        %v2490 = vadd.f32 0.0, %v2489
        %v2491 = vpop.f32.mrb[0].mxu0
        %v2492 = vpop.f32.mrb[0].mxu0
        %v2493 = vadd.f32 0.0, %v2492
        %v2494 = vpop.f32.mrb[0].mxu0
        %2495 = vmatprep.mubr.bf16.mxu0 0
        %2496 = vmatmul.mubr.bf16.gmra.mrb[0].mxu0 %v2213
        %v2497 = vpop.f32.mrb[0].mxu0
        %v2498 = vadd.f32 0.0, %v2497
        %v2499 = vpop.f32.mrb[0].mxu0
        %v2500 = vpop.f32.mrb[0].mxu0
        %v2501 = vadd.f32 0.0, %v2500
        %v2502 = vpop.f32.mrb[0].mxu0
        %2503 = vdwg.mxu0
        %v2504 = vmax.f32 %v1830, %v2250
        %v2505 = vmax.f32 %v1831, %v2253
        %v2506 = vmax.f32 %v1832, %v2258
        %v2507 = vmax.f32 %v1833, %v2261
        %v2508 = vmax.f32 %v1834, %v2266
        %v2509 = vmax.f32 %v1835, %v2269
        %v2510 = vmax.f32 %v1836, %v2274
        %v2511 = vmax.f32 %v1837, %v2277
        %v2512 = vmax.f32 %v1838, %v2282
        %v2513 = vmax.f32 %v1839, %v2285
        %v2514 = vmax.f32 %v1840, %v2290
        %v2515 = vmax.f32 %v1841, %v2293
        %v2516 = vmax.f32 %v1842, %v2298
        %v2517 = vmax.f32 %v1843, %v2301
        %v2518 = vmax.f32 %v1844, %v2306
        %v2519 = vmax.f32 %v1845, %v2309
        %v2520 = vmax.f32 %v1846, %v2314
        %v2521 = vmax.f32 %v1847, %v2317
        %v2522 = vmax.f32 %v1848, %v2322
        %v2523 = vmax.f32 %v1849, %v2325
        %v2524 = vmax.f32 %v1850, %v2330
        %v2525 = vmax.f32 %v1851, %v2333
        %v2526 = vmax.f32 %v1852, %v2338
        %v2527 = vmax.f32 %v1853, %v2341
        %v2528 = vmax.f32 %v1854, %v2346
        %v2529 = vmax.f32 %v1855, %v2349
        %v2530 = vmax.f32 %v1856, %v2354
        %v2531 = vmax.f32 %v1857, %v2357
        %v2532 = vmax.f32 %v1858, %v2362
        %v2533 = vmax.f32 %v1859, %v2365
        %v2534 = vmax.f32 %v1860, %v2370
        %v2535 = vmax.f32 %v1861, %v2373
        %v2536 = vmax.f32 %v1862, %v2378
        %v2537 = vmax.f32 %v1863, %v2381
        %v2538 = vmax.f32 %v1864, %v2386
        %v2539 = vmax.f32 %v1865, %v2389
        %v2540 = vmax.f32 %v1866, %v2394
        %v2541 = vmax.f32 %v1867, %v2397
        %v2542 = vmax.f32 %v1868, %v2402
        %v2543 = vmax.f32 %v1869, %v2405
        %v2544 = vmax.f32 %v1870, %v2410
        %v2545 = vmax.f32 %v1871, %v2413
        %v2546 = vmax.f32 %v1872, %v2418
        %v2547 = vmax.f32 %v1873, %v2421
        %v2548 = vmax.f32 %v1874, %v2426
        %v2549 = vmax.f32 %v1875, %v2429
        %v2550 = vmax.f32 %v1876, %v2434
        %v2551 = vmax.f32 %v1877, %v2437
        %v2552 = vmax.f32 %v1878, %v2442
        %v2553 = vmax.f32 %v1879, %v2445
        %v2554 = vmax.f32 %v1880, %v2450
        %v2555 = vmax.f32 %v1881, %v2453
        %v2556 = vmax.f32 %v1882, %v2458
        %v2557 = vmax.f32 %v1883, %v2461
        %v2558 = vmax.f32 %v1884, %v2466
        %v2559 = vmax.f32 %v1885, %v2469
        %v2560 = vmax.f32 %v1886, %v2474
        %v2561 = vmax.f32 %v1887, %v2477
        %v2562 = vmax.f32 %v1888, %v2482
        %v2563 = vmax.f32 %v1889, %v2485
        %v2564 = vmax.f32 %v1890, %v2490
        %v2565 = vmax.f32 %v1891, %v2493
        %v2566 = vmax.f32 %v1892, %v2498
        %v2567 = vmax.f32 %v1893, %v2501
        %s2568 = scalar_lea.vmem %s557, 768 [#allocation2]
        %v2569 = vld [vmem:[%s2568] sm:$0xf]
        %v2570 = vld [vmem:[%s2568 + $0x4] sm:$0xf]
        %v2571 = vld [vmem:[%s2568 + $0x8] sm:$0xf]
        %v2572 = vld [vmem:[%s2568 + $0xc] sm:$0xf]
        %v2573 = vld [vmem:[%s2568 + $0x10] sm:$0xf]
        %v2574 = vld [vmem:[%s2568 + $0x14] sm:$0xf]
        %v2575 = vld [vmem:[%s2568 + $0x18] sm:$0xf]
        %v2576 = vld [vmem:[%s2568 + $0x1c] sm:$0xf]
        %v2577 = vld [vmem:[%s2568 + $0x20] sm:$0xf]
        %v2578 = vld [vmem:[%s2568 + $0x24] sm:$0xf]
        %v2579 = vld [vmem:[%s2568 + $0x28] sm:$0xf]
        %v2580 = vld [vmem:[%s2568 + $0x2c] sm:$0xf]
        %v2581 = vld [vmem:[%s2568 + $0x30] sm:$0xf]
        %v2582 = vld [vmem:[%s2568 + $0x34] sm:$0xf]
        %v2583 = vld [vmem:[%s2568 + $0x38] sm:$0xf]
        %v2584 = vld [vmem:[%s2568 + $0x3c] sm:$0xf]
        %v2585 = vld [vmem:[%s2568 + $0x40] sm:$0xf]
        %v2586 = vld [vmem:[%s2568 + $0x44] sm:$0xf]
        %v2587 = vld [vmem:[%s2568 + $0x48] sm:$0xf]
        %v2588 = vld [vmem:[%s2568 + $0x4c] sm:$0xf]
        %v2589 = vld [vmem:[%s2568 + $0x50] sm:$0xf]
        %v2590 = vld [vmem:[%s2568 + $0x54] sm:$0xf]
        %v2591 = vld [vmem:[%s2568 + $0x58] sm:$0xf]
        %v2592 = vld [vmem:[%s2568 + $0x5c] sm:$0xf]
        %v2593 = vld [vmem:[%s2568 + $0x60] sm:$0xf]
        %v2594 = vld [vmem:[%s2568 + $0x64] sm:$0xf]
        %v2595 = vld [vmem:[%s2568 + $0x68] sm:$0xf]
        %v2596 = vld [vmem:[%s2568 + $0x6c] sm:$0xf]
        %v2597 = vld [vmem:[%s2568 + $0x70] sm:$0xf]
        %v2598 = vld [vmem:[%s2568 + $0x74] sm:$0xf]
        %v2599 = vld [vmem:[%s2568 + $0x78] sm:$0xf]
        %v2600 = vld [vmem:[%s2568 + $0x7c] sm:$0xf]
        %v2601 = vld [vmem:[%s2568 + $0x80] sm:$0xf]
        %v2602 = vld [vmem:[%s2568 + $0x84] sm:$0xf]
        %v2603 = vld [vmem:[%s2568 + $0x88] sm:$0xf]
        %v2604 = vld [vmem:[%s2568 + $0x8c] sm:$0xf]
        %v2605 = vld [vmem:[%s2568 + $0x90] sm:$0xf]
        %v2606 = vld [vmem:[%s2568 + $0x94] sm:$0xf]
        %v2607 = vld [vmem:[%s2568 + $0x98] sm:$0xf]
        %v2608 = vld [vmem:[%s2568 + $0x9c] sm:$0xf]
        %v2609 = vld [vmem:[%s2568 + $0xa0] sm:$0xf]
        %v2610 = vld [vmem:[%s2568 + $0xa4] sm:$0xf]
        %v2611 = vld [vmem:[%s2568 + $0xa8] sm:$0xf]
        %v2612 = vld [vmem:[%s2568 + $0xac] sm:$0xf]
        %v2613 = vld [vmem:[%s2568 + $0xb0] sm:$0xf]
        %v2614 = vld [vmem:[%s2568 + $0xb4] sm:$0xf]
        %v2615 = vld [vmem:[%s2568 + $0xb8] sm:$0xf]
        %v2616 = vld [vmem:[%s2568 + $0xbc] sm:$0xf]
        %v2617 = vld [vmem:[%s2568 + $0xc0] sm:$0xf]
        %v2618 = vld [vmem:[%s2568 + $0xc4] sm:$0xf]
        %v2619 = vld [vmem:[%s2568 + $0xc8] sm:$0xf]
        %v2620 = vld [vmem:[%s2568 + $0xcc] sm:$0xf]
        %v2621 = vld [vmem:[%s2568 + $0xd0] sm:$0xf]
        %v2622 = vld [vmem:[%s2568 + $0xd4] sm:$0xf]
        %v2623 = vld [vmem:[%s2568 + $0xd8] sm:$0xf]
        %v2624 = vld [vmem:[%s2568 + $0xdc] sm:$0xf]
        %v2625 = vld [vmem:[%s2568 + $0xe0] sm:$0xf]
        %v2626 = vld [vmem:[%s2568 + $0xe4] sm:$0xf]
        %v2627 = vld [vmem:[%s2568 + $0xe8] sm:$0xf]
        %v2628 = vld [vmem:[%s2568 + $0xec] sm:$0xf]
        %v2629 = vld [vmem:[%s2568 + $0xf0] sm:$0xf]
        %v2630 = vld [vmem:[%s2568 + $0xf4] sm:$0xf]
        %v2631 = vld [vmem:[%s2568 + $0xf8] sm:$0xf]
        %v2632 = vld [vmem:[%s2568 + $0xfc] sm:$0xf]
        %v2697 = vunpack.c.l.b16 %v2569
        %v2698 = vunpack.c.l.b16 %v2570
        %v2699 = vunpack.c.l.b16 %v2571
        %v2700 = vunpack.c.l.b16 %v2572
        %v2701 = vunpack.c.l.b16 %v2573
        %v2702 = vunpack.c.l.b16 %v2574
        %v2703 = vunpack.c.l.b16 %v2575
        %v2704 = vunpack.c.l.b16 %v2576
        %v2705 = vunpack.c.l.b16 %v2577
        %v2706 = vunpack.c.l.b16 %v2578
        %v2707 = vunpack.c.l.b16 %v2579
        %v2708 = vunpack.c.l.b16 %v2580
        %v2709 = vunpack.c.l.b16 %v2581
        %v2710 = vunpack.c.l.b16 %v2582
        %v2711 = vunpack.c.l.b16 %v2583
        %v2712 = vunpack.c.l.b16 %v2584
        %v2713 = vunpack.c.l.b16 %v2585
        %v2714 = vunpack.c.l.b16 %v2586
        %v2715 = vunpack.c.l.b16 %v2587
        %v2716 = vunpack.c.l.b16 %v2588
        %v2717 = vunpack.c.l.b16 %v2589
        %v2718 = vunpack.c.l.b16 %v2590
        %v2719 = vunpack.c.l.b16 %v2591
        %v2720 = vunpack.c.l.b16 %v2592
        %v2721 = vunpack.c.l.b16 %v2593
        %v2722 = vunpack.c.l.b16 %v2594
        %v2723 = vunpack.c.l.b16 %v2595
        %v2724 = vunpack.c.l.b16 %v2596
        %v2725 = vunpack.c.l.b16 %v2597
        %v2726 = vunpack.c.l.b16 %v2598
        %v2727 = vunpack.c.l.b16 %v2599
        %v2728 = vunpack.c.l.b16 %v2600
        %v2729 = vunpack.c.l.b16 %v2601
        %v2730 = vunpack.c.l.b16 %v2602
        %v2731 = vunpack.c.l.b16 %v2603
        %v2732 = vunpack.c.l.b16 %v2604
        %v2733 = vunpack.c.l.b16 %v2605
        %v2734 = vunpack.c.l.b16 %v2606
        %v2735 = vunpack.c.l.b16 %v2607
        %v2736 = vunpack.c.l.b16 %v2608
        %v2737 = vunpack.c.l.b16 %v2609
        %v2738 = vunpack.c.l.b16 %v2610
        %v2739 = vunpack.c.l.b16 %v2611
        %v2740 = vunpack.c.l.b16 %v2612
        %v2741 = vunpack.c.l.b16 %v2613
        %v2742 = vunpack.c.l.b16 %v2614
        %v2743 = vunpack.c.l.b16 %v2615
        %v2744 = vunpack.c.l.b16 %v2616
        %v2745 = vunpack.c.l.b16 %v2617
        %v2746 = vunpack.c.l.b16 %v2618
        %v2747 = vunpack.c.l.b16 %v2619
        %v2748 = vunpack.c.l.b16 %v2620
        %v2749 = vunpack.c.l.b16 %v2621
        %v2750 = vunpack.c.l.b16 %v2622
        %v2751 = vunpack.c.l.b16 %v2623
        %v2752 = vunpack.c.l.b16 %v2624
        %v2753 = vunpack.c.l.b16 %v2625
        %v2754 = vunpack.c.l.b16 %v2626
        %v2755 = vunpack.c.l.b16 %v2627
        %v2756 = vunpack.c.l.b16 %v2628
        %v2757 = vunpack.c.l.b16 %v2629
        %v2758 = vunpack.c.l.b16 %v2630
        %v2759 = vunpack.c.l.b16 %v2631
        %v2760 = vunpack.c.l.b16 %v2632
        %v2761 = vpack.c.b16 %v2698, %v2697
        %v2762 = vpack.c.b16 %v2700, %v2699
        %v2763 = vpack.c.b16 %v2702, %v2701
        %v2764 = vpack.c.b16 %v2704, %v2703
        %v2765 = vpack.c.b16 %v2706, %v2705
        %v2766 = vpack.c.b16 %v2708, %v2707
        %v2767 = vpack.c.b16 %v2710, %v2709
        %v2768 = vpack.c.b16 %v2712, %v2711
        %v2769 = vpack.c.b16 %v2714, %v2713
        %v2770 = vpack.c.b16 %v2716, %v2715
        %v2771 = vpack.c.b16 %v2718, %v2717
        %v2772 = vpack.c.b16 %v2720, %v2719
        %v2773 = vpack.c.b16 %v2722, %v2721
        %v2774 = vpack.c.b16 %v2724, %v2723
        %v2775 = vpack.c.b16 %v2726, %v2725
        %v2776 = vpack.c.b16 %v2728, %v2727
        %v2777 = vpack.c.b16 %v2730, %v2729
        %v2778 = vpack.c.b16 %v2732, %v2731
        %v2779 = vpack.c.b16 %v2734, %v2733
        %v2780 = vpack.c.b16 %v2736, %v2735
        %v2781 = vpack.c.b16 %v2738, %v2737
        %v2782 = vpack.c.b16 %v2740, %v2739
        %v2783 = vpack.c.b16 %v2742, %v2741
        %v2784 = vpack.c.b16 %v2744, %v2743
        %v2785 = vpack.c.b16 %v2746, %v2745
        %v2786 = vpack.c.b16 %v2748, %v2747
        %v2787 = vpack.c.b16 %v2750, %v2749
        %v2788 = vpack.c.b16 %v2752, %v2751
        %v2789 = vpack.c.b16 %v2754, %v2753
        %v2790 = vpack.c.b16 %v2756, %v2755
        %v2791 = vpack.c.b16 %v2758, %v2757
        %v2792 = vpack.c.b16 %v2760, %v2759
        %v2794 = vsel %vm827, %v2761, 0
        %v2797 = vsel %vm827, %v2762, 0
        %v2800 = vsel %vm827, %v2763, 0
        %v2803 = vsel %vm827, %v2764, 0
        %v2806 = vsel %vm827, %v2765, 0
        %v2809 = vsel %vm827, %v2766, 0
        %v2812 = vsel %vm827, %v2767, 0
        %v2815 = vsel %vm827, %v2768, 0
        %v2818 = vsel %vm827, %v2769, 0
        %v2821 = vsel %vm827, %v2770, 0
        %v2824 = vsel %vm827, %v2771, 0
        %v2827 = vsel %vm827, %v2772, 0
        %v2830 = vsel %vm827, %v2773, 0
        %v2833 = vsel %vm827, %v2774, 0
        %v2836 = vsel %vm827, %v2775, 0
        %v2839 = vsel %vm827, %v2776, 0
        %v2842 = vsel %vm827, %v2777, 0
        %v2845 = vsel %vm827, %v2778, 0
        %v2848 = vsel %vm827, %v2779, 0
        %v2851 = vsel %vm827, %v2780, 0
        %v2854 = vsel %vm827, %v2781, 0
        %v2857 = vsel %vm827, %v2782, 0
        %v2860 = vsel %vm827, %v2783, 0
        %v2863 = vsel %vm827, %v2784, 0
        %v2866 = vsel %vm827, %v2785, 0
        %v2869 = vsel %vm827, %v2786, 0
        %v2872 = vsel %vm827, %v2787, 0
        %v2875 = vsel %vm827, %v2788, 0
        %v2878 = vsel %vm827, %v2789, 0
        %v2881 = vsel %vm827, %v2790, 0
        %v2884 = vsel %vm827, %v2791, 0
        %v2887 = vsel %vm827, %v2792, 0
        %2889 = vmatprep.subr.bf16.mxu0 0
        %2890 = vmatpush1.bf16.msra.mxu0 %v824
        %2891 = vmatprep.subr.bf16.mxu0 0
        %2892 = vmatpush1.bf16.msra.mxu0 %v929
        %2893 = vmatprep.subr.bf16.mxu0 0
        %2894 = vmatpush1.bf16.msra.mxu0 0
        %2895 = vmatprep.subr.bf16.mxu0 0
        %2896 = vmatpush1.bf16.msra.mxu0 0
        %2897 = vmatprep.subr.bf16.mxu0 0
        %2898 = vmatpush1.bf16.msra.mxu0 0
        %2899 = vmatprep.subr.bf16.mxu0 0
        %2900 = vmatpush1.bf16.msra.mxu0 0
        %2901 = vmatprep.subr.bf16.mxu0 0
        %2902 = vmatpush1.bf16.msra.mxu0 0
        %2903 = vmatprep.subr.bf16.mxu0 0
        %2904 = vmatpush1.bf16.msra.mxu0 0
        %2905 = vmatprep.subr.bf16.mxu0 0
        %2906 = vmatpush1.bf16.msra.mxu0 0
        %2907 = vmatprep.subr.bf16.mxu0 0
        %2908 = vmatpush1.bf16.msra.mxu0 0
        %2909 = vmatprep.subr.bf16.mxu0 0
        %2910 = vmatpush1.bf16.msra.mxu0 0
        %2911 = vmatprep.subr.bf16.mxu0 0
        %2912 = vmatpush1.bf16.msra.mxu0 0
        %2913 = vmatprep.subr.bf16.mxu0 0
        %2914 = vmatpush1.bf16.msra.mxu0 0
        %2915 = vmatprep.subr.bf16.mxu0 0
        %2916 = vmatpush1.bf16.msra.mxu0 0
        %2917 = vmatprep.subr.bf16.mxu0 0
        %2918 = vmatpush1.bf16.msra.mxu0 0
        %2919 = vmatprep.subr.bf16.mxu0 0
        %2920 = vmatpush1.bf16.msra.mxu0 0
        %2921 = vmatprep.mubr.bf16.mxu0 0
        %2922 = vmatmul.mubr.bf16.gmra.mrb[0].mxu0 %v2794
        %v2923 = vpop.f32.mrb[0].mxu0
        %v2924 = vadd.f32 0.0, %v2923
        %v2925 = vpop.f32.mrb[0].mxu0
        %v2926 = vpop.f32.mrb[0].mxu0
        %v2927 = vadd.f32 0.0, %v2926
        %v2928 = vpop.f32.mrb[0].mxu0
        %2929 = vmatprep.mubr.bf16.mxu0 0
        %2930 = vmatmul.mubr.bf16.gmra.mrb[0].mxu0 %v2797
        %v2931 = vpop.f32.mrb[0].mxu0
        %v2932 = vadd.f32 0.0, %v2931
        %v2933 = vpop.f32.mrb[0].mxu0
        %v2934 = vpop.f32.mrb[0].mxu0
        %v2935 = vadd.f32 0.0, %v2934
        %v2936 = vpop.f32.mrb[0].mxu0
        %2937 = vmatprep.mubr.bf16.mxu0 0
        %2938 = vmatmul.mubr.bf16.gmra.mrb[0].mxu0 %v2800
        %v2939 = vpop.f32.mrb[0].mxu0
        %v2940 = vadd.f32 0.0, %v2939
        %v2941 = vpop.f32.mrb[0].mxu0
        %v2942 = vpop.f32.mrb[0].mxu0
        %v2943 = vadd.f32 0.0, %v2942
        %v2944 = vpop.f32.mrb[0].mxu0
        %2945 = vmatprep.mubr.bf16.mxu0 0
        %2946 = vmatmul.mubr.bf16.gmra.mrb[0].mxu0 %v2803
        %v2947 = vpop.f32.mrb[0].mxu0
        %v2948 = vadd.f32 0.0, %v2947
        %v2949 = vpop.f32.mrb[0].mxu0
        %v2950 = vpop.f32.mrb[0].mxu0
        %v2951 = vadd.f32 0.0, %v2950
        %v2952 = vpop.f32.mrb[0].mxu0
        %2953 = vmatprep.mubr.bf16.mxu0 0
        %2954 = vmatmul.mubr.bf16.gmra.mrb[0].mxu0 %v2806
        %v2955 = vpop.f32.mrb[0].mxu0
        %v2956 = vadd.f32 0.0, %v2955
        %v2957 = vpop.f32.mrb[0].mxu0
        %v2958 = vpop.f32.mrb[0].mxu0
        %v2959 = vadd.f32 0.0, %v2958
        %v2960 = vpop.f32.mrb[0].mxu0
        %2961 = vmatprep.mubr.bf16.mxu0 0
        %2962 = vmatmul.mubr.bf16.gmra.mrb[0].mxu0 %v2809
        %v2963 = vpop.f32.mrb[0].mxu0
        %v2964 = vadd.f32 0.0, %v2963
        %v2965 = vpop.f32.mrb[0].mxu0
        %v2966 = vpop.f32.mrb[0].mxu0
        %v2967 = vadd.f32 0.0, %v2966
        %v2968 = vpop.f32.mrb[0].mxu0
        %2969 = vmatprep.mubr.bf16.mxu0 0
        %2970 = vmatmul.mubr.bf16.gmra.mrb[0].mxu0 %v2812
        %v2971 = vpop.f32.mrb[0].mxu0
        %v2972 = vadd.f32 0.0, %v2971
        %v2973 = vpop.f32.mrb[0].mxu0
        %v2974 = vpop.f32.mrb[0].mxu0
        %v2975 = vadd.f32 0.0, %v2974
        %v2976 = vpop.f32.mrb[0].mxu0
        %2977 = vmatprep.mubr.bf16.mxu0 0
        %2978 = vmatmul.mubr.bf16.gmra.mrb[0].mxu0 %v2815
        %v2979 = vpop.f32.mrb[0].mxu0
        %v2980 = vadd.f32 0.0, %v2979
        %v2981 = vpop.f32.mrb[0].mxu0
        %v2982 = vpop.f32.mrb[0].mxu0
        %v2983 = vadd.f32 0.0, %v2982
        %v2984 = vpop.f32.mrb[0].mxu0
        %2985 = vmatprep.mubr.bf16.mxu0 0
        %2986 = vmatmul.mubr.bf16.gmra.mrb[0].mxu0 %v2818
        %v2987 = vpop.f32.mrb[0].mxu0
        %v2988 = vadd.f32 0.0, %v2987
        %v2989 = vpop.f32.mrb[0].mxu0
        %v2990 = vpop.f32.mrb[0].mxu0
        %v2991 = vadd.f32 0.0, %v2990
        %v2992 = vpop.f32.mrb[0].mxu0
        %2993 = vmatprep.mubr.bf16.mxu0 0
        %2994 = vmatmul.mubr.bf16.gmra.mrb[0].mxu0 %v2821
        %v2995 = vpop.f32.mrb[0].mxu0
        %v2996 = vadd.f32 0.0, %v2995
        %v2997 = vpop.f32.mrb[0].mxu0
        %v2998 = vpop.f32.mrb[0].mxu0
        %v2999 = vadd.f32 0.0, %v2998
        %v3000 = vpop.f32.mrb[0].mxu0
        %3001 = vmatprep.mubr.bf16.mxu0 0
        %3002 = vmatmul.mubr.bf16.gmra.mrb[0].mxu0 %v2824
        %v3003 = vpop.f32.mrb[0].mxu0
        %v3004 = vadd.f32 0.0, %v3003
        %v3005 = vpop.f32.mrb[0].mxu0
        %v3006 = vpop.f32.mrb[0].mxu0
        %v3007 = vadd.f32 0.0, %v3006
        %v3008 = vpop.f32.mrb[0].mxu0
        %3009 = vmatprep.mubr.bf16.mxu0 0
        %3010 = vmatmul.mubr.bf16.gmra.mrb[0].mxu0 %v2827
        %v3011 = vpop.f32.mrb[0].mxu0
        %v3012 = vadd.f32 0.0, %v3011
        %v3013 = vpop.f32.mrb[0].mxu0
        %v3014 = vpop.f32.mrb[0].mxu0
        %v3015 = vadd.f32 0.0, %v3014
        %v3016 = vpop.f32.mrb[0].mxu0
        %3017 = vmatprep.mubr.bf16.mxu0 0
        %3018 = vmatmul.mubr.bf16.gmra.mrb[0].mxu0 %v2830
        %v3019 = vpop.f32.mrb[0].mxu0
        %v3020 = vadd.f32 0.0, %v3019
        %v3021 = vpop.f32.mrb[0].mxu0
        %v3022 = vpop.f32.mrb[0].mxu0
        %v3023 = vadd.f32 0.0, %v3022
        %v3024 = vpop.f32.mrb[0].mxu0
        %3025 = vmatprep.mubr.bf16.mxu0 0
        %3026 = vmatmul.mubr.bf16.gmra.mrb[0].mxu0 %v2833
        %v3027 = vpop.f32.mrb[0].mxu0
        %v3028 = vadd.f32 0.0, %v3027
        %v3029 = vpop.f32.mrb[0].mxu0
        %v3030 = vpop.f32.mrb[0].mxu0
        %v3031 = vadd.f32 0.0, %v3030
        %v3032 = vpop.f32.mrb[0].mxu0
        %3033 = vmatprep.mubr.bf16.mxu0 0
        %3034 = vmatmul.mubr.bf16.gmra.mrb[0].mxu0 %v2836
        %v3035 = vpop.f32.mrb[0].mxu0
        %v3036 = vadd.f32 0.0, %v3035
        %v3037 = vpop.f32.mrb[0].mxu0
        %v3038 = vpop.f32.mrb[0].mxu0
        %v3039 = vadd.f32 0.0, %v3038
        %v3040 = vpop.f32.mrb[0].mxu0
        %3041 = vmatprep.mubr.bf16.mxu0 0
        %3042 = vmatmul.mubr.bf16.gmra.mrb[0].mxu0 %v2839
        %v3043 = vpop.f32.mrb[0].mxu0
        %v3044 = vadd.f32 0.0, %v3043
        %v3045 = vpop.f32.mrb[0].mxu0
        %v3046 = vpop.f32.mrb[0].mxu0
        %v3047 = vadd.f32 0.0, %v3046
        %v3048 = vpop.f32.mrb[0].mxu0
        %3049 = vmatprep.mubr.bf16.mxu0 0
        %3050 = vmatmul.mubr.bf16.gmra.mrb[0].mxu0 %v2842
        %v3051 = vpop.f32.mrb[0].mxu0
        %v3052 = vadd.f32 0.0, %v3051
        %v3053 = vpop.f32.mrb[0].mxu0
        %v3054 = vpop.f32.mrb[0].mxu0
        %v3055 = vadd.f32 0.0, %v3054
        %v3056 = vpop.f32.mrb[0].mxu0
        %3057 = vmatprep.mubr.bf16.mxu0 0
        %3058 = vmatmul.mubr.bf16.gmra.mrb[0].mxu0 %v2845
        %v3059 = vpop.f32.mrb[0].mxu0
        %v3060 = vadd.f32 0.0, %v3059
        %v3061 = vpop.f32.mrb[0].mxu0
        %v3062 = vpop.f32.mrb[0].mxu0
        %v3063 = vadd.f32 0.0, %v3062
        %v3064 = vpop.f32.mrb[0].mxu0
        %3065 = vmatprep.mubr.bf16.mxu0 0
        %3066 = vmatmul.mubr.bf16.gmra.mrb[0].mxu0 %v2848
        %v3067 = vpop.f32.mrb[0].mxu0
        %v3068 = vadd.f32 0.0, %v3067
        %v3069 = vpop.f32.mrb[0].mxu0
        %v3070 = vpop.f32.mrb[0].mxu0
        %v3071 = vadd.f32 0.0, %v3070
        %v3072 = vpop.f32.mrb[0].mxu0
        %3073 = vmatprep.mubr.bf16.mxu0 0
        %3074 = vmatmul.mubr.bf16.gmra.mrb[0].mxu0 %v2851
        %v3075 = vpop.f32.mrb[0].mxu0
        %v3076 = vadd.f32 0.0, %v3075
        %v3077 = vpop.f32.mrb[0].mxu0
        %v3078 = vpop.f32.mrb[0].mxu0
        %v3079 = vadd.f32 0.0, %v3078
        %v3080 = vpop.f32.mrb[0].mxu0
        %3081 = vmatprep.mubr.bf16.mxu0 0
        %3082 = vmatmul.mubr.bf16.gmra.mrb[0].mxu0 %v2854
        %v3083 = vpop.f32.mrb[0].mxu0
        %v3084 = vadd.f32 0.0, %v3083
        %v3085 = vpop.f32.mrb[0].mxu0
        %v3086 = vpop.f32.mrb[0].mxu0
        %v3087 = vadd.f32 0.0, %v3086
        %v3088 = vpop.f32.mrb[0].mxu0
        %3089 = vmatprep.mubr.bf16.mxu0 0
        %3090 = vmatmul.mubr.bf16.gmra.mrb[0].mxu0 %v2857
        %v3091 = vpop.f32.mrb[0].mxu0
        %v3092 = vadd.f32 0.0, %v3091
        %v3093 = vpop.f32.mrb[0].mxu0
        %v3094 = vpop.f32.mrb[0].mxu0
        %v3095 = vadd.f32 0.0, %v3094
        %v3096 = vpop.f32.mrb[0].mxu0
        %3097 = vmatprep.mubr.bf16.mxu0 0
        %3098 = vmatmul.mubr.bf16.gmra.mrb[0].mxu0 %v2860
        %v3099 = vpop.f32.mrb[0].mxu0
        %v3100 = vadd.f32 0.0, %v3099
        %v3101 = vpop.f32.mrb[0].mxu0
        %v3102 = vpop.f32.mrb[0].mxu0
        %v3103 = vadd.f32 0.0, %v3102
        %v3104 = vpop.f32.mrb[0].mxu0
        %3105 = vmatprep.mubr.bf16.mxu0 0
        %3106 = vmatmul.mubr.bf16.gmra.mrb[0].mxu0 %v2863
        %v3107 = vpop.f32.mrb[0].mxu0
        %v3108 = vadd.f32 0.0, %v3107
        %v3109 = vpop.f32.mrb[0].mxu0
        %v3110 = vpop.f32.mrb[0].mxu0
        %v3111 = vadd.f32 0.0, %v3110
        %v3112 = vpop.f32.mrb[0].mxu0
        %3113 = vmatprep.mubr.bf16.mxu0 0
        %3114 = vmatmul.mubr.bf16.gmra.mrb[0].mxu0 %v2866
        %v3115 = vpop.f32.mrb[0].mxu0
        %v3116 = vadd.f32 0.0, %v3115
        %v3117 = vpop.f32.mrb[0].mxu0
        %v3118 = vpop.f32.mrb[0].mxu0
        %v3119 = vadd.f32 0.0, %v3118
        %v3120 = vpop.f32.mrb[0].mxu0
        %3121 = vmatprep.mubr.bf16.mxu0 0
        %3122 = vmatmul.mubr.bf16.gmra.mrb[0].mxu0 %v2869
        %v3123 = vpop.f32.mrb[0].mxu0
        %v3124 = vadd.f32 0.0, %v3123
        %v3125 = vpop.f32.mrb[0].mxu0
        %v3126 = vpop.f32.mrb[0].mxu0
        %v3127 = vadd.f32 0.0, %v3126
        %v3128 = vpop.f32.mrb[0].mxu0
        %3129 = vmatprep.mubr.bf16.mxu0 0
        %3130 = vmatmul.mubr.bf16.gmra.mrb[0].mxu0 %v2872
        %v3131 = vpop.f32.mrb[0].mxu0
        %v3132 = vadd.f32 0.0, %v3131
        %v3133 = vpop.f32.mrb[0].mxu0
        %v3134 = vpop.f32.mrb[0].mxu0
        %v3135 = vadd.f32 0.0, %v3134
        %v3136 = vpop.f32.mrb[0].mxu0
        %3137 = vmatprep.mubr.bf16.mxu0 0
        %3138 = vmatmul.mubr.bf16.gmra.mrb[0].mxu0 %v2875
        %v3139 = vpop.f32.mrb[0].mxu0
        %v3140 = vadd.f32 0.0, %v3139
        %v3141 = vpop.f32.mrb[0].mxu0
        %v3142 = vpop.f32.mrb[0].mxu0
        %v3143 = vadd.f32 0.0, %v3142
        %v3144 = vpop.f32.mrb[0].mxu0
        %3145 = vmatprep.mubr.bf16.mxu0 0
        %3146 = vmatmul.mubr.bf16.gmra.mrb[0].mxu0 %v2878
        %v3147 = vpop.f32.mrb[0].mxu0
        %v3148 = vadd.f32 0.0, %v3147
        %v3149 = vpop.f32.mrb[0].mxu0
        %v3150 = vpop.f32.mrb[0].mxu0
        %v3151 = vadd.f32 0.0, %v3150
        %v3152 = vpop.f32.mrb[0].mxu0
        %3153 = vmatprep.mubr.bf16.mxu0 0
        %3154 = vmatmul.mubr.bf16.gmra.mrb[0].mxu0 %v2881
        %v3155 = vpop.f32.mrb[0].mxu0
        %v3156 = vadd.f32 0.0, %v3155
        %v3157 = vpop.f32.mrb[0].mxu0
        %v3158 = vpop.f32.mrb[0].mxu0
        %v3159 = vadd.f32 0.0, %v3158
        %v3160 = vpop.f32.mrb[0].mxu0
        %3161 = vmatprep.mubr.bf16.mxu0 0
        %3162 = vmatmul.mubr.bf16.gmra.mrb[0].mxu0 %v2884
        %v3163 = vpop.f32.mrb[0].mxu0
        %v3164 = vadd.f32 0.0, %v3163
        %v3165 = vpop.f32.mrb[0].mxu0
        %v3166 = vpop.f32.mrb[0].mxu0
        %v3167 = vadd.f32 0.0, %v3166
        %v3168 = vpop.f32.mrb[0].mxu0
        %3169 = vmatprep.mubr.bf16.mxu0 0
        %3170 = vmatmul.mubr.bf16.gmra.mrb[0].mxu0 %v2887
        %v3171 = vpop.f32.mrb[0].mxu0
        %v3172 = vadd.f32 0.0, %v3171
        %v3173 = vpop.f32.mrb[0].mxu0
        %v3174 = vpop.f32.mrb[0].mxu0
        %v3175 = vadd.f32 0.0, %v3174
        %v3176 = vpop.f32.mrb[0].mxu0
        %3177 = vdwg.mxu0
        %v3178 = vmax.f32 %v2504, %v2924
        %v3179 = vmax.f32 %v2505, %v2927
        %v3180 = vmax.f32 %v2506, %v2932
        %v3181 = vmax.f32 %v2507, %v2935
        %v3182 = vmax.f32 %v2508, %v2940
        %v3183 = vmax.f32 %v2509, %v2943
        %v3184 = vmax.f32 %v2510, %v2948
        %v3185 = vmax.f32 %v2511, %v2951
        %v3186 = vmax.f32 %v2512, %v2956
        %v3187 = vmax.f32 %v2513, %v2959
        %v3188 = vmax.f32 %v2514, %v2964
        %v3189 = vmax.f32 %v2515, %v2967
        %v3190 = vmax.f32 %v2516, %v2972
        %v3191 = vmax.f32 %v2517, %v2975
        %v3192 = vmax.f32 %v2518, %v2980
        %v3193 = vmax.f32 %v2519, %v2983
        %v3194 = vmax.f32 %v2520, %v2988
        %v3195 = vmax.f32 %v2521, %v2991
        %v3196 = vmax.f32 %v2522, %v2996
        %v3197 = vmax.f32 %v2523, %v2999
        %v3198 = vmax.f32 %v2524, %v3004
        %v3199 = vmax.f32 %v2525, %v3007
        %v3200 = vmax.f32 %v2526, %v3012
        %v3201 = vmax.f32 %v2527, %v3015
        %v3202 = vmax.f32 %v2528, %v3020
        %v3203 = vmax.f32 %v2529, %v3023
        %v3204 = vmax.f32 %v2530, %v3028
        %v3205 = vmax.f32 %v2531, %v3031
        %v3206 = vmax.f32 %v2532, %v3036
        %v3207 = vmax.f32 %v2533, %v3039
        %v3208 = vmax.f32 %v2534, %v3044
        %v3209 = vmax.f32 %v2535, %v3047
        %v3210 = vmax.f32 %v2536, %v3052
        %v3211 = vmax.f32 %v2537, %v3055
        %v3212 = vmax.f32 %v2538, %v3060
        %v3213 = vmax.f32 %v2539, %v3063
        %v3214 = vmax.f32 %v2540, %v3068
        %v3215 = vmax.f32 %v2541, %v3071
        %v3216 = vmax.f32 %v2542, %v3076
        %v3217 = vmax.f32 %v2543, %v3079
        %v3218 = vmax.f32 %v2544, %v3084
        %v3219 = vmax.f32 %v2545, %v3087
        %v3220 = vmax.f32 %v2546, %v3092
        %v3221 = vmax.f32 %v2547, %v3095
        %v3222 = vmax.f32 %v2548, %v3100
        %v3223 = vmax.f32 %v2549, %v3103
        %v3224 = vmax.f32 %v2550, %v3108
        %v3225 = vmax.f32 %v2551, %v3111
        %v3226 = vmax.f32 %v2552, %v3116
        %v3227 = vmax.f32 %v2553, %v3119
        %v3228 = vmax.f32 %v2554, %v3124
        %v3229 = vmax.f32 %v2555, %v3127
        %v3230 = vmax.f32 %v2556, %v3132
        %v3231 = vmax.f32 %v2557, %v3135
        %v3232 = vmax.f32 %v2558, %v3140
        %v3233 = vmax.f32 %v2559, %v3143
        %v3234 = vmax.f32 %v2560, %v3148
        %v3235 = vmax.f32 %v2561, %v3151
        %v3236 = vmax.f32 %v2562, %v3156
        %v3237 = vmax.f32 %v2563, %v3159
        %v3238 = vmax.f32 %v2564, %v3164
        %v3239 = vmax.f32 %v2565, %v3167
        %v3240 = vmax.f32 %v2566, %v3172
        %v3241 = vmax.f32 %v2567, %v3175
        %v3242 = vld [vmem:[%s2] sm:$0x1]
        %v3244 = vlaneseq
        %v3245 = vshrl.u32 %v3244, 7
        %v3246 = vsub.s32 0, %v3245
        %v3247 = vrot.slane %v3242, %v3246
        %v3249 = vadd.f32 %v3178, %v3247
        %v3250 = vadd.f32 %v3179, %v3247
        %v3251 = vadd.f32 %v3180, %v3247
        %v3252 = vadd.f32 %v3181, %v3247
        %v3253 = vadd.f32 %v3182, %v3247
        %v3254 = vadd.f32 %v3183, %v3247
        %v3255 = vadd.f32 %v3184, %v3247
        %v3256 = vadd.f32 %v3185, %v3247
        %v3257 = vadd.f32 %v3186, %v3247
        %v3258 = vadd.f32 %v3187, %v3247
        %v3259 = vadd.f32 %v3188, %v3247
        %v3260 = vadd.f32 %v3189, %v3247
        %v3261 = vadd.f32 %v3190, %v3247
        %v3262 = vadd.f32 %v3191, %v3247
        %v3263 = vadd.f32 %v3192, %v3247
        %v3264 = vadd.f32 %v3193, %v3247
        %v3265 = vadd.f32 %v3194, %v3247
        %v3266 = vadd.f32 %v3195, %v3247
        %v3267 = vadd.f32 %v3196, %v3247
        %v3268 = vadd.f32 %v3197, %v3247
        %v3269 = vadd.f32 %v3198, %v3247
        %v3270 = vadd.f32 %v3199, %v3247
        %v3271 = vadd.f32 %v3200, %v3247
        %v3272 = vadd.f32 %v3201, %v3247
        %v3273 = vadd.f32 %v3202, %v3247
        %v3274 = vadd.f32 %v3203, %v3247
        %v3275 = vadd.f32 %v3204, %v3247
        %v3276 = vadd.f32 %v3205, %v3247
        %v3277 = vadd.f32 %v3206, %v3247
        %v3278 = vadd.f32 %v3207, %v3247
        %v3279 = vadd.f32 %v3208, %v3247
        %v3280 = vadd.f32 %v3209, %v3247
        %v3281 = vadd.f32 %v3210, %v3247
        %v3282 = vadd.f32 %v3211, %v3247
        %v3283 = vadd.f32 %v3212, %v3247
        %v3284 = vadd.f32 %v3213, %v3247
        %v3285 = vadd.f32 %v3214, %v3247
        %v3286 = vadd.f32 %v3215, %v3247
        %v3287 = vadd.f32 %v3216, %v3247
        %v3288 = vadd.f32 %v3217, %v3247
        %v3289 = vadd.f32 %v3218, %v3247
        %v3290 = vadd.f32 %v3219, %v3247
        %v3291 = vadd.f32 %v3220, %v3247
        %v3292 = vadd.f32 %v3221, %v3247
        %v3293 = vadd.f32 %v3222, %v3247
        %v3294 = vadd.f32 %v3223, %v3247
        %v3295 = vadd.f32 %v3224, %v3247
        %v3296 = vadd.f32 %v3225, %v3247
        %v3297 = vadd.f32 %v3226, %v3247
        %v3298 = vadd.f32 %v3227, %v3247
        %v3299 = vadd.f32 %v3228, %v3247
        %v3300 = vadd.f32 %v3229, %v3247
        %v3301 = vadd.f32 %v3230, %v3247
        %v3302 = vadd.f32 %v3231, %v3247
        %v3303 = vadd.f32 %v3232, %v3247
        %v3304 = vadd.f32 %v3233, %v3247
        %v3305 = vadd.f32 %v3234, %v3247
        %v3306 = vadd.f32 %v3235, %v3247
        %v3307 = vadd.f32 %v3236, %v3247
        %v3308 = vadd.f32 %v3237, %v3247
        %v3309 = vadd.f32 %v3238, %v3247
        %v3310 = vadd.f32 %v3239, %v3247
        %v3311 = vadd.f32 %v3240, %v3247
        %v3312 = vadd.f32 %v3241, %v3247
        %v3313 = vmax.f32 %v3249, 0.0
        %v3314 = vmax.f32 %v3250, 0.0
        %v3315 = vmax.f32 %v3251, 0.0
        %v3316 = vmax.f32 %v3252, 0.0
        %v3317 = vmax.f32 %v3253, 0.0
        %v3318 = vmax.f32 %v3254, 0.0
        %v3319 = vmax.f32 %v3255, 0.0
        %v3320 = vmax.f32 %v3256, 0.0
        %v3321 = vmax.f32 %v3257, 0.0
        %v3322 = vmax.f32 %v3258, 0.0
        %v3323 = vmax.f32 %v3259, 0.0
        %v3324 = vmax.f32 %v3260, 0.0
        %v3325 = vmax.f32 %v3261, 0.0
        %v3326 = vmax.f32 %v3262, 0.0
        %v3327 = vmax.f32 %v3263, 0.0
        %v3328 = vmax.f32 %v3264, 0.0
        %v3329 = vmax.f32 %v3265, 0.0
        %v3330 = vmax.f32 %v3266, 0.0
        %v3331 = vmax.f32 %v3267, 0.0
        %v3332 = vmax.f32 %v3268, 0.0
        %v3333 = vmax.f32 %v3269, 0.0
        %v3334 = vmax.f32 %v3270, 0.0
        %v3335 = vmax.f32 %v3271, 0.0
        %v3336 = vmax.f32 %v3272, 0.0
        %v3337 = vmax.f32 %v3273, 0.0
        %v3338 = vmax.f32 %v3274, 0.0
        %v3339 = vmax.f32 %v3275, 0.0
        %v3340 = vmax.f32 %v3276, 0.0
        %v3341 = vmax.f32 %v3277, 0.0
        %v3342 = vmax.f32 %v3278, 0.0
        %v3343 = vmax.f32 %v3279, 0.0
        %v3344 = vmax.f32 %v3280, 0.0
        %v3345 = vmax.f32 %v3281, 0.0
        %v3346 = vmax.f32 %v3282, 0.0
        %v3347 = vmax.f32 %v3283, 0.0
        %v3348 = vmax.f32 %v3284, 0.0
        %v3349 = vmax.f32 %v3285, 0.0
        %v3350 = vmax.f32 %v3286, 0.0
        %v3351 = vmax.f32 %v3287, 0.0
        %v3352 = vmax.f32 %v3288, 0.0
        %v3353 = vmax.f32 %v3289, 0.0
        %v3354 = vmax.f32 %v3290, 0.0
        %v3355 = vmax.f32 %v3291, 0.0
        %v3356 = vmax.f32 %v3292, 0.0
        %v3357 = vmax.f32 %v3293, 0.0
        %v3358 = vmax.f32 %v3294, 0.0
        %v3359 = vmax.f32 %v3295, 0.0
        %v3360 = vmax.f32 %v3296, 0.0
        %v3361 = vmax.f32 %v3297, 0.0
        %v3362 = vmax.f32 %v3298, 0.0
        %v3363 = vmax.f32 %v3299, 0.0
        %v3364 = vmax.f32 %v3300, 0.0
        %v3365 = vmax.f32 %v3301, 0.0
        %v3366 = vmax.f32 %v3302, 0.0
        %v3367 = vmax.f32 %v3303, 0.0
        %v3368 = vmax.f32 %v3304, 0.0
        %v3369 = vmax.f32 %v3305, 0.0
        %v3370 = vmax.f32 %v3306, 0.0
        %v3371 = vmax.f32 %v3307, 0.0
        %v3372 = vmax.f32 %v3308, 0.0
        %v3373 = vmax.f32 %v3309, 0.0
        %v3374 = vmax.f32 %v3310, 0.0
        %v3375 = vmax.f32 %v3311, 0.0
        %v3376 = vmax.f32 %v3312, 0.0
        %vm3377 = vcmask 64512
        %3378 = vst.msk [vmem:[%s576] sm:$0xff] %vm3377, %v3313
        %3379 = vst.msk [vmem:[%s576 + $0x8] sm:$0xff] %vm3377, %v3314
        %3380 = vst.msk [vmem:[%s576 + $0x10] sm:$0xff] %vm3377, %v3315
        %3381 = vst.msk [vmem:[%s576 + $0x18] sm:$0xff] %vm3377, %v3316
        %3382 = vst.msk [vmem:[%s576 + $0x20] sm:$0xff] %vm3377, %v3317
        %3383 = vst.msk [vmem:[%s576 + $0x28] sm:$0xff] %vm3377, %v3318
        %3384 = vst.msk [vmem:[%s576 + $0x30] sm:$0xff] %vm3377, %v3319
        %3385 = vst.msk [vmem:[%s576 + $0x38] sm:$0xff] %vm3377, %v3320
        %3386 = vst.msk [vmem:[%s576 + $0x40] sm:$0xff] %vm3377, %v3321
        %3387 = vst.msk [vmem:[%s576 + $0x48] sm:$0xff] %vm3377, %v3322
        %3388 = vst.msk [vmem:[%s576 + $0x50] sm:$0xff] %vm3377, %v3323
        %3389 = vst.msk [vmem:[%s576 + $0x58] sm:$0xff] %vm3377, %v3324
        %3390 = vst.msk [vmem:[%s576 + $0x60] sm:$0xff] %vm3377, %v3325
        %3391 = vst.msk [vmem:[%s576 + $0x68] sm:$0xff] %vm3377, %v3326
        %3392 = vst.msk [vmem:[%s576 + $0x70] sm:$0xff] %vm3377, %v3327
        %3393 = vst.msk [vmem:[%s576 + $0x78] sm:$0xff] %vm3377, %v3328
        %3394 = vst.msk [vmem:[%s576 + $0x80] sm:$0xff] %vm3377, %v3329
        %3395 = vst.msk [vmem:[%s576 + $0x88] sm:$0xff] %vm3377, %v3330
        %3396 = vst.msk [vmem:[%s576 + $0x90] sm:$0xff] %vm3377, %v3331
        %3397 = vst.msk [vmem:[%s576 + $0x98] sm:$0xff] %vm3377, %v3332
        %3398 = vst.msk [vmem:[%s576 + $0xa0] sm:$0xff] %vm3377, %v3333
        %3399 = vst.msk [vmem:[%s576 + $0xa8] sm:$0xff] %vm3377, %v3334
        %3400 = vst.msk [vmem:[%s576 + $0xb0] sm:$0xff] %vm3377, %v3335
        %3401 = vst.msk [vmem:[%s576 + $0xb8] sm:$0xff] %vm3377, %v3336
        %3402 = vst.msk [vmem:[%s576 + $0xc0] sm:$0xff] %vm3377, %v3337
        %3403 = vst.msk [vmem:[%s576 + $0xc8] sm:$0xff] %vm3377, %v3338
        %3404 = vst.msk [vmem:[%s576 + $0xd0] sm:$0xff] %vm3377, %v3339
        %3405 = vst.msk [vmem:[%s576 + $0xd8] sm:$0xff] %vm3377, %v3340
        %3406 = vst.msk [vmem:[%s576 + $0xe0] sm:$0xff] %vm3377, %v3341
        %3407 = vst.msk [vmem:[%s576 + $0xe8] sm:$0xff] %vm3377, %v3342
        %3408 = vst.msk [vmem:[%s576 + $0xf0] sm:$0xff] %vm3377, %v3343
        %3409 = vst.msk [vmem:[%s576 + $0xf8] sm:$0xff] %vm3377, %v3344
        %3410 = vst.msk [vmem:[%s576 + $0x100] sm:$0xff] %vm3377, %v3345
        %3411 = vst.msk [vmem:[%s576 + $0x108] sm:$0xff] %vm3377, %v3346
        %3412 = vst.msk [vmem:[%s576 + $0x110] sm:$0xff] %vm3377, %v3347
        %3413 = vst.msk [vmem:[%s576 + $0x118] sm:$0xff] %vm3377, %v3348
        %3414 = vst.msk [vmem:[%s576 + $0x120] sm:$0xff] %vm3377, %v3349
        %3415 = vst.msk [vmem:[%s576 + $0x128] sm:$0xff] %vm3377, %v3350
        %3416 = vst.msk [vmem:[%s576 + $0x130] sm:$0xff] %vm3377, %v3351
        %3417 = vst.msk [vmem:[%s576 + $0x138] sm:$0xff] %vm3377, %v3352
        %3418 = vst.msk [vmem:[%s576 + $0x140] sm:$0xff] %vm3377, %v3353
        %3419 = vst.msk [vmem:[%s576 + $0x148] sm:$0xff] %vm3377, %v3354
        %3420 = vst.msk [vmem:[%s576 + $0x150] sm:$0xff] %vm3377, %v3355
        %3421 = vst.msk [vmem:[%s576 + $0x158] sm:$0xff] %vm3377, %v3356
        %3422 = vst.msk [vmem:[%s576 + $0x160] sm:$0xff] %vm3377, %v3357
        %3423 = vst.msk [vmem:[%s576 + $0x168] sm:$0xff] %vm3377, %v3358
        %3424 = vst.msk [vmem:[%s576 + $0x170] sm:$0xff] %vm3377, %v3359
        %3425 = vst.msk [vmem:[%s576 + $0x178] sm:$0xff] %vm3377, %v3360
        %3426 = vst.msk [vmem:[%s576 + $0x180] sm:$0xff] %vm3377, %v3361
        %3427 = vst.msk [vmem:[%s576 + $0x188] sm:$0xff] %vm3377, %v3362
        %3428 = vst.msk [vmem:[%s576 + $0x190] sm:$0xff] %vm3377, %v3363
        %3429 = vst.msk [vmem:[%s576 + $0x198] sm:$0xff] %vm3377, %v3364
        %3430 = vst.msk [vmem:[%s576 + $0x1a0] sm:$0xff] %vm3377, %v3365
        %3431 = vst.msk [vmem:[%s576 + $0x1a8] sm:$0xff] %vm3377, %v3366
        %3432 = vst.msk [vmem:[%s576 + $0x1b0] sm:$0xff] %vm3377, %v3367
        %3433 = vst.msk [vmem:[%s576 + $0x1b8] sm:$0xff] %vm3377, %v3368
        %3434 = vst.msk [vmem:[%s576 + $0x1c0] sm:$0xff] %vm3377, %v3369
        %3435 = vst.msk [vmem:[%s576 + $0x1c8] sm:$0xff] %vm3377, %v3370
        %3436 = vst.msk [vmem:[%s576 + $0x1d0] sm:$0xff] %vm3377, %v3371
        %3437 = vst.msk [vmem:[%s576 + $0x1d8] sm:$0xff] %vm3377, %v3372
        %3438 = vst.msk [vmem:[%s576 + $0x1e0] sm:$0xff] %vm3377, %v3373
        %3439 = vst.msk [vmem:[%s576 + $0x1e8] sm:$0xff] %vm3377, %v3374
        %3440 = vst.msk [vmem:[%s576 + $0x1f0] sm:$0xff] %vm3377, %v3375
        %3441 = vst.msk [vmem:[%s576 + $0x1f8] sm:$0xff] %vm3377, %v3376
        %s3442 = sand.u32 %s90, 1
        %s3443 = sand.u32 %s90, 1
        %s3444 = smul.addr %s3443, 512
        %s3445 = scalar_lea.vmem [#allocation3], %s3444
        // Predicated region
        $region95: #{double_cnn_forward.3} parent=89 // pred_check
          %p3446 = pneg %p100
        $region96: #{double_cnn_forward.3} parent=89 // pred_check_branch
          %3448 = sbr.rel (%p3446) target = $region98
        $region97: #{double_cnn_forward.3} parent=89 // pred_region
          %s3449 = smul.u32 64, %s14
          %s3450 = ssub.s32 98, %s3449
          %p3451 = scmp.lt.s32.totalorder %s3450, 64
          %s3452 = scalar_select %p3451, %s3450, 64
          %s3453 = smul.u32 128, %s3452
          %p3454 = scmp.ne.s32.totalorder 0, %s3453
          %s3455 = smul.addr %s3449, 8
          %s3456 = scalar_lea.vmem %s3, %s3455
          // Predicated region
          $region99: #{double_cnn_forward.3} parent=97 // pred_check
            %p3457 = pneg %p3454
          $region100: #{double_cnn_forward.3} parent=97 // pred_check_branch
            %3459 = sbr.rel (%p3457) target = $region102
          $region101: #{double_cnn_forward.3} parent=97 // pred_region
            // Predicated region
            $region103: #{double_cnn_forward.3} parent=101 // pred_check
              _
            $region104: #{double_cnn_forward.3} parent=101 // pred_check_branch
              %3461 = sbr.rel (0) target = $region106
            $region105: #{double_cnn_forward.3} parent=101 // pred_region
              // Predicated region
              $region125: #{double_cnn_forward.3} parent=105 // pred_check
                _
              $region126: #{double_cnn_forward.3} parent=105 // pred_check_branch
                %3636 = sbr.rel (0) target = $region128
              $region127: #{double_cnn_forward.3} parent=105 // pred_region
                %s3637 = sshrl.u32 %s3452, 6
                // While loop
                $region129: #{double_cnn_forward.3} parent=127 // loop_pre_header
                  _
                $region130: #{double_cnn_forward.3} parent=127 // loop_header
                  %s3639 = sphi 0, %s3641
                  %p3640 = scmp.ge.s32.totalorder %s3639, %s3637
                  %s3644 = sphi 0, %s3777
                  %s3645 = sphi %s3445, %s3780
                  %s3646 = sphi %s3456, %s3781
                $region131: #{double_cnn_forward.3} parent=127 // loop_header_branch
                  %3643 = sbr.rel (%p3640) target = $region135
                $region132: #{double_cnn_forward.3} parent=127 // loop_body
                  %v3647 = vld [vmem:[%s3645] sm:$0xff]
                  %3648 = vst [vmem:[%s3646] sm:$0xff] %v3647
                  %v3649 = vld [vmem:[%s3645 + $0x8] sm:$0xff]
                  %3650 = vst [vmem:[%s3646 + $0x8] sm:$0xff] %v3649
                  %v3651 = vld [vmem:[%s3645 + $0x10] sm:$0xff]
                  %3652 = vst [vmem:[%s3646 + $0x10] sm:$0xff] %v3651
                  %v3653 = vld [vmem:[%s3645 + $0x18] sm:$0xff]
                  %3654 = vst [vmem:[%s3646 + $0x18] sm:$0xff] %v3653
                  %v3655 = vld [vmem:[%s3645 + $0x20] sm:$0xff]
                  %3656 = vst [vmem:[%s3646 + $0x20] sm:$0xff] %v3655
                  %v3657 = vld [vmem:[%s3645 + $0x28] sm:$0xff]
                  %3658 = vst [vmem:[%s3646 + $0x28] sm:$0xff] %v3657
                  %v3659 = vld [vmem:[%s3645 + $0x30] sm:$0xff]
                  %3660 = vst [vmem:[%s3646 + $0x30] sm:$0xff] %v3659
                  %v3661 = vld [vmem:[%s3645 + $0x38] sm:$0xff]
                  %3662 = vst [vmem:[%s3646 + $0x38] sm:$0xff] %v3661
                  %v3663 = vld [vmem:[%s3645 + $0x40] sm:$0xff]
                  %3664 = vst [vmem:[%s3646 + $0x40] sm:$0xff] %v3663
                  %v3665 = vld [vmem:[%s3645 + $0x48] sm:$0xff]
                  %3666 = vst [vmem:[%s3646 + $0x48] sm:$0xff] %v3665
                  %v3667 = vld [vmem:[%s3645 + $0x50] sm:$0xff]
                  %3668 = vst [vmem:[%s3646 + $0x50] sm:$0xff] %v3667
                  %v3669 = vld [vmem:[%s3645 + $0x58] sm:$0xff]
                  %3670 = vst [vmem:[%s3646 + $0x58] sm:$0xff] %v3669
                  %v3671 = vld [vmem:[%s3645 + $0x60] sm:$0xff]
                  %3672 = vst [vmem:[%s3646 + $0x60] sm:$0xff] %v3671
                  %v3673 = vld [vmem:[%s3645 + $0x68] sm:$0xff]
                  %3674 = vst [vmem:[%s3646 + $0x68] sm:$0xff] %v3673
                  %v3675 = vld [vmem:[%s3645 + $0x70] sm:$0xff]
                  %3676 = vst [vmem:[%s3646 + $0x70] sm:$0xff] %v3675
                  %v3677 = vld [vmem:[%s3645 + $0x78] sm:$0xff]
                  %3678 = vst [vmem:[%s3646 + $0x78] sm:$0xff] %v3677
                  %v3679 = vld [vmem:[%s3645 + $0x80] sm:$0xff]
                  %3680 = vst [vmem:[%s3646 + $0x80] sm:$0xff] %v3679
                  %v3681 = vld [vmem:[%s3645 + $0x88] sm:$0xff]
                  %3682 = vst [vmem:[%s3646 + $0x88] sm:$0xff] %v3681
                  %v3683 = vld [vmem:[%s3645 + $0x90] sm:$0xff]
                  %3684 = vst [vmem:[%s3646 + $0x90] sm:$0xff] %v3683
                  %v3685 = vld [vmem:[%s3645 + $0x98] sm:$0xff]
                  %3686 = vst [vmem:[%s3646 + $0x98] sm:$0xff] %v3685
                  %v3687 = vld [vmem:[%s3645 + $0xa0] sm:$0xff]
                  %3688 = vst [vmem:[%s3646 + $0xa0] sm:$0xff] %v3687
                  %v3689 = vld [vmem:[%s3645 + $0xa8] sm:$0xff]
                  %3690 = vst [vmem:[%s3646 + $0xa8] sm:$0xff] %v3689
                  %v3691 = vld [vmem:[%s3645 + $0xb0] sm:$0xff]
                  %3692 = vst [vmem:[%s3646 + $0xb0] sm:$0xff] %v3691
                  %v3693 = vld [vmem:[%s3645 + $0xb8] sm:$0xff]
                  %3694 = vst [vmem:[%s3646 + $0xb8] sm:$0xff] %v3693
                  %v3695 = vld [vmem:[%s3645 + $0xc0] sm:$0xff]
                  %3696 = vst [vmem:[%s3646 + $0xc0] sm:$0xff] %v3695
                  %v3697 = vld [vmem:[%s3645 + $0xc8] sm:$0xff]
                  %3698 = vst [vmem:[%s3646 + $0xc8] sm:$0xff] %v3697
                  %v3699 = vld [vmem:[%s3645 + $0xd0] sm:$0xff]
                  %3700 = vst [vmem:[%s3646 + $0xd0] sm:$0xff] %v3699
                  %v3701 = vld [vmem:[%s3645 + $0xd8] sm:$0xff]
                  %3702 = vst [vmem:[%s3646 + $0xd8] sm:$0xff] %v3701
                  %v3703 = vld [vmem:[%s3645 + $0xe0] sm:$0xff]
                  %3704 = vst [vmem:[%s3646 + $0xe0] sm:$0xff] %v3703
                  %v3705 = vld [vmem:[%s3645 + $0xe8] sm:$0xff]
                  %3706 = vst [vmem:[%s3646 + $0xe8] sm:$0xff] %v3705
                  %v3707 = vld [vmem:[%s3645 + $0xf0] sm:$0xff]
                  %3708 = vst [vmem:[%s3646 + $0xf0] sm:$0xff] %v3707
                  %v3709 = vld [vmem:[%s3645 + $0xf8] sm:$0xff]
                  %3710 = vst [vmem:[%s3646 + $0xf8] sm:$0xff] %v3709
                  %v3711 = vld [vmem:[%s3645 + $0x100] sm:$0xff]
                  %3712 = vst [vmem:[%s3646 + $0x100] sm:$0xff] %v3711
                  %v3713 = vld [vmem:[%s3645 + $0x108] sm:$0xff]
                  %3714 = vst [vmem:[%s3646 + $0x108] sm:$0xff] %v3713
                  %v3715 = vld [vmem:[%s3645 + $0x110] sm:$0xff]
                  %3716 = vst [vmem:[%s3646 + $0x110] sm:$0xff] %v3715
                  %v3717 = vld [vmem:[%s3645 + $0x118] sm:$0xff]
                  %3718 = vst [vmem:[%s3646 + $0x118] sm:$0xff] %v3717
                  %v3719 = vld [vmem:[%s3645 + $0x120] sm:$0xff]
                  %3720 = vst [vmem:[%s3646 + $0x120] sm:$0xff] %v3719
                  %v3721 = vld [vmem:[%s3645 + $0x128] sm:$0xff]
                  %3722 = vst [vmem:[%s3646 + $0x128] sm:$0xff] %v3721
                  %v3723 = vld [vmem:[%s3645 + $0x130] sm:$0xff]
                  %3724 = vst [vmem:[%s3646 + $0x130] sm:$0xff] %v3723
                  %v3725 = vld [vmem:[%s3645 + $0x138] sm:$0xff]
                  %3726 = vst [vmem:[%s3646 + $0x138] sm:$0xff] %v3725
                  %v3727 = vld [vmem:[%s3645 + $0x140] sm:$0xff]
                  %3728 = vst [vmem:[%s3646 + $0x140] sm:$0xff] %v3727
                  %v3729 = vld [vmem:[%s3645 + $0x148] sm:$0xff]
                  %3730 = vst [vmem:[%s3646 + $0x148] sm:$0xff] %v3729
                  %v3731 = vld [vmem:[%s3645 + $0x150] sm:$0xff]
                  %3732 = vst [vmem:[%s3646 + $0x150] sm:$0xff] %v3731
                  %v3733 = vld [vmem:[%s3645 + $0x158] sm:$0xff]
                  %3734 = vst [vmem:[%s3646 + $0x158] sm:$0xff] %v3733
                  %v3735 = vld [vmem:[%s3645 + $0x160] sm:$0xff]
                  %3736 = vst [vmem:[%s3646 + $0x160] sm:$0xff] %v3735
                  %v3737 = vld [vmem:[%s3645 + $0x168] sm:$0xff]
                  %3738 = vst [vmem:[%s3646 + $0x168] sm:$0xff] %v3737
                  %v3739 = vld [vmem:[%s3645 + $0x170] sm:$0xff]
                  %3740 = vst [vmem:[%s3646 + $0x170] sm:$0xff] %v3739
                  %v3741 = vld [vmem:[%s3645 + $0x178] sm:$0xff]
                  %3742 = vst [vmem:[%s3646 + $0x178] sm:$0xff] %v3741
                  %v3743 = vld [vmem:[%s3645 + $0x180] sm:$0xff]
                  %3744 = vst [vmem:[%s3646 + $0x180] sm:$0xff] %v3743
                  %v3745 = vld [vmem:[%s3645 + $0x188] sm:$0xff]
                  %3746 = vst [vmem:[%s3646 + $0x188] sm:$0xff] %v3745
                  %v3747 = vld [vmem:[%s3645 + $0x190] sm:$0xff]
                  %3748 = vst [vmem:[%s3646 + $0x190] sm:$0xff] %v3747
                  %v3749 = vld [vmem:[%s3645 + $0x198] sm:$0xff]
                  %3750 = vst [vmem:[%s3646 + $0x198] sm:$0xff] %v3749
                  %v3751 = vld [vmem:[%s3645 + $0x1a0] sm:$0xff]
                  %3752 = vst [vmem:[%s3646 + $0x1a0] sm:$0xff] %v3751
                  %v3753 = vld [vmem:[%s3645 + $0x1a8] sm:$0xff]
                  %3754 = vst [vmem:[%s3646 + $0x1a8] sm:$0xff] %v3753
                  %v3755 = vld [vmem:[%s3645 + $0x1b0] sm:$0xff]
                  %3756 = vst [vmem:[%s3646 + $0x1b0] sm:$0xff] %v3755
                  %v3757 = vld [vmem:[%s3645 + $0x1b8] sm:$0xff]
                  %3758 = vst [vmem:[%s3646 + $0x1b8] sm:$0xff] %v3757
                  %v3759 = vld [vmem:[%s3645 + $0x1c0] sm:$0xff]
                  %3760 = vst [vmem:[%s3646 + $0x1c0] sm:$0xff] %v3759
                  %v3761 = vld [vmem:[%s3645 + $0x1c8] sm:$0xff]
                  %3762 = vst [vmem:[%s3646 + $0x1c8] sm:$0xff] %v3761
                  %v3763 = vld [vmem:[%s3645 + $0x1d0] sm:$0xff]
                  %3764 = vst [vmem:[%s3646 + $0x1d0] sm:$0xff] %v3763
                  %v3765 = vld [vmem:[%s3645 + $0x1d8] sm:$0xff]
                  %3766 = vst [vmem:[%s3646 + $0x1d8] sm:$0xff] %v3765
                  %v3767 = vld [vmem:[%s3645 + $0x1e0] sm:$0xff]
                  %3768 = vst [vmem:[%s3646 + $0x1e0] sm:$0xff] %v3767
                  %v3769 = vld [vmem:[%s3645 + $0x1e8] sm:$0xff]
                  %3770 = vst [vmem:[%s3646 + $0x1e8] sm:$0xff] %v3769
                  %v3771 = vld [vmem:[%s3645 + $0x1f0] sm:$0xff]
                  %3772 = vst [vmem:[%s3646 + $0x1f0] sm:$0xff] %v3771
                  %v3773 = vld [vmem:[%s3645 + $0x1f8] sm:$0xff]
                  %3774 = vst [vmem:[%s3646 + $0x1f8] sm:$0xff] %v3773
                  %s3775 = sadd.s32 1, %s3644
                  %p3776 = scmp.ge.s32.totalorder %s3775, %s3637
                  %s3777 = scalar_select %p3776, 0, %s3775
                  %s3778 = smul.u32 %s3777, 512
                  %s3779 = smul.u32 %s3777, 512
                  %s3780 = scalar_lea.vmem %s3445, %s3778 [#allocation3]
                  %s3781 = scalar_lea.vmem %s3456, %s3779
                $region133: #{double_cnn_forward.3} parent=127 // loop_footer
                  %s3641 = sadd.s32 %s3639, 1
                $region134: #{double_cnn_forward.3} parent=127 // loop_footer_branch
                  %3638 = sbr.rel target = $region130
                $region135: #{double_cnn_forward.3} parent=127 // loop_exit
                  _
                %s3782 = sshrl.u32 %s3452, 6
                %s3783 = sand.u32 %s3452, 63
                %s3784 = smul.u32 %s3782, 64
                %s3785 = smul.u32 8, %s3784
                %s3786 = scalar_lea.vmem %s3445, %s3785 [#allocation3]
                %s3787 = smul.u32 8, %s3784
                %s3788 = scalar_lea.vmem %s3456, %s3787
                // While loop
                $region136: #{double_cnn_forward.3} parent=127 // loop_pre_header
                  _
                $region137: #{double_cnn_forward.3} parent=127 // loop_header
                  %s3790 = sphi 0, %s3792
                  %p3791 = scmp.ge.s32.totalorder %s3790, %s3783
                  %s3795 = sphi 0, %s3802
                  %s3796 = sphi %s3786, %s3805
                  %s3797 = sphi %s3788, %s3806
                $region138: #{double_cnn_forward.3} parent=127 // loop_header_branch
                  %3794 = sbr.rel (%p3791) target = $region142
                $region139: #{double_cnn_forward.3} parent=127 // loop_body
                  %v3798 = vld [vmem:[%s3796] sm:$0xff]
                  %3799 = vst [vmem:[%s3797] sm:$0xff] %v3798
                  %s3800 = sadd.s32 1, %s3795
                  %p3801 = scmp.ge.s32.totalorder %s3800, %s3783
                  %s3802 = scalar_select %p3801, 0, %s3800
                  %s3803 = smul.u32 %s3802, 8
                  %s3804 = smul.u32 %s3802, 8
                  %s3805 = scalar_lea.vmem %s3786, %s3803 [#allocation3]
                  %s3806 = scalar_lea.vmem %s3788, %s3804
                $region140: #{double_cnn_forward.3} parent=127 // loop_footer
                  %s3792 = sadd.s32 %s3790, 1
                $region141: #{double_cnn_forward.3} parent=127 // loop_footer_branch
                  %3789 = sbr.rel target = $region137
                $region142: #{double_cnn_forward.3} parent=127 // loop_exit
                  _
              $region128: #{double_cnn_forward.3} parent=105 // pred_fallthru
                _
              // Predicated region
              $region143: #{double_cnn_forward.3} parent=105 // pred_check
                _
              $region144: #{double_cnn_forward.3} parent=105 // pred_check_branch
                %3808 = sbr.rel target = $region146
              $region145: #{double_cnn_forward.3} parent=105 // pred_region
                _
              $region146: #{double_cnn_forward.3} parent=105 // pred_fallthru
                _
            $region106: #{double_cnn_forward.3} parent=101 // pred_fallthru
              _
            // Predicated region
            $region107: #{double_cnn_forward.3} parent=101 // pred_check
              _
            $region108: #{double_cnn_forward.3} parent=101 // pred_check_branch
              %3463 = sbr.rel target = $region110
            $region109: #{double_cnn_forward.3} parent=101 // pred_region
              %s3465 = sshrl.u32 %s3452, 6
              // While loop
              $region111: #{double_cnn_forward.3} parent=109 // loop_pre_header
                _
              $region112: #{double_cnn_forward.3} parent=109 // loop_header
                %s3467 = sphi 0, %s3469
                %p3468 = scmp.ge.s32.totalorder %s3467, %s3465
                %s3472 = sphi 0, %s3605
                %s3473 = sphi %s3445, %s3608
                %s3474 = sphi %s3456, %s3609
              $region113: #{double_cnn_forward.3} parent=109 // loop_header_branch
                %3471 = sbr.rel (%p3468) target = $region117
              $region114: #{double_cnn_forward.3} parent=109 // loop_body
                %v3475 = vld [vmem:[%s3473] sm:$0xff]
                %3476 = vst [vmem:[%s3474] sm:$0xff] %v3475
                %v3477 = vld [vmem:[%s3473 + $0x8] sm:$0xff]
                %3478 = vst [vmem:[%s3474 + $0x8] sm:$0xff] %v3477
                %v3479 = vld [vmem:[%s3473 + $0x10] sm:$0xff]
                %3480 = vst [vmem:[%s3474 + $0x10] sm:$0xff] %v3479
                %v3481 = vld [vmem:[%s3473 + $0x18] sm:$0xff]
                %3482 = vst [vmem:[%s3474 + $0x18] sm:$0xff] %v3481
                %v3483 = vld [vmem:[%s3473 + $0x20] sm:$0xff]
                %3484 = vst [vmem:[%s3474 + $0x20] sm:$0xff] %v3483
                %v3485 = vld [vmem:[%s3473 + $0x28] sm:$0xff]
                %3486 = vst [vmem:[%s3474 + $0x28] sm:$0xff] %v3485
                %v3487 = vld [vmem:[%s3473 + $0x30] sm:$0xff]
                %3488 = vst [vmem:[%s3474 + $0x30] sm:$0xff] %v3487
                %v3489 = vld [vmem:[%s3473 + $0x38] sm:$0xff]
                %3490 = vst [vmem:[%s3474 + $0x38] sm:$0xff] %v3489
                %v3491 = vld [vmem:[%s3473 + $0x40] sm:$0xff]
                %3492 = vst [vmem:[%s3474 + $0x40] sm:$0xff] %v3491
                %v3493 = vld [vmem:[%s3473 + $0x48] sm:$0xff]
                %3494 = vst [vmem:[%s3474 + $0x48] sm:$0xff] %v3493
                %v3495 = vld [vmem:[%s3473 + $0x50] sm:$0xff]
                %3496 = vst [vmem:[%s3474 + $0x50] sm:$0xff] %v3495
                %v3497 = vld [vmem:[%s3473 + $0x58] sm:$0xff]
                %3498 = vst [vmem:[%s3474 + $0x58] sm:$0xff] %v3497
                %v3499 = vld [vmem:[%s3473 + $0x60] sm:$0xff]
                %3500 = vst [vmem:[%s3474 + $0x60] sm:$0xff] %v3499
                %v3501 = vld [vmem:[%s3473 + $0x68] sm:$0xff]
                %3502 = vst [vmem:[%s3474 + $0x68] sm:$0xff] %v3501
                %v3503 = vld [vmem:[%s3473 + $0x70] sm:$0xff]
                %3504 = vst [vmem:[%s3474 + $0x70] sm:$0xff] %v3503
                %v3505 = vld [vmem:[%s3473 + $0x78] sm:$0xff]
                %3506 = vst [vmem:[%s3474 + $0x78] sm:$0xff] %v3505
                %v3507 = vld [vmem:[%s3473 + $0x80] sm:$0xff]
                %3508 = vst [vmem:[%s3474 + $0x80] sm:$0xff] %v3507
                %v3509 = vld [vmem:[%s3473 + $0x88] sm:$0xff]
                %3510 = vst [vmem:[%s3474 + $0x88] sm:$0xff] %v3509
                %v3511 = vld [vmem:[%s3473 + $0x90] sm:$0xff]
                %3512 = vst [vmem:[%s3474 + $0x90] sm:$0xff] %v3511
                %v3513 = vld [vmem:[%s3473 + $0x98] sm:$0xff]
                %3514 = vst [vmem:[%s3474 + $0x98] sm:$0xff] %v3513
                %v3515 = vld [vmem:[%s3473 + $0xa0] sm:$0xff]
                %3516 = vst [vmem:[%s3474 + $0xa0] sm:$0xff] %v3515
                %v3517 = vld [vmem:[%s3473 + $0xa8] sm:$0xff]
                %3518 = vst [vmem:[%s3474 + $0xa8] sm:$0xff] %v3517
                %v3519 = vld [vmem:[%s3473 + $0xb0] sm:$0xff]
                %3520 = vst [vmem:[%s3474 + $0xb0] sm:$0xff] %v3519
                %v3521 = vld [vmem:[%s3473 + $0xb8] sm:$0xff]
                %3522 = vst [vmem:[%s3474 + $0xb8] sm:$0xff] %v3521
                %v3523 = vld [vmem:[%s3473 + $0xc0] sm:$0xff]
                %3524 = vst [vmem:[%s3474 + $0xc0] sm:$0xff] %v3523
                %v3525 = vld [vmem:[%s3473 + $0xc8] sm:$0xff]
                %3526 = vst [vmem:[%s3474 + $0xc8] sm:$0xff] %v3525
                %v3527 = vld [vmem:[%s3473 + $0xd0] sm:$0xff]
                %3528 = vst [vmem:[%s3474 + $0xd0] sm:$0xff] %v3527
                %v3529 = vld [vmem:[%s3473 + $0xd8] sm:$0xff]
                %3530 = vst [vmem:[%s3474 + $0xd8] sm:$0xff] %v3529
                %v3531 = vld [vmem:[%s3473 + $0xe0] sm:$0xff]
                %3532 = vst [vmem:[%s3474 + $0xe0] sm:$0xff] %v3531
                %v3533 = vld [vmem:[%s3473 + $0xe8] sm:$0xff]
                %3534 = vst [vmem:[%s3474 + $0xe8] sm:$0xff] %v3533
                %v3535 = vld [vmem:[%s3473 + $0xf0] sm:$0xff]
                %3536 = vst [vmem:[%s3474 + $0xf0] sm:$0xff] %v3535
                %v3537 = vld [vmem:[%s3473 + $0xf8] sm:$0xff]
                %3538 = vst [vmem:[%s3474 + $0xf8] sm:$0xff] %v3537
                %v3539 = vld [vmem:[%s3473 + $0x100] sm:$0xff]
                %3540 = vst [vmem:[%s3474 + $0x100] sm:$0xff] %v3539
                %v3541 = vld [vmem:[%s3473 + $0x108] sm:$0xff]
                %3542 = vst [vmem:[%s3474 + $0x108] sm:$0xff] %v3541
                %v3543 = vld [vmem:[%s3473 + $0x110] sm:$0xff]
                %3544 = vst [vmem:[%s3474 + $0x110] sm:$0xff] %v3543
                %v3545 = vld [vmem:[%s3473 + $0x118] sm:$0xff]
                %3546 = vst [vmem:[%s3474 + $0x118] sm:$0xff] %v3545
                %v3547 = vld [vmem:[%s3473 + $0x120] sm:$0xff]
                %3548 = vst [vmem:[%s3474 + $0x120] sm:$0xff] %v3547
                %v3549 = vld [vmem:[%s3473 + $0x128] sm:$0xff]
                %3550 = vst [vmem:[%s3474 + $0x128] sm:$0xff] %v3549
                %v3551 = vld [vmem:[%s3473 + $0x130] sm:$0xff]
                %3552 = vst [vmem:[%s3474 + $0x130] sm:$0xff] %v3551
                %v3553 = vld [vmem:[%s3473 + $0x138] sm:$0xff]
                %3554 = vst [vmem:[%s3474 + $0x138] sm:$0xff] %v3553
                %v3555 = vld [vmem:[%s3473 + $0x140] sm:$0xff]
                %3556 = vst [vmem:[%s3474 + $0x140] sm:$0xff] %v3555
                %v3557 = vld [vmem:[%s3473 + $0x148] sm:$0xff]
                %3558 = vst [vmem:[%s3474 + $0x148] sm:$0xff] %v3557
                %v3559 = vld [vmem:[%s3473 + $0x150] sm:$0xff]
                %3560 = vst [vmem:[%s3474 + $0x150] sm:$0xff] %v3559
                %v3561 = vld [vmem:[%s3473 + $0x158] sm:$0xff]
                %3562 = vst [vmem:[%s3474 + $0x158] sm:$0xff] %v3561
                %v3563 = vld [vmem:[%s3473 + $0x160] sm:$0xff]
                %3564 = vst [vmem:[%s3474 + $0x160] sm:$0xff] %v3563
                %v3565 = vld [vmem:[%s3473 + $0x168] sm:$0xff]
                %3566 = vst [vmem:[%s3474 + $0x168] sm:$0xff] %v3565
                %v3567 = vld [vmem:[%s3473 + $0x170] sm:$0xff]
                %3568 = vst [vmem:[%s3474 + $0x170] sm:$0xff] %v3567
                %v3569 = vld [vmem:[%s3473 + $0x178] sm:$0xff]
                %3570 = vst [vmem:[%s3474 + $0x178] sm:$0xff] %v3569
                %v3571 = vld [vmem:[%s3473 + $0x180] sm:$0xff]
                %3572 = vst [vmem:[%s3474 + $0x180] sm:$0xff] %v3571
                %v3573 = vld [vmem:[%s3473 + $0x188] sm:$0xff]
                %3574 = vst [vmem:[%s3474 + $0x188] sm:$0xff] %v3573
                %v3575 = vld [vmem:[%s3473 + $0x190] sm:$0xff]
                %3576 = vst [vmem:[%s3474 + $0x190] sm:$0xff] %v3575
                %v3577 = vld [vmem:[%s3473 + $0x198] sm:$0xff]
                %3578 = vst [vmem:[%s3474 + $0x198] sm:$0xff] %v3577
                %v3579 = vld [vmem:[%s3473 + $0x1a0] sm:$0xff]
                %3580 = vst [vmem:[%s3474 + $0x1a0] sm:$0xff] %v3579
                %v3581 = vld [vmem:[%s3473 + $0x1a8] sm:$0xff]
                %3582 = vst [vmem:[%s3474 + $0x1a8] sm:$0xff] %v3581
                %v3583 = vld [vmem:[%s3473 + $0x1b0] sm:$0xff]
                %3584 = vst [vmem:[%s3474 + $0x1b0] sm:$0xff] %v3583
                %v3585 = vld [vmem:[%s3473 + $0x1b8] sm:$0xff]
                %3586 = vst [vmem:[%s3474 + $0x1b8] sm:$0xff] %v3585
                %v3587 = vld [vmem:[%s3473 + $0x1c0] sm:$0xff]
                %3588 = vst [vmem:[%s3474 + $0x1c0] sm:$0xff] %v3587
                %v3589 = vld [vmem:[%s3473 + $0x1c8] sm:$0xff]
                %3590 = vst [vmem:[%s3474 + $0x1c8] sm:$0xff] %v3589
                %v3591 = vld [vmem:[%s3473 + $0x1d0] sm:$0xff]
                %3592 = vst [vmem:[%s3474 + $0x1d0] sm:$0xff] %v3591
                %v3593 = vld [vmem:[%s3473 + $0x1d8] sm:$0xff]
                %3594 = vst [vmem:[%s3474 + $0x1d8] sm:$0xff] %v3593
                %v3595 = vld [vmem:[%s3473 + $0x1e0] sm:$0xff]
                %3596 = vst [vmem:[%s3474 + $0x1e0] sm:$0xff] %v3595
                %v3597 = vld [vmem:[%s3473 + $0x1e8] sm:$0xff]
                %3598 = vst [vmem:[%s3474 + $0x1e8] sm:$0xff] %v3597
                %v3599 = vld [vmem:[%s3473 + $0x1f0] sm:$0xff]
                %3600 = vst [vmem:[%s3474 + $0x1f0] sm:$0xff] %v3599
                %v3601 = vld [vmem:[%s3473 + $0x1f8] sm:$0xff]
                %3602 = vst [vmem:[%s3474 + $0x1f8] sm:$0xff] %v3601
                %s3603 = sadd.s32 1, %s3472
                %p3604 = scmp.ge.s32.totalorder %s3603, %s3465
                %s3605 = scalar_select %p3604, 0, %s3603
                %s3606 = smul.u32 %s3605, 512
                %s3607 = smul.u32 %s3605, 512
                %s3608 = scalar_lea.vmem %s3445, %s3606 [#allocation3]
                %s3609 = scalar_lea.vmem %s3456, %s3607
              $region115: #{double_cnn_forward.3} parent=109 // loop_footer
                %s3469 = sadd.s32 %s3467, 1
              $region116: #{double_cnn_forward.3} parent=109 // loop_footer_branch
                %3466 = sbr.rel target = $region112
              $region117: #{double_cnn_forward.3} parent=109 // loop_exit
                _
              %s3610 = sshrl.u32 %s3452, 6
              %s3611 = sand.u32 %s3452, 63
              %s3612 = smul.u32 %s3610, 64
              %s3613 = smul.u32 8, %s3612
              %s3614 = scalar_lea.vmem %s3445, %s3613 [#allocation3]
              %s3615 = smul.u32 8, %s3612
              %s3616 = scalar_lea.vmem %s3456, %s3615
              // While loop
              $region118: #{double_cnn_forward.3} parent=109 // loop_pre_header
                _
              $region119: #{double_cnn_forward.3} parent=109 // loop_header
                %s3618 = sphi 0, %s3620
                %p3619 = scmp.ge.s32.totalorder %s3618, %s3611
                %s3623 = sphi 0, %s3630
                %s3624 = sphi %s3614, %s3633
                %s3625 = sphi %s3616, %s3634
              $region120: #{double_cnn_forward.3} parent=109 // loop_header_branch
                %3622 = sbr.rel (%p3619) target = $region124
              $region121: #{double_cnn_forward.3} parent=109 // loop_body
                %v3626 = vld [vmem:[%s3624] sm:$0xff]
                %3627 = vst [vmem:[%s3625] sm:$0xff] %v3626
                %s3628 = sadd.s32 1, %s3623
                %p3629 = scmp.ge.s32.totalorder %s3628, %s3611
                %s3630 = scalar_select %p3629, 0, %s3628
                %s3631 = smul.u32 %s3630, 8
                %s3632 = smul.u32 %s3630, 8
                %s3633 = scalar_lea.vmem %s3614, %s3631 [#allocation3]
                %s3634 = scalar_lea.vmem %s3616, %s3632
              $region122: #{double_cnn_forward.3} parent=109 // loop_footer
                %s3620 = sadd.s32 %s3618, 1
              $region123: #{double_cnn_forward.3} parent=109 // loop_footer_branch
                %3617 = sbr.rel target = $region119
              $region124: #{double_cnn_forward.3} parent=109 // loop_exit
                _
            $region110: #{double_cnn_forward.3} parent=101 // pred_fallthru
              _
          $region102: #{double_cnn_forward.3} parent=97 // pred_fallthru
            _
          %3809 = vnop
        $region98: #{double_cnn_forward.3} parent=89 // pred_fallthru
          _
      $region90: #{double_cnn_forward.3} parent=5 // pred_fallthru
        _
      %p3810 = scmp.le.s32.totalorder 2, %s9
      // Predicated region
      $region147: #{double_cnn_forward.3} parent=5 // pred_check
        %p3811 = pneg %p3810
      $region148: #{double_cnn_forward.3} parent=5 // pred_check_branch
        %3813 = sbr.rel (%p3811) target = $region150
      $region149: #{double_cnn_forward.3} parent=5 // pred_region
        %s3814 = ssub.s32 %s9, 2
        // Predicated region
        $region151: #{double_cnn_forward.3} parent=149 // pred_check
          %p3815 = pneg %p106
        $region152: #{double_cnn_forward.3} parent=149 // pred_check_branch
          %3817 = sbr.rel (%p3815) target = $region154
        $region153: #{double_cnn_forward.3} parent=149 // pred_region
          %s3818 = sand.u32 %s91, 1
          %s3819 = sand.u32 %s91, 1
          %s3820 = smul.addr %s3819, 512
          %s3821 = scalar_lea.vmem [#allocation3], %s3820
        $region154: #{double_cnn_forward.3} parent=149 // pred_fallthru
          _
      $region150: #{double_cnn_forward.3} parent=5 // pred_fallthru
        _
    $region6: #{double_cnn_forward.3} parent=1 // loop_footer
      %s13 = sadd.s32 1, %s9
    $region7: #{double_cnn_forward.3} parent=1 // loop_footer_branch
      %8 = sbr.rel target = $region3
    $region8: #{double_cnn_forward.3} parent=1 // loop_exit
      _

// kernel: double_cnn_forward.4
$region0: #{double_cnn_forward.4}
  #allocation0 [shape = 'u32[]', space=smem, size = 0x4, offset = 0x4, fixed_abs, tag = 'smem constant byte address 0x4 - core index']
  #allocation1 [shape = 'u32[144,128]{1,0:T(1,128)}', space=vmem, size = 0x12000, scoped, tag = 'internal scratch']
  %s0 = inlined_call_operand.vmem [shape: bf16[4,144,72], index: 0, kind: input, shape index: {}]
  %s1 = inlined_call_operand.vmem [shape: bf16[72,64], index: 1, kind: input, shape index: {}]
  %s2 = inlined_call_operand.vmem [shape: f32[1,64], index: 2, kind: input, shape index: {}]
  %s3 = inlined_call_operand.vmem [shape: f32[144,64], index: 3, kind: output, shape index: {}]
  %s4 = sld [smem:[#allocation0]]
  $region22: #{double_cnn_forward.4} parent=0
    _
  %s6 = ssub.s32 1, %s4
  %s7 = scalar_select 0, %s6, %s4
  // Predicated region
  $region2: #{double_cnn_forward.4} parent=0 // pred_check
    _
  $region3: #{double_cnn_forward.4} parent=0 // pred_check_branch
    %9 = sbr.rel (0) target = $region5
  $region4: #{double_cnn_forward.4} parent=0 // pred_region
    _
  $region5: #{double_cnn_forward.4} parent=0 // pred_fallthru
    _
  // Predicated region
  $region6: #{double_cnn_forward.4} parent=0 // pred_check
    _
  $region7: #{double_cnn_forward.4} parent=0 // pred_check_branch
    %11 = sbr.rel (0) target = $region9
  $region8: #{double_cnn_forward.4} parent=0 // pred_region
    _
  $region9: #{double_cnn_forward.4} parent=0 // pred_fallthru
    _
  // Predicated region
  $region10: #{double_cnn_forward.4} parent=0 // pred_check
    _
  $region11: #{double_cnn_forward.4} parent=0 // pred_check_branch
    %13 = sbr.rel (0) target = $region13
  $region12: #{double_cnn_forward.4} parent=0 // pred_region
    _
  $region13: #{double_cnn_forward.4} parent=0 // pred_fallthru
    _
  %v15 = vld [vmem:[%s1] sm:$0xf]
  %v16 = vld [vmem:[%s1 + $0x4] sm:$0xf]
  %v17 = vld [vmem:[%s1 + $0x8] sm:$0xf]
  %v18 = vld [vmem:[%s1 + $0xc] sm:$0xf]
  %v19 = vld [vmem:[%s1 + $0x10] sm:$0xf]
  %v20 = vld [vmem:[%s1 + $0x14] sm:$0xf]
  %v21 = vld [vmem:[%s1 + $0x18] sm:$0xf]
  %v22 = vld [vmem:[%s1 + $0x1c] sm:$0xf]
  %v23 = vld [vmem:[%s1 + $0x20] sm:$0xf]
  %v24 = vld [vmem:[%s0] sm:$0xf]
  %v25 = vld [vmem:[%s0 + $0x4] sm:$0xf]
  %v26 = vld [vmem:[%s0 + $0x8] sm:$0xf]
  %v27 = vld [vmem:[%s0 + $0xc] sm:$0xf]
  %v28 = vld [vmem:[%s0 + $0x10] sm:$0xf]
  %v29 = vld [vmem:[%s0 + $0x14] sm:$0xf]
  %v30 = vld [vmem:[%s0 + $0x18] sm:$0xf]
  %v31 = vld [vmem:[%s0 + $0x1c] sm:$0xf]
  %v32 = vld [vmem:[%s0 + $0x20] sm:$0xf]
  %v33 = vld [vmem:[%s0 + $0x24] sm:$0xf]
  %v34 = vld [vmem:[%s0 + $0x28] sm:$0xf]
  %v35 = vld [vmem:[%s0 + $0x2c] sm:$0xf]
  %v36 = vld [vmem:[%s0 + $0x30] sm:$0xf]
  %v37 = vld [vmem:[%s0 + $0x34] sm:$0xf]
  %v38 = vld [vmem:[%s0 + $0x38] sm:$0xf]
  %v39 = vld [vmem:[%s0 + $0x3c] sm:$0xf]
  %v40 = vld [vmem:[%s0 + $0x40] sm:$0xf]
  %v41 = vld [vmem:[%s0 + $0x44] sm:$0xf]
  %v60 = vunpack.c.l.b16 %v24
  %v61 = vunpack.c.l.b16 %v25
  %v62 = vunpack.c.l.b16 %v26
  %v63 = vunpack.c.l.b16 %v27
  %v64 = vunpack.c.l.b16 %v28
  %v65 = vunpack.c.l.b16 %v29
  %v66 = vunpack.c.l.b16 %v30
  %v67 = vunpack.c.l.b16 %v31
  %v68 = vunpack.c.l.b16 %v32
  %v69 = vunpack.c.l.b16 %v33
  %v70 = vunpack.c.l.b16 %v34
  %v71 = vunpack.c.l.b16 %v35
  %v72 = vunpack.c.l.b16 %v36
  %v73 = vunpack.c.l.b16 %v37
  %v74 = vunpack.c.l.b16 %v38
  %v75 = vunpack.c.l.b16 %v39
  %v76 = vunpack.c.l.b16 %v40
  %v77 = vunpack.c.l.b16 %v41
  %v78 = vpack.c.b16 %v61, %v60
  %v79 = vpack.c.b16 %v63, %v62
  %v80 = vpack.c.b16 %v65, %v64
  %v81 = vpack.c.b16 %v67, %v66
  %v82 = vpack.c.b16 %v69, %v68
  %v83 = vpack.c.b16 %v71, %v70
  %v84 = vpack.c.b16 %v73, %v72
  %v85 = vpack.c.b16 %v75, %v74
  %v86 = vpack.c.b16 %v77, %v76
  %v96 = vunpack.c.l.b16 %v15
  %v97 = vunpack.c.l.b16 %v16
  %v98 = vunpack.c.l.b16 %v17
  %v99 = vunpack.c.l.b16 %v18
  %v100 = vunpack.c.l.b16 %v19
  %v101 = vunpack.c.l.b16 %v20
  %v102 = vunpack.c.l.b16 %v21
  %v103 = vunpack.c.l.b16 %v22
  %v104 = vunpack.c.l.b16 %v23
  %v105 = vpack.c.b16 %v97, %v96
  %v106 = vpack.c.b16 %v99, %v98
  %v107 = vpack.c.b16 %v101, %v100
  %v108 = vpack.c.b16 %v103, %v102
  %v109 = vpack.c.b16 %v104, %v104
  %vm114 = vcmask 588800
  %v116 = vsel %vm114, %v78, 0
  %v119 = vsel %vm114, %v79, 0
  %v122 = vsel %vm114, %v80, 0
  %v125 = vsel %vm114, %v81, 0
  %v128 = vsel %vm114, %v82, 0
  %v131 = vsel %vm114, %v83, 0
  %v134 = vsel %vm114, %v84, 0
  %v137 = vsel %vm114, %v85, 0
  %v140 = vsel %vm114, %v86, 0
  %vm142 = vcmask 1043456
  %v144 = vsel %vm142, %v109, 0
  %146 = vmatprep.subr.bf16.mxu0 0
  %147 = vmatpush1.bf16.msra.mxu0 %v105
  %148 = vmatprep.subr.bf16.mxu0 0
  %149 = vmatpush1.bf16.msra.mxu0 %v106
  %150 = vmatprep.subr.bf16.mxu0 0
  %151 = vmatpush1.bf16.msra.mxu0 %v107
  %152 = vmatprep.subr.bf16.mxu0 0
  %153 = vmatpush1.bf16.msra.mxu0 %v108
  %154 = vmatprep.subr.bf16.mxu0 0
  %155 = vmatpush1.bf16.msra.mxu0 %v144
  %156 = vmatprep.subr.bf16.mxu0 0
  %157 = vmatpush1.bf16.msra.mxu0 0
  %158 = vmatprep.subr.bf16.mxu0 0
  %159 = vmatpush1.bf16.msra.mxu0 0
  %160 = vmatprep.subr.bf16.mxu0 0
  %161 = vmatpush1.bf16.msra.mxu0 0
  %162 = vmatprep.subr.bf16.mxu0 0
  %163 = vmatpush1.bf16.msra.mxu0 0
  %164 = vmatprep.subr.bf16.mxu0 0
  %165 = vmatpush1.bf16.msra.mxu0 0
  %166 = vmatprep.subr.bf16.mxu0 0
  %167 = vmatpush1.bf16.msra.mxu0 0
  %168 = vmatprep.subr.bf16.mxu0 0
  %169 = vmatpush1.bf16.msra.mxu0 0
  %170 = vmatprep.subr.bf16.mxu0 0
  %171 = vmatpush1.bf16.msra.mxu0 0
  %172 = vmatprep.subr.bf16.mxu0 0
  %173 = vmatpush1.bf16.msra.mxu0 0
  %174 = vmatprep.subr.bf16.mxu0 0
  %175 = vmatpush1.bf16.msra.mxu0 0
  %176 = vmatprep.subr.bf16.mxu0 0
  %177 = vmatpush1.bf16.msra.mxu0 0
  %178 = vmatprep.mubr.bf16.mxu0 0
  %179 = vmatmul.mubr.bf16.gmra.mrb[0].mxu0 %v116
  %v180 = vpop.f32.mrb[0].mxu0
  %v181 = vadd.f32 0.0, %v180
  %v182 = vpop.f32.mrb[0].mxu0
  %v183 = vpop.f32.mrb[0].mxu0
  %v184 = vadd.f32 0.0, %v183
  %v185 = vpop.f32.mrb[0].mxu0
  %186 = vmatprep.mubr.bf16.mxu0 0
  %187 = vmatmul.mubr.bf16.gmra.mrb[0].mxu0 %v119
  %v188 = vpop.f32.mrb[0].mxu0
  %v189 = vadd.f32 0.0, %v188
  %v190 = vpop.f32.mrb[0].mxu0
  %v191 = vpop.f32.mrb[0].mxu0
  %v192 = vadd.f32 0.0, %v191
  %v193 = vpop.f32.mrb[0].mxu0
  %194 = vmatprep.mubr.bf16.mxu0 0
  %195 = vmatmul.mubr.bf16.gmra.mrb[0].mxu0 %v122
  %v196 = vpop.f32.mrb[0].mxu0
  %v197 = vadd.f32 0.0, %v196
  %v198 = vpop.f32.mrb[0].mxu0
  %v199 = vpop.f32.mrb[0].mxu0
  %v200 = vadd.f32 0.0, %v199
  %v201 = vpop.f32.mrb[0].mxu0
  %202 = vmatprep.mubr.bf16.mxu0 0
  %203 = vmatmul.mubr.bf16.gmra.mrb[0].mxu0 %v125
  %v204 = vpop.f32.mrb[0].mxu0
  %v205 = vadd.f32 0.0, %v204
  %v206 = vpop.f32.mrb[0].mxu0
  %v207 = vpop.f32.mrb[0].mxu0
  %v208 = vadd.f32 0.0, %v207
  %v209 = vpop.f32.mrb[0].mxu0
  %210 = vmatprep.mubr.bf16.mxu0 0
  %211 = vmatmul.mubr.bf16.gmra.mrb[0].mxu0 %v128
  %v212 = vpop.f32.mrb[0].mxu0
  %v213 = vadd.f32 0.0, %v212
  %v214 = vpop.f32.mrb[0].mxu0
  %v215 = vpop.f32.mrb[0].mxu0
  %v216 = vadd.f32 0.0, %v215
  %v217 = vpop.f32.mrb[0].mxu0
  %218 = vmatprep.mubr.bf16.mxu0 0
  %219 = vmatmul.mubr.bf16.gmra.mrb[0].mxu0 %v131
  %v220 = vpop.f32.mrb[0].mxu0
  %v221 = vadd.f32 0.0, %v220
  %v222 = vpop.f32.mrb[0].mxu0
  %v223 = vpop.f32.mrb[0].mxu0
  %v224 = vadd.f32 0.0, %v223
  %v225 = vpop.f32.mrb[0].mxu0
  %226 = vmatprep.mubr.bf16.mxu0 0
  %227 = vmatmul.mubr.bf16.gmra.mrb[0].mxu0 %v134
  %v228 = vpop.f32.mrb[0].mxu0
  %v229 = vadd.f32 0.0, %v228
  %v230 = vpop.f32.mrb[0].mxu0
  %v231 = vpop.f32.mrb[0].mxu0
  %v232 = vadd.f32 0.0, %v231
  %v233 = vpop.f32.mrb[0].mxu0
  %234 = vmatprep.mubr.bf16.mxu0 0
  %235 = vmatmul.mubr.bf16.gmra.mrb[0].mxu0 %v137
  %v236 = vpop.f32.mrb[0].mxu0
  %v237 = vadd.f32 0.0, %v236
  %v238 = vpop.f32.mrb[0].mxu0
  %v239 = vpop.f32.mrb[0].mxu0
  %v240 = vadd.f32 0.0, %v239
  %v241 = vpop.f32.mrb[0].mxu0
  %242 = vmatprep.mubr.bf16.mxu0 0
  %243 = vmatmul.mubr.bf16.gmra.mrb[0].mxu0 %v140
  %v244 = vpop.f32.mrb[0].mxu0
  %v245 = vadd.f32 0.0, %v244
  %v246 = vpop.f32.mrb[0].mxu0
  %v247 = vpop.f32.mrb[0].mxu0
  %v248 = vadd.f32 0.0, %v247
  %v249 = vpop.f32.mrb[0].mxu0
  %250 = vdwg.mxu0
  %s251 = scalar_lea.vmem %s0, 72
  %v252 = vld [vmem:[%s251] sm:$0xf]
  %v253 = vld [vmem:[%s251 + $0x4] sm:$0xf]
  %v254 = vld [vmem:[%s251 + $0x8] sm:$0xf]
  %v255 = vld [vmem:[%s251 + $0xc] sm:$0xf]
  %v256 = vld [vmem:[%s251 + $0x10] sm:$0xf]
  %v257 = vld [vmem:[%s251 + $0x14] sm:$0xf]
  %v258 = vld [vmem:[%s251 + $0x18] sm:$0xf]
  %v259 = vld [vmem:[%s251 + $0x1c] sm:$0xf]
  %v260 = vld [vmem:[%s251 + $0x20] sm:$0xf]
  %v261 = vld [vmem:[%s251 + $0x24] sm:$0xf]
  %v262 = vld [vmem:[%s251 + $0x28] sm:$0xf]
  %v263 = vld [vmem:[%s251 + $0x2c] sm:$0xf]
  %v264 = vld [vmem:[%s251 + $0x30] sm:$0xf]
  %v265 = vld [vmem:[%s251 + $0x34] sm:$0xf]
  %v266 = vld [vmem:[%s251 + $0x38] sm:$0xf]
  %v267 = vld [vmem:[%s251 + $0x3c] sm:$0xf]
  %v268 = vld [vmem:[%s251 + $0x40] sm:$0xf]
  %v269 = vld [vmem:[%s251 + $0x44] sm:$0xf]
  %v288 = vunpack.c.l.b16 %v252
  %v289 = vunpack.c.l.b16 %v253
  %v290 = vunpack.c.l.b16 %v254
  %v291 = vunpack.c.l.b16 %v255
  %v292 = vunpack.c.l.b16 %v256
  %v293 = vunpack.c.l.b16 %v257
  %v294 = vunpack.c.l.b16 %v258
  %v295 = vunpack.c.l.b16 %v259
  %v296 = vunpack.c.l.b16 %v260
  %v297 = vunpack.c.l.b16 %v261
  %v298 = vunpack.c.l.b16 %v262
  %v299 = vunpack.c.l.b16 %v263
  %v300 = vunpack.c.l.b16 %v264
  %v301 = vunpack.c.l.b16 %v265
  %v302 = vunpack.c.l.b16 %v266
  %v303 = vunpack.c.l.b16 %v267
  %v304 = vunpack.c.l.b16 %v268
  %v305 = vunpack.c.l.b16 %v269
  %v306 = vpack.c.b16 %v289, %v288
  %v307 = vpack.c.b16 %v291, %v290
  %v308 = vpack.c.b16 %v293, %v292
  %v309 = vpack.c.b16 %v295, %v294
  %v310 = vpack.c.b16 %v297, %v296
  %v311 = vpack.c.b16 %v299, %v298
  %v312 = vpack.c.b16 %v301, %v300
  %v313 = vpack.c.b16 %v303, %v302
  %v314 = vpack.c.b16 %v305, %v304
  %v316 = vsel %vm114, %v306, 0
  %v319 = vsel %vm114, %v307, 0
  %v322 = vsel %vm114, %v308, 0
  %v325 = vsel %vm114, %v309, 0
  %v328 = vsel %vm114, %v310, 0
  %v331 = vsel %vm114, %v311, 0
  %v334 = vsel %vm114, %v312, 0
  %v337 = vsel %vm114, %v313, 0
  %v340 = vsel %vm114, %v314, 0
  %342 = vmatprep.subr.bf16.mxu0 0
  %343 = vmatpush1.bf16.msra.mxu0 %v105
  %344 = vmatprep.subr.bf16.mxu0 0
  %345 = vmatpush1.bf16.msra.mxu0 %v106
  %346 = vmatprep.subr.bf16.mxu0 0
  %347 = vmatpush1.bf16.msra.mxu0 %v107
  %348 = vmatprep.subr.bf16.mxu0 0
  %349 = vmatpush1.bf16.msra.mxu0 %v108
  %350 = vmatprep.subr.bf16.mxu0 0
  %351 = vmatpush1.bf16.msra.mxu0 %v144
  %352 = vmatprep.subr.bf16.mxu0 0
  %353 = vmatpush1.bf16.msra.mxu0 0
  %354 = vmatprep.subr.bf16.mxu0 0
  %355 = vmatpush1.bf16.msra.mxu0 0
  %356 = vmatprep.subr.bf16.mxu0 0
  %357 = vmatpush1.bf16.msra.mxu0 0
  %358 = vmatprep.subr.bf16.mxu0 0
  %359 = vmatpush1.bf16.msra.mxu0 0
  %360 = vmatprep.subr.bf16.mxu0 0
  %361 = vmatpush1.bf16.msra.mxu0 0
  %362 = vmatprep.subr.bf16.mxu0 0
  %363 = vmatpush1.bf16.msra.mxu0 0
  %364 = vmatprep.subr.bf16.mxu0 0
  %365 = vmatpush1.bf16.msra.mxu0 0
  %366 = vmatprep.subr.bf16.mxu0 0
  %367 = vmatpush1.bf16.msra.mxu0 0
  %368 = vmatprep.subr.bf16.mxu0 0
  %369 = vmatpush1.bf16.msra.mxu0 0
  %370 = vmatprep.subr.bf16.mxu0 0
  %371 = vmatpush1.bf16.msra.mxu0 0
  %372 = vmatprep.subr.bf16.mxu0 0
  %373 = vmatpush1.bf16.msra.mxu0 0
  %374 = vmatprep.mubr.bf16.mxu0 0
  %375 = vmatmul.mubr.bf16.gmra.mrb[0].mxu0 %v316
  %v376 = vpop.f32.mrb[0].mxu0
  %v377 = vadd.f32 0.0, %v376
  %v378 = vpop.f32.mrb[0].mxu0
  %v379 = vpop.f32.mrb[0].mxu0
  %v380 = vadd.f32 0.0, %v379
  %v381 = vpop.f32.mrb[0].mxu0
  %382 = vmatprep.mubr.bf16.mxu0 0
  %383 = vmatmul.mubr.bf16.gmra.mrb[0].mxu0 %v319
  %v384 = vpop.f32.mrb[0].mxu0
  %v385 = vadd.f32 0.0, %v384
  %v386 = vpop.f32.mrb[0].mxu0
  %v387 = vpop.f32.mrb[0].mxu0
  %v388 = vadd.f32 0.0, %v387
  %v389 = vpop.f32.mrb[0].mxu0
  %390 = vmatprep.mubr.bf16.mxu0 0
  %391 = vmatmul.mubr.bf16.gmra.mrb[0].mxu0 %v322
  %v392 = vpop.f32.mrb[0].mxu0
  %v393 = vadd.f32 0.0, %v392
  %v394 = vpop.f32.mrb[0].mxu0
  %v395 = vpop.f32.mrb[0].mxu0
  %v396 = vadd.f32 0.0, %v395
  %v397 = vpop.f32.mrb[0].mxu0
  %398 = vmatprep.mubr.bf16.mxu0 0
  %399 = vmatmul.mubr.bf16.gmra.mrb[0].mxu0 %v325
  %v400 = vpop.f32.mrb[0].mxu0
  %v401 = vadd.f32 0.0, %v400
  %v402 = vpop.f32.mrb[0].mxu0
  %v403 = vpop.f32.mrb[0].mxu0
  %v404 = vadd.f32 0.0, %v403
  %v405 = vpop.f32.mrb[0].mxu0
  %406 = vmatprep.mubr.bf16.mxu0 0
  %407 = vmatmul.mubr.bf16.gmra.mrb[0].mxu0 %v328
  %v408 = vpop.f32.mrb[0].mxu0
  %v409 = vadd.f32 0.0, %v408
  %v410 = vpop.f32.mrb[0].mxu0
  %v411 = vpop.f32.mrb[0].mxu0
  %v412 = vadd.f32 0.0, %v411
  %v413 = vpop.f32.mrb[0].mxu0
  %414 = vmatprep.mubr.bf16.mxu0 0
  %415 = vmatmul.mubr.bf16.gmra.mrb[0].mxu0 %v331
  %v416 = vpop.f32.mrb[0].mxu0
  %v417 = vadd.f32 0.0, %v416
  %v418 = vpop.f32.mrb[0].mxu0
  %v419 = vpop.f32.mrb[0].mxu0
  %v420 = vadd.f32 0.0, %v419
  %v421 = vpop.f32.mrb[0].mxu0
  %422 = vmatprep.mubr.bf16.mxu0 0
  %423 = vmatmul.mubr.bf16.gmra.mrb[0].mxu0 %v334
  %v424 = vpop.f32.mrb[0].mxu0
  %v425 = vadd.f32 0.0, %v424
  %v426 = vpop.f32.mrb[0].mxu0
  %v427 = vpop.f32.mrb[0].mxu0
  %v428 = vadd.f32 0.0, %v427
  %v429 = vpop.f32.mrb[0].mxu0
  %430 = vmatprep.mubr.bf16.mxu0 0
  %431 = vmatmul.mubr.bf16.gmra.mrb[0].mxu0 %v337
  %v432 = vpop.f32.mrb[0].mxu0
  %v433 = vadd.f32 0.0, %v432
  %v434 = vpop.f32.mrb[0].mxu0
  %v435 = vpop.f32.mrb[0].mxu0
  %v436 = vadd.f32 0.0, %v435
  %v437 = vpop.f32.mrb[0].mxu0
  %438 = vmatprep.mubr.bf16.mxu0 0
  %439 = vmatmul.mubr.bf16.gmra.mrb[0].mxu0 %v340
  %v440 = vpop.f32.mrb[0].mxu0
  %v441 = vadd.f32 0.0, %v440
  %v442 = vpop.f32.mrb[0].mxu0
  %v443 = vpop.f32.mrb[0].mxu0
  %v444 = vadd.f32 0.0, %v443
  %v445 = vpop.f32.mrb[0].mxu0
  %446 = vdwg.mxu0
  %v447 = vmax.f32 %v181, %v377
  %v448 = vmax.f32 %v184, %v380
  %v449 = vmax.f32 %v189, %v385
  %v450 = vmax.f32 %v192, %v388
  %v451 = vmax.f32 %v197, %v393
  %v452 = vmax.f32 %v200, %v396
  %v453 = vmax.f32 %v205, %v401
  %v454 = vmax.f32 %v208, %v404
  %v455 = vmax.f32 %v213, %v409
  %v456 = vmax.f32 %v216, %v412
  %v457 = vmax.f32 %v221, %v417
  %v458 = vmax.f32 %v224, %v420
  %v459 = vmax.f32 %v229, %v425
  %v460 = vmax.f32 %v232, %v428
  %v461 = vmax.f32 %v237, %v433
  %v462 = vmax.f32 %v240, %v436
  %v463 = vmax.f32 %v245, %v441
  %v464 = vmax.f32 %v248, %v444
  %s465 = scalar_lea.vmem %s0, 144
  %v466 = vld [vmem:[%s465] sm:$0xf]
  %v467 = vld [vmem:[%s465 + $0x4] sm:$0xf]
  %v468 = vld [vmem:[%s465 + $0x8] sm:$0xf]
  %v469 = vld [vmem:[%s465 + $0xc] sm:$0xf]
  %v470 = vld [vmem:[%s465 + $0x10] sm:$0xf]
  %v471 = vld [vmem:[%s465 + $0x14] sm:$0xf]
  %v472 = vld [vmem:[%s465 + $0x18] sm:$0xf]
  %v473 = vld [vmem:[%s465 + $0x1c] sm:$0xf]
  %v474 = vld [vmem:[%s465 + $0x20] sm:$0xf]
  %v475 = vld [vmem:[%s465 + $0x24] sm:$0xf]
  %v476 = vld [vmem:[%s465 + $0x28] sm:$0xf]
  %v477 = vld [vmem:[%s465 + $0x2c] sm:$0xf]
  %v478 = vld [vmem:[%s465 + $0x30] sm:$0xf]
  %v479 = vld [vmem:[%s465 + $0x34] sm:$0xf]
  %v480 = vld [vmem:[%s465 + $0x38] sm:$0xf]
  %v481 = vld [vmem:[%s465 + $0x3c] sm:$0xf]
  %v482 = vld [vmem:[%s465 + $0x40] sm:$0xf]
  %v483 = vld [vmem:[%s465 + $0x44] sm:$0xf]
  %v502 = vunpack.c.l.b16 %v466
  %v503 = vunpack.c.l.b16 %v467
  %v504 = vunpack.c.l.b16 %v468
  %v505 = vunpack.c.l.b16 %v469
  %v506 = vunpack.c.l.b16 %v470
  %v507 = vunpack.c.l.b16 %v471
  %v508 = vunpack.c.l.b16 %v472
  %v509 = vunpack.c.l.b16 %v473
  %v510 = vunpack.c.l.b16 %v474
  %v511 = vunpack.c.l.b16 %v475
  %v512 = vunpack.c.l.b16 %v476
  %v513 = vunpack.c.l.b16 %v477
  %v514 = vunpack.c.l.b16 %v478
  %v515 = vunpack.c.l.b16 %v479
  %v516 = vunpack.c.l.b16 %v480
  %v517 = vunpack.c.l.b16 %v481
  %v518 = vunpack.c.l.b16 %v482
  %v519 = vunpack.c.l.b16 %v483
  %v520 = vpack.c.b16 %v503, %v502
  %v521 = vpack.c.b16 %v505, %v504
  %v522 = vpack.c.b16 %v507, %v506
  %v523 = vpack.c.b16 %v509, %v508
  %v524 = vpack.c.b16 %v511, %v510
  %v525 = vpack.c.b16 %v513, %v512
  %v526 = vpack.c.b16 %v515, %v514
  %v527 = vpack.c.b16 %v517, %v516
  %v528 = vpack.c.b16 %v519, %v518
  %v530 = vsel %vm114, %v520, 0
  %v533 = vsel %vm114, %v521, 0
  %v536 = vsel %vm114, %v522, 0
  %v539 = vsel %vm114, %v523, 0
  %v542 = vsel %vm114, %v524, 0
  %v545 = vsel %vm114, %v525, 0
  %v548 = vsel %vm114, %v526, 0
  %v551 = vsel %vm114, %v527, 0
  %v554 = vsel %vm114, %v528, 0
  %556 = vmatprep.subr.bf16.mxu0 0
  %557 = vmatpush1.bf16.msra.mxu0 %v105
  %558 = vmatprep.subr.bf16.mxu0 0
  %559 = vmatpush1.bf16.msra.mxu0 %v106
  %560 = vmatprep.subr.bf16.mxu0 0
  %561 = vmatpush1.bf16.msra.mxu0 %v107
  %562 = vmatprep.subr.bf16.mxu0 0
  %563 = vmatpush1.bf16.msra.mxu0 %v108
  %564 = vmatprep.subr.bf16.mxu0 0
  %565 = vmatpush1.bf16.msra.mxu0 %v144
  %566 = vmatprep.subr.bf16.mxu0 0
  %567 = vmatpush1.bf16.msra.mxu0 0
  %568 = vmatprep.subr.bf16.mxu0 0
  %569 = vmatpush1.bf16.msra.mxu0 0
  %570 = vmatprep.subr.bf16.mxu0 0
  %571 = vmatpush1.bf16.msra.mxu0 0
  %572 = vmatprep.subr.bf16.mxu0 0
  %573 = vmatpush1.bf16.msra.mxu0 0
  %574 = vmatprep.subr.bf16.mxu0 0
  %575 = vmatpush1.bf16.msra.mxu0 0
  %576 = vmatprep.subr.bf16.mxu0 0
  %577 = vmatpush1.bf16.msra.mxu0 0
  %578 = vmatprep.subr.bf16.mxu0 0
  %579 = vmatpush1.bf16.msra.mxu0 0
  %580 = vmatprep.subr.bf16.mxu0 0
  %581 = vmatpush1.bf16.msra.mxu0 0
  %582 = vmatprep.subr.bf16.mxu0 0
  %583 = vmatpush1.bf16.msra.mxu0 0
  %584 = vmatprep.subr.bf16.mxu0 0
  %585 = vmatpush1.bf16.msra.mxu0 0
  %586 = vmatprep.subr.bf16.mxu0 0
  %587 = vmatpush1.bf16.msra.mxu0 0
  %588 = vmatprep.mubr.bf16.mxu0 0
  %589 = vmatmul.mubr.bf16.gmra.mrb[0].mxu0 %v530
  %v590 = vpop.f32.mrb[0].mxu0
  %v591 = vadd.f32 0.0, %v590
  %v592 = vpop.f32.mrb[0].mxu0
  %v593 = vpop.f32.mrb[0].mxu0
  %v594 = vadd.f32 0.0, %v593
  %v595 = vpop.f32.mrb[0].mxu0
  %596 = vmatprep.mubr.bf16.mxu0 0
  %597 = vmatmul.mubr.bf16.gmra.mrb[0].mxu0 %v533
  %v598 = vpop.f32.mrb[0].mxu0
  %v599 = vadd.f32 0.0, %v598
  %v600 = vpop.f32.mrb[0].mxu0
  %v601 = vpop.f32.mrb[0].mxu0
  %v602 = vadd.f32 0.0, %v601
  %v603 = vpop.f32.mrb[0].mxu0
  %604 = vmatprep.mubr.bf16.mxu0 0
  %605 = vmatmul.mubr.bf16.gmra.mrb[0].mxu0 %v536
  %v606 = vpop.f32.mrb[0].mxu0
  %v607 = vadd.f32 0.0, %v606
  %v608 = vpop.f32.mrb[0].mxu0
  %v609 = vpop.f32.mrb[0].mxu0
  %v610 = vadd.f32 0.0, %v609
  %v611 = vpop.f32.mrb[0].mxu0
  %612 = vmatprep.mubr.bf16.mxu0 0
  %613 = vmatmul.mubr.bf16.gmra.mrb[0].mxu0 %v539
  %v614 = vpop.f32.mrb[0].mxu0
  %v615 = vadd.f32 0.0, %v614
  %v616 = vpop.f32.mrb[0].mxu0
  %v617 = vpop.f32.mrb[0].mxu0
  %v618 = vadd.f32 0.0, %v617
  %v619 = vpop.f32.mrb[0].mxu0
  %620 = vmatprep.mubr.bf16.mxu0 0
  %621 = vmatmul.mubr.bf16.gmra.mrb[0].mxu0 %v542
  %v622 = vpop.f32.mrb[0].mxu0
  %v623 = vadd.f32 0.0, %v622
  %v624 = vpop.f32.mrb[0].mxu0
  %v625 = vpop.f32.mrb[0].mxu0
  %v626 = vadd.f32 0.0, %v625
  %v627 = vpop.f32.mrb[0].mxu0
  %628 = vmatprep.mubr.bf16.mxu0 0
  %629 = vmatmul.mubr.bf16.gmra.mrb[0].mxu0 %v545
  %v630 = vpop.f32.mrb[0].mxu0
  %v631 = vadd.f32 0.0, %v630
  %v632 = vpop.f32.mrb[0].mxu0
  %v633 = vpop.f32.mrb[0].mxu0
  %v634 = vadd.f32 0.0, %v633
  %v635 = vpop.f32.mrb[0].mxu0
  %636 = vmatprep.mubr.bf16.mxu0 0
  %637 = vmatmul.mubr.bf16.gmra.mrb[0].mxu0 %v548
  %v638 = vpop.f32.mrb[0].mxu0
  %v639 = vadd.f32 0.0, %v638
  %v640 = vpop.f32.mrb[0].mxu0
  %v641 = vpop.f32.mrb[0].mxu0
  %v642 = vadd.f32 0.0, %v641
  %v643 = vpop.f32.mrb[0].mxu0
  %644 = vmatprep.mubr.bf16.mxu0 0
  %645 = vmatmul.mubr.bf16.gmra.mrb[0].mxu0 %v551
  %v646 = vpop.f32.mrb[0].mxu0
  %v647 = vadd.f32 0.0, %v646
  %v648 = vpop.f32.mrb[0].mxu0
  %v649 = vpop.f32.mrb[0].mxu0
  %v650 = vadd.f32 0.0, %v649
  %v651 = vpop.f32.mrb[0].mxu0
  %652 = vmatprep.mubr.bf16.mxu0 0
  %653 = vmatmul.mubr.bf16.gmra.mrb[0].mxu0 %v554
  %v654 = vpop.f32.mrb[0].mxu0
  %v655 = vadd.f32 0.0, %v654
  %v656 = vpop.f32.mrb[0].mxu0
  %v657 = vpop.f32.mrb[0].mxu0
  %v658 = vadd.f32 0.0, %v657
  %v659 = vpop.f32.mrb[0].mxu0
  %660 = vdwg.mxu0
  %v661 = vmax.f32 %v447, %v591
  %v662 = vmax.f32 %v448, %v594
  %v663 = vmax.f32 %v449, %v599
  %v664 = vmax.f32 %v450, %v602
  %v665 = vmax.f32 %v451, %v607
  %v666 = vmax.f32 %v452, %v610
  %v667 = vmax.f32 %v453, %v615
  %v668 = vmax.f32 %v454, %v618
  %v669 = vmax.f32 %v455, %v623
  %v670 = vmax.f32 %v456, %v626
  %v671 = vmax.f32 %v457, %v631
  %v672 = vmax.f32 %v458, %v634
  %v673 = vmax.f32 %v459, %v639
  %v674 = vmax.f32 %v460, %v642
  %v675 = vmax.f32 %v461, %v647
  %v676 = vmax.f32 %v462, %v650
  %v677 = vmax.f32 %v463, %v655
  %v678 = vmax.f32 %v464, %v658
  %s679 = scalar_lea.vmem %s0, 216
  %v680 = vld [vmem:[%s679] sm:$0xf]
  %v681 = vld [vmem:[%s679 + $0x4] sm:$0xf]
  %v682 = vld [vmem:[%s679 + $0x8] sm:$0xf]
  %v683 = vld [vmem:[%s679 + $0xc] sm:$0xf]
  %v684 = vld [vmem:[%s679 + $0x10] sm:$0xf]
  %v685 = vld [vmem:[%s679 + $0x14] sm:$0xf]
  %v686 = vld [vmem:[%s679 + $0x18] sm:$0xf]
  %v687 = vld [vmem:[%s679 + $0x1c] sm:$0xf]
  %v688 = vld [vmem:[%s679 + $0x20] sm:$0xf]
  %v689 = vld [vmem:[%s679 + $0x24] sm:$0xf]
  %v690 = vld [vmem:[%s679 + $0x28] sm:$0xf]
  %v691 = vld [vmem:[%s679 + $0x2c] sm:$0xf]
  %v692 = vld [vmem:[%s679 + $0x30] sm:$0xf]
  %v693 = vld [vmem:[%s679 + $0x34] sm:$0xf]
  %v694 = vld [vmem:[%s679 + $0x38] sm:$0xf]
  %v695 = vld [vmem:[%s679 + $0x3c] sm:$0xf]
  %v696 = vld [vmem:[%s679 + $0x40] sm:$0xf]
  %v697 = vld [vmem:[%s679 + $0x44] sm:$0xf]
  %v716 = vunpack.c.l.b16 %v680
  %v717 = vunpack.c.l.b16 %v681
  %v718 = vunpack.c.l.b16 %v682
  %v719 = vunpack.c.l.b16 %v683
  %v720 = vunpack.c.l.b16 %v684
  %v721 = vunpack.c.l.b16 %v685
  %v722 = vunpack.c.l.b16 %v686
  %v723 = vunpack.c.l.b16 %v687
  %v724 = vunpack.c.l.b16 %v688
  %v725 = vunpack.c.l.b16 %v689
  %v726 = vunpack.c.l.b16 %v690
  %v727 = vunpack.c.l.b16 %v691
  %v728 = vunpack.c.l.b16 %v692
  %v729 = vunpack.c.l.b16 %v693
  %v730 = vunpack.c.l.b16 %v694
  %v731 = vunpack.c.l.b16 %v695
  %v732 = vunpack.c.l.b16 %v696
  %v733 = vunpack.c.l.b16 %v697
  %v734 = vpack.c.b16 %v717, %v716
  %v735 = vpack.c.b16 %v719, %v718
  %v736 = vpack.c.b16 %v721, %v720
  %v737 = vpack.c.b16 %v723, %v722
  %v738 = vpack.c.b16 %v725, %v724
  %v739 = vpack.c.b16 %v727, %v726
  %v740 = vpack.c.b16 %v729, %v728
  %v741 = vpack.c.b16 %v731, %v730
  %v742 = vpack.c.b16 %v733, %v732
  %v744 = vsel %vm114, %v734, 0
  %v747 = vsel %vm114, %v735, 0
  %v750 = vsel %vm114, %v736, 0
  %v753 = vsel %vm114, %v737, 0
  %v756 = vsel %vm114, %v738, 0
  %v759 = vsel %vm114, %v739, 0
  %v762 = vsel %vm114, %v740, 0
  %v765 = vsel %vm114, %v741, 0
  %v768 = vsel %vm114, %v742, 0
  %770 = vmatprep.subr.bf16.mxu0 0
  %771 = vmatpush1.bf16.msra.mxu0 %v105
  %772 = vmatprep.subr.bf16.mxu0 0
  %773 = vmatpush1.bf16.msra.mxu0 %v106
  %774 = vmatprep.subr.bf16.mxu0 0
  %775 = vmatpush1.bf16.msra.mxu0 %v107
  %776 = vmatprep.subr.bf16.mxu0 0
  %777 = vmatpush1.bf16.msra.mxu0 %v108
  %778 = vmatprep.subr.bf16.mxu0 0
  %779 = vmatpush1.bf16.msra.mxu0 %v144
  %780 = vmatprep.subr.bf16.mxu0 0
  %781 = vmatpush1.bf16.msra.mxu0 0
  %782 = vmatprep.subr.bf16.mxu0 0
  %783 = vmatpush1.bf16.msra.mxu0 0
  %784 = vmatprep.subr.bf16.mxu0 0
  %785 = vmatpush1.bf16.msra.mxu0 0
  %786 = vmatprep.subr.bf16.mxu0 0
  %787 = vmatpush1.bf16.msra.mxu0 0
  %788 = vmatprep.subr.bf16.mxu0 0
  %789 = vmatpush1.bf16.msra.mxu0 0
  %790 = vmatprep.subr.bf16.mxu0 0
  %791 = vmatpush1.bf16.msra.mxu0 0
  %792 = vmatprep.subr.bf16.mxu0 0
  %793 = vmatpush1.bf16.msra.mxu0 0
  %794 = vmatprep.subr.bf16.mxu0 0
  %795 = vmatpush1.bf16.msra.mxu0 0
  %796 = vmatprep.subr.bf16.mxu0 0
  %797 = vmatpush1.bf16.msra.mxu0 0
  %798 = vmatprep.subr.bf16.mxu0 0
  %799 = vmatpush1.bf16.msra.mxu0 0
  %800 = vmatprep.subr.bf16.mxu0 0
  %801 = vmatpush1.bf16.msra.mxu0 0
  %802 = vmatprep.mubr.bf16.mxu0 0
  %803 = vmatmul.mubr.bf16.gmra.mrb[0].mxu0 %v744
  %v804 = vpop.f32.mrb[0].mxu0
  %v805 = vadd.f32 0.0, %v804
  %v806 = vpop.f32.mrb[0].mxu0
  %v807 = vpop.f32.mrb[0].mxu0
  %v808 = vadd.f32 0.0, %v807
  %v809 = vpop.f32.mrb[0].mxu0
  %810 = vmatprep.mubr.bf16.mxu0 0
  %811 = vmatmul.mubr.bf16.gmra.mrb[0].mxu0 %v747
  %v812 = vpop.f32.mrb[0].mxu0
  %v813 = vadd.f32 0.0, %v812
  %v814 = vpop.f32.mrb[0].mxu0
  %v815 = vpop.f32.mrb[0].mxu0
  %v816 = vadd.f32 0.0, %v815
  %v817 = vpop.f32.mrb[0].mxu0
  %818 = vmatprep.mubr.bf16.mxu0 0
  %819 = vmatmul.mubr.bf16.gmra.mrb[0].mxu0 %v750
  %v820 = vpop.f32.mrb[0].mxu0
  %v821 = vadd.f32 0.0, %v820
  %v822 = vpop.f32.mrb[0].mxu0
  %v823 = vpop.f32.mrb[0].mxu0
  %v824 = vadd.f32 0.0, %v823
  %v825 = vpop.f32.mrb[0].mxu0
  %826 = vmatprep.mubr.bf16.mxu0 0
  %827 = vmatmul.mubr.bf16.gmra.mrb[0].mxu0 %v753
  %v828 = vpop.f32.mrb[0].mxu0
  %v829 = vadd.f32 0.0, %v828
  %v830 = vpop.f32.mrb[0].mxu0
  %v831 = vpop.f32.mrb[0].mxu0
  %v832 = vadd.f32 0.0, %v831
  %v833 = vpop.f32.mrb[0].mxu0
  %834 = vmatprep.mubr.bf16.mxu0 0
  %835 = vmatmul.mubr.bf16.gmra.mrb[0].mxu0 %v756
  %v836 = vpop.f32.mrb[0].mxu0
  %v837 = vadd.f32 0.0, %v836
  %v838 = vpop.f32.mrb[0].mxu0
  %v839 = vpop.f32.mrb[0].mxu0
  %v840 = vadd.f32 0.0, %v839
  %v841 = vpop.f32.mrb[0].mxu0
  %842 = vmatprep.mubr.bf16.mxu0 0
  %843 = vmatmul.mubr.bf16.gmra.mrb[0].mxu0 %v759
  %v844 = vpop.f32.mrb[0].mxu0
  %v845 = vadd.f32 0.0, %v844
  %v846 = vpop.f32.mrb[0].mxu0
  %v847 = vpop.f32.mrb[0].mxu0
  %v848 = vadd.f32 0.0, %v847
  %v849 = vpop.f32.mrb[0].mxu0
  %850 = vmatprep.mubr.bf16.mxu0 0
  %851 = vmatmul.mubr.bf16.gmra.mrb[0].mxu0 %v762
  %v852 = vpop.f32.mrb[0].mxu0
  %v853 = vadd.f32 0.0, %v852
  %v854 = vpop.f32.mrb[0].mxu0
  %v855 = vpop.f32.mrb[0].mxu0
  %v856 = vadd.f32 0.0, %v855
  %v857 = vpop.f32.mrb[0].mxu0
  %858 = vmatprep.mubr.bf16.mxu0 0
  %859 = vmatmul.mubr.bf16.gmra.mrb[0].mxu0 %v765
  %v860 = vpop.f32.mrb[0].mxu0
  %v861 = vadd.f32 0.0, %v860
  %v862 = vpop.f32.mrb[0].mxu0
  %v863 = vpop.f32.mrb[0].mxu0
  %v864 = vadd.f32 0.0, %v863
  %v865 = vpop.f32.mrb[0].mxu0
  %866 = vmatprep.mubr.bf16.mxu0 0
  %867 = vmatmul.mubr.bf16.gmra.mrb[0].mxu0 %v768
  %v868 = vpop.f32.mrb[0].mxu0
  %v869 = vadd.f32 0.0, %v868
  %v870 = vpop.f32.mrb[0].mxu0
  %v871 = vpop.f32.mrb[0].mxu0
  %v872 = vadd.f32 0.0, %v871
  %v873 = vpop.f32.mrb[0].mxu0
  %874 = vdwg.mxu0
  %v875 = vmax.f32 %v661, %v805
  %v876 = vmax.f32 %v662, %v808
  %v877 = vmax.f32 %v663, %v813
  %v878 = vmax.f32 %v664, %v816
  %v879 = vmax.f32 %v665, %v821
  %v880 = vmax.f32 %v666, %v824
  %v881 = vmax.f32 %v667, %v829
  %v882 = vmax.f32 %v668, %v832
  %v883 = vmax.f32 %v669, %v837
  %v884 = vmax.f32 %v670, %v840
  %v885 = vmax.f32 %v671, %v845
  %v886 = vmax.f32 %v672, %v848
  %v887 = vmax.f32 %v673, %v853
  %v888 = vmax.f32 %v674, %v856
  %v889 = vmax.f32 %v675, %v861
  %v890 = vmax.f32 %v676, %v864
  %v891 = vmax.f32 %v677, %v869
  %v892 = vmax.f32 %v678, %v872
  %v893 = vld [vmem:[%s2] sm:$0x1]
  %v895 = vlaneseq
  %v896 = vshrl.u32 %v895, 7
  %v897 = vsub.s32 0, %v896
  %v898 = vrot.slane %v893, %v897
  %v900 = vadd.f32 %v875, %v898
  %v901 = vadd.f32 %v876, %v898
  %v902 = vadd.f32 %v877, %v898
  %v903 = vadd.f32 %v878, %v898
  %v904 = vadd.f32 %v879, %v898
  %v905 = vadd.f32 %v880, %v898
  %v906 = vadd.f32 %v881, %v898
  %v907 = vadd.f32 %v882, %v898
  %v908 = vadd.f32 %v883, %v898
  %v909 = vadd.f32 %v884, %v898
  %v910 = vadd.f32 %v885, %v898
  %v911 = vadd.f32 %v886, %v898
  %v912 = vadd.f32 %v887, %v898
  %v913 = vadd.f32 %v888, %v898
  %v914 = vadd.f32 %v889, %v898
  %v915 = vadd.f32 %v890, %v898
  %v916 = vadd.f32 %v891, %v898
  %v917 = vadd.f32 %v892, %v898
  %v918 = vmax.f32 %v900, 0.0
  %v919 = vmax.f32 %v901, 0.0
  %v920 = vmax.f32 %v902, 0.0
  %v921 = vmax.f32 %v903, 0.0
  %v922 = vmax.f32 %v904, 0.0
  %v923 = vmax.f32 %v905, 0.0
  %v924 = vmax.f32 %v906, 0.0
  %v925 = vmax.f32 %v907, 0.0
  %v926 = vmax.f32 %v908, 0.0
  %v927 = vmax.f32 %v909, 0.0
  %v928 = vmax.f32 %v910, 0.0
  %v929 = vmax.f32 %v911, 0.0
  %v930 = vmax.f32 %v912, 0.0
  %v931 = vmax.f32 %v913, 0.0
  %v932 = vmax.f32 %v914, 0.0
  %v933 = vmax.f32 %v915, 0.0
  %v934 = vmax.f32 %v916, 0.0
  %v935 = vmax.f32 %v917, 0.0
  %vm936 = vcmask 523264
  %937 = vst.msk [vmem:[%s3] sm:$0xff] %vm936, %v918
  %938 = vst.msk [vmem:[%s3 + $0x8] sm:$0xff] %vm936, %v919
  %939 = vst.msk [vmem:[%s3 + $0x10] sm:$0xff] %vm936, %v920
  %940 = vst.msk [vmem:[%s3 + $0x18] sm:$0xff] %vm936, %v921
  %941 = vst.msk [vmem:[%s3 + $0x20] sm:$0xff] %vm936, %v922
  %942 = vst.msk [vmem:[%s3 + $0x28] sm:$0xff] %vm936, %v923
  %943 = vst.msk [vmem:[%s3 + $0x30] sm:$0xff] %vm936, %v924
  %944 = vst.msk [vmem:[%s3 + $0x38] sm:$0xff] %vm936, %v925
  %945 = vst.msk [vmem:[%s3 + $0x40] sm:$0xff] %vm936, %v926
  %946 = vst.msk [vmem:[%s3 + $0x48] sm:$0xff] %vm936, %v927
  %947 = vst.msk [vmem:[%s3 + $0x50] sm:$0xff] %vm936, %v928
  %948 = vst.msk [vmem:[%s3 + $0x58] sm:$0xff] %vm936, %v929
  %949 = vst.msk [vmem:[%s3 + $0x60] sm:$0xff] %vm936, %v930
  %950 = vst.msk [vmem:[%s3 + $0x68] sm:$0xff] %vm936, %v931
  %951 = vst.msk [vmem:[%s3 + $0x70] sm:$0xff] %vm936, %v932
  %952 = vst.msk [vmem:[%s3 + $0x78] sm:$0xff] %vm936, %v933
  %953 = vst.msk [vmem:[%s3 + $0x80] sm:$0xff] %vm936, %v934
  %954 = vst.msk [vmem:[%s3 + $0x88] sm:$0xff] %vm936, %v935
  // Predicated region
  $region14: #{double_cnn_forward.4} parent=0 // pred_check
    _
  $region15: #{double_cnn_forward.4} parent=0 // pred_check_branch
    %956 = sbr.rel (0) target = $region17
  $region16: #{double_cnn_forward.4} parent=0 // pred_region
    _
  $region17: #{double_cnn_forward.4} parent=0 // pred_fallthru
    _
  // Predicated region
  $region18: #{double_cnn_forward.4} parent=0 // pred_check
    _
  $region19: #{double_cnn_forward.4} parent=0 // pred_check_branch
    %958 = sbr.rel (0) target = $region21
  $region20: #{double_cnn_forward.4} parent=0 // pred_region
    _
  $region21: #{double_cnn_forward.4} parent=0 // pred_fallthru
    _

// kernel: double_cnn_forward.5
$region0: #{double_cnn_forward.5}
  #allocation0 [shape = 'u32[]', space=smem, size = 0x4, offset = 0x4, fixed_abs, tag = 'smem constant byte address 0x4 - core index']
  #allocation1 [shape = 'u32[144,128]{1,0:T(1,128)}', space=vmem, size = 0x12000, scoped, tag = 'internal scratch']
  %s0 = inlined_call_operand.vmem [shape: bf16[2,4608], index: 0, kind: input, shape index: {}]
  %s1 = inlined_call_operand.vmem [shape: bf16[4608,512], index: 1, kind: input, shape index: {}]
  %s2 = inlined_call_operand.vmem [shape: f32[1,512], index: 2, kind: input, shape index: {}]
  %s3 = inlined_call_operand.vmem [shape: bf16[512,19], index: 3, kind: input, shape index: {}]
  %s4 = inlined_call_operand.vmem [shape: f32[1,19], index: 4, kind: input, shape index: {}]
  %s5 = inlined_call_operand.hbm [shape: f32[2,19], index: 5, kind: output, shape index: {}]
  %s6 = sld [smem:[#allocation0]]
  $region30: #{double_cnn_forward.5} parent=0
    _
  %s8 = ssub.s32 1, %s6
  %s9 = scalar_select 0, %s8, %s6
  $region1: #{double_cnn_forward.5} parent=0
    #allocation2 [shape = 'u8[1024]{0}', space=vmem, size = 0x400, scoped, tag = 'output window, operand 0, single buffered']
    #allocation3 [shape = 's32[1]{0}', space=sflag, size = 0x4, scoped, tag = 'scoped memory for double_cnn_forward.5']
    %10 = vsyncpa [#allocation3], 0
    // Predicated region
    $region2: #{double_cnn_forward.5} parent=1 // pred_check
      _
    $region3: #{double_cnn_forward.5} parent=1 // pred_check_branch
      %12 = sbr.rel (0) target = $region5
    $region4: #{double_cnn_forward.5} parent=1 // pred_region
      _
    $region5: #{double_cnn_forward.5} parent=1 // pred_fallthru
      _
    // Predicated region
    $region6: #{double_cnn_forward.5} parent=1 // pred_check
      _
    $region7: #{double_cnn_forward.5} parent=1 // pred_check_branch
      %14 = sbr.rel (0) target = $region9
    $region8: #{double_cnn_forward.5} parent=1 // pred_region
      _
    $region9: #{double_cnn_forward.5} parent=1 // pred_fallthru
      _
    // Predicated region
    $region10: #{double_cnn_forward.5} parent=1 // pred_check
      _
    $region11: #{double_cnn_forward.5} parent=1 // pred_check_branch
      %16 = sbr.rel (0) target = $region13
    $region12: #{double_cnn_forward.5} parent=1 // pred_region
      _
    $region13: #{double_cnn_forward.5} parent=1 // pred_fallthru
      _
    // Predicated region
    $region14: #{double_cnn_forward.5} parent=1 // pred_check
      _
    $region15: #{double_cnn_forward.5} parent=1 // pred_check_branch
      %18 = sbr.rel (0) target = $region17
    $region16: #{double_cnn_forward.5} parent=1 // pred_region
      _
    $region17: #{double_cnn_forward.5} parent=1 // pred_fallthru
      _
    // Predicated region
    $region18: #{double_cnn_forward.5} parent=1 // pred_check
      _
    $region19: #{double_cnn_forward.5} parent=1 // pred_check_branch
      %20 = sbr.rel (0) target = $region21
    $region20: #{double_cnn_forward.5} parent=1 // pred_region
      _
    $region21: #{double_cnn_forward.5} parent=1 // pred_fallthru
      _
    %v22 = vld [vmem:[%s0] sm:$0xff]
    %v23 = vld [vmem:[%s0 + $0x8] sm:$0xff]
    %v24 = vld [vmem:[%s0 + $0x10] sm:$0xff]
    %v25 = vld [vmem:[%s0 + $0x18] sm:$0xff]
    %v26 = vld [vmem:[%s0 + $0x20] sm:$0xf]
    %v27 = vld [vmem:[%s1] sm:$0xff]
    %v28 = vld [vmem:[%s1 + $0x8] sm:$0xff]
    %v29 = vld [vmem:[%s1 + $0x10] sm:$0xff]
    %v30 = vld [vmem:[%s1 + $0x18] sm:$0xff]
    %v31 = vld [vmem:[%s1 + $0x20] sm:$0xff]
    %v32 = vld [vmem:[%s1 + $0x28] sm:$0xff]
    %v33 = vld [vmem:[%s1 + $0x30] sm:$0xff]
    %v34 = vld [vmem:[%s1 + $0x38] sm:$0xff]
    %v35 = vld [vmem:[%s1 + $0x40] sm:$0xff]
    %v36 = vld [vmem:[%s1 + $0x48] sm:$0xff]
    %v37 = vld [vmem:[%s1 + $0x50] sm:$0xff]
    %v38 = vld [vmem:[%s1 + $0x58] sm:$0xff]
    %v39 = vld [vmem:[%s1 + $0x60] sm:$0xff]
    %v40 = vld [vmem:[%s1 + $0x68] sm:$0xff]
    %v41 = vld [vmem:[%s1 + $0x70] sm:$0xff]
    %v42 = vld [vmem:[%s1 + $0x78] sm:$0xff]
    %v43 = vld [vmem:[%s1 + $0x80] sm:$0xff]
    %v44 = vld [vmem:[%s1 + $0x88] sm:$0xff]
    %v45 = vld [vmem:[%s1 + $0x90] sm:$0xff]
    %v46 = vld [vmem:[%s1 + $0x98] sm:$0xff]
    %v47 = vld [vmem:[%s1 + $0xa0] sm:$0xff]
    %v48 = vld [vmem:[%s1 + $0xa8] sm:$0xff]
    %v49 = vld [vmem:[%s1 + $0xb0] sm:$0xff]
    %v50 = vld [vmem:[%s1 + $0xb8] sm:$0xff]
    %v51 = vld [vmem:[%s1 + $0xc0] sm:$0xff]
    %v52 = vld [vmem:[%s1 + $0xc8] sm:$0xff]
    %v53 = vld [vmem:[%s1 + $0xd0] sm:$0xff]
    %v54 = vld [vmem:[%s1 + $0xd8] sm:$0xff]
    %v55 = vld [vmem:[%s1 + $0xe0] sm:$0xff]
    %v56 = vld [vmem:[%s1 + $0xe8] sm:$0xff]
    %v57 = vld [vmem:[%s1 + $0xf0] sm:$0xff]
    %v58 = vld [vmem:[%s1 + $0xf8] sm:$0xff]
    %v59 = vld [vmem:[%s1 + $0x100] sm:$0xff]
    %v60 = vld [vmem:[%s1 + $0x108] sm:$0xff]
    %v61 = vld [vmem:[%s1 + $0x110] sm:$0xff]
    %v62 = vld [vmem:[%s1 + $0x118] sm:$0xff]
    %v63 = vld [vmem:[%s1 + $0x120] sm:$0xff]
    %v64 = vld [vmem:[%s1 + $0x128] sm:$0xff]
    %v65 = vld [vmem:[%s1 + $0x130] sm:$0xff]
    %v66 = vld [vmem:[%s1 + $0x138] sm:$0xff]
    %v67 = vld [vmem:[%s1 + $0x140] sm:$0xff]
    %v68 = vld [vmem:[%s1 + $0x148] sm:$0xff]
    %v69 = vld [vmem:[%s1 + $0x150] sm:$0xff]
    %v70 = vld [vmem:[%s1 + $0x158] sm:$0xff]
    %v71 = vld [vmem:[%s1 + $0x160] sm:$0xff]
    %v72 = vld [vmem:[%s1 + $0x168] sm:$0xff]
    %v73 = vld [vmem:[%s1 + $0x170] sm:$0xff]
    %v74 = vld [vmem:[%s1 + $0x178] sm:$0xff]
    %v75 = vld [vmem:[%s1 + $0x180] sm:$0xff]
    %v76 = vld [vmem:[%s1 + $0x188] sm:$0xff]
    %v77 = vld [vmem:[%s1 + $0x190] sm:$0xff]
    %v78 = vld [vmem:[%s1 + $0x198] sm:$0xff]
    %v79 = vld [vmem:[%s1 + $0x1a0] sm:$0xff]
    %v80 = vld [vmem:[%s1 + $0x1a8] sm:$0xff]
    %v81 = vld [vmem:[%s1 + $0x1b0] sm:$0xff]
    %v82 = vld [vmem:[%s1 + $0x1b8] sm:$0xff]
    %v83 = vld [vmem:[%s1 + $0x1c0] sm:$0xff]
    %v84 = vld [vmem:[%s1 + $0x1c8] sm:$0xff]
    %v85 = vld [vmem:[%s1 + $0x1d0] sm:$0xff]
    %v86 = vld [vmem:[%s1 + $0x1d8] sm:$0xff]
    %v87 = vld [vmem:[%s1 + $0x1e0] sm:$0xff]
    %v88 = vld [vmem:[%s1 + $0x1e8] sm:$0xff]
    %v89 = vld [vmem:[%s1 + $0x1f0] sm:$0xff]
    %v90 = vld [vmem:[%s1 + $0x1f8] sm:$0xff]
    %v91 = vld [vmem:[%s1 + $0x200] sm:$0xff]
    %v92 = vld [vmem:[%s1 + $0x208] sm:$0xff]
    %v93 = vld [vmem:[%s1 + $0x210] sm:$0xff]
    %v94 = vld [vmem:[%s1 + $0x218] sm:$0xff]
    %v95 = vld [vmem:[%s1 + $0x220] sm:$0xff]
    %v96 = vld [vmem:[%s1 + $0x228] sm:$0xff]
    %v97 = vld [vmem:[%s1 + $0x230] sm:$0xff]
    %v98 = vld [vmem:[%s1 + $0x238] sm:$0xff]
    %v99 = vld [vmem:[%s1 + $0x240] sm:$0xff]
    %v100 = vld [vmem:[%s1 + $0x248] sm:$0xff]
    %v101 = vld [vmem:[%s1 + $0x250] sm:$0xff]
    %v102 = vld [vmem:[%s1 + $0x258] sm:$0xff]
    %v103 = vld [vmem:[%s1 + $0x260] sm:$0xff]
    %v104 = vld [vmem:[%s1 + $0x268] sm:$0xff]
    %v105 = vld [vmem:[%s1 + $0x270] sm:$0xff]
    %v106 = vld [vmem:[%s1 + $0x278] sm:$0xff]
    %v107 = vld [vmem:[%s1 + $0x280] sm:$0xff]
    %v108 = vld [vmem:[%s1 + $0x288] sm:$0xff]
    %v109 = vld [vmem:[%s1 + $0x290] sm:$0xff]
    %v110 = vld [vmem:[%s1 + $0x298] sm:$0xff]
    %v111 = vld [vmem:[%s1 + $0x2a0] sm:$0xff]
    %v112 = vld [vmem:[%s1 + $0x2a8] sm:$0xff]
    %v113 = vld [vmem:[%s1 + $0x2b0] sm:$0xff]
    %v114 = vld [vmem:[%s1 + $0x2b8] sm:$0xff]
    %v115 = vld [vmem:[%s1 + $0x2c0] sm:$0xff]
    %v116 = vld [vmem:[%s1 + $0x2c8] sm:$0xff]
    %v117 = vld [vmem:[%s1 + $0x2d0] sm:$0xff]
    %v118 = vld [vmem:[%s1 + $0x2d8] sm:$0xff]
    %v119 = vld [vmem:[%s1 + $0x2e0] sm:$0xff]
    %v120 = vld [vmem:[%s1 + $0x2e8] sm:$0xff]
    %v121 = vld [vmem:[%s1 + $0x2f0] sm:$0xff]
    %v122 = vld [vmem:[%s1 + $0x2f8] sm:$0xff]
    %v123 = vld [vmem:[%s1 + $0x300] sm:$0xff]
    %v124 = vld [vmem:[%s1 + $0x308] sm:$0xff]
    %v125 = vld [vmem:[%s1 + $0x310] sm:$0xff]
    %v126 = vld [vmem:[%s1 + $0x318] sm:$0xff]
    %v127 = vld [vmem:[%s1 + $0x320] sm:$0xff]
    %v128 = vld [vmem:[%s1 + $0x328] sm:$0xff]
    %v129 = vld [vmem:[%s1 + $0x330] sm:$0xff]
    %v130 = vld [vmem:[%s1 + $0x338] sm:$0xff]
    %v131 = vld [vmem:[%s1 + $0x340] sm:$0xff]
    %v132 = vld [vmem:[%s1 + $0x348] sm:$0xff]
    %v133 = vld [vmem:[%s1 + $0x350] sm:$0xff]
    %v134 = vld [vmem:[%s1 + $0x358] sm:$0xff]
    %v135 = vld [vmem:[%s1 + $0x360] sm:$0xff]
    %v136 = vld [vmem:[%s1 + $0x368] sm:$0xff]
    %v137 = vld [vmem:[%s1 + $0x370] sm:$0xff]
    %v138 = vld [vmem:[%s1 + $0x378] sm:$0xff]
    %v139 = vld [vmem:[%s1 + $0x380] sm:$0xff]
    %v140 = vld [vmem:[%s1 + $0x388] sm:$0xff]
    %v141 = vld [vmem:[%s1 + $0x390] sm:$0xff]
    %v142 = vld [vmem:[%s1 + $0x398] sm:$0xff]
    %v143 = vld [vmem:[%s1 + $0x3a0] sm:$0xff]
    %v144 = vld [vmem:[%s1 + $0x3a8] sm:$0xff]
    %v145 = vld [vmem:[%s1 + $0x3b0] sm:$0xff]
    %v146 = vld [vmem:[%s1 + $0x3b8] sm:$0xff]
    %v147 = vld [vmem:[%s1 + $0x3c0] sm:$0xff]
    %v148 = vld [vmem:[%s1 + $0x3c8] sm:$0xff]
    %v149 = vld [vmem:[%s1 + $0x3d0] sm:$0xff]
    %v150 = vld [vmem:[%s1 + $0x3d8] sm:$0xff]
    %v151 = vld [vmem:[%s1 + $0x3e0] sm:$0xff]
    %v152 = vld [vmem:[%s1 + $0x3e8] sm:$0xff]
    %v153 = vld [vmem:[%s1 + $0x3f0] sm:$0xff]
    %v154 = vld [vmem:[%s1 + $0x3f8] sm:$0xff]
    %v155 = vld [vmem:[%s1 + $0x400] sm:$0xff]
    %v156 = vld [vmem:[%s1 + $0x408] sm:$0xff]
    %v157 = vld [vmem:[%s1 + $0x410] sm:$0xff]
    %v158 = vld [vmem:[%s1 + $0x418] sm:$0xff]
    %v159 = vld [vmem:[%s1 + $0x420] sm:$0xff]
    %v160 = vld [vmem:[%s1 + $0x428] sm:$0xff]
    %v161 = vld [vmem:[%s1 + $0x430] sm:$0xff]
    %v162 = vld [vmem:[%s1 + $0x438] sm:$0xff]
    %v163 = vld [vmem:[%s1 + $0x440] sm:$0xff]
    %v164 = vld [vmem:[%s1 + $0x448] sm:$0xff]
    %v165 = vld [vmem:[%s1 + $0x450] sm:$0xff]
    %v166 = vld [vmem:[%s1 + $0x458] sm:$0xff]
    %v167 = vld [vmem:[%s1 + $0x460] sm:$0xff]
    %v168 = vld [vmem:[%s1 + $0x468] sm:$0xff]
    %v169 = vld [vmem:[%s1 + $0x470] sm:$0xff]
    %v170 = vld [vmem:[%s1 + $0x478] sm:$0xff]
    %v171 = vld [vmem:[%s1 + $0x480] sm:$0xff]
    %v172 = vld [vmem:[%s1 + $0x488] sm:$0xff]
    %v173 = vld [vmem:[%s1 + $0x490] sm:$0xff]
    %v174 = vld [vmem:[%s1 + $0x498] sm:$0xff]
    %v175 = vld [vmem:[%s1 + $0x4a0] sm:$0xff]
    %v176 = vld [vmem:[%s1 + $0x4a8] sm:$0xff]
    %v177 = vld [vmem:[%s1 + $0x4b0] sm:$0xff]
    %v178 = vld [vmem:[%s1 + $0x4b8] sm:$0xff]
    %v179 = vld [vmem:[%s1 + $0x4c0] sm:$0xff]
    %v180 = vld [vmem:[%s1 + $0x4c8] sm:$0xff]
    %v181 = vld [vmem:[%s1 + $0x4d0] sm:$0xff]
    %v182 = vld [vmem:[%s1 + $0x4d8] sm:$0xff]
    %v183 = vld [vmem:[%s1 + $0x4e0] sm:$0xff]
    %v184 = vld [vmem:[%s1 + $0x4e8] sm:$0xff]
    %v185 = vld [vmem:[%s1 + $0x4f0] sm:$0xff]
    %v186 = vld [vmem:[%s1 + $0x4f8] sm:$0xff]
    %v187 = vld [vmem:[%s1 + $0x500] sm:$0xff]
    %v188 = vld [vmem:[%s1 + $0x508] sm:$0xff]
    %v189 = vld [vmem:[%s1 + $0x510] sm:$0xff]
    %v190 = vld [vmem:[%s1 + $0x518] sm:$0xff]
    %v191 = vld [vmem:[%s1 + $0x520] sm:$0xff]
    %v192 = vld [vmem:[%s1 + $0x528] sm:$0xff]
    %v193 = vld [vmem:[%s1 + $0x530] sm:$0xff]
    %v194 = vld [vmem:[%s1 + $0x538] sm:$0xff]
    %v195 = vld [vmem:[%s1 + $0x540] sm:$0xff]
    %v196 = vld [vmem:[%s1 + $0x548] sm:$0xff]
    %v197 = vld [vmem:[%s1 + $0x550] sm:$0xff]
    %v198 = vld [vmem:[%s1 + $0x558] sm:$0xff]
    %v199 = vld [vmem:[%s1 + $0x560] sm:$0xff]
    %v200 = vld [vmem:[%s1 + $0x568] sm:$0xff]
    %v201 = vld [vmem:[%s1 + $0x570] sm:$0xff]
    %v202 = vld [vmem:[%s1 + $0x578] sm:$0xff]
    %v203 = vld [vmem:[%s1 + $0x580] sm:$0xff]
    %v204 = vld [vmem:[%s1 + $0x588] sm:$0xff]
    %v205 = vld [vmem:[%s1 + $0x590] sm:$0xff]
    %v206 = vld [vmem:[%s1 + $0x598] sm:$0xff]
    %v207 = vld [vmem:[%s1 + $0x5a0] sm:$0xff]
    %v208 = vld [vmem:[%s1 + $0x5a8] sm:$0xff]
    %v209 = vld [vmem:[%s1 + $0x5b0] sm:$0xff]
    %v210 = vld [vmem:[%s1 + $0x5b8] sm:$0xff]
    %v211 = vld [vmem:[%s1 + $0x5c0] sm:$0xff]
    %v212 = vld [vmem:[%s1 + $0x5c8] sm:$0xff]
    %v213 = vld [vmem:[%s1 + $0x5d0] sm:$0xff]
    %v214 = vld [vmem:[%s1 + $0x5d8] sm:$0xff]
    %v215 = vld [vmem:[%s1 + $0x5e0] sm:$0xff]
    %v216 = vld [vmem:[%s1 + $0x5e8] sm:$0xff]
    %v217 = vld [vmem:[%s1 + $0x5f0] sm:$0xff]
    %v218 = vld [vmem:[%s1 + $0x5f8] sm:$0xff]
    %v219 = vld [vmem:[%s1 + $0x600] sm:$0xff]
    %v220 = vld [vmem:[%s1 + $0x608] sm:$0xff]
    %v221 = vld [vmem:[%s1 + $0x610] sm:$0xff]
    %v222 = vld [vmem:[%s1 + $0x618] sm:$0xff]
    %v223 = vld [vmem:[%s1 + $0x620] sm:$0xff]
    %v224 = vld [vmem:[%s1 + $0x628] sm:$0xff]
    %v225 = vld [vmem:[%s1 + $0x630] sm:$0xff]
    %v226 = vld [vmem:[%s1 + $0x638] sm:$0xff]
    %v227 = vld [vmem:[%s1 + $0x640] sm:$0xff]
    %v228 = vld [vmem:[%s1 + $0x648] sm:$0xff]
    %v229 = vld [vmem:[%s1 + $0x650] sm:$0xff]
    %v230 = vld [vmem:[%s1 + $0x658] sm:$0xff]
    %v231 = vld [vmem:[%s1 + $0x660] sm:$0xff]
    %v232 = vld [vmem:[%s1 + $0x668] sm:$0xff]
    %v233 = vld [vmem:[%s1 + $0x670] sm:$0xff]
    %v234 = vld [vmem:[%s1 + $0x678] sm:$0xff]
    %v235 = vld [vmem:[%s1 + $0x680] sm:$0xff]
    %v236 = vld [vmem:[%s1 + $0x688] sm:$0xff]
    %v237 = vld [vmem:[%s1 + $0x690] sm:$0xff]
    %v238 = vld [vmem:[%s1 + $0x698] sm:$0xff]
    %v239 = vld [vmem:[%s1 + $0x6a0] sm:$0xff]
    %v240 = vld [vmem:[%s1 + $0x6a8] sm:$0xff]
    %v241 = vld [vmem:[%s1 + $0x6b0] sm:$0xff]
    %v242 = vld [vmem:[%s1 + $0x6b8] sm:$0xff]
    %v243 = vld [vmem:[%s1 + $0x6c0] sm:$0xff]
    %v244 = vld [vmem:[%s1 + $0x6c8] sm:$0xff]
    %v245 = vld [vmem:[%s1 + $0x6d0] sm:$0xff]
    %v246 = vld [vmem:[%s1 + $0x6d8] sm:$0xff]
    %v247 = vld [vmem:[%s1 + $0x6e0] sm:$0xff]
    %v248 = vld [vmem:[%s1 + $0x6e8] sm:$0xff]
    %v249 = vld [vmem:[%s1 + $0x6f0] sm:$0xff]
    %v250 = vld [vmem:[%s1 + $0x6f8] sm:$0xff]
    %v251 = vld [vmem:[%s1 + $0x700] sm:$0xff]
    %v252 = vld [vmem:[%s1 + $0x708] sm:$0xff]
    %v253 = vld [vmem:[%s1 + $0x710] sm:$0xff]
    %v254 = vld [vmem:[%s1 + $0x718] sm:$0xff]
    %v255 = vld [vmem:[%s1 + $0x720] sm:$0xff]
    %v256 = vld [vmem:[%s1 + $0x728] sm:$0xff]
    %v257 = vld [vmem:[%s1 + $0x730] sm:$0xff]
    %v258 = vld [vmem:[%s1 + $0x738] sm:$0xff]
    %v259 = vld [vmem:[%s1 + $0x740] sm:$0xff]
    %v260 = vld [vmem:[%s1 + $0x748] sm:$0xff]
    %v261 = vld [vmem:[%s1 + $0x750] sm:$0xff]
    %v262 = vld [vmem:[%s1 + $0x758] sm:$0xff]
    %v263 = vld [vmem:[%s1 + $0x760] sm:$0xff]
    %v264 = vld [vmem:[%s1 + $0x768] sm:$0xff]
    %v265 = vld [vmem:[%s1 + $0x770] sm:$0xff]
    %v266 = vld [vmem:[%s1 + $0x778] sm:$0xff]
    %v267 = vld [vmem:[%s1 + $0x780] sm:$0xff]
    %v268 = vld [vmem:[%s1 + $0x788] sm:$0xff]
    %v269 = vld [vmem:[%s1 + $0x790] sm:$0xff]
    %v270 = vld [vmem:[%s1 + $0x798] sm:$0xff]
    %v271 = vld [vmem:[%s1 + $0x7a0] sm:$0xff]
    %v272 = vld [vmem:[%s1 + $0x7a8] sm:$0xff]
    %v273 = vld [vmem:[%s1 + $0x7b0] sm:$0xff]
    %v274 = vld [vmem:[%s1 + $0x7b8] sm:$0xff]
    %v275 = vld [vmem:[%s1 + $0x7c0] sm:$0xff]
    %v276 = vld [vmem:[%s1 + $0x7c8] sm:$0xff]
    %v277 = vld [vmem:[%s1 + $0x7d0] sm:$0xff]
    %v278 = vld [vmem:[%s1 + $0x7d8] sm:$0xff]
    %v279 = vld [vmem:[%s1 + $0x7e0] sm:$0xff]
    %v280 = vld [vmem:[%s1 + $0x7e8] sm:$0xff]
    %v281 = vld [vmem:[%s1 + $0x7f0] sm:$0xff]
    %v282 = vld [vmem:[%s1 + $0x7f8] sm:$0xff]
    %v283 = vld [vmem:[%s1 + $0x800] sm:$0xff]
    %v284 = vld [vmem:[%s1 + $0x808] sm:$0xff]
    %v285 = vld [vmem:[%s1 + $0x810] sm:$0xff]
    %v286 = vld [vmem:[%s1 + $0x818] sm:$0xff]
    %v287 = vld [vmem:[%s1 + $0x820] sm:$0xff]
    %v288 = vld [vmem:[%s1 + $0x828] sm:$0xff]
    %v289 = vld [vmem:[%s1 + $0x830] sm:$0xff]
    %v290 = vld [vmem:[%s1 + $0x838] sm:$0xff]
    %v291 = vld [vmem:[%s1 + $0x840] sm:$0xff]
    %v292 = vld [vmem:[%s1 + $0x848] sm:$0xff]
    %v293 = vld [vmem:[%s1 + $0x850] sm:$0xff]
    %v294 = vld [vmem:[%s1 + $0x858] sm:$0xff]
    %v295 = vld [vmem:[%s1 + $0x860] sm:$0xff]
    %v296 = vld [vmem:[%s1 + $0x868] sm:$0xff]
    %v297 = vld [vmem:[%s1 + $0x870] sm:$0xff]
    %v298 = vld [vmem:[%s1 + $0x878] sm:$0xff]
    %v299 = vld [vmem:[%s1 + $0x880] sm:$0xff]
    %v300 = vld [vmem:[%s1 + $0x888] sm:$0xff]
    %v301 = vld [vmem:[%s1 + $0x890] sm:$0xff]
    %v302 = vld [vmem:[%s1 + $0x898] sm:$0xff]
    %v303 = vld [vmem:[%s1 + $0x8a0] sm:$0xff]
    %v304 = vld [vmem:[%s1 + $0x8a8] sm:$0xff]
    %v305 = vld [vmem:[%s1 + $0x8b0] sm:$0xff]
    %v306 = vld [vmem:[%s1 + $0x8b8] sm:$0xff]
    %v307 = vld [vmem:[%s1 + $0x8c0] sm:$0xff]
    %v308 = vld [vmem:[%s1 + $0x8c8] sm:$0xff]
    %v309 = vld [vmem:[%s1 + $0x8d0] sm:$0xff]
    %v310 = vld [vmem:[%s1 + $0x8d8] sm:$0xff]
    %v311 = vld [vmem:[%s1 + $0x8e0] sm:$0xff]
    %v312 = vld [vmem:[%s1 + $0x8e8] sm:$0xff]
    %v313 = vld [vmem:[%s1 + $0x8f0] sm:$0xff]
    %v314 = vld [vmem:[%s1 + $0x8f8] sm:$0xff]
    %v315 = vld [vmem:[%s1 + $0x900] sm:$0xff]
    %v316 = vld [vmem:[%s1 + $0x908] sm:$0xff]
    %v317 = vld [vmem:[%s1 + $0x910] sm:$0xff]
    %v318 = vld [vmem:[%s1 + $0x918] sm:$0xff]
    %v319 = vld [vmem:[%s1 + $0x920] sm:$0xff]
    %v320 = vld [vmem:[%s1 + $0x928] sm:$0xff]
    %v321 = vld [vmem:[%s1 + $0x930] sm:$0xff]
    %v322 = vld [vmem:[%s1 + $0x938] sm:$0xff]
    %v323 = vld [vmem:[%s1 + $0x940] sm:$0xff]
    %v324 = vld [vmem:[%s1 + $0x948] sm:$0xff]
    %v325 = vld [vmem:[%s1 + $0x950] sm:$0xff]
    %v326 = vld [vmem:[%s1 + $0x958] sm:$0xff]
    %v327 = vld [vmem:[%s1 + $0x960] sm:$0xff]
    %v328 = vld [vmem:[%s1 + $0x968] sm:$0xff]
    %v329 = vld [vmem:[%s1 + $0x970] sm:$0xff]
    %v330 = vld [vmem:[%s1 + $0x978] sm:$0xff]
    %v331 = vld [vmem:[%s1 + $0x980] sm:$0xff]
    %v332 = vld [vmem:[%s1 + $0x988] sm:$0xff]
    %v333 = vld [vmem:[%s1 + $0x990] sm:$0xff]
    %v334 = vld [vmem:[%s1 + $0x998] sm:$0xff]
    %v335 = vld [vmem:[%s1 + $0x9a0] sm:$0xff]
    %v336 = vld [vmem:[%s1 + $0x9a8] sm:$0xff]
    %v337 = vld [vmem:[%s1 + $0x9b0] sm:$0xff]
    %v338 = vld [vmem:[%s1 + $0x9b8] sm:$0xff]
    %v339 = vld [vmem:[%s1 + $0x9c0] sm:$0xff]
    %v340 = vld [vmem:[%s1 + $0x9c8] sm:$0xff]
    %v341 = vld [vmem:[%s1 + $0x9d0] sm:$0xff]
    %v342 = vld [vmem:[%s1 + $0x9d8] sm:$0xff]
    %v343 = vld [vmem:[%s1 + $0x9e0] sm:$0xff]
    %v344 = vld [vmem:[%s1 + $0x9e8] sm:$0xff]
    %v345 = vld [vmem:[%s1 + $0x9f0] sm:$0xff]
    %v346 = vld [vmem:[%s1 + $0x9f8] sm:$0xff]
    %v347 = vld [vmem:[%s1 + $0xa00] sm:$0xff]
    %v348 = vld [vmem:[%s1 + $0xa08] sm:$0xff]
    %v349 = vld [vmem:[%s1 + $0xa10] sm:$0xff]
    %v350 = vld [vmem:[%s1 + $0xa18] sm:$0xff]
    %v351 = vld [vmem:[%s1 + $0xa20] sm:$0xff]
    %v352 = vld [vmem:[%s1 + $0xa28] sm:$0xff]
    %v353 = vld [vmem:[%s1 + $0xa30] sm:$0xff]
    %v354 = vld [vmem:[%s1 + $0xa38] sm:$0xff]
    %v355 = vld [vmem:[%s1 + $0xa40] sm:$0xff]
    %v356 = vld [vmem:[%s1 + $0xa48] sm:$0xff]
    %v357 = vld [vmem:[%s1 + $0xa50] sm:$0xff]
    %v358 = vld [vmem:[%s1 + $0xa58] sm:$0xff]
    %v359 = vld [vmem:[%s1 + $0xa60] sm:$0xff]
    %v360 = vld [vmem:[%s1 + $0xa68] sm:$0xff]
    %v361 = vld [vmem:[%s1 + $0xa70] sm:$0xff]
    %v362 = vld [vmem:[%s1 + $0xa78] sm:$0xff]
    %v363 = vld [vmem:[%s1 + $0xa80] sm:$0xff]
    %v364 = vld [vmem:[%s1 + $0xa88] sm:$0xff]
    %v365 = vld [vmem:[%s1 + $0xa90] sm:$0xff]
    %v366 = vld [vmem:[%s1 + $0xa98] sm:$0xff]
    %v367 = vld [vmem:[%s1 + $0xaa0] sm:$0xff]
    %v368 = vld [vmem:[%s1 + $0xaa8] sm:$0xff]
    %v369 = vld [vmem:[%s1 + $0xab0] sm:$0xff]
    %v370 = vld [vmem:[%s1 + $0xab8] sm:$0xff]
    %v371 = vld [vmem:[%s1 + $0xac0] sm:$0xff]
    %v372 = vld [vmem:[%s1 + $0xac8] sm:$0xff]
    %v373 = vld [vmem:[%s1 + $0xad0] sm:$0xff]
    %v374 = vld [vmem:[%s1 + $0xad8] sm:$0xff]
    %v375 = vld [vmem:[%s1 + $0xae0] sm:$0xff]
    %v376 = vld [vmem:[%s1 + $0xae8] sm:$0xff]
    %v377 = vld [vmem:[%s1 + $0xaf0] sm:$0xff]
    %v378 = vld [vmem:[%s1 + $0xaf8] sm:$0xff]
    %v379 = vld [vmem:[%s1 + $0xb00] sm:$0xff]
    %v380 = vld [vmem:[%s1 + $0xb08] sm:$0xff]
    %v381 = vld [vmem:[%s1 + $0xb10] sm:$0xff]
    %v382 = vld [vmem:[%s1 + $0xb18] sm:$0xff]
    %v383 = vld [vmem:[%s1 + $0xb20] sm:$0xff]
    %v384 = vld [vmem:[%s1 + $0xb28] sm:$0xff]
    %v385 = vld [vmem:[%s1 + $0xb30] sm:$0xff]
    %v386 = vld [vmem:[%s1 + $0xb38] sm:$0xff]
    %v387 = vld [vmem:[%s1 + $0xb40] sm:$0xff]
    %v388 = vld [vmem:[%s1 + $0xb48] sm:$0xff]
    %v389 = vld [vmem:[%s1 + $0xb50] sm:$0xff]
    %v390 = vld [vmem:[%s1 + $0xb58] sm:$0xff]
    %v391 = vld [vmem:[%s1 + $0xb60] sm:$0xff]
    %v392 = vld [vmem:[%s1 + $0xb68] sm:$0xff]
    %v393 = vld [vmem:[%s1 + $0xb70] sm:$0xff]
    %v394 = vld [vmem:[%s1 + $0xb78] sm:$0xff]
    %v395 = vld [vmem:[%s1 + $0xb80] sm:$0xff]
    %v396 = vld [vmem:[%s1 + $0xb88] sm:$0xff]
    %v397 = vld [vmem:[%s1 + $0xb90] sm:$0xff]
    %v398 = vld [vmem:[%s1 + $0xb98] sm:$0xff]
    %v399 = vld [vmem:[%s1 + $0xba0] sm:$0xff]
    %v400 = vld [vmem:[%s1 + $0xba8] sm:$0xff]
    %v401 = vld [vmem:[%s1 + $0xbb0] sm:$0xff]
    %v402 = vld [vmem:[%s1 + $0xbb8] sm:$0xff]
    %v403 = vld [vmem:[%s1 + $0xbc0] sm:$0xff]
    %v404 = vld [vmem:[%s1 + $0xbc8] sm:$0xff]
    %v405 = vld [vmem:[%s1 + $0xbd0] sm:$0xff]
    %v406 = vld [vmem:[%s1 + $0xbd8] sm:$0xff]
    %v407 = vld [vmem:[%s1 + $0xbe0] sm:$0xff]
    %v408 = vld [vmem:[%s1 + $0xbe8] sm:$0xff]
    %v409 = vld [vmem:[%s1 + $0xbf0] sm:$0xff]
    %v410 = vld [vmem:[%s1 + $0xbf8] sm:$0xff]
    %v411 = vld [vmem:[%s1 + $0xc00] sm:$0xff]
    %v412 = vld [vmem:[%s1 + $0xc08] sm:$0xff]
    %v413 = vld [vmem:[%s1 + $0xc10] sm:$0xff]
    %v414 = vld [vmem:[%s1 + $0xc18] sm:$0xff]
    %v415 = vld [vmem:[%s1 + $0xc20] sm:$0xff]
    %v416 = vld [vmem:[%s1 + $0xc28] sm:$0xff]
    %v417 = vld [vmem:[%s1 + $0xc30] sm:$0xff]
    %v418 = vld [vmem:[%s1 + $0xc38] sm:$0xff]
    %v419 = vld [vmem:[%s1 + $0xc40] sm:$0xff]
    %v420 = vld [vmem:[%s1 + $0xc48] sm:$0xff]
    %v421 = vld [vmem:[%s1 + $0xc50] sm:$0xff]
    %v422 = vld [vmem:[%s1 + $0xc58] sm:$0xff]
    %v423 = vld [vmem:[%s1 + $0xc60] sm:$0xff]
    %v424 = vld [vmem:[%s1 + $0xc68] sm:$0xff]
    %v425 = vld [vmem:[%s1 + $0xc70] sm:$0xff]
    %v426 = vld [vmem:[%s1 + $0xc78] sm:$0xff]
    %v427 = vld [vmem:[%s1 + $0xc80] sm:$0xff]
    %v428 = vld [vmem:[%s1 + $0xc88] sm:$0xff]
    %v429 = vld [vmem:[%s1 + $0xc90] sm:$0xff]
    %v430 = vld [vmem:[%s1 + $0xc98] sm:$0xff]
    %v431 = vld [vmem:[%s1 + $0xca0] sm:$0xff]
    %v432 = vld [vmem:[%s1 + $0xca8] sm:$0xff]
    %v433 = vld [vmem:[%s1 + $0xcb0] sm:$0xff]
    %v434 = vld [vmem:[%s1 + $0xcb8] sm:$0xff]
    %v435 = vld [vmem:[%s1 + $0xcc0] sm:$0xff]
    %v436 = vld [vmem:[%s1 + $0xcc8] sm:$0xff]
    %v437 = vld [vmem:[%s1 + $0xcd0] sm:$0xff]
    %v438 = vld [vmem:[%s1 + $0xcd8] sm:$0xff]
    %v439 = vld [vmem:[%s1 + $0xce0] sm:$0xff]
    %v440 = vld [vmem:[%s1 + $0xce8] sm:$0xff]
    %v441 = vld [vmem:[%s1 + $0xcf0] sm:$0xff]
    %v442 = vld [vmem:[%s1 + $0xcf8] sm:$0xff]
    %v443 = vld [vmem:[%s1 + $0xd00] sm:$0xff]
    %v444 = vld [vmem:[%s1 + $0xd08] sm:$0xff]
    %v445 = vld [vmem:[%s1 + $0xd10] sm:$0xff]
    %v446 = vld [vmem:[%s1 + $0xd18] sm:$0xff]
    %v447 = vld [vmem:[%s1 + $0xd20] sm:$0xff]
    %v448 = vld [vmem:[%s1 + $0xd28] sm:$0xff]
    %v449 = vld [vmem:[%s1 + $0xd30] sm:$0xff]
    %v450 = vld [vmem:[%s1 + $0xd38] sm:$0xff]
    %v451 = vld [vmem:[%s1 + $0xd40] sm:$0xff]
    %v452 = vld [vmem:[%s1 + $0xd48] sm:$0xff]
    %v453 = vld [vmem:[%s1 + $0xd50] sm:$0xff]
    %v454 = vld [vmem:[%s1 + $0xd58] sm:$0xff]
    %v455 = vld [vmem:[%s1 + $0xd60] sm:$0xff]
    %v456 = vld [vmem:[%s1 + $0xd68] sm:$0xff]
    %v457 = vld [vmem:[%s1 + $0xd70] sm:$0xff]
    %v458 = vld [vmem:[%s1 + $0xd78] sm:$0xff]
    %v459 = vld [vmem:[%s1 + $0xd80] sm:$0xff]
    %v460 = vld [vmem:[%s1 + $0xd88] sm:$0xff]
    %v461 = vld [vmem:[%s1 + $0xd90] sm:$0xff]
    %v462 = vld [vmem:[%s1 + $0xd98] sm:$0xff]
    %v463 = vld [vmem:[%s1 + $0xda0] sm:$0xff]
    %v464 = vld [vmem:[%s1 + $0xda8] sm:$0xff]
    %v465 = vld [vmem:[%s1 + $0xdb0] sm:$0xff]
    %v466 = vld [vmem:[%s1 + $0xdb8] sm:$0xff]
    %v467 = vld [vmem:[%s1 + $0xdc0] sm:$0xff]
    %v468 = vld [vmem:[%s1 + $0xdc8] sm:$0xff]
    %v469 = vld [vmem:[%s1 + $0xdd0] sm:$0xff]
    %v470 = vld [vmem:[%s1 + $0xdd8] sm:$0xff]
    %v471 = vld [vmem:[%s1 + $0xde0] sm:$0xff]
    %v472 = vld [vmem:[%s1 + $0xde8] sm:$0xff]
    %v473 = vld [vmem:[%s1 + $0xdf0] sm:$0xff]
    %v474 = vld [vmem:[%s1 + $0xdf8] sm:$0xff]
    %v475 = vld [vmem:[%s1 + $0xe00] sm:$0xff]
    %v476 = vld [vmem:[%s1 + $0xe08] sm:$0xff]
    %v477 = vld [vmem:[%s1 + $0xe10] sm:$0xff]
    %v478 = vld [vmem:[%s1 + $0xe18] sm:$0xff]
    %v479 = vld [vmem:[%s1 + $0xe20] sm:$0xff]
    %v480 = vld [vmem:[%s1 + $0xe28] sm:$0xff]
    %v481 = vld [vmem:[%s1 + $0xe30] sm:$0xff]
    %v482 = vld [vmem:[%s1 + $0xe38] sm:$0xff]
    %v483 = vld [vmem:[%s1 + $0xe40] sm:$0xff]
    %v484 = vld [vmem:[%s1 + $0xe48] sm:$0xff]
    %v485 = vld [vmem:[%s1 + $0xe50] sm:$0xff]
    %v486 = vld [vmem:[%s1 + $0xe58] sm:$0xff]
    %v487 = vld [vmem:[%s1 + $0xe60] sm:$0xff]
    %v488 = vld [vmem:[%s1 + $0xe68] sm:$0xff]
    %v489 = vld [vmem:[%s1 + $0xe70] sm:$0xff]
    %v490 = vld [vmem:[%s1 + $0xe78] sm:$0xff]
    %v491 = vld [vmem:[%s1 + $0xe80] sm:$0xff]
    %v492 = vld [vmem:[%s1 + $0xe88] sm:$0xff]
    %v493 = vld [vmem:[%s1 + $0xe90] sm:$0xff]
    %v494 = vld [vmem:[%s1 + $0xe98] sm:$0xff]
    %v495 = vld [vmem:[%s1 + $0xea0] sm:$0xff]
    %v496 = vld [vmem:[%s1 + $0xea8] sm:$0xff]
    %v497 = vld [vmem:[%s1 + $0xeb0] sm:$0xff]
    %v498 = vld [vmem:[%s1 + $0xeb8] sm:$0xff]
    %v499 = vld [vmem:[%s1 + $0xec0] sm:$0xff]
    %v500 = vld [vmem:[%s1 + $0xec8] sm:$0xff]
    %v501 = vld [vmem:[%s1 + $0xed0] sm:$0xff]
    %v502 = vld [vmem:[%s1 + $0xed8] sm:$0xff]
    %v503 = vld [vmem:[%s1 + $0xee0] sm:$0xff]
    %v504 = vld [vmem:[%s1 + $0xee8] sm:$0xff]
    %v505 = vld [vmem:[%s1 + $0xef0] sm:$0xff]
    %v506 = vld [vmem:[%s1 + $0xef8] sm:$0xff]
    %v507 = vld [vmem:[%s1 + $0xf00] sm:$0xff]
    %v508 = vld [vmem:[%s1 + $0xf08] sm:$0xff]
    %v509 = vld [vmem:[%s1 + $0xf10] sm:$0xff]
    %v510 = vld [vmem:[%s1 + $0xf18] sm:$0xff]
    %v511 = vld [vmem:[%s1 + $0xf20] sm:$0xff]
    %v512 = vld [vmem:[%s1 + $0xf28] sm:$0xff]
    %v513 = vld [vmem:[%s1 + $0xf30] sm:$0xff]
    %v514 = vld [vmem:[%s1 + $0xf38] sm:$0xff]
    %v515 = vld [vmem:[%s1 + $0xf40] sm:$0xff]
    %v516 = vld [vmem:[%s1 + $0xf48] sm:$0xff]
    %v517 = vld [vmem:[%s1 + $0xf50] sm:$0xff]
    %v518 = vld [vmem:[%s1 + $0xf58] sm:$0xff]
    %v519 = vld [vmem:[%s1 + $0xf60] sm:$0xff]
    %v520 = vld [vmem:[%s1 + $0xf68] sm:$0xff]
    %v521 = vld [vmem:[%s1 + $0xf70] sm:$0xff]
    %v522 = vld [vmem:[%s1 + $0xf78] sm:$0xff]
    %v523 = vld [vmem:[%s1 + $0xf80] sm:$0xff]
    %v524 = vld [vmem:[%s1 + $0xf88] sm:$0xff]
    %v525 = vld [vmem:[%s1 + $0xf90] sm:$0xff]
    %v526 = vld [vmem:[%s1 + $0xf98] sm:$0xff]
    %v527 = vld [vmem:[%s1 + $0xfa0] sm:$0xff]
    %v528 = vld [vmem:[%s1 + $0xfa8] sm:$0xff]
    %v529 = vld [vmem:[%s1 + $0xfb0] sm:$0xff]
    %v530 = vld [vmem:[%s1 + $0xfb8] sm:$0xff]
    %v531 = vld [vmem:[%s1 + $0xfc0] sm:$0xff]
    %v532 = vld [vmem:[%s1 + $0xfc8] sm:$0xff]
    %v533 = vld [vmem:[%s1 + $0xfd0] sm:$0xff]
    %v534 = vld [vmem:[%s1 + $0xfd8] sm:$0xff]
    %v535 = vld [vmem:[%s1 + $0xfe0] sm:$0xff]
    %v536 = vld [vmem:[%s1 + $0xfe8] sm:$0xff]
    %v537 = vld [vmem:[%s1 + $0xff0] sm:$0xff]
    %v538 = vld [vmem:[%s1 + $0xff8] sm:$0xff]
    %v539 = vld [vmem:[%s1 + $0x1000] sm:$0xff]
    %v540 = vld [vmem:[%s1 + $0x1008] sm:$0xff]
    %v541 = vld [vmem:[%s1 + $0x1010] sm:$0xff]
    %v542 = vld [vmem:[%s1 + $0x1018] sm:$0xff]
    %v543 = vld [vmem:[%s1 + $0x1020] sm:$0xff]
    %v544 = vld [vmem:[%s1 + $0x1028] sm:$0xff]
    %v545 = vld [vmem:[%s1 + $0x1030] sm:$0xff]
    %v546 = vld [vmem:[%s1 + $0x1038] sm:$0xff]
    %v547 = vld [vmem:[%s1 + $0x1040] sm:$0xff]
    %v548 = vld [vmem:[%s1 + $0x1048] sm:$0xff]
    %v549 = vld [vmem:[%s1 + $0x1050] sm:$0xff]
    %v550 = vld [vmem:[%s1 + $0x1058] sm:$0xff]
    %v551 = vld [vmem:[%s1 + $0x1060] sm:$0xff]
    %v552 = vld [vmem:[%s1 + $0x1068] sm:$0xff]
    %v553 = vld [vmem:[%s1 + $0x1070] sm:$0xff]
    %v554 = vld [vmem:[%s1 + $0x1078] sm:$0xff]
    %v555 = vld [vmem:[%s1 + $0x1080] sm:$0xff]
    %v556 = vld [vmem:[%s1 + $0x1088] sm:$0xff]
    %v557 = vld [vmem:[%s1 + $0x1090] sm:$0xff]
    %v558 = vld [vmem:[%s1 + $0x1098] sm:$0xff]
    %v559 = vld [vmem:[%s1 + $0x10a0] sm:$0xff]
    %v560 = vld [vmem:[%s1 + $0x10a8] sm:$0xff]
    %v561 = vld [vmem:[%s1 + $0x10b0] sm:$0xff]
    %v562 = vld [vmem:[%s1 + $0x10b8] sm:$0xff]
    %v563 = vld [vmem:[%s1 + $0x10c0] sm:$0xff]
    %v564 = vld [vmem:[%s1 + $0x10c8] sm:$0xff]
    %v565 = vld [vmem:[%s1 + $0x10d0] sm:$0xff]
    %v566 = vld [vmem:[%s1 + $0x10d8] sm:$0xff]
    %v567 = vld [vmem:[%s1 + $0x10e0] sm:$0xff]
    %v568 = vld [vmem:[%s1 + $0x10e8] sm:$0xff]
    %v569 = vld [vmem:[%s1 + $0x10f0] sm:$0xff]
    %v570 = vld [vmem:[%s1 + $0x10f8] sm:$0xff]
    %v571 = vld [vmem:[%s1 + $0x1100] sm:$0xff]
    %v572 = vld [vmem:[%s1 + $0x1108] sm:$0xff]
    %v573 = vld [vmem:[%s1 + $0x1110] sm:$0xff]
    %v574 = vld [vmem:[%s1 + $0x1118] sm:$0xff]
    %v575 = vld [vmem:[%s1 + $0x1120] sm:$0xff]
    %v576 = vld [vmem:[%s1 + $0x1128] sm:$0xff]
    %v577 = vld [vmem:[%s1 + $0x1130] sm:$0xff]
    %v578 = vld [vmem:[%s1 + $0x1138] sm:$0xff]
    %v579 = vld [vmem:[%s1 + $0x1140] sm:$0xff]
    %v580 = vld [vmem:[%s1 + $0x1148] sm:$0xff]
    %v581 = vld [vmem:[%s1 + $0x1150] sm:$0xff]
    %v582 = vld [vmem:[%s1 + $0x1158] sm:$0xff]
    %v583 = vld [vmem:[%s1 + $0x1160] sm:$0xff]
    %v584 = vld [vmem:[%s1 + $0x1168] sm:$0xff]
    %v585 = vld [vmem:[%s1 + $0x1170] sm:$0xff]
    %v586 = vld [vmem:[%s1 + $0x1178] sm:$0xff]
    %v587 = vld [vmem:[%s1 + $0x1180] sm:$0xff]
    %v588 = vld [vmem:[%s1 + $0x1188] sm:$0xff]
    %v589 = vld [vmem:[%s1 + $0x1190] sm:$0xff]
    %v590 = vld [vmem:[%s1 + $0x1198] sm:$0xff]
    %v591 = vld [vmem:[%s1 + $0x11a0] sm:$0xff]
    %v592 = vld [vmem:[%s1 + $0x11a8] sm:$0xff]
    %v593 = vld [vmem:[%s1 + $0x11b0] sm:$0xff]
    %v594 = vld [vmem:[%s1 + $0x11b8] sm:$0xff]
    %v595 = vld [vmem:[%s1 + $0x11c0] sm:$0xff]
    %v596 = vld [vmem:[%s1 + $0x11c8] sm:$0xff]
    %v597 = vld [vmem:[%s1 + $0x11d0] sm:$0xff]
    %v598 = vld [vmem:[%s1 + $0x11d8] sm:$0xff]
    %v599 = vld [vmem:[%s1 + $0x11e0] sm:$0xff]
    %v600 = vld [vmem:[%s1 + $0x11e8] sm:$0xff]
    %v601 = vld [vmem:[%s1 + $0x11f0] sm:$0xff]
    %v602 = vld [vmem:[%s1 + $0x11f8] sm:$0xff]
    %v603 = vld [vmem:[%s1 + $0x1200] sm:$0xff]
    %v604 = vld [vmem:[%s1 + $0x1208] sm:$0xff]
    %v605 = vld [vmem:[%s1 + $0x1210] sm:$0xff]
    %v606 = vld [vmem:[%s1 + $0x1218] sm:$0xff]
    %v607 = vld [vmem:[%s1 + $0x1220] sm:$0xff]
    %v608 = vld [vmem:[%s1 + $0x1228] sm:$0xff]
    %v609 = vld [vmem:[%s1 + $0x1230] sm:$0xff]
    %v610 = vld [vmem:[%s1 + $0x1238] sm:$0xff]
    %v611 = vld [vmem:[%s1 + $0x1240] sm:$0xff]
    %v612 = vld [vmem:[%s1 + $0x1248] sm:$0xff]
    %v613 = vld [vmem:[%s1 + $0x1250] sm:$0xff]
    %v614 = vld [vmem:[%s1 + $0x1258] sm:$0xff]
    %v615 = vld [vmem:[%s1 + $0x1260] sm:$0xff]
    %v616 = vld [vmem:[%s1 + $0x1268] sm:$0xff]
    %v617 = vld [vmem:[%s1 + $0x1270] sm:$0xff]
    %v618 = vld [vmem:[%s1 + $0x1278] sm:$0xff]
    %v619 = vld [vmem:[%s1 + $0x1280] sm:$0xff]
    %v620 = vld [vmem:[%s1 + $0x1288] sm:$0xff]
    %v621 = vld [vmem:[%s1 + $0x1290] sm:$0xff]
    %v622 = vld [vmem:[%s1 + $0x1298] sm:$0xff]
    %v623 = vld [vmem:[%s1 + $0x12a0] sm:$0xff]
    %v624 = vld [vmem:[%s1 + $0x12a8] sm:$0xff]
    %v625 = vld [vmem:[%s1 + $0x12b0] sm:$0xff]
    %v626 = vld [vmem:[%s1 + $0x12b8] sm:$0xff]
    %v627 = vld [vmem:[%s1 + $0x12c0] sm:$0xff]
    %v628 = vld [vmem:[%s1 + $0x12c8] sm:$0xff]
    %v629 = vld [vmem:[%s1 + $0x12d0] sm:$0xff]
    %v630 = vld [vmem:[%s1 + $0x12d8] sm:$0xff]
    %v631 = vld [vmem:[%s1 + $0x12e0] sm:$0xff]
    %v632 = vld [vmem:[%s1 + $0x12e8] sm:$0xff]
    %v633 = vld [vmem:[%s1 + $0x12f0] sm:$0xff]
    %v634 = vld [vmem:[%s1 + $0x12f8] sm:$0xff]
    %v635 = vld [vmem:[%s1 + $0x1300] sm:$0xff]
    %v636 = vld [vmem:[%s1 + $0x1308] sm:$0xff]
    %v637 = vld [vmem:[%s1 + $0x1310] sm:$0xff]
    %v638 = vld [vmem:[%s1 + $0x1318] sm:$0xff]
    %v639 = vld [vmem:[%s1 + $0x1320] sm:$0xff]
    %v640 = vld [vmem:[%s1 + $0x1328] sm:$0xff]
    %v641 = vld [vmem:[%s1 + $0x1330] sm:$0xff]
    %v642 = vld [vmem:[%s1 + $0x1338] sm:$0xff]
    %v643 = vld [vmem:[%s1 + $0x1340] sm:$0xff]
    %v644 = vld [vmem:[%s1 + $0x1348] sm:$0xff]
    %v645 = vld [vmem:[%s1 + $0x1350] sm:$0xff]
    %v646 = vld [vmem:[%s1 + $0x1358] sm:$0xff]
    %v647 = vld [vmem:[%s1 + $0x1360] sm:$0xff]
    %v648 = vld [vmem:[%s1 + $0x1368] sm:$0xff]
    %v649 = vld [vmem:[%s1 + $0x1370] sm:$0xff]
    %v650 = vld [vmem:[%s1 + $0x1378] sm:$0xff]
    %v651 = vld [vmem:[%s1 + $0x1380] sm:$0xff]
    %v652 = vld [vmem:[%s1 + $0x1388] sm:$0xff]
    %v653 = vld [vmem:[%s1 + $0x1390] sm:$0xff]
    %v654 = vld [vmem:[%s1 + $0x1398] sm:$0xff]
    %v655 = vld [vmem:[%s1 + $0x13a0] sm:$0xff]
    %v656 = vld [vmem:[%s1 + $0x13a8] sm:$0xff]
    %v657 = vld [vmem:[%s1 + $0x13b0] sm:$0xff]
    %v658 = vld [vmem:[%s1 + $0x13b8] sm:$0xff]
    %v659 = vld [vmem:[%s1 + $0x13c0] sm:$0xff]
    %v660 = vld [vmem:[%s1 + $0x13c8] sm:$0xff]
    %v661 = vld [vmem:[%s1 + $0x13d0] sm:$0xff]
    %v662 = vld [vmem:[%s1 + $0x13d8] sm:$0xff]
    %v663 = vld [vmem:[%s1 + $0x13e0] sm:$0xff]
    %v664 = vld [vmem:[%s1 + $0x13e8] sm:$0xff]
    %v665 = vld [vmem:[%s1 + $0x13f0] sm:$0xff]
    %v666 = vld [vmem:[%s1 + $0x13f8] sm:$0xff]
    %v667 = vld [vmem:[%s1 + $0x1400] sm:$0xff]
    %v668 = vld [vmem:[%s1 + $0x1408] sm:$0xff]
    %v669 = vld [vmem:[%s1 + $0x1410] sm:$0xff]
    %v670 = vld [vmem:[%s1 + $0x1418] sm:$0xff]
    %v671 = vld [vmem:[%s1 + $0x1420] sm:$0xff]
    %v672 = vld [vmem:[%s1 + $0x1428] sm:$0xff]
    %v673 = vld [vmem:[%s1 + $0x1430] sm:$0xff]
    %v674 = vld [vmem:[%s1 + $0x1438] sm:$0xff]
    %v675 = vld [vmem:[%s1 + $0x1440] sm:$0xff]
    %v676 = vld [vmem:[%s1 + $0x1448] sm:$0xff]
    %v677 = vld [vmem:[%s1 + $0x1450] sm:$0xff]
    %v678 = vld [vmem:[%s1 + $0x1458] sm:$0xff]
    %v679 = vld [vmem:[%s1 + $0x1460] sm:$0xff]
    %v680 = vld [vmem:[%s1 + $0x1468] sm:$0xff]
    %v681 = vld [vmem:[%s1 + $0x1470] sm:$0xff]
    %v682 = vld [vmem:[%s1 + $0x1478] sm:$0xff]
    %v683 = vld [vmem:[%s1 + $0x1480] sm:$0xff]
    %v684 = vld [vmem:[%s1 + $0x1488] sm:$0xff]
    %v685 = vld [vmem:[%s1 + $0x1490] sm:$0xff]
    %v686 = vld [vmem:[%s1 + $0x1498] sm:$0xff]
    %v687 = vld [vmem:[%s1 + $0x14a0] sm:$0xff]
    %v688 = vld [vmem:[%s1 + $0x14a8] sm:$0xff]
    %v689 = vld [vmem:[%s1 + $0x14b0] sm:$0xff]
    %v690 = vld [vmem:[%s1 + $0x14b8] sm:$0xff]
    %v691 = vld [vmem:[%s1 + $0x14c0] sm:$0xff]
    %v692 = vld [vmem:[%s1 + $0x14c8] sm:$0xff]
    %v693 = vld [vmem:[%s1 + $0x14d0] sm:$0xff]
    %v694 = vld [vmem:[%s1 + $0x14d8] sm:$0xff]
    %v695 = vld [vmem:[%s1 + $0x14e0] sm:$0xff]
    %v696 = vld [vmem:[%s1 + $0x14e8] sm:$0xff]
    %v697 = vld [vmem:[%s1 + $0x14f0] sm:$0xff]
    %v698 = vld [vmem:[%s1 + $0x14f8] sm:$0xff]
    %v699 = vld [vmem:[%s1 + $0x1500] sm:$0xff]
    %v700 = vld [vmem:[%s1 + $0x1508] sm:$0xff]
    %v701 = vld [vmem:[%s1 + $0x1510] sm:$0xff]
    %v702 = vld [vmem:[%s1 + $0x1518] sm:$0xff]
    %v703 = vld [vmem:[%s1 + $0x1520] sm:$0xff]
    %v704 = vld [vmem:[%s1 + $0x1528] sm:$0xff]
    %v705 = vld [vmem:[%s1 + $0x1530] sm:$0xff]
    %v706 = vld [vmem:[%s1 + $0x1538] sm:$0xff]
    %v707 = vld [vmem:[%s1 + $0x1540] sm:$0xff]
    %v708 = vld [vmem:[%s1 + $0x1548] sm:$0xff]
    %v709 = vld [vmem:[%s1 + $0x1550] sm:$0xff]
    %v710 = vld [vmem:[%s1 + $0x1558] sm:$0xff]
    %v711 = vld [vmem:[%s1 + $0x1560] sm:$0xff]
    %v712 = vld [vmem:[%s1 + $0x1568] sm:$0xff]
    %v713 = vld [vmem:[%s1 + $0x1570] sm:$0xff]
    %v714 = vld [vmem:[%s1 + $0x1578] sm:$0xff]
    %v715 = vld [vmem:[%s1 + $0x1580] sm:$0xff]
    %v716 = vld [vmem:[%s1 + $0x1588] sm:$0xff]
    %v717 = vld [vmem:[%s1 + $0x1590] sm:$0xff]
    %v718 = vld [vmem:[%s1 + $0x1598] sm:$0xff]
    %v719 = vld [vmem:[%s1 + $0x15a0] sm:$0xff]
    %v720 = vld [vmem:[%s1 + $0x15a8] sm:$0xff]
    %v721 = vld [vmem:[%s1 + $0x15b0] sm:$0xff]
    %v722 = vld [vmem:[%s1 + $0x15b8] sm:$0xff]
    %v723 = vld [vmem:[%s1 + $0x15c0] sm:$0xff]
    %v724 = vld [vmem:[%s1 + $0x15c8] sm:$0xff]
    %v725 = vld [vmem:[%s1 + $0x15d0] sm:$0xff]
    %v726 = vld [vmem:[%s1 + $0x15d8] sm:$0xff]
    %v727 = vld [vmem:[%s1 + $0x15e0] sm:$0xff]
    %v728 = vld [vmem:[%s1 + $0x15e8] sm:$0xff]
    %v729 = vld [vmem:[%s1 + $0x15f0] sm:$0xff]
    %v730 = vld [vmem:[%s1 + $0x15f8] sm:$0xff]
    %v731 = vld [vmem:[%s1 + $0x1600] sm:$0xff]
    %v732 = vld [vmem:[%s1 + $0x1608] sm:$0xff]
    %v733 = vld [vmem:[%s1 + $0x1610] sm:$0xff]
    %v734 = vld [vmem:[%s1 + $0x1618] sm:$0xff]
    %v735 = vld [vmem:[%s1 + $0x1620] sm:$0xff]
    %v736 = vld [vmem:[%s1 + $0x1628] sm:$0xff]
    %v737 = vld [vmem:[%s1 + $0x1630] sm:$0xff]
    %v738 = vld [vmem:[%s1 + $0x1638] sm:$0xff]
    %v739 = vld [vmem:[%s1 + $0x1640] sm:$0xff]
    %v740 = vld [vmem:[%s1 + $0x1648] sm:$0xff]
    %v741 = vld [vmem:[%s1 + $0x1650] sm:$0xff]
    %v742 = vld [vmem:[%s1 + $0x1658] sm:$0xff]
    %v743 = vld [vmem:[%s1 + $0x1660] sm:$0xff]
    %v744 = vld [vmem:[%s1 + $0x1668] sm:$0xff]
    %v745 = vld [vmem:[%s1 + $0x1670] sm:$0xff]
    %v746 = vld [vmem:[%s1 + $0x1678] sm:$0xff]
    %v747 = vld [vmem:[%s1 + $0x1680] sm:$0xff]
    %v748 = vld [vmem:[%s1 + $0x1688] sm:$0xff]
    %v749 = vld [vmem:[%s1 + $0x1690] sm:$0xff]
    %v750 = vld [vmem:[%s1 + $0x1698] sm:$0xff]
    %v751 = vld [vmem:[%s1 + $0x16a0] sm:$0xff]
    %v752 = vld [vmem:[%s1 + $0x16a8] sm:$0xff]
    %v753 = vld [vmem:[%s1 + $0x16b0] sm:$0xff]
    %v754 = vld [vmem:[%s1 + $0x16b8] sm:$0xff]
    %v755 = vld [vmem:[%s1 + $0x16c0] sm:$0xff]
    %v756 = vld [vmem:[%s1 + $0x16c8] sm:$0xff]
    %v757 = vld [vmem:[%s1 + $0x16d0] sm:$0xff]
    %v758 = vld [vmem:[%s1 + $0x16d8] sm:$0xff]
    %v759 = vld [vmem:[%s1 + $0x16e0] sm:$0xff]
    %v760 = vld [vmem:[%s1 + $0x16e8] sm:$0xff]
    %v761 = vld [vmem:[%s1 + $0x16f0] sm:$0xff]
    %v762 = vld [vmem:[%s1 + $0x16f8] sm:$0xff]
    %v763 = vld [vmem:[%s1 + $0x1700] sm:$0xff]
    %v764 = vld [vmem:[%s1 + $0x1708] sm:$0xff]
    %v765 = vld [vmem:[%s1 + $0x1710] sm:$0xff]
    %v766 = vld [vmem:[%s1 + $0x1718] sm:$0xff]
    %v767 = vld [vmem:[%s1 + $0x1720] sm:$0xff]
    %v768 = vld [vmem:[%s1 + $0x1728] sm:$0xff]
    %v769 = vld [vmem:[%s1 + $0x1730] sm:$0xff]
    %v770 = vld [vmem:[%s1 + $0x1738] sm:$0xff]
    %v771 = vld [vmem:[%s1 + $0x1740] sm:$0xff]
    %v772 = vld [vmem:[%s1 + $0x1748] sm:$0xff]
    %v773 = vld [vmem:[%s1 + $0x1750] sm:$0xff]
    %v774 = vld [vmem:[%s1 + $0x1758] sm:$0xff]
    %v775 = vld [vmem:[%s1 + $0x1760] sm:$0xff]
    %v776 = vld [vmem:[%s1 + $0x1768] sm:$0xff]
    %v777 = vld [vmem:[%s1 + $0x1770] sm:$0xff]
    %v778 = vld [vmem:[%s1 + $0x1778] sm:$0xff]
    %v779 = vld [vmem:[%s1 + $0x1780] sm:$0xff]
    %v780 = vld [vmem:[%s1 + $0x1788] sm:$0xff]
    %v781 = vld [vmem:[%s1 + $0x1790] sm:$0xff]
    %v782 = vld [vmem:[%s1 + $0x1798] sm:$0xff]
    %v783 = vld [vmem:[%s1 + $0x17a0] sm:$0xff]
    %v784 = vld [vmem:[%s1 + $0x17a8] sm:$0xff]
    %v785 = vld [vmem:[%s1 + $0x17b0] sm:$0xff]
    %v786 = vld [vmem:[%s1 + $0x17b8] sm:$0xff]
    %v787 = vld [vmem:[%s1 + $0x17c0] sm:$0xff]
    %v788 = vld [vmem:[%s1 + $0x17c8] sm:$0xff]
    %v789 = vld [vmem:[%s1 + $0x17d0] sm:$0xff]
    %v790 = vld [vmem:[%s1 + $0x17d8] sm:$0xff]
    %v791 = vld [vmem:[%s1 + $0x17e0] sm:$0xff]
    %v792 = vld [vmem:[%s1 + $0x17e8] sm:$0xff]
    %v793 = vld [vmem:[%s1 + $0x17f0] sm:$0xff]
    %v794 = vld [vmem:[%s1 + $0x17f8] sm:$0xff]
    %v795 = vld [vmem:[%s1 + $0x1800] sm:$0xff]
    %v796 = vld [vmem:[%s1 + $0x1808] sm:$0xff]
    %v797 = vld [vmem:[%s1 + $0x1810] sm:$0xff]
    %v798 = vld [vmem:[%s1 + $0x1818] sm:$0xff]
    %v799 = vld [vmem:[%s1 + $0x1820] sm:$0xff]
    %v800 = vld [vmem:[%s1 + $0x1828] sm:$0xff]
    %v801 = vld [vmem:[%s1 + $0x1830] sm:$0xff]
    %v802 = vld [vmem:[%s1 + $0x1838] sm:$0xff]
    %v803 = vld [vmem:[%s1 + $0x1840] sm:$0xff]
    %v804 = vld [vmem:[%s1 + $0x1848] sm:$0xff]
    %v805 = vld [vmem:[%s1 + $0x1850] sm:$0xff]
    %v806 = vld [vmem:[%s1 + $0x1858] sm:$0xff]
    %v807 = vld [vmem:[%s1 + $0x1860] sm:$0xff]
    %v808 = vld [vmem:[%s1 + $0x1868] sm:$0xff]
    %v809 = vld [vmem:[%s1 + $0x1870] sm:$0xff]
    %v810 = vld [vmem:[%s1 + $0x1878] sm:$0xff]
    %v811 = vld [vmem:[%s1 + $0x1880] sm:$0xff]
    %v812 = vld [vmem:[%s1 + $0x1888] sm:$0xff]
    %v813 = vld [vmem:[%s1 + $0x1890] sm:$0xff]
    %v814 = vld [vmem:[%s1 + $0x1898] sm:$0xff]
    %v815 = vld [vmem:[%s1 + $0x18a0] sm:$0xff]
    %v816 = vld [vmem:[%s1 + $0x18a8] sm:$0xff]
    %v817 = vld [vmem:[%s1 + $0x18b0] sm:$0xff]
    %v818 = vld [vmem:[%s1 + $0x18b8] sm:$0xff]
    %v819 = vld [vmem:[%s1 + $0x18c0] sm:$0xff]
    %v820 = vld [vmem:[%s1 + $0x18c8] sm:$0xff]
    %v821 = vld [vmem:[%s1 + $0x18d0] sm:$0xff]
    %v822 = vld [vmem:[%s1 + $0x18d8] sm:$0xff]
    %v823 = vld [vmem:[%s1 + $0x18e0] sm:$0xff]
    %v824 = vld [vmem:[%s1 + $0x18e8] sm:$0xff]
    %v825 = vld [vmem:[%s1 + $0x18f0] sm:$0xff]
    %v826 = vld [vmem:[%s1 + $0x18f8] sm:$0xff]
    %v827 = vld [vmem:[%s1 + $0x1900] sm:$0xff]
    %v828 = vld [vmem:[%s1 + $0x1908] sm:$0xff]
    %v829 = vld [vmem:[%s1 + $0x1910] sm:$0xff]
    %v830 = vld [vmem:[%s1 + $0x1918] sm:$0xff]
    %v831 = vld [vmem:[%s1 + $0x1920] sm:$0xff]
    %v832 = vld [vmem:[%s1 + $0x1928] sm:$0xff]
    %v833 = vld [vmem:[%s1 + $0x1930] sm:$0xff]
    %v834 = vld [vmem:[%s1 + $0x1938] sm:$0xff]
    %v835 = vld [vmem:[%s1 + $0x1940] sm:$0xff]
    %v836 = vld [vmem:[%s1 + $0x1948] sm:$0xff]
    %v837 = vld [vmem:[%s1 + $0x1950] sm:$0xff]
    %v838 = vld [vmem:[%s1 + $0x1958] sm:$0xff]
    %v839 = vld [vmem:[%s1 + $0x1960] sm:$0xff]
    %v840 = vld [vmem:[%s1 + $0x1968] sm:$0xff]
    %v841 = vld [vmem:[%s1 + $0x1970] sm:$0xff]
    %v842 = vld [vmem:[%s1 + $0x1978] sm:$0xff]
    %v843 = vld [vmem:[%s1 + $0x1980] sm:$0xff]
    %v844 = vld [vmem:[%s1 + $0x1988] sm:$0xff]
    %v845 = vld [vmem:[%s1 + $0x1990] sm:$0xff]
    %v846 = vld [vmem:[%s1 + $0x1998] sm:$0xff]
    %v847 = vld [vmem:[%s1 + $0x19a0] sm:$0xff]
    %v848 = vld [vmem:[%s1 + $0x19a8] sm:$0xff]
    %v849 = vld [vmem:[%s1 + $0x19b0] sm:$0xff]
    %v850 = vld [vmem:[%s1 + $0x19b8] sm:$0xff]
    %v851 = vld [vmem:[%s1 + $0x19c0] sm:$0xff]
    %v852 = vld [vmem:[%s1 + $0x19c8] sm:$0xff]
    %v853 = vld [vmem:[%s1 + $0x19d0] sm:$0xff]
    %v854 = vld [vmem:[%s1 + $0x19d8] sm:$0xff]
    %v855 = vld [vmem:[%s1 + $0x19e0] sm:$0xff]
    %v856 = vld [vmem:[%s1 + $0x19e8] sm:$0xff]
    %v857 = vld [vmem:[%s1 + $0x19f0] sm:$0xff]
    %v858 = vld [vmem:[%s1 + $0x19f8] sm:$0xff]
    %v859 = vld [vmem:[%s1 + $0x1a00] sm:$0xff]
    %v860 = vld [vmem:[%s1 + $0x1a08] sm:$0xff]
    %v861 = vld [vmem:[%s1 + $0x1a10] sm:$0xff]
    %v862 = vld [vmem:[%s1 + $0x1a18] sm:$0xff]
    %v863 = vld [vmem:[%s1 + $0x1a20] sm:$0xff]
    %v864 = vld [vmem:[%s1 + $0x1a28] sm:$0xff]
    %v865 = vld [vmem:[%s1 + $0x1a30] sm:$0xff]
    %v866 = vld [vmem:[%s1 + $0x1a38] sm:$0xff]
    %v867 = vld [vmem:[%s1 + $0x1a40] sm:$0xff]
    %v868 = vld [vmem:[%s1 + $0x1a48] sm:$0xff]
    %v869 = vld [vmem:[%s1 + $0x1a50] sm:$0xff]
    %v870 = vld [vmem:[%s1 + $0x1a58] sm:$0xff]
    %v871 = vld [vmem:[%s1 + $0x1a60] sm:$0xff]
    %v872 = vld [vmem:[%s1 + $0x1a68] sm:$0xff]
    %v873 = vld [vmem:[%s1 + $0x1a70] sm:$0xff]
    %v874 = vld [vmem:[%s1 + $0x1a78] sm:$0xff]
    %v875 = vld [vmem:[%s1 + $0x1a80] sm:$0xff]
    %v876 = vld [vmem:[%s1 + $0x1a88] sm:$0xff]
    %v877 = vld [vmem:[%s1 + $0x1a90] sm:$0xff]
    %v878 = vld [vmem:[%s1 + $0x1a98] sm:$0xff]
    %v879 = vld [vmem:[%s1 + $0x1aa0] sm:$0xff]
    %v880 = vld [vmem:[%s1 + $0x1aa8] sm:$0xff]
    %v881 = vld [vmem:[%s1 + $0x1ab0] sm:$0xff]
    %v882 = vld [vmem:[%s1 + $0x1ab8] sm:$0xff]
    %v883 = vld [vmem:[%s1 + $0x1ac0] sm:$0xff]
    %v884 = vld [vmem:[%s1 + $0x1ac8] sm:$0xff]
    %v885 = vld [vmem:[%s1 + $0x1ad0] sm:$0xff]
    %v886 = vld [vmem:[%s1 + $0x1ad8] sm:$0xff]
    %v887 = vld [vmem:[%s1 + $0x1ae0] sm:$0xff]
    %v888 = vld [vmem:[%s1 + $0x1ae8] sm:$0xff]
    %v889 = vld [vmem:[%s1 + $0x1af0] sm:$0xff]
    %v890 = vld [vmem:[%s1 + $0x1af8] sm:$0xff]
    %v891 = vld [vmem:[%s1 + $0x1b00] sm:$0xff]
    %v892 = vld [vmem:[%s1 + $0x1b08] sm:$0xff]
    %v893 = vld [vmem:[%s1 + $0x1b10] sm:$0xff]
    %v894 = vld [vmem:[%s1 + $0x1b18] sm:$0xff]
    %v895 = vld [vmem:[%s1 + $0x1b20] sm:$0xff]
    %v896 = vld [vmem:[%s1 + $0x1b28] sm:$0xff]
    %v897 = vld [vmem:[%s1 + $0x1b30] sm:$0xff]
    %v898 = vld [vmem:[%s1 + $0x1b38] sm:$0xff]
    %v899 = vld [vmem:[%s1 + $0x1b40] sm:$0xff]
    %v900 = vld [vmem:[%s1 + $0x1b48] sm:$0xff]
    %v901 = vld [vmem:[%s1 + $0x1b50] sm:$0xff]
    %v902 = vld [vmem:[%s1 + $0x1b58] sm:$0xff]
    %v903 = vld [vmem:[%s1 + $0x1b60] sm:$0xff]
    %v904 = vld [vmem:[%s1 + $0x1b68] sm:$0xff]
    %v905 = vld [vmem:[%s1 + $0x1b70] sm:$0xff]
    %v906 = vld [vmem:[%s1 + $0x1b78] sm:$0xff]
    %v907 = vld [vmem:[%s1 + $0x1b80] sm:$0xff]
    %v908 = vld [vmem:[%s1 + $0x1b88] sm:$0xff]
    %v909 = vld [vmem:[%s1 + $0x1b90] sm:$0xff]
    %v910 = vld [vmem:[%s1 + $0x1b98] sm:$0xff]
    %v911 = vld [vmem:[%s1 + $0x1ba0] sm:$0xff]
    %v912 = vld [vmem:[%s1 + $0x1ba8] sm:$0xff]
    %v913 = vld [vmem:[%s1 + $0x1bb0] sm:$0xff]
    %v914 = vld [vmem:[%s1 + $0x1bb8] sm:$0xff]
    %v915 = vld [vmem:[%s1 + $0x1bc0] sm:$0xff]
    %v916 = vld [vmem:[%s1 + $0x1bc8] sm:$0xff]
    %v917 = vld [vmem:[%s1 + $0x1bd0] sm:$0xff]
    %v918 = vld [vmem:[%s1 + $0x1bd8] sm:$0xff]
    %v919 = vld [vmem:[%s1 + $0x1be0] sm:$0xff]
    %v920 = vld [vmem:[%s1 + $0x1be8] sm:$0xff]
    %v921 = vld [vmem:[%s1 + $0x1bf0] sm:$0xff]
    %v922 = vld [vmem:[%s1 + $0x1bf8] sm:$0xff]
    %v923 = vld [vmem:[%s1 + $0x1c00] sm:$0xff]
    %v924 = vld [vmem:[%s1 + $0x1c08] sm:$0xff]
    %v925 = vld [vmem:[%s1 + $0x1c10] sm:$0xff]
    %v926 = vld [vmem:[%s1 + $0x1c18] sm:$0xff]
    %v927 = vld [vmem:[%s1 + $0x1c20] sm:$0xff]
    %v928 = vld [vmem:[%s1 + $0x1c28] sm:$0xff]
    %v929 = vld [vmem:[%s1 + $0x1c30] sm:$0xff]
    %v930 = vld [vmem:[%s1 + $0x1c38] sm:$0xff]
    %v931 = vld [vmem:[%s1 + $0x1c40] sm:$0xff]
    %v932 = vld [vmem:[%s1 + $0x1c48] sm:$0xff]
    %v933 = vld [vmem:[%s1 + $0x1c50] sm:$0xff]
    %v934 = vld [vmem:[%s1 + $0x1c58] sm:$0xff]
    %v935 = vld [vmem:[%s1 + $0x1c60] sm:$0xff]
    %v936 = vld [vmem:[%s1 + $0x1c68] sm:$0xff]
    %v937 = vld [vmem:[%s1 + $0x1c70] sm:$0xff]
    %v938 = vld [vmem:[%s1 + $0x1c78] sm:$0xff]
    %v939 = vld [vmem:[%s1 + $0x1c80] sm:$0xff]
    %v940 = vld [vmem:[%s1 + $0x1c88] sm:$0xff]
    %v941 = vld [vmem:[%s1 + $0x1c90] sm:$0xff]
    %v942 = vld [vmem:[%s1 + $0x1c98] sm:$0xff]
    %v943 = vld [vmem:[%s1 + $0x1ca0] sm:$0xff]
    %v944 = vld [vmem:[%s1 + $0x1ca8] sm:$0xff]
    %v945 = vld [vmem:[%s1 + $0x1cb0] sm:$0xff]
    %v946 = vld [vmem:[%s1 + $0x1cb8] sm:$0xff]
    %v947 = vld [vmem:[%s1 + $0x1cc0] sm:$0xff]
    %v948 = vld [vmem:[%s1 + $0x1cc8] sm:$0xff]
    %v949 = vld [vmem:[%s1 + $0x1cd0] sm:$0xff]
    %v950 = vld [vmem:[%s1 + $0x1cd8] sm:$0xff]
    %v951 = vld [vmem:[%s1 + $0x1ce0] sm:$0xff]
    %v952 = vld [vmem:[%s1 + $0x1ce8] sm:$0xff]
    %v953 = vld [vmem:[%s1 + $0x1cf0] sm:$0xff]
    %v954 = vld [vmem:[%s1 + $0x1cf8] sm:$0xff]
    %v955 = vld [vmem:[%s1 + $0x1d00] sm:$0xff]
    %v956 = vld [vmem:[%s1 + $0x1d08] sm:$0xff]
    %v957 = vld [vmem:[%s1 + $0x1d10] sm:$0xff]
    %v958 = vld [vmem:[%s1 + $0x1d18] sm:$0xff]
    %v959 = vld [vmem:[%s1 + $0x1d20] sm:$0xff]
    %v960 = vld [vmem:[%s1 + $0x1d28] sm:$0xff]
    %v961 = vld [vmem:[%s1 + $0x1d30] sm:$0xff]
    %v962 = vld [vmem:[%s1 + $0x1d38] sm:$0xff]
    %v963 = vld [vmem:[%s1 + $0x1d40] sm:$0xff]
    %v964 = vld [vmem:[%s1 + $0x1d48] sm:$0xff]
    %v965 = vld [vmem:[%s1 + $0x1d50] sm:$0xff]
    %v966 = vld [vmem:[%s1 + $0x1d58] sm:$0xff]
    %v967 = vld [vmem:[%s1 + $0x1d60] sm:$0xff]
    %v968 = vld [vmem:[%s1 + $0x1d68] sm:$0xff]
    %v969 = vld [vmem:[%s1 + $0x1d70] sm:$0xff]
    %v970 = vld [vmem:[%s1 + $0x1d78] sm:$0xff]
    %v971 = vld [vmem:[%s1 + $0x1d80] sm:$0xff]
    %v972 = vld [vmem:[%s1 + $0x1d88] sm:$0xff]
    %v973 = vld [vmem:[%s1 + $0x1d90] sm:$0xff]
    %v974 = vld [vmem:[%s1 + $0x1d98] sm:$0xff]
    %v975 = vld [vmem:[%s1 + $0x1da0] sm:$0xff]
    %v976 = vld [vmem:[%s1 + $0x1da8] sm:$0xff]
    %v977 = vld [vmem:[%s1 + $0x1db0] sm:$0xff]
    %v978 = vld [vmem:[%s1 + $0x1db8] sm:$0xff]
    %v979 = vld [vmem:[%s1 + $0x1dc0] sm:$0xff]
    %v980 = vld [vmem:[%s1 + $0x1dc8] sm:$0xff]
    %v981 = vld [vmem:[%s1 + $0x1dd0] sm:$0xff]
    %v982 = vld [vmem:[%s1 + $0x1dd8] sm:$0xff]
    %v983 = vld [vmem:[%s1 + $0x1de0] sm:$0xff]
    %v984 = vld [vmem:[%s1 + $0x1de8] sm:$0xff]
    %v985 = vld [vmem:[%s1 + $0x1df0] sm:$0xff]
    %v986 = vld [vmem:[%s1 + $0x1df8] sm:$0xff]
    %v987 = vld [vmem:[%s1 + $0x1e00] sm:$0xff]
    %v988 = vld [vmem:[%s1 + $0x1e08] sm:$0xff]
    %v989 = vld [vmem:[%s1 + $0x1e10] sm:$0xff]
    %v990 = vld [vmem:[%s1 + $0x1e18] sm:$0xff]
    %v991 = vld [vmem:[%s1 + $0x1e20] sm:$0xff]
    %v992 = vld [vmem:[%s1 + $0x1e28] sm:$0xff]
    %v993 = vld [vmem:[%s1 + $0x1e30] sm:$0xff]
    %v994 = vld [vmem:[%s1 + $0x1e38] sm:$0xff]
    %v995 = vld [vmem:[%s1 + $0x1e40] sm:$0xff]
    %v996 = vld [vmem:[%s1 + $0x1e48] sm:$0xff]
    %v997 = vld [vmem:[%s1 + $0x1e50] sm:$0xff]
    %v998 = vld [vmem:[%s1 + $0x1e58] sm:$0xff]
    %v999 = vld [vmem:[%s1 + $0x1e60] sm:$0xff]
    %v1000 = vld [vmem:[%s1 + $0x1e68] sm:$0xff]
    %v1001 = vld [vmem:[%s1 + $0x1e70] sm:$0xff]
    %v1002 = vld [vmem:[%s1 + $0x1e78] sm:$0xff]
    %v1003 = vld [vmem:[%s1 + $0x1e80] sm:$0xff]
    %v1004 = vld [vmem:[%s1 + $0x1e88] sm:$0xff]
    %v1005 = vld [vmem:[%s1 + $0x1e90] sm:$0xff]
    %v1006 = vld [vmem:[%s1 + $0x1e98] sm:$0xff]
    %v1007 = vld [vmem:[%s1 + $0x1ea0] sm:$0xff]
    %v1008 = vld [vmem:[%s1 + $0x1ea8] sm:$0xff]
    %v1009 = vld [vmem:[%s1 + $0x1eb0] sm:$0xff]
    %v1010 = vld [vmem:[%s1 + $0x1eb8] sm:$0xff]
    %v1011 = vld [vmem:[%s1 + $0x1ec0] sm:$0xff]
    %v1012 = vld [vmem:[%s1 + $0x1ec8] sm:$0xff]
    %v1013 = vld [vmem:[%s1 + $0x1ed0] sm:$0xff]
    %v1014 = vld [vmem:[%s1 + $0x1ed8] sm:$0xff]
    %v1015 = vld [vmem:[%s1 + $0x1ee0] sm:$0xff]
    %v1016 = vld [vmem:[%s1 + $0x1ee8] sm:$0xff]
    %v1017 = vld [vmem:[%s1 + $0x1ef0] sm:$0xff]
    %v1018 = vld [vmem:[%s1 + $0x1ef8] sm:$0xff]
    %v1019 = vld [vmem:[%s1 + $0x1f00] sm:$0xff]
    %v1020 = vld [vmem:[%s1 + $0x1f08] sm:$0xff]
    %v1021 = vld [vmem:[%s1 + $0x1f10] sm:$0xff]
    %v1022 = vld [vmem:[%s1 + $0x1f18] sm:$0xff]
    %v1023 = vld [vmem:[%s1 + $0x1f20] sm:$0xff]
    %v1024 = vld [vmem:[%s1 + $0x1f28] sm:$0xff]
    %v1025 = vld [vmem:[%s1 + $0x1f30] sm:$0xff]
    %v1026 = vld [vmem:[%s1 + $0x1f38] sm:$0xff]
    %v1027 = vld [vmem:[%s1 + $0x1f40] sm:$0xff]
    %v1028 = vld [vmem:[%s1 + $0x1f48] sm:$0xff]
    %v1029 = vld [vmem:[%s1 + $0x1f50] sm:$0xff]
    %v1030 = vld [vmem:[%s1 + $0x1f58] sm:$0xff]
    %v1031 = vld [vmem:[%s1 + $0x1f60] sm:$0xff]
    %v1032 = vld [vmem:[%s1 + $0x1f68] sm:$0xff]
    %v1033 = vld [vmem:[%s1 + $0x1f70] sm:$0xff]
    %v1034 = vld [vmem:[%s1 + $0x1f78] sm:$0xff]
    %v1035 = vld [vmem:[%s1 + $0x1f80] sm:$0xff]
    %v1036 = vld [vmem:[%s1 + $0x1f88] sm:$0xff]
    %v1037 = vld [vmem:[%s1 + $0x1f90] sm:$0xff]
    %v1038 = vld [vmem:[%s1 + $0x1f98] sm:$0xff]
    %v1039 = vld [vmem:[%s1 + $0x1fa0] sm:$0xff]
    %v1040 = vld [vmem:[%s1 + $0x1fa8] sm:$0xff]
    %v1041 = vld [vmem:[%s1 + $0x1fb0] sm:$0xff]
    %v1042 = vld [vmem:[%s1 + $0x1fb8] sm:$0xff]
    %v1043 = vld [vmem:[%s1 + $0x1fc0] sm:$0xff]
    %v1044 = vld [vmem:[%s1 + $0x1fc8] sm:$0xff]
    %v1045 = vld [vmem:[%s1 + $0x1fd0] sm:$0xff]
    %v1046 = vld [vmem:[%s1 + $0x1fd8] sm:$0xff]
    %v1047 = vld [vmem:[%s1 + $0x1fe0] sm:$0xff]
    %v1048 = vld [vmem:[%s1 + $0x1fe8] sm:$0xff]
    %v1049 = vld [vmem:[%s1 + $0x1ff0] sm:$0xff]
    %v1050 = vld [vmem:[%s1 + $0x1ff8] sm:$0xff]
    %v1051 = vld [vmem:[%s1 + $0x2000] sm:$0xff]
    %v1052 = vld [vmem:[%s1 + $0x2008] sm:$0xff]
    %v1053 = vld [vmem:[%s1 + $0x2010] sm:$0xff]
    %v1054 = vld [vmem:[%s1 + $0x2018] sm:$0xff]
    %v1055 = vld [vmem:[%s1 + $0x2020] sm:$0xff]
    %v1056 = vld [vmem:[%s1 + $0x2028] sm:$0xff]
    %v1057 = vld [vmem:[%s1 + $0x2030] sm:$0xff]
    %v1058 = vld [vmem:[%s1 + $0x2038] sm:$0xff]
    %v1059 = vld [vmem:[%s1 + $0x2040] sm:$0xff]
    %v1060 = vld [vmem:[%s1 + $0x2048] sm:$0xff]
    %v1061 = vld [vmem:[%s1 + $0x2050] sm:$0xff]
    %v1062 = vld [vmem:[%s1 + $0x2058] sm:$0xff]
    %v1063 = vld [vmem:[%s1 + $0x2060] sm:$0xff]
    %v1064 = vld [vmem:[%s1 + $0x2068] sm:$0xff]
    %v1065 = vld [vmem:[%s1 + $0x2070] sm:$0xff]
    %v1066 = vld [vmem:[%s1 + $0x2078] sm:$0xff]
    %v1067 = vld [vmem:[%s1 + $0x2080] sm:$0xff]
    %v1068 = vld [vmem:[%s1 + $0x2088] sm:$0xff]
    %v1069 = vld [vmem:[%s1 + $0x2090] sm:$0xff]
    %v1070 = vld [vmem:[%s1 + $0x2098] sm:$0xff]
    %v1071 = vld [vmem:[%s1 + $0x20a0] sm:$0xff]
    %v1072 = vld [vmem:[%s1 + $0x20a8] sm:$0xff]
    %v1073 = vld [vmem:[%s1 + $0x20b0] sm:$0xff]
    %v1074 = vld [vmem:[%s1 + $0x20b8] sm:$0xff]
    %v1075 = vld [vmem:[%s1 + $0x20c0] sm:$0xff]
    %v1076 = vld [vmem:[%s1 + $0x20c8] sm:$0xff]
    %v1077 = vld [vmem:[%s1 + $0x20d0] sm:$0xff]
    %v1078 = vld [vmem:[%s1 + $0x20d8] sm:$0xff]
    %v1079 = vld [vmem:[%s1 + $0x20e0] sm:$0xff]
    %v1080 = vld [vmem:[%s1 + $0x20e8] sm:$0xff]
    %v1081 = vld [vmem:[%s1 + $0x20f0] sm:$0xff]
    %v1082 = vld [vmem:[%s1 + $0x20f8] sm:$0xff]
    %v1083 = vld [vmem:[%s1 + $0x2100] sm:$0xff]
    %v1084 = vld [vmem:[%s1 + $0x2108] sm:$0xff]
    %v1085 = vld [vmem:[%s1 + $0x2110] sm:$0xff]
    %v1086 = vld [vmem:[%s1 + $0x2118] sm:$0xff]
    %v1087 = vld [vmem:[%s1 + $0x2120] sm:$0xff]
    %v1088 = vld [vmem:[%s1 + $0x2128] sm:$0xff]
    %v1089 = vld [vmem:[%s1 + $0x2130] sm:$0xff]
    %v1090 = vld [vmem:[%s1 + $0x2138] sm:$0xff]
    %v1091 = vld [vmem:[%s1 + $0x2140] sm:$0xff]
    %v1092 = vld [vmem:[%s1 + $0x2148] sm:$0xff]
    %v1093 = vld [vmem:[%s1 + $0x2150] sm:$0xff]
    %v1094 = vld [vmem:[%s1 + $0x2158] sm:$0xff]
    %v1095 = vld [vmem:[%s1 + $0x2160] sm:$0xff]
    %v1096 = vld [vmem:[%s1 + $0x2168] sm:$0xff]
    %v1097 = vld [vmem:[%s1 + $0x2170] sm:$0xff]
    %v1098 = vld [vmem:[%s1 + $0x2178] sm:$0xff]
    %v1099 = vld [vmem:[%s1 + $0x2180] sm:$0xff]
    %v1100 = vld [vmem:[%s1 + $0x2188] sm:$0xff]
    %v1101 = vld [vmem:[%s1 + $0x2190] sm:$0xff]
    %v1102 = vld [vmem:[%s1 + $0x2198] sm:$0xff]
    %v1103 = vld [vmem:[%s1 + $0x21a0] sm:$0xff]
    %v1104 = vld [vmem:[%s1 + $0x21a8] sm:$0xff]
    %v1105 = vld [vmem:[%s1 + $0x21b0] sm:$0xff]
    %v1106 = vld [vmem:[%s1 + $0x21b8] sm:$0xff]
    %v1107 = vld [vmem:[%s1 + $0x21c0] sm:$0xff]
    %v1108 = vld [vmem:[%s1 + $0x21c8] sm:$0xff]
    %v1109 = vld [vmem:[%s1 + $0x21d0] sm:$0xff]
    %v1110 = vld [vmem:[%s1 + $0x21d8] sm:$0xff]
    %v1111 = vld [vmem:[%s1 + $0x21e0] sm:$0xff]
    %v1112 = vld [vmem:[%s1 + $0x21e8] sm:$0xff]
    %v1113 = vld [vmem:[%s1 + $0x21f0] sm:$0xff]
    %v1114 = vld [vmem:[%s1 + $0x21f8] sm:$0xff]
    %v1115 = vld [vmem:[%s1 + $0x2200] sm:$0xff]
    %v1116 = vld [vmem:[%s1 + $0x2208] sm:$0xff]
    %v1117 = vld [vmem:[%s1 + $0x2210] sm:$0xff]
    %v1118 = vld [vmem:[%s1 + $0x2218] sm:$0xff]
    %v1119 = vld [vmem:[%s1 + $0x2220] sm:$0xff]
    %v1120 = vld [vmem:[%s1 + $0x2228] sm:$0xff]
    %v1121 = vld [vmem:[%s1 + $0x2230] sm:$0xff]
    %v1122 = vld [vmem:[%s1 + $0x2238] sm:$0xff]
    %v1123 = vld [vmem:[%s1 + $0x2240] sm:$0xff]
    %v1124 = vld [vmem:[%s1 + $0x2248] sm:$0xff]
    %v1125 = vld [vmem:[%s1 + $0x2250] sm:$0xff]
    %v1126 = vld [vmem:[%s1 + $0x2258] sm:$0xff]
    %v1127 = vld [vmem:[%s1 + $0x2260] sm:$0xff]
    %v1128 = vld [vmem:[%s1 + $0x2268] sm:$0xff]
    %v1129 = vld [vmem:[%s1 + $0x2270] sm:$0xff]
    %v1130 = vld [vmem:[%s1 + $0x2278] sm:$0xff]
    %v1131 = vld [vmem:[%s1 + $0x2280] sm:$0xff]
    %v1132 = vld [vmem:[%s1 + $0x2288] sm:$0xff]
    %v1133 = vld [vmem:[%s1 + $0x2290] sm:$0xff]
    %v1134 = vld [vmem:[%s1 + $0x2298] sm:$0xff]
    %v1135 = vld [vmem:[%s1 + $0x22a0] sm:$0xff]
    %v1136 = vld [vmem:[%s1 + $0x22a8] sm:$0xff]
    %v1137 = vld [vmem:[%s1 + $0x22b0] sm:$0xff]
    %v1138 = vld [vmem:[%s1 + $0x22b8] sm:$0xff]
    %v1139 = vld [vmem:[%s1 + $0x22c0] sm:$0xff]
    %v1140 = vld [vmem:[%s1 + $0x22c8] sm:$0xff]
    %v1141 = vld [vmem:[%s1 + $0x22d0] sm:$0xff]
    %v1142 = vld [vmem:[%s1 + $0x22d8] sm:$0xff]
    %v1143 = vld [vmem:[%s1 + $0x22e0] sm:$0xff]
    %v1144 = vld [vmem:[%s1 + $0x22e8] sm:$0xff]
    %v1145 = vld [vmem:[%s1 + $0x22f0] sm:$0xff]
    %v1146 = vld [vmem:[%s1 + $0x22f8] sm:$0xff]
    %v1147 = vld [vmem:[%s1 + $0x2300] sm:$0xff]
    %v1148 = vld [vmem:[%s1 + $0x2308] sm:$0xff]
    %v1149 = vld [vmem:[%s1 + $0x2310] sm:$0xff]
    %v1150 = vld [vmem:[%s1 + $0x2318] sm:$0xff]
    %v1151 = vld [vmem:[%s1 + $0x2320] sm:$0xff]
    %v1152 = vld [vmem:[%s1 + $0x2328] sm:$0xff]
    %v1153 = vld [vmem:[%s1 + $0x2330] sm:$0xff]
    %v1154 = vld [vmem:[%s1 + $0x2338] sm:$0xff]
    %v1155 = vld [vmem:[%s1 + $0x2340] sm:$0xff]
    %v1156 = vld [vmem:[%s1 + $0x2348] sm:$0xff]
    %v1157 = vld [vmem:[%s1 + $0x2350] sm:$0xff]
    %v1158 = vld [vmem:[%s1 + $0x2358] sm:$0xff]
    %v1159 = vld [vmem:[%s1 + $0x2360] sm:$0xff]
    %v1160 = vld [vmem:[%s1 + $0x2368] sm:$0xff]
    %v1161 = vld [vmem:[%s1 + $0x2370] sm:$0xff]
    %v1162 = vld [vmem:[%s1 + $0x2378] sm:$0xff]
    %v1163 = vld [vmem:[%s1 + $0x2380] sm:$0xff]
    %v1164 = vld [vmem:[%s1 + $0x2388] sm:$0xff]
    %v1165 = vld [vmem:[%s1 + $0x2390] sm:$0xff]
    %v1166 = vld [vmem:[%s1 + $0x2398] sm:$0xff]
    %v1167 = vld [vmem:[%s1 + $0x23a0] sm:$0xff]
    %v1168 = vld [vmem:[%s1 + $0x23a8] sm:$0xff]
    %v1169 = vld [vmem:[%s1 + $0x23b0] sm:$0xff]
    %v1170 = vld [vmem:[%s1 + $0x23b8] sm:$0xff]
    %v1171 = vld [vmem:[%s1 + $0x23c0] sm:$0xff]
    %v1172 = vld [vmem:[%s1 + $0x23c8] sm:$0xff]
    %v1173 = vld [vmem:[%s1 + $0x23d0] sm:$0xff]
    %v1174 = vld [vmem:[%s1 + $0x23d8] sm:$0xff]
    %v1175 = vld [vmem:[%s1 + $0x23e0] sm:$0xff]
    %v1176 = vld [vmem:[%s1 + $0x23e8] sm:$0xff]
    %v1177 = vld [vmem:[%s1 + $0x23f0] sm:$0xff]
    %v1178 = vld [vmem:[%s1 + $0x23f8] sm:$0xff]
    %v1179 = vld [vmem:[%s2] sm:$0xf]
    %v1181 = vlaneseq
    %v1182 = vshrl.u32 %v1181, 7
    %v1183 = vsub.s32 0, %v1182
    %v1184 = vrot.slane %v1179, %v1183
    %v1185 = vlaneseq
    %v1186 = vshrl.u32 %v1185, 7
    %v1187 = vsub.s32 1, %v1186
    %v1188 = vrot.slane %v1179, %v1187
    %v1189 = vlaneseq
    %v1190 = vshrl.u32 %v1189, 7
    %v1191 = vsub.s32 2, %v1190
    %v1192 = vrot.slane %v1179, %v1191
    %v1193 = vlaneseq
    %v1194 = vshrl.u32 %v1193, 7
    %v1195 = vsub.s32 3, %v1194
    %v1196 = vrot.slane %v1179, %v1195
    %v1206 = vcombine.high %v22, %v22
    %v1208 = vunpack.c.l.s4 1966171168
    %v1209 = vunpack.c.0.s8 %v1208
    %v1210 = vlaneseq
    %v1211 = vshrl.u32 %v1210, 7
    %v1212 = vsub.s32 %v1209, %v1211
    %v1213 = vrot.slane %v22, %v1212
    %v1215 = vunpack.c.l.s4 1966171168
    %v1216 = vunpack.c.0.s8 %v1215
    %v1217 = vlaneseq
    %v1218 = vshrl.u32 %v1217, 7
    %v1219 = vsub.s32 %v1216, %v1218
    %v1220 = vrot.slane %v1206, %v1219
    %v1221 = vcombine.high %v1213, %v1213
    %v1222 = vcombine.high %v1220, %v1220
    %v1224 = vunpack.c.l.s4 1966171168
    %v1225 = vunpack.c.0.s8 %v1224
    %v1226 = vlaneseq
    %v1227 = vshrl.u32 %v1226, 7
    %v1228 = vsub.s32 %v1225, %v1227
    %v1229 = vrot.slane %v1213, %v1228
    %v1231 = vunpack.c.l.s4 1966171168
    %v1232 = vunpack.c.0.s8 %v1231
    %v1233 = vlaneseq
    %v1234 = vshrl.u32 %v1233, 7
    %v1235 = vsub.s32 %v1232, %v1234
    %v1236 = vrot.slane %v1220, %v1235
    %v1238 = vunpack.c.l.s4 1966171168
    %v1239 = vunpack.c.0.s8 %v1238
    %v1240 = vlaneseq
    %v1241 = vshrl.u32 %v1240, 7
    %v1242 = vsub.s32 %v1239, %v1241
    %v1243 = vrot.slane %v1221, %v1242
    %v1245 = vunpack.c.l.s4 1966171168
    %v1246 = vunpack.c.0.s8 %v1245
    %v1247 = vlaneseq
    %v1248 = vshrl.u32 %v1247, 7
    %v1249 = vsub.s32 %v1246, %v1248
    %v1250 = vrot.slane %v1222, %v1249
    %v1251 = vcombine.high %v1229, %v1229
    %v1252 = vcombine.high %v1236, %v1236
    %v1253 = vcombine.high %v1243, %v1243
    %v1254 = vcombine.high %v1250, %v1250
    %v1255 = vcombine.high %v23, %v23
    %v1257 = vunpack.c.l.s4 1966171168
    %v1258 = vunpack.c.0.s8 %v1257
    %v1259 = vlaneseq
    %v1260 = vshrl.u32 %v1259, 7
    %v1261 = vsub.s32 %v1258, %v1260
    %v1262 = vrot.slane %v23, %v1261
    %v1264 = vunpack.c.l.s4 1966171168
    %v1265 = vunpack.c.0.s8 %v1264
    %v1266 = vlaneseq
    %v1267 = vshrl.u32 %v1266, 7
    %v1268 = vsub.s32 %v1265, %v1267
    %v1269 = vrot.slane %v1255, %v1268
    %v1270 = vcombine.high %v1262, %v1262
    %v1271 = vcombine.high %v1269, %v1269
    %v1273 = vunpack.c.l.s4 1966171168
    %v1274 = vunpack.c.0.s8 %v1273
    %v1275 = vlaneseq
    %v1276 = vshrl.u32 %v1275, 7
    %v1277 = vsub.s32 %v1274, %v1276
    %v1278 = vrot.slane %v1262, %v1277
    %v1280 = vunpack.c.l.s4 1966171168
    %v1281 = vunpack.c.0.s8 %v1280
    %v1282 = vlaneseq
    %v1283 = vshrl.u32 %v1282, 7
    %v1284 = vsub.s32 %v1281, %v1283
    %v1285 = vrot.slane %v1269, %v1284
    %v1287 = vunpack.c.l.s4 1966171168
    %v1288 = vunpack.c.0.s8 %v1287
    %v1289 = vlaneseq
    %v1290 = vshrl.u32 %v1289, 7
    %v1291 = vsub.s32 %v1288, %v1290
    %v1292 = vrot.slane %v1270, %v1291
    %v1294 = vunpack.c.l.s4 1966171168
    %v1295 = vunpack.c.0.s8 %v1294
    %v1296 = vlaneseq
    %v1297 = vshrl.u32 %v1296, 7
    %v1298 = vsub.s32 %v1295, %v1297
    %v1299 = vrot.slane %v1271, %v1298
    %v1300 = vcombine.high %v1278, %v1278
    %v1301 = vcombine.high %v1285, %v1285
    %v1302 = vcombine.high %v1292, %v1292
    %v1303 = vcombine.high %v1299, %v1299
    %v1304 = vcombine.high %v24, %v24
    %v1306 = vunpack.c.l.s4 1966171168
    %v1307 = vunpack.c.0.s8 %v1306
    %v1308 = vlaneseq
    %v1309 = vshrl.u32 %v1308, 7
    %v1310 = vsub.s32 %v1307, %v1309
    %v1311 = vrot.slane %v24, %v1310
    %v1313 = vunpack.c.l.s4 1966171168
    %v1314 = vunpack.c.0.s8 %v1313
    %v1315 = vlaneseq
    %v1316 = vshrl.u32 %v1315, 7
    %v1317 = vsub.s32 %v1314, %v1316
    %v1318 = vrot.slane %v1304, %v1317
    %v1319 = vcombine.high %v1311, %v1311
    %v1320 = vcombine.high %v1318, %v1318
    %v1322 = vunpack.c.l.s4 1966171168
    %v1323 = vunpack.c.0.s8 %v1322
    %v1324 = vlaneseq
    %v1325 = vshrl.u32 %v1324, 7
    %v1326 = vsub.s32 %v1323, %v1325
    %v1327 = vrot.slane %v1311, %v1326
    %v1329 = vunpack.c.l.s4 1966171168
    %v1330 = vunpack.c.0.s8 %v1329
    %v1331 = vlaneseq
    %v1332 = vshrl.u32 %v1331, 7
    %v1333 = vsub.s32 %v1330, %v1332
    %v1334 = vrot.slane %v1318, %v1333
    %v1336 = vunpack.c.l.s4 1966171168
    %v1337 = vunpack.c.0.s8 %v1336
    %v1338 = vlaneseq
    %v1339 = vshrl.u32 %v1338, 7
    %v1340 = vsub.s32 %v1337, %v1339
    %v1341 = vrot.slane %v1319, %v1340
    %v1343 = vunpack.c.l.s4 1966171168
    %v1344 = vunpack.c.0.s8 %v1343
    %v1345 = vlaneseq
    %v1346 = vshrl.u32 %v1345, 7
    %v1347 = vsub.s32 %v1344, %v1346
    %v1348 = vrot.slane %v1320, %v1347
    %v1349 = vcombine.high %v1327, %v1327
    %v1350 = vcombine.high %v1334, %v1334
    %v1351 = vcombine.high %v1341, %v1341
    %v1352 = vcombine.high %v1348, %v1348
    %v1353 = vcombine.high %v25, %v25
    %v1355 = vunpack.c.l.s4 1966171168
    %v1356 = vunpack.c.0.s8 %v1355
    %v1357 = vlaneseq
    %v1358 = vshrl.u32 %v1357, 7
    %v1359 = vsub.s32 %v1356, %v1358
    %v1360 = vrot.slane %v25, %v1359
    %v1362 = vunpack.c.l.s4 1966171168
    %v1363 = vunpack.c.0.s8 %v1362
    %v1364 = vlaneseq
    %v1365 = vshrl.u32 %v1364, 7
    %v1366 = vsub.s32 %v1363, %v1365
    %v1367 = vrot.slane %v1353, %v1366
    %v1368 = vcombine.high %v1360, %v1360
    %v1369 = vcombine.high %v1367, %v1367
    %v1371 = vunpack.c.l.s4 1966171168
    %v1372 = vunpack.c.0.s8 %v1371
    %v1373 = vlaneseq
    %v1374 = vshrl.u32 %v1373, 7
    %v1375 = vsub.s32 %v1372, %v1374
    %v1376 = vrot.slane %v1360, %v1375
    %v1378 = vunpack.c.l.s4 1966171168
    %v1379 = vunpack.c.0.s8 %v1378
    %v1380 = vlaneseq
    %v1381 = vshrl.u32 %v1380, 7
    %v1382 = vsub.s32 %v1379, %v1381
    %v1383 = vrot.slane %v1367, %v1382
    %v1385 = vunpack.c.l.s4 1966171168
    %v1386 = vunpack.c.0.s8 %v1385
    %v1387 = vlaneseq
    %v1388 = vshrl.u32 %v1387, 7
    %v1389 = vsub.s32 %v1386, %v1388
    %v1390 = vrot.slane %v1368, %v1389
    %v1392 = vunpack.c.l.s4 1966171168
    %v1393 = vunpack.c.0.s8 %v1392
    %v1394 = vlaneseq
    %v1395 = vshrl.u32 %v1394, 7
    %v1396 = vsub.s32 %v1393, %v1395
    %v1397 = vrot.slane %v1369, %v1396
    %v1398 = vcombine.high %v1376, %v1376
    %v1399 = vcombine.high %v1383, %v1383
    %v1400 = vcombine.high %v1390, %v1390
    %v1401 = vcombine.high %v1397, %v1397
    %v1403 = vunpack.c.l.s4 1966171168
    %v1404 = vunpack.c.0.s8 %v1403
    %v1405 = vlaneseq
    %v1406 = vshrl.u32 %v1405, 7
    %v1407 = vsub.s32 %v1404, %v1406
    %v1408 = vrot.slane %v26, %v1407
    %v1409 = vcombine.high %v1408, %v1408
    %v1411 = vunpack.c.l.s4 1966171168
    %v1412 = vunpack.c.0.s8 %v1411
    %v1413 = vlaneseq
    %v1414 = vshrl.u32 %v1413, 7
    %v1415 = vsub.s32 %v1412, %v1414
    %v1416 = vrot.slane %v1408, %v1415
    %v1418 = vunpack.c.l.s4 1966171168
    %v1419 = vunpack.c.0.s8 %v1418
    %v1420 = vlaneseq
    %v1421 = vshrl.u32 %v1420, 7
    %v1422 = vsub.s32 %v1419, %v1421
    %v1423 = vrot.slane %v1409, %v1422
    %v1424 = vcombine.high %v1416, %v1416
    %v1425 = vcombine.high %v1423, %v1423
    %v2614 = vunpack.c.l.b16 %v27
    %v2615 = vunpack.c.h.b16 %v27
    %v2616 = vunpack.c.l.b16 %v28
    %v2617 = vunpack.c.h.b16 %v28
    %v2618 = vunpack.c.l.b16 %v29
    %v2619 = vunpack.c.h.b16 %v29
    %v2620 = vunpack.c.l.b16 %v30
    %v2621 = vunpack.c.h.b16 %v30
    %v2622 = vunpack.c.l.b16 %v31
    %v2623 = vunpack.c.h.b16 %v31
    %v2624 = vunpack.c.l.b16 %v32
    %v2625 = vunpack.c.h.b16 %v32
    %v2626 = vunpack.c.l.b16 %v33
    %v2627 = vunpack.c.h.b16 %v33
    %v2628 = vunpack.c.l.b16 %v34
    %v2629 = vunpack.c.h.b16 %v34
    %v2630 = vunpack.c.l.b16 %v35
    %v2631 = vunpack.c.h.b16 %v35
    %v2632 = vunpack.c.l.b16 %v36
    %v2633 = vunpack.c.h.b16 %v36
    %v2634 = vunpack.c.l.b16 %v37
    %v2635 = vunpack.c.h.b16 %v37
    %v2636 = vunpack.c.l.b16 %v38
    %v2637 = vunpack.c.h.b16 %v38
    %v2638 = vunpack.c.l.b16 %v39
    %v2639 = vunpack.c.h.b16 %v39
    %v2640 = vunpack.c.l.b16 %v40
    %v2641 = vunpack.c.h.b16 %v40
    %v2642 = vunpack.c.l.b16 %v41
    %v2643 = vunpack.c.h.b16 %v41
    %v2644 = vunpack.c.l.b16 %v42
    %v2645 = vunpack.c.h.b16 %v42
    %v2646 = vunpack.c.l.b16 %v43
    %v2647 = vunpack.c.h.b16 %v43
    %v2648 = vunpack.c.l.b16 %v44
    %v2649 = vunpack.c.h.b16 %v44
    %v2650 = vunpack.c.l.b16 %v45
    %v2651 = vunpack.c.h.b16 %v45
    %v2652 = vunpack.c.l.b16 %v46
    %v2653 = vunpack.c.h.b16 %v46
    %v2654 = vunpack.c.l.b16 %v47
    %v2655 = vunpack.c.h.b16 %v47
    %v2656 = vunpack.c.l.b16 %v48
    %v2657 = vunpack.c.h.b16 %v48
    %v2658 = vunpack.c.l.b16 %v49
    %v2659 = vunpack.c.h.b16 %v49
    %v2660 = vunpack.c.l.b16 %v50
    %v2661 = vunpack.c.h.b16 %v50
    %v2662 = vunpack.c.l.b16 %v51
    %v2663 = vunpack.c.h.b16 %v51
    %v2664 = vunpack.c.l.b16 %v52
    %v2665 = vunpack.c.h.b16 %v52
    %v2666 = vunpack.c.l.b16 %v53
    %v2667 = vunpack.c.h.b16 %v53
    %v2668 = vunpack.c.l.b16 %v54
    %v2669 = vunpack.c.h.b16 %v54
    %v2670 = vunpack.c.l.b16 %v55
    %v2671 = vunpack.c.h.b16 %v55
    %v2672 = vunpack.c.l.b16 %v56
    %v2673 = vunpack.c.h.b16 %v56
    %v2674 = vunpack.c.l.b16 %v57
    %v2675 = vunpack.c.h.b16 %v57
    %v2676 = vunpack.c.l.b16 %v58
    %v2677 = vunpack.c.h.b16 %v58
    %v2678 = vunpack.c.l.b16 %v59
    %v2679 = vunpack.c.h.b16 %v59
    %v2680 = vunpack.c.l.b16 %v60
    %v2681 = vunpack.c.h.b16 %v60
    %v2682 = vunpack.c.l.b16 %v61
    %v2683 = vunpack.c.h.b16 %v61
    %v2684 = vunpack.c.l.b16 %v62
    %v2685 = vunpack.c.h.b16 %v62
    %v2686 = vunpack.c.l.b16 %v63
    %v2687 = vunpack.c.h.b16 %v63
    %v2688 = vunpack.c.l.b16 %v64
    %v2689 = vunpack.c.h.b16 %v64
    %v2690 = vunpack.c.l.b16 %v65
    %v2691 = vunpack.c.h.b16 %v65
    %v2692 = vunpack.c.l.b16 %v66
    %v2693 = vunpack.c.h.b16 %v66
    %v2694 = vunpack.c.l.b16 %v67
    %v2695 = vunpack.c.h.b16 %v67
    %v2696 = vunpack.c.l.b16 %v68
    %v2697 = vunpack.c.h.b16 %v68
    %v2698 = vunpack.c.l.b16 %v69
    %v2699 = vunpack.c.h.b16 %v69
    %v2700 = vunpack.c.l.b16 %v70
    %v2701 = vunpack.c.h.b16 %v70
    %v2702 = vunpack.c.l.b16 %v71
    %v2703 = vunpack.c.h.b16 %v71
    %v2704 = vunpack.c.l.b16 %v72
    %v2705 = vunpack.c.h.b16 %v72
    %v2706 = vunpack.c.l.b16 %v73
    %v2707 = vunpack.c.h.b16 %v73
    %v2708 = vunpack.c.l.b16 %v74
    %v2709 = vunpack.c.h.b16 %v74
    %v2710 = vunpack.c.l.b16 %v75
    %v2711 = vunpack.c.h.b16 %v75
    %v2712 = vunpack.c.l.b16 %v76
    %v2713 = vunpack.c.h.b16 %v76
    %v2714 = vunpack.c.l.b16 %v77
    %v2715 = vunpack.c.h.b16 %v77
    %v2716 = vunpack.c.l.b16 %v78
    %v2717 = vunpack.c.h.b16 %v78
    %v2718 = vunpack.c.l.b16 %v79
    %v2719 = vunpack.c.h.b16 %v79
    %v2720 = vunpack.c.l.b16 %v80
    %v2721 = vunpack.c.h.b16 %v80
    %v2722 = vunpack.c.l.b16 %v81
    %v2723 = vunpack.c.h.b16 %v81
    %v2724 = vunpack.c.l.b16 %v82
    %v2725 = vunpack.c.h.b16 %v82
    %v2726 = vunpack.c.l.b16 %v83
    %v2727 = vunpack.c.h.b16 %v83
    %v2728 = vunpack.c.l.b16 %v84
    %v2729 = vunpack.c.h.b16 %v84
    %v2730 = vunpack.c.l.b16 %v85
    %v2731 = vunpack.c.h.b16 %v85
    %v2732 = vunpack.c.l.b16 %v86
    %v2733 = vunpack.c.h.b16 %v86
    %v2734 = vunpack.c.l.b16 %v87
    %v2735 = vunpack.c.h.b16 %v87
    %v2736 = vunpack.c.l.b16 %v88
    %v2737 = vunpack.c.h.b16 %v88
    %v2738 = vunpack.c.l.b16 %v89
    %v2739 = vunpack.c.h.b16 %v89
    %v2740 = vunpack.c.l.b16 %v90
    %v2741 = vunpack.c.h.b16 %v90
    %v2742 = vunpack.c.l.b16 %v91
    %v2743 = vunpack.c.h.b16 %v91
    %v2744 = vunpack.c.l.b16 %v92
    %v2745 = vunpack.c.h.b16 %v92
    %v2746 = vunpack.c.l.b16 %v93
    %v2747 = vunpack.c.h.b16 %v93
    %v2748 = vunpack.c.l.b16 %v94
    %v2749 = vunpack.c.h.b16 %v94
    %v2750 = vunpack.c.l.b16 %v95
    %v2751 = vunpack.c.h.b16 %v95
    %v2752 = vunpack.c.l.b16 %v96
    %v2753 = vunpack.c.h.b16 %v96
    %v2754 = vunpack.c.l.b16 %v97
    %v2755 = vunpack.c.h.b16 %v97
    %v2756 = vunpack.c.l.b16 %v98
    %v2757 = vunpack.c.h.b16 %v98
    %v2758 = vunpack.c.l.b16 %v99
    %v2759 = vunpack.c.h.b16 %v99
    %v2760 = vunpack.c.l.b16 %v100
    %v2761 = vunpack.c.h.b16 %v100
    %v2762 = vunpack.c.l.b16 %v101
    %v2763 = vunpack.c.h.b16 %v101
    %v2764 = vunpack.c.l.b16 %v102
    %v2765 = vunpack.c.h.b16 %v102
    %v2766 = vunpack.c.l.b16 %v103
    %v2767 = vunpack.c.h.b16 %v103
    %v2768 = vunpack.c.l.b16 %v104
    %v2769 = vunpack.c.h.b16 %v104
    %v2770 = vunpack.c.l.b16 %v105
    %v2771 = vunpack.c.h.b16 %v105
    %v2772 = vunpack.c.l.b16 %v106
    %v2773 = vunpack.c.h.b16 %v106
    %v2774 = vunpack.c.l.b16 %v107
    %v2775 = vunpack.c.h.b16 %v107
    %v2776 = vunpack.c.l.b16 %v108
    %v2777 = vunpack.c.h.b16 %v108
    %v2778 = vunpack.c.l.b16 %v109
    %v2779 = vunpack.c.h.b16 %v109
    %v2780 = vunpack.c.l.b16 %v110
    %v2781 = vunpack.c.h.b16 %v110
    %v2782 = vunpack.c.l.b16 %v111
    %v2783 = vunpack.c.h.b16 %v111
    %v2784 = vunpack.c.l.b16 %v112
    %v2785 = vunpack.c.h.b16 %v112
    %v2786 = vunpack.c.l.b16 %v113
    %v2787 = vunpack.c.h.b16 %v113
    %v2788 = vunpack.c.l.b16 %v114
    %v2789 = vunpack.c.h.b16 %v114
    %v2790 = vunpack.c.l.b16 %v115
    %v2791 = vunpack.c.h.b16 %v115
    %v2792 = vunpack.c.l.b16 %v116
    %v2793 = vunpack.c.h.b16 %v116
    %v2794 = vunpack.c.l.b16 %v117
    %v2795 = vunpack.c.h.b16 %v117
    %v2796 = vunpack.c.l.b16 %v118
    %v2797 = vunpack.c.h.b16 %v118
    %v2798 = vunpack.c.l.b16 %v119
    %v2799 = vunpack.c.h.b16 %v119
    %v2800 = vunpack.c.l.b16 %v120
    %v2801 = vunpack.c.h.b16 %v120
    %v2802 = vunpack.c.l.b16 %v121
    %v2803 = vunpack.c.h.b16 %v121
    %v2804 = vunpack.c.l.b16 %v122
    %v2805 = vunpack.c.h.b16 %v122
    %v2806 = vunpack.c.l.b16 %v123
    %v2807 = vunpack.c.h.b16 %v123
    %v2808 = vunpack.c.l.b16 %v124
    %v2809 = vunpack.c.h.b16 %v124
    %v2810 = vunpack.c.l.b16 %v125
    %v2811 = vunpack.c.h.b16 %v125
    %v2812 = vunpack.c.l.b16 %v126
    %v2813 = vunpack.c.h.b16 %v126
    %v2814 = vunpack.c.l.b16 %v127
    %v2815 = vunpack.c.h.b16 %v127
    %v2816 = vunpack.c.l.b16 %v128
    %v2817 = vunpack.c.h.b16 %v128
    %v2818 = vunpack.c.l.b16 %v129
    %v2819 = vunpack.c.h.b16 %v129
    %v2820 = vunpack.c.l.b16 %v130
    %v2821 = vunpack.c.h.b16 %v130
    %v2822 = vunpack.c.l.b16 %v131
    %v2823 = vunpack.c.h.b16 %v131
    %v2824 = vunpack.c.l.b16 %v132
    %v2825 = vunpack.c.h.b16 %v132
    %v2826 = vunpack.c.l.b16 %v133
    %v2827 = vunpack.c.h.b16 %v133
    %v2828 = vunpack.c.l.b16 %v134
    %v2829 = vunpack.c.h.b16 %v134
    %v2830 = vunpack.c.l.b16 %v135
    %v2831 = vunpack.c.h.b16 %v135
    %v2832 = vunpack.c.l.b16 %v136
    %v2833 = vunpack.c.h.b16 %v136
    %v2834 = vunpack.c.l.b16 %v137
    %v2835 = vunpack.c.h.b16 %v137
    %v2836 = vunpack.c.l.b16 %v138
    %v2837 = vunpack.c.h.b16 %v138
    %v2838 = vunpack.c.l.b16 %v139
    %v2839 = vunpack.c.h.b16 %v139
    %v2840 = vunpack.c.l.b16 %v140
    %v2841 = vunpack.c.h.b16 %v140
    %v2842 = vunpack.c.l.b16 %v141
    %v2843 = vunpack.c.h.b16 %v141
    %v2844 = vunpack.c.l.b16 %v142
    %v2845 = vunpack.c.h.b16 %v142
    %v2846 = vunpack.c.l.b16 %v143
    %v2847 = vunpack.c.h.b16 %v143
    %v2848 = vunpack.c.l.b16 %v144
    %v2849 = vunpack.c.h.b16 %v144
    %v2850 = vunpack.c.l.b16 %v145
    %v2851 = vunpack.c.h.b16 %v145
    %v2852 = vunpack.c.l.b16 %v146
    %v2853 = vunpack.c.h.b16 %v146
    %v2854 = vunpack.c.l.b16 %v147
    %v2855 = vunpack.c.h.b16 %v147
    %v2856 = vunpack.c.l.b16 %v148
    %v2857 = vunpack.c.h.b16 %v148
    %v2858 = vunpack.c.l.b16 %v149
    %v2859 = vunpack.c.h.b16 %v149
    %v2860 = vunpack.c.l.b16 %v150
    %v2861 = vunpack.c.h.b16 %v150
    %v2862 = vunpack.c.l.b16 %v151
    %v2863 = vunpack.c.h.b16 %v151
    %v2864 = vunpack.c.l.b16 %v152
    %v2865 = vunpack.c.h.b16 %v152
    %v2866 = vunpack.c.l.b16 %v153
    %v2867 = vunpack.c.h.b16 %v153
    %v2868 = vunpack.c.l.b16 %v154
    %v2869 = vunpack.c.h.b16 %v154
    %v2870 = vunpack.c.l.b16 %v155
    %v2871 = vunpack.c.h.b16 %v155
    %v2872 = vunpack.c.l.b16 %v156
    %v2873 = vunpack.c.h.b16 %v156
    %v2874 = vunpack.c.l.b16 %v157
    %v2875 = vunpack.c.h.b16 %v157
    %v2876 = vunpack.c.l.b16 %v158
    %v2877 = vunpack.c.h.b16 %v158
    %v2878 = vunpack.c.l.b16 %v159
    %v2879 = vunpack.c.h.b16 %v159
    %v2880 = vunpack.c.l.b16 %v160
    %v2881 = vunpack.c.h.b16 %v160
    %v2882 = vunpack.c.l.b16 %v161
    %v2883 = vunpack.c.h.b16 %v161
    %v2884 = vunpack.c.l.b16 %v162
    %v2885 = vunpack.c.h.b16 %v162
    %v2886 = vunpack.c.l.b16 %v163
    %v2887 = vunpack.c.h.b16 %v163
    %v2888 = vunpack.c.l.b16 %v164
    %v2889 = vunpack.c.h.b16 %v164
    %v2890 = vunpack.c.l.b16 %v165
    %v2891 = vunpack.c.h.b16 %v165
    %v2892 = vunpack.c.l.b16 %v166
    %v2893 = vunpack.c.h.b16 %v166
    %v2894 = vunpack.c.l.b16 %v167
    %v2895 = vunpack.c.h.b16 %v167
    %v2896 = vunpack.c.l.b16 %v168
    %v2897 = vunpack.c.h.b16 %v168
    %v2898 = vunpack.c.l.b16 %v169
    %v2899 = vunpack.c.h.b16 %v169
    %v2900 = vunpack.c.l.b16 %v170
    %v2901 = vunpack.c.h.b16 %v170
    %v2902 = vunpack.c.l.b16 %v171
    %v2903 = vunpack.c.h.b16 %v171
    %v2904 = vunpack.c.l.b16 %v172
    %v2905 = vunpack.c.h.b16 %v172
    %v2906 = vunpack.c.l.b16 %v173
    %v2907 = vunpack.c.h.b16 %v173
    %v2908 = vunpack.c.l.b16 %v174
    %v2909 = vunpack.c.h.b16 %v174
    %v2910 = vunpack.c.l.b16 %v175
    %v2911 = vunpack.c.h.b16 %v175
    %v2912 = vunpack.c.l.b16 %v176
    %v2913 = vunpack.c.h.b16 %v176
    %v2914 = vunpack.c.l.b16 %v177
    %v2915 = vunpack.c.h.b16 %v177
    %v2916 = vunpack.c.l.b16 %v178
    %v2917 = vunpack.c.h.b16 %v178
    %v2918 = vunpack.c.l.b16 %v179
    %v2919 = vunpack.c.h.b16 %v179
    %v2920 = vunpack.c.l.b16 %v180
    %v2921 = vunpack.c.h.b16 %v180
    %v2922 = vunpack.c.l.b16 %v181
    %v2923 = vunpack.c.h.b16 %v181
    %v2924 = vunpack.c.l.b16 %v182
    %v2925 = vunpack.c.h.b16 %v182
    %v2926 = vunpack.c.l.b16 %v183
    %v2927 = vunpack.c.h.b16 %v183
    %v2928 = vunpack.c.l.b16 %v184
    %v2929 = vunpack.c.h.b16 %v184
    %v2930 = vunpack.c.l.b16 %v185
    %v2931 = vunpack.c.h.b16 %v185
    %v2932 = vunpack.c.l.b16 %v186
    %v2933 = vunpack.c.h.b16 %v186
    %v2934 = vunpack.c.l.b16 %v187
    %v2935 = vunpack.c.h.b16 %v187
    %v2936 = vunpack.c.l.b16 %v188
    %v2937 = vunpack.c.h.b16 %v188
    %v2938 = vunpack.c.l.b16 %v189
    %v2939 = vunpack.c.h.b16 %v189
    %v2940 = vunpack.c.l.b16 %v190
    %v2941 = vunpack.c.h.b16 %v190
    %v2942 = vunpack.c.l.b16 %v191
    %v2943 = vunpack.c.h.b16 %v191
    %v2944 = vunpack.c.l.b16 %v192
    %v2945 = vunpack.c.h.b16 %v192
    %v2946 = vunpack.c.l.b16 %v193
    %v2947 = vunpack.c.h.b16 %v193
    %v2948 = vunpack.c.l.b16 %v194
    %v2949 = vunpack.c.h.b16 %v194
    %v2950 = vunpack.c.l.b16 %v195
    %v2951 = vunpack.c.h.b16 %v195
    %v2952 = vunpack.c.l.b16 %v196
    %v2953 = vunpack.c.h.b16 %v196
    %v2954 = vunpack.c.l.b16 %v197
    %v2955 = vunpack.c.h.b16 %v197
    %v2956 = vunpack.c.l.b16 %v198
    %v2957 = vunpack.c.h.b16 %v198
    %v2958 = vunpack.c.l.b16 %v199
    %v2959 = vunpack.c.h.b16 %v199
    %v2960 = vunpack.c.l.b16 %v200
    %v2961 = vunpack.c.h.b16 %v200
    %v2962 = vunpack.c.l.b16 %v201
    %v2963 = vunpack.c.h.b16 %v201
    %v2964 = vunpack.c.l.b16 %v202
    %v2965 = vunpack.c.h.b16 %v202
    %v2966 = vunpack.c.l.b16 %v203
    %v2967 = vunpack.c.h.b16 %v203
    %v2968 = vunpack.c.l.b16 %v204
    %v2969 = vunpack.c.h.b16 %v204
    %v2970 = vunpack.c.l.b16 %v205
    %v2971 = vunpack.c.h.b16 %v205
    %v2972 = vunpack.c.l.b16 %v206
    %v2973 = vunpack.c.h.b16 %v206
    %v2974 = vunpack.c.l.b16 %v207
    %v2975 = vunpack.c.h.b16 %v207
    %v2976 = vunpack.c.l.b16 %v208
    %v2977 = vunpack.c.h.b16 %v208
    %v2978 = vunpack.c.l.b16 %v209
    %v2979 = vunpack.c.h.b16 %v209
    %v2980 = vunpack.c.l.b16 %v210
    %v2981 = vunpack.c.h.b16 %v210
    %v2982 = vunpack.c.l.b16 %v211
    %v2983 = vunpack.c.h.b16 %v211
    %v2984 = vunpack.c.l.b16 %v212
    %v2985 = vunpack.c.h.b16 %v212
    %v2986 = vunpack.c.l.b16 %v213
    %v2987 = vunpack.c.h.b16 %v213
    %v2988 = vunpack.c.l.b16 %v214
    %v2989 = vunpack.c.h.b16 %v214
    %v2990 = vunpack.c.l.b16 %v215
    %v2991 = vunpack.c.h.b16 %v215
    %v2992 = vunpack.c.l.b16 %v216
    %v2993 = vunpack.c.h.b16 %v216
    %v2994 = vunpack.c.l.b16 %v217
    %v2995 = vunpack.c.h.b16 %v217
    %v2996 = vunpack.c.l.b16 %v218
    %v2997 = vunpack.c.h.b16 %v218
    %v2998 = vunpack.c.l.b16 %v219
    %v2999 = vunpack.c.h.b16 %v219
    %v3000 = vunpack.c.l.b16 %v220
    %v3001 = vunpack.c.h.b16 %v220
    %v3002 = vunpack.c.l.b16 %v221
    %v3003 = vunpack.c.h.b16 %v221
    %v3004 = vunpack.c.l.b16 %v222
    %v3005 = vunpack.c.h.b16 %v222
    %v3006 = vunpack.c.l.b16 %v223
    %v3007 = vunpack.c.h.b16 %v223
    %v3008 = vunpack.c.l.b16 %v224
    %v3009 = vunpack.c.h.b16 %v224
    %v3010 = vunpack.c.l.b16 %v225
    %v3011 = vunpack.c.h.b16 %v225
    %v3012 = vunpack.c.l.b16 %v226
    %v3013 = vunpack.c.h.b16 %v226
    %v3014 = vunpack.c.l.b16 %v227
    %v3015 = vunpack.c.h.b16 %v227
    %v3016 = vunpack.c.l.b16 %v228
    %v3017 = vunpack.c.h.b16 %v228
    %v3018 = vunpack.c.l.b16 %v229
    %v3019 = vunpack.c.h.b16 %v229
    %v3020 = vunpack.c.l.b16 %v230
    %v3021 = vunpack.c.h.b16 %v230
    %v3022 = vunpack.c.l.b16 %v231
    %v3023 = vunpack.c.h.b16 %v231
    %v3024 = vunpack.c.l.b16 %v232
    %v3025 = vunpack.c.h.b16 %v232
    %v3026 = vunpack.c.l.b16 %v233
    %v3027 = vunpack.c.h.b16 %v233
    %v3028 = vunpack.c.l.b16 %v234
    %v3029 = vunpack.c.h.b16 %v234
    %v3030 = vunpack.c.l.b16 %v235
    %v3031 = vunpack.c.h.b16 %v235
    %v3032 = vunpack.c.l.b16 %v236
    %v3033 = vunpack.c.h.b16 %v236
    %v3034 = vunpack.c.l.b16 %v237
    %v3035 = vunpack.c.h.b16 %v237
    %v3036 = vunpack.c.l.b16 %v238
    %v3037 = vunpack.c.h.b16 %v238
    %v3038 = vunpack.c.l.b16 %v239
    %v3039 = vunpack.c.h.b16 %v239
    %v3040 = vunpack.c.l.b16 %v240
    %v3041 = vunpack.c.h.b16 %v240
    %v3042 = vunpack.c.l.b16 %v241
    %v3043 = vunpack.c.h.b16 %v241
    %v3044 = vunpack.c.l.b16 %v242
    %v3045 = vunpack.c.h.b16 %v242
    %v3046 = vunpack.c.l.b16 %v243
    %v3047 = vunpack.c.h.b16 %v243
    %v3048 = vunpack.c.l.b16 %v244
    %v3049 = vunpack.c.h.b16 %v244
    %v3050 = vunpack.c.l.b16 %v245
    %v3051 = vunpack.c.h.b16 %v245
    %v3052 = vunpack.c.l.b16 %v246
    %v3053 = vunpack.c.h.b16 %v246
    %v3054 = vunpack.c.l.b16 %v247
    %v3055 = vunpack.c.h.b16 %v247
    %v3056 = vunpack.c.l.b16 %v248
    %v3057 = vunpack.c.h.b16 %v248
    %v3058 = vunpack.c.l.b16 %v249
    %v3059 = vunpack.c.h.b16 %v249
    %v3060 = vunpack.c.l.b16 %v250
    %v3061 = vunpack.c.h.b16 %v250
    %v3062 = vunpack.c.l.b16 %v251
    %v3063 = vunpack.c.h.b16 %v251
    %v3064 = vunpack.c.l.b16 %v252
    %v3065 = vunpack.c.h.b16 %v252
    %v3066 = vunpack.c.l.b16 %v253
    %v3067 = vunpack.c.h.b16 %v253
    %v3068 = vunpack.c.l.b16 %v254
    %v3069 = vunpack.c.h.b16 %v254
    %v3070 = vunpack.c.l.b16 %v255
    %v3071 = vunpack.c.h.b16 %v255
    %v3072 = vunpack.c.l.b16 %v256
    %v3073 = vunpack.c.h.b16 %v256
    %v3074 = vunpack.c.l.b16 %v257
    %v3075 = vunpack.c.h.b16 %v257
    %v3076 = vunpack.c.l.b16 %v258
    %v3077 = vunpack.c.h.b16 %v258
    %v3078 = vunpack.c.l.b16 %v259
    %v3079 = vunpack.c.h.b16 %v259
    %v3080 = vunpack.c.l.b16 %v260
    %v3081 = vunpack.c.h.b16 %v260
    %v3082 = vunpack.c.l.b16 %v261
    %v3083 = vunpack.c.h.b16 %v261
    %v3084 = vunpack.c.l.b16 %v262
    %v3085 = vunpack.c.h.b16 %v262
    %v3086 = vunpack.c.l.b16 %v263
    %v3087 = vunpack.c.h.b16 %v263
    %v3088 = vunpack.c.l.b16 %v264
    %v3089 = vunpack.c.h.b16 %v264
    %v3090 = vunpack.c.l.b16 %v265
    %v3091 = vunpack.c.h.b16 %v265
    %v3092 = vunpack.c.l.b16 %v266
    %v3093 = vunpack.c.h.b16 %v266
    %v3094 = vunpack.c.l.b16 %v267
    %v3095 = vunpack.c.h.b16 %v267
    %v3096 = vunpack.c.l.b16 %v268
    %v3097 = vunpack.c.h.b16 %v268
    %v3098 = vunpack.c.l.b16 %v269
    %v3099 = vunpack.c.h.b16 %v269
    %v3100 = vunpack.c.l.b16 %v270
    %v3101 = vunpack.c.h.b16 %v270
    %v3102 = vunpack.c.l.b16 %v271
    %v3103 = vunpack.c.h.b16 %v271
    %v3104 = vunpack.c.l.b16 %v272
    %v3105 = vunpack.c.h.b16 %v272
    %v3106 = vunpack.c.l.b16 %v273
    %v3107 = vunpack.c.h.b16 %v273
    %v3108 = vunpack.c.l.b16 %v274
    %v3109 = vunpack.c.h.b16 %v274
    %v3110 = vunpack.c.l.b16 %v275
    %v3111 = vunpack.c.h.b16 %v275
    %v3112 = vunpack.c.l.b16 %v276
    %v3113 = vunpack.c.h.b16 %v276
    %v3114 = vunpack.c.l.b16 %v277
    %v3115 = vunpack.c.h.b16 %v277
    %v3116 = vunpack.c.l.b16 %v278
    %v3117 = vunpack.c.h.b16 %v278
    %v3118 = vunpack.c.l.b16 %v279
    %v3119 = vunpack.c.h.b16 %v279
    %v3120 = vunpack.c.l.b16 %v280
    %v3121 = vunpack.c.h.b16 %v280
    %v3122 = vunpack.c.l.b16 %v281
    %v3123 = vunpack.c.h.b16 %v281
    %v3124 = vunpack.c.l.b16 %v282
    %v3125 = vunpack.c.h.b16 %v282
    %v3126 = vunpack.c.l.b16 %v283
    %v3127 = vunpack.c.h.b16 %v283
    %v3128 = vunpack.c.l.b16 %v284
    %v3129 = vunpack.c.h.b16 %v284
    %v3130 = vunpack.c.l.b16 %v285
    %v3131 = vunpack.c.h.b16 %v285
    %v3132 = vunpack.c.l.b16 %v286
    %v3133 = vunpack.c.h.b16 %v286
    %v3134 = vunpack.c.l.b16 %v287
    %v3135 = vunpack.c.h.b16 %v287
    %v3136 = vunpack.c.l.b16 %v288
    %v3137 = vunpack.c.h.b16 %v288
    %v3138 = vunpack.c.l.b16 %v289
    %v3139 = vunpack.c.h.b16 %v289
    %v3140 = vunpack.c.l.b16 %v290
    %v3141 = vunpack.c.h.b16 %v290
    %v3142 = vunpack.c.l.b16 %v291
    %v3143 = vunpack.c.h.b16 %v291
    %v3144 = vunpack.c.l.b16 %v292
    %v3145 = vunpack.c.h.b16 %v292
    %v3146 = vunpack.c.l.b16 %v293
    %v3147 = vunpack.c.h.b16 %v293
    %v3148 = vunpack.c.l.b16 %v294
    %v3149 = vunpack.c.h.b16 %v294
    %v3150 = vunpack.c.l.b16 %v295
    %v3151 = vunpack.c.h.b16 %v295
    %v3152 = vunpack.c.l.b16 %v296
    %v3153 = vunpack.c.h.b16 %v296
    %v3154 = vunpack.c.l.b16 %v297
    %v3155 = vunpack.c.h.b16 %v297
    %v3156 = vunpack.c.l.b16 %v298
    %v3157 = vunpack.c.h.b16 %v298
    %v3158 = vunpack.c.l.b16 %v299
    %v3159 = vunpack.c.h.b16 %v299
    %v3160 = vunpack.c.l.b16 %v300
    %v3161 = vunpack.c.h.b16 %v300
    %v3162 = vunpack.c.l.b16 %v301
    %v3163 = vunpack.c.h.b16 %v301
    %v3164 = vunpack.c.l.b16 %v302
    %v3165 = vunpack.c.h.b16 %v302
    %v3166 = vunpack.c.l.b16 %v303
    %v3167 = vunpack.c.h.b16 %v303
    %v3168 = vunpack.c.l.b16 %v304
    %v3169 = vunpack.c.h.b16 %v304
    %v3170 = vunpack.c.l.b16 %v305
    %v3171 = vunpack.c.h.b16 %v305
    %v3172 = vunpack.c.l.b16 %v306
    %v3173 = vunpack.c.h.b16 %v306
    %v3174 = vunpack.c.l.b16 %v307
    %v3175 = vunpack.c.h.b16 %v307
    %v3176 = vunpack.c.l.b16 %v308
    %v3177 = vunpack.c.h.b16 %v308
    %v3178 = vunpack.c.l.b16 %v309
    %v3179 = vunpack.c.h.b16 %v309
    %v3180 = vunpack.c.l.b16 %v310
    %v3181 = vunpack.c.h.b16 %v310
    %v3182 = vunpack.c.l.b16 %v311
    %v3183 = vunpack.c.h.b16 %v311
    %v3184 = vunpack.c.l.b16 %v312
    %v3185 = vunpack.c.h.b16 %v312
    %v3186 = vunpack.c.l.b16 %v313
    %v3187 = vunpack.c.h.b16 %v313
    %v3188 = vunpack.c.l.b16 %v314
    %v3189 = vunpack.c.h.b16 %v314
    %v3190 = vunpack.c.l.b16 %v315
    %v3191 = vunpack.c.h.b16 %v315
    %v3192 = vunpack.c.l.b16 %v316
    %v3193 = vunpack.c.h.b16 %v316
    %v3194 = vunpack.c.l.b16 %v317
    %v3195 = vunpack.c.h.b16 %v317
    %v3196 = vunpack.c.l.b16 %v318
    %v3197 = vunpack.c.h.b16 %v318
    %v3198 = vunpack.c.l.b16 %v319
    %v3199 = vunpack.c.h.b16 %v319
    %v3200 = vunpack.c.l.b16 %v320
    %v3201 = vunpack.c.h.b16 %v320
    %v3202 = vunpack.c.l.b16 %v321
    %v3203 = vunpack.c.h.b16 %v321
    %v3204 = vunpack.c.l.b16 %v322
    %v3205 = vunpack.c.h.b16 %v322
    %v3206 = vunpack.c.l.b16 %v323
    %v3207 = vunpack.c.h.b16 %v323
    %v3208 = vunpack.c.l.b16 %v324
    %v3209 = vunpack.c.h.b16 %v324
    %v3210 = vunpack.c.l.b16 %v325
    %v3211 = vunpack.c.h.b16 %v325
    %v3212 = vunpack.c.l.b16 %v326
    %v3213 = vunpack.c.h.b16 %v326
    %v3214 = vunpack.c.l.b16 %v327
    %v3215 = vunpack.c.h.b16 %v327
    %v3216 = vunpack.c.l.b16 %v328
    %v3217 = vunpack.c.h.b16 %v328
    %v3218 = vunpack.c.l.b16 %v329
    %v3219 = vunpack.c.h.b16 %v329
    %v3220 = vunpack.c.l.b16 %v330
    %v3221 = vunpack.c.h.b16 %v330
    %v3222 = vunpack.c.l.b16 %v331
    %v3223 = vunpack.c.h.b16 %v331
    %v3224 = vunpack.c.l.b16 %v332
    %v3225 = vunpack.c.h.b16 %v332
    %v3226 = vunpack.c.l.b16 %v333
    %v3227 = vunpack.c.h.b16 %v333
    %v3228 = vunpack.c.l.b16 %v334
    %v3229 = vunpack.c.h.b16 %v334
    %v3230 = vunpack.c.l.b16 %v335
    %v3231 = vunpack.c.h.b16 %v335
    %v3232 = vunpack.c.l.b16 %v336
    %v3233 = vunpack.c.h.b16 %v336
    %v3234 = vunpack.c.l.b16 %v337
    %v3235 = vunpack.c.h.b16 %v337
    %v3236 = vunpack.c.l.b16 %v338
    %v3237 = vunpack.c.h.b16 %v338
    %v3238 = vunpack.c.l.b16 %v339
    %v3239 = vunpack.c.h.b16 %v339
    %v3240 = vunpack.c.l.b16 %v340
    %v3241 = vunpack.c.h.b16 %v340
    %v3242 = vunpack.c.l.b16 %v341
    %v3243 = vunpack.c.h.b16 %v341
    %v3244 = vunpack.c.l.b16 %v342
    %v3245 = vunpack.c.h.b16 %v342
    %v3246 = vunpack.c.l.b16 %v343
    %v3247 = vunpack.c.h.b16 %v343
    %v3248 = vunpack.c.l.b16 %v344
    %v3249 = vunpack.c.h.b16 %v344
    %v3250 = vunpack.c.l.b16 %v345
    %v3251 = vunpack.c.h.b16 %v345
    %v3252 = vunpack.c.l.b16 %v346
    %v3253 = vunpack.c.h.b16 %v346
    %v3254 = vunpack.c.l.b16 %v347
    %v3255 = vunpack.c.h.b16 %v347
    %v3256 = vunpack.c.l.b16 %v348
    %v3257 = vunpack.c.h.b16 %v348
    %v3258 = vunpack.c.l.b16 %v349
    %v3259 = vunpack.c.h.b16 %v349
    %v3260 = vunpack.c.l.b16 %v350
    %v3261 = vunpack.c.h.b16 %v350
    %v3262 = vunpack.c.l.b16 %v351
    %v3263 = vunpack.c.h.b16 %v351
    %v3264 = vunpack.c.l.b16 %v352
    %v3265 = vunpack.c.h.b16 %v352
    %v3266 = vunpack.c.l.b16 %v353
    %v3267 = vunpack.c.h.b16 %v353
    %v3268 = vunpack.c.l.b16 %v354
    %v3269 = vunpack.c.h.b16 %v354
    %v3270 = vunpack.c.l.b16 %v355
    %v3271 = vunpack.c.h.b16 %v355
    %v3272 = vunpack.c.l.b16 %v356
    %v3273 = vunpack.c.h.b16 %v356
    %v3274 = vunpack.c.l.b16 %v357
    %v3275 = vunpack.c.h.b16 %v357
    %v3276 = vunpack.c.l.b16 %v358
    %v3277 = vunpack.c.h.b16 %v358
    %v3278 = vunpack.c.l.b16 %v359
    %v3279 = vunpack.c.h.b16 %v359
    %v3280 = vunpack.c.l.b16 %v360
    %v3281 = vunpack.c.h.b16 %v360
    %v3282 = vunpack.c.l.b16 %v361
    %v3283 = vunpack.c.h.b16 %v361
    %v3284 = vunpack.c.l.b16 %v362
    %v3285 = vunpack.c.h.b16 %v362
    %v3286 = vunpack.c.l.b16 %v363
    %v3287 = vunpack.c.h.b16 %v363
    %v3288 = vunpack.c.l.b16 %v364
    %v3289 = vunpack.c.h.b16 %v364
    %v3290 = vunpack.c.l.b16 %v365
    %v3291 = vunpack.c.h.b16 %v365
    %v3292 = vunpack.c.l.b16 %v366
    %v3293 = vunpack.c.h.b16 %v366
    %v3294 = vunpack.c.l.b16 %v367
    %v3295 = vunpack.c.h.b16 %v367
    %v3296 = vunpack.c.l.b16 %v368
    %v3297 = vunpack.c.h.b16 %v368
    %v3298 = vunpack.c.l.b16 %v369
    %v3299 = vunpack.c.h.b16 %v369
    %v3300 = vunpack.c.l.b16 %v370
    %v3301 = vunpack.c.h.b16 %v370
    %v3302 = vunpack.c.l.b16 %v371
    %v3303 = vunpack.c.h.b16 %v371
    %v3304 = vunpack.c.l.b16 %v372
    %v3305 = vunpack.c.h.b16 %v372
    %v3306 = vunpack.c.l.b16 %v373
    %v3307 = vunpack.c.h.b16 %v373
    %v3308 = vunpack.c.l.b16 %v374
    %v3309 = vunpack.c.h.b16 %v374
    %v3310 = vunpack.c.l.b16 %v375
    %v3311 = vunpack.c.h.b16 %v375
    %v3312 = vunpack.c.l.b16 %v376
    %v3313 = vunpack.c.h.b16 %v376
    %v3314 = vunpack.c.l.b16 %v377
    %v3315 = vunpack.c.h.b16 %v377
    %v3316 = vunpack.c.l.b16 %v378
    %v3317 = vunpack.c.h.b16 %v378
    %v3318 = vunpack.c.l.b16 %v379
    %v3319 = vunpack.c.h.b16 %v379
    %v3320 = vunpack.c.l.b16 %v380
    %v3321 = vunpack.c.h.b16 %v380
    %v3322 = vunpack.c.l.b16 %v381
    %v3323 = vunpack.c.h.b16 %v381
    %v3324 = vunpack.c.l.b16 %v382
    %v3325 = vunpack.c.h.b16 %v382
    %v3326 = vunpack.c.l.b16 %v383
    %v3327 = vunpack.c.h.b16 %v383
    %v3328 = vunpack.c.l.b16 %v384
    %v3329 = vunpack.c.h.b16 %v384
    %v3330 = vunpack.c.l.b16 %v385
    %v3331 = vunpack.c.h.b16 %v385
    %v3332 = vunpack.c.l.b16 %v386
    %v3333 = vunpack.c.h.b16 %v386
    %v3334 = vunpack.c.l.b16 %v387
    %v3335 = vunpack.c.h.b16 %v387
    %v3336 = vunpack.c.l.b16 %v388
    %v3337 = vunpack.c.h.b16 %v388
    %v3338 = vunpack.c.l.b16 %v389
    %v3339 = vunpack.c.h.b16 %v389
    %v3340 = vunpack.c.l.b16 %v390
    %v3341 = vunpack.c.h.b16 %v390
    %v3342 = vunpack.c.l.b16 %v391
    %v3343 = vunpack.c.h.b16 %v391
    %v3344 = vunpack.c.l.b16 %v392
    %v3345 = vunpack.c.h.b16 %v392
    %v3346 = vunpack.c.l.b16 %v393
    %v3347 = vunpack.c.h.b16 %v393
    %v3348 = vunpack.c.l.b16 %v394
    %v3349 = vunpack.c.h.b16 %v394
    %v3350 = vunpack.c.l.b16 %v395
    %v3351 = vunpack.c.h.b16 %v395
    %v3352 = vunpack.c.l.b16 %v396
    %v3353 = vunpack.c.h.b16 %v396
    %v3354 = vunpack.c.l.b16 %v397
    %v3355 = vunpack.c.h.b16 %v397
    %v3356 = vunpack.c.l.b16 %v398
    %v3357 = vunpack.c.h.b16 %v398
    %v3358 = vunpack.c.l.b16 %v399
    %v3359 = vunpack.c.h.b16 %v399
    %v3360 = vunpack.c.l.b16 %v400
    %v3361 = vunpack.c.h.b16 %v400
    %v3362 = vunpack.c.l.b16 %v401
    %v3363 = vunpack.c.h.b16 %v401
    %v3364 = vunpack.c.l.b16 %v402
    %v3365 = vunpack.c.h.b16 %v402
    %v3366 = vunpack.c.l.b16 %v403
    %v3367 = vunpack.c.h.b16 %v403
    %v3368 = vunpack.c.l.b16 %v404
    %v3369 = vunpack.c.h.b16 %v404
    %v3370 = vunpack.c.l.b16 %v405
    %v3371 = vunpack.c.h.b16 %v405
    %v3372 = vunpack.c.l.b16 %v406
    %v3373 = vunpack.c.h.b16 %v406
    %v3374 = vunpack.c.l.b16 %v407
    %v3375 = vunpack.c.h.b16 %v407
    %v3376 = vunpack.c.l.b16 %v408
    %v3377 = vunpack.c.h.b16 %v408
    %v3378 = vunpack.c.l.b16 %v409
    %v3379 = vunpack.c.h.b16 %v409
    %v3380 = vunpack.c.l.b16 %v410
    %v3381 = vunpack.c.h.b16 %v410
    %v3382 = vunpack.c.l.b16 %v411
    %v3383 = vunpack.c.h.b16 %v411
    %v3384 = vunpack.c.l.b16 %v412
    %v3385 = vunpack.c.h.b16 %v412
    %v3386 = vunpack.c.l.b16 %v413
    %v3387 = vunpack.c.h.b16 %v413
    %v3388 = vunpack.c.l.b16 %v414
    %v3389 = vunpack.c.h.b16 %v414
    %v3390 = vunpack.c.l.b16 %v415
    %v3391 = vunpack.c.h.b16 %v415
    %v3392 = vunpack.c.l.b16 %v416
    %v3393 = vunpack.c.h.b16 %v416
    %v3394 = vunpack.c.l.b16 %v417
    %v3395 = vunpack.c.h.b16 %v417
    %v3396 = vunpack.c.l.b16 %v418
    %v3397 = vunpack.c.h.b16 %v418
    %v3398 = vunpack.c.l.b16 %v419
    %v3399 = vunpack.c.h.b16 %v419
    %v3400 = vunpack.c.l.b16 %v420
    %v3401 = vunpack.c.h.b16 %v420
    %v3402 = vunpack.c.l.b16 %v421
    %v3403 = vunpack.c.h.b16 %v421
    %v3404 = vunpack.c.l.b16 %v422
    %v3405 = vunpack.c.h.b16 %v422
    %v3406 = vunpack.c.l.b16 %v423
    %v3407 = vunpack.c.h.b16 %v423
    %v3408 = vunpack.c.l.b16 %v424
    %v3409 = vunpack.c.h.b16 %v424
    %v3410 = vunpack.c.l.b16 %v425
    %v3411 = vunpack.c.h.b16 %v425
    %v3412 = vunpack.c.l.b16 %v426
    %v3413 = vunpack.c.h.b16 %v426
    %v3414 = vunpack.c.l.b16 %v427
    %v3415 = vunpack.c.h.b16 %v427
    %v3416 = vunpack.c.l.b16 %v428
    %v3417 = vunpack.c.h.b16 %v428
    %v3418 = vunpack.c.l.b16 %v429
    %v3419 = vunpack.c.h.b16 %v429
    %v3420 = vunpack.c.l.b16 %v430
    %v3421 = vunpack.c.h.b16 %v430
    %v3422 = vunpack.c.l.b16 %v431
    %v3423 = vunpack.c.h.b16 %v431
    %v3424 = vunpack.c.l.b16 %v432
    %v3425 = vunpack.c.h.b16 %v432
    %v3426 = vunpack.c.l.b16 %v433
    %v3427 = vunpack.c.h.b16 %v433
    %v3428 = vunpack.c.l.b16 %v434
    %v3429 = vunpack.c.h.b16 %v434
    %v3430 = vunpack.c.l.b16 %v435
    %v3431 = vunpack.c.h.b16 %v435
    %v3432 = vunpack.c.l.b16 %v436
    %v3433 = vunpack.c.h.b16 %v436
    %v3434 = vunpack.c.l.b16 %v437
    %v3435 = vunpack.c.h.b16 %v437
    %v3436 = vunpack.c.l.b16 %v438
    %v3437 = vunpack.c.h.b16 %v438
    %v3438 = vunpack.c.l.b16 %v439
    %v3439 = vunpack.c.h.b16 %v439
    %v3440 = vunpack.c.l.b16 %v440
    %v3441 = vunpack.c.h.b16 %v440
    %v3442 = vunpack.c.l.b16 %v441
    %v3443 = vunpack.c.h.b16 %v441
    %v3444 = vunpack.c.l.b16 %v442
    %v3445 = vunpack.c.h.b16 %v442
    %v3446 = vunpack.c.l.b16 %v443
    %v3447 = vunpack.c.h.b16 %v443
    %v3448 = vunpack.c.l.b16 %v444
    %v3449 = vunpack.c.h.b16 %v444
    %v3450 = vunpack.c.l.b16 %v445
    %v3451 = vunpack.c.h.b16 %v445
    %v3452 = vunpack.c.l.b16 %v446
    %v3453 = vunpack.c.h.b16 %v446
    %v3454 = vunpack.c.l.b16 %v447
    %v3455 = vunpack.c.h.b16 %v447
    %v3456 = vunpack.c.l.b16 %v448
    %v3457 = vunpack.c.h.b16 %v448
    %v3458 = vunpack.c.l.b16 %v449
    %v3459 = vunpack.c.h.b16 %v449
    %v3460 = vunpack.c.l.b16 %v450
    %v3461 = vunpack.c.h.b16 %v450
    %v3462 = vunpack.c.l.b16 %v451
    %v3463 = vunpack.c.h.b16 %v451
    %v3464 = vunpack.c.l.b16 %v452
    %v3465 = vunpack.c.h.b16 %v452
    %v3466 = vunpack.c.l.b16 %v453
    %v3467 = vunpack.c.h.b16 %v453
    %v3468 = vunpack.c.l.b16 %v454
    %v3469 = vunpack.c.h.b16 %v454
    %v3470 = vunpack.c.l.b16 %v455
    %v3471 = vunpack.c.h.b16 %v455
    %v3472 = vunpack.c.l.b16 %v456
    %v3473 = vunpack.c.h.b16 %v456
    %v3474 = vunpack.c.l.b16 %v457
    %v3475 = vunpack.c.h.b16 %v457
    %v3476 = vunpack.c.l.b16 %v458
    %v3477 = vunpack.c.h.b16 %v458
    %v3478 = vunpack.c.l.b16 %v459
    %v3479 = vunpack.c.h.b16 %v459
    %v3480 = vunpack.c.l.b16 %v460
    %v3481 = vunpack.c.h.b16 %v460
    %v3482 = vunpack.c.l.b16 %v461
    %v3483 = vunpack.c.h.b16 %v461
    %v3484 = vunpack.c.l.b16 %v462
    %v3485 = vunpack.c.h.b16 %v462
    %v3486 = vunpack.c.l.b16 %v463
    %v3487 = vunpack.c.h.b16 %v463
    %v3488 = vunpack.c.l.b16 %v464
    %v3489 = vunpack.c.h.b16 %v464
    %v3490 = vunpack.c.l.b16 %v465
    %v3491 = vunpack.c.h.b16 %v465
    %v3492 = vunpack.c.l.b16 %v466
    %v3493 = vunpack.c.h.b16 %v466
    %v3494 = vunpack.c.l.b16 %v467
    %v3495 = vunpack.c.h.b16 %v467
    %v3496 = vunpack.c.l.b16 %v468
    %v3497 = vunpack.c.h.b16 %v468
    %v3498 = vunpack.c.l.b16 %v469
    %v3499 = vunpack.c.h.b16 %v469
    %v3500 = vunpack.c.l.b16 %v470
    %v3501 = vunpack.c.h.b16 %v470
    %v3502 = vunpack.c.l.b16 %v471
    %v3503 = vunpack.c.h.b16 %v471
    %v3504 = vunpack.c.l.b16 %v472
    %v3505 = vunpack.c.h.b16 %v472
    %v3506 = vunpack.c.l.b16 %v473
    %v3507 = vunpack.c.h.b16 %v473
    %v3508 = vunpack.c.l.b16 %v474
    %v3509 = vunpack.c.h.b16 %v474
    %v3510 = vunpack.c.l.b16 %v475
    %v3511 = vunpack.c.h.b16 %v475
    %v3512 = vunpack.c.l.b16 %v476
    %v3513 = vunpack.c.h.b16 %v476
    %v3514 = vunpack.c.l.b16 %v477
    %v3515 = vunpack.c.h.b16 %v477
    %v3516 = vunpack.c.l.b16 %v478
    %v3517 = vunpack.c.h.b16 %v478
    %v3518 = vunpack.c.l.b16 %v479
    %v3519 = vunpack.c.h.b16 %v479
    %v3520 = vunpack.c.l.b16 %v480
    %v3521 = vunpack.c.h.b16 %v480
    %v3522 = vunpack.c.l.b16 %v481
    %v3523 = vunpack.c.h.b16 %v481
    %v3524 = vunpack.c.l.b16 %v482
    %v3525 = vunpack.c.h.b16 %v482
    %v3526 = vunpack.c.l.b16 %v483
    %v3527 = vunpack.c.h.b16 %v483
    %v3528 = vunpack.c.l.b16 %v484
    %v3529 = vunpack.c.h.b16 %v484
    %v3530 = vunpack.c.l.b16 %v485
    %v3531 = vunpack.c.h.b16 %v485
    %v3532 = vunpack.c.l.b16 %v486
    %v3533 = vunpack.c.h.b16 %v486
    %v3534 = vunpack.c.l.b16 %v487
    %v3535 = vunpack.c.h.b16 %v487
    %v3536 = vunpack.c.l.b16 %v488
    %v3537 = vunpack.c.h.b16 %v488
    %v3538 = vunpack.c.l.b16 %v489
    %v3539 = vunpack.c.h.b16 %v489
    %v3540 = vunpack.c.l.b16 %v490
    %v3541 = vunpack.c.h.b16 %v490
    %v3542 = vunpack.c.l.b16 %v491
    %v3543 = vunpack.c.h.b16 %v491
    %v3544 = vunpack.c.l.b16 %v492
    %v3545 = vunpack.c.h.b16 %v492
    %v3546 = vunpack.c.l.b16 %v493
    %v3547 = vunpack.c.h.b16 %v493
    %v3548 = vunpack.c.l.b16 %v494
    %v3549 = vunpack.c.h.b16 %v494
    %v3550 = vunpack.c.l.b16 %v495
    %v3551 = vunpack.c.h.b16 %v495
    %v3552 = vunpack.c.l.b16 %v496
    %v3553 = vunpack.c.h.b16 %v496
    %v3554 = vunpack.c.l.b16 %v497
    %v3555 = vunpack.c.h.b16 %v497
    %v3556 = vunpack.c.l.b16 %v498
    %v3557 = vunpack.c.h.b16 %v498
    %v3558 = vunpack.c.l.b16 %v499
    %v3559 = vunpack.c.h.b16 %v499
    %v3560 = vunpack.c.l.b16 %v500
    %v3561 = vunpack.c.h.b16 %v500
    %v3562 = vunpack.c.l.b16 %v501
    %v3563 = vunpack.c.h.b16 %v501
    %v3564 = vunpack.c.l.b16 %v502
    %v3565 = vunpack.c.h.b16 %v502
    %v3566 = vunpack.c.l.b16 %v503
    %v3567 = vunpack.c.h.b16 %v503
    %v3568 = vunpack.c.l.b16 %v504
    %v3569 = vunpack.c.h.b16 %v504
    %v3570 = vunpack.c.l.b16 %v505
    %v3571 = vunpack.c.h.b16 %v505
    %v3572 = vunpack.c.l.b16 %v506
    %v3573 = vunpack.c.h.b16 %v506
    %v3574 = vunpack.c.l.b16 %v507
    %v3575 = vunpack.c.h.b16 %v507
    %v3576 = vunpack.c.l.b16 %v508
    %v3577 = vunpack.c.h.b16 %v508
    %v3578 = vunpack.c.l.b16 %v509
    %v3579 = vunpack.c.h.b16 %v509
    %v3580 = vunpack.c.l.b16 %v510
    %v3581 = vunpack.c.h.b16 %v510
    %v3582 = vunpack.c.l.b16 %v511
    %v3583 = vunpack.c.h.b16 %v511
    %v3584 = vunpack.c.l.b16 %v512
    %v3585 = vunpack.c.h.b16 %v512
    %v3586 = vunpack.c.l.b16 %v513
    %v3587 = vunpack.c.h.b16 %v513
    %v3588 = vunpack.c.l.b16 %v514
    %v3589 = vunpack.c.h.b16 %v514
    %v3590 = vunpack.c.l.b16 %v515
    %v3591 = vunpack.c.h.b16 %v515
    %v3592 = vunpack.c.l.b16 %v516
    %v3593 = vunpack.c.h.b16 %v516
    %v3594 = vunpack.c.l.b16 %v517
    %v3595 = vunpack.c.h.b16 %v517
    %v3596 = vunpack.c.l.b16 %v518
    %v3597 = vunpack.c.h.b16 %v518
    %v3598 = vunpack.c.l.b16 %v519
    %v3599 = vunpack.c.h.b16 %v519
    %v3600 = vunpack.c.l.b16 %v520
    %v3601 = vunpack.c.h.b16 %v520
    %v3602 = vunpack.c.l.b16 %v521
    %v3603 = vunpack.c.h.b16 %v521
    %v3604 = vunpack.c.l.b16 %v522
    %v3605 = vunpack.c.h.b16 %v522
    %v3606 = vunpack.c.l.b16 %v523
    %v3607 = vunpack.c.h.b16 %v523
    %v3608 = vunpack.c.l.b16 %v524
    %v3609 = vunpack.c.h.b16 %v524
    %v3610 = vunpack.c.l.b16 %v525
    %v3611 = vunpack.c.h.b16 %v525
    %v3612 = vunpack.c.l.b16 %v526
    %v3613 = vunpack.c.h.b16 %v526
    %v3614 = vunpack.c.l.b16 %v527
    %v3615 = vunpack.c.h.b16 %v527
    %v3616 = vunpack.c.l.b16 %v528
    %v3617 = vunpack.c.h.b16 %v528
    %v3618 = vunpack.c.l.b16 %v529
    %v3619 = vunpack.c.h.b16 %v529
    %v3620 = vunpack.c.l.b16 %v530
    %v3621 = vunpack.c.h.b16 %v530
    %v3622 = vunpack.c.l.b16 %v531
    %v3623 = vunpack.c.h.b16 %v531
    %v3624 = vunpack.c.l.b16 %v532
    %v3625 = vunpack.c.h.b16 %v532
    %v3626 = vunpack.c.l.b16 %v533
    %v3627 = vunpack.c.h.b16 %v533
    %v3628 = vunpack.c.l.b16 %v534
    %v3629 = vunpack.c.h.b16 %v534
    %v3630 = vunpack.c.l.b16 %v535
    %v3631 = vunpack.c.h.b16 %v535
    %v3632 = vunpack.c.l.b16 %v536
    %v3633 = vunpack.c.h.b16 %v536
    %v3634 = vunpack.c.l.b16 %v537
    %v3635 = vunpack.c.h.b16 %v537
    %v3636 = vunpack.c.l.b16 %v538
    %v3637 = vunpack.c.h.b16 %v538
    %v3638 = vunpack.c.l.b16 %v539
    %v3639 = vunpack.c.h.b16 %v539
    %v3640 = vunpack.c.l.b16 %v540
    %v3641 = vunpack.c.h.b16 %v540
    %v3642 = vunpack.c.l.b16 %v541
    %v3643 = vunpack.c.h.b16 %v541
    %v3644 = vunpack.c.l.b16 %v542
    %v3645 = vunpack.c.h.b16 %v542
    %v3646 = vunpack.c.l.b16 %v543
    %v3647 = vunpack.c.h.b16 %v543
    %v3648 = vunpack.c.l.b16 %v544
    %v3649 = vunpack.c.h.b16 %v544
    %v3650 = vunpack.c.l.b16 %v545
    %v3651 = vunpack.c.h.b16 %v545
    %v3652 = vunpack.c.l.b16 %v546
    %v3653 = vunpack.c.h.b16 %v546
    %v3654 = vunpack.c.l.b16 %v547
    %v3655 = vunpack.c.h.b16 %v547
    %v3656 = vunpack.c.l.b16 %v548
    %v3657 = vunpack.c.h.b16 %v548
    %v3658 = vunpack.c.l.b16 %v549
    %v3659 = vunpack.c.h.b16 %v549
    %v3660 = vunpack.c.l.b16 %v550
    %v3661 = vunpack.c.h.b16 %v550
    %v3662 = vunpack.c.l.b16 %v551
    %v3663 = vunpack.c.h.b16 %v551
    %v3664 = vunpack.c.l.b16 %v552
    %v3665 = vunpack.c.h.b16 %v552
    %v3666 = vunpack.c.l.b16 %v553
    %v3667 = vunpack.c.h.b16 %v553
    %v3668 = vunpack.c.l.b16 %v554
    %v3669 = vunpack.c.h.b16 %v554
    %v3670 = vunpack.c.l.b16 %v555
    %v3671 = vunpack.c.h.b16 %v555
    %v3672 = vunpack.c.l.b16 %v556
    %v3673 = vunpack.c.h.b16 %v556
    %v3674 = vunpack.c.l.b16 %v557
    %v3675 = vunpack.c.h.b16 %v557
    %v3676 = vunpack.c.l.b16 %v558
    %v3677 = vunpack.c.h.b16 %v558
    %v3678 = vunpack.c.l.b16 %v559
    %v3679 = vunpack.c.h.b16 %v559
    %v3680 = vunpack.c.l.b16 %v560
    %v3681 = vunpack.c.h.b16 %v560
    %v3682 = vunpack.c.l.b16 %v561
    %v3683 = vunpack.c.h.b16 %v561
    %v3684 = vunpack.c.l.b16 %v562
    %v3685 = vunpack.c.h.b16 %v562
    %v3686 = vunpack.c.l.b16 %v563
    %v3687 = vunpack.c.h.b16 %v563
    %v3688 = vunpack.c.l.b16 %v564
    %v3689 = vunpack.c.h.b16 %v564
    %v3690 = vunpack.c.l.b16 %v565
    %v3691 = vunpack.c.h.b16 %v565
    %v3692 = vunpack.c.l.b16 %v566
    %v3693 = vunpack.c.h.b16 %v566
    %v3694 = vunpack.c.l.b16 %v567
    %v3695 = vunpack.c.h.b16 %v567
    %v3696 = vunpack.c.l.b16 %v568
    %v3697 = vunpack.c.h.b16 %v568
    %v3698 = vunpack.c.l.b16 %v569
    %v3699 = vunpack.c.h.b16 %v569
    %v3700 = vunpack.c.l.b16 %v570
    %v3701 = vunpack.c.h.b16 %v570
    %v3702 = vunpack.c.l.b16 %v571
    %v3703 = vunpack.c.h.b16 %v571
    %v3704 = vunpack.c.l.b16 %v572
    %v3705 = vunpack.c.h.b16 %v572
    %v3706 = vunpack.c.l.b16 %v573
    %v3707 = vunpack.c.h.b16 %v573
    %v3708 = vunpack.c.l.b16 %v574
    %v3709 = vunpack.c.h.b16 %v574
    %v3710 = vunpack.c.l.b16 %v575
    %v3711 = vunpack.c.h.b16 %v575
    %v3712 = vunpack.c.l.b16 %v576
    %v3713 = vunpack.c.h.b16 %v576
    %v3714 = vunpack.c.l.b16 %v577
    %v3715 = vunpack.c.h.b16 %v577
    %v3716 = vunpack.c.l.b16 %v578
    %v3717 = vunpack.c.h.b16 %v578
    %v3718 = vunpack.c.l.b16 %v579
    %v3719 = vunpack.c.h.b16 %v579
    %v3720 = vunpack.c.l.b16 %v580
    %v3721 = vunpack.c.h.b16 %v580
    %v3722 = vunpack.c.l.b16 %v581
    %v3723 = vunpack.c.h.b16 %v581
    %v3724 = vunpack.c.l.b16 %v582
    %v3725 = vunpack.c.h.b16 %v582
    %v3726 = vunpack.c.l.b16 %v583
    %v3727 = vunpack.c.h.b16 %v583
    %v3728 = vunpack.c.l.b16 %v584
    %v3729 = vunpack.c.h.b16 %v584
    %v3730 = vunpack.c.l.b16 %v585
    %v3731 = vunpack.c.h.b16 %v585
    %v3732 = vunpack.c.l.b16 %v586
    %v3733 = vunpack.c.h.b16 %v586
    %v3734 = vunpack.c.l.b16 %v587
    %v3735 = vunpack.c.h.b16 %v587
    %v3736 = vunpack.c.l.b16 %v588
    %v3737 = vunpack.c.h.b16 %v588
    %v3738 = vunpack.c.l.b16 %v589
    %v3739 = vunpack.c.h.b16 %v589
    %v3740 = vunpack.c.l.b16 %v590
    %v3741 = vunpack.c.h.b16 %v590
    %v3742 = vunpack.c.l.b16 %v591
    %v3743 = vunpack.c.h.b16 %v591
    %v3744 = vunpack.c.l.b16 %v592
    %v3745 = vunpack.c.h.b16 %v592
    %v3746 = vunpack.c.l.b16 %v593
    %v3747 = vunpack.c.h.b16 %v593
    %v3748 = vunpack.c.l.b16 %v594
    %v3749 = vunpack.c.h.b16 %v594
    %v3750 = vunpack.c.l.b16 %v595
    %v3751 = vunpack.c.h.b16 %v595
    %v3752 = vunpack.c.l.b16 %v596
    %v3753 = vunpack.c.h.b16 %v596
    %v3754 = vunpack.c.l.b16 %v597
    %v3755 = vunpack.c.h.b16 %v597
    %v3756 = vunpack.c.l.b16 %v598
    %v3757 = vunpack.c.h.b16 %v598
    %v3758 = vunpack.c.l.b16 %v599
    %v3759 = vunpack.c.h.b16 %v599
    %v3760 = vunpack.c.l.b16 %v600
    %v3761 = vunpack.c.h.b16 %v600
    %v3762 = vunpack.c.l.b16 %v601
    %v3763 = vunpack.c.h.b16 %v601
    %v3764 = vunpack.c.l.b16 %v602
    %v3765 = vunpack.c.h.b16 %v602
    %v3766 = vunpack.c.l.b16 %v603
    %v3767 = vunpack.c.h.b16 %v603
    %v3768 = vunpack.c.l.b16 %v604
    %v3769 = vunpack.c.h.b16 %v604
    %v3770 = vunpack.c.l.b16 %v605
    %v3771 = vunpack.c.h.b16 %v605
    %v3772 = vunpack.c.l.b16 %v606
    %v3773 = vunpack.c.h.b16 %v606
    %v3774 = vunpack.c.l.b16 %v607
    %v3775 = vunpack.c.h.b16 %v607
    %v3776 = vunpack.c.l.b16 %v608
    %v3777 = vunpack.c.h.b16 %v608
    %v3778 = vunpack.c.l.b16 %v609
    %v3779 = vunpack.c.h.b16 %v609
    %v3780 = vunpack.c.l.b16 %v610
    %v3781 = vunpack.c.h.b16 %v610
    %v3782 = vunpack.c.l.b16 %v611
    %v3783 = vunpack.c.h.b16 %v611
    %v3784 = vunpack.c.l.b16 %v612
    %v3785 = vunpack.c.h.b16 %v612
    %v3786 = vunpack.c.l.b16 %v613
    %v3787 = vunpack.c.h.b16 %v613
    %v3788 = vunpack.c.l.b16 %v614
    %v3789 = vunpack.c.h.b16 %v614
    %v3790 = vunpack.c.l.b16 %v615
    %v3791 = vunpack.c.h.b16 %v615
    %v3792 = vunpack.c.l.b16 %v616
    %v3793 = vunpack.c.h.b16 %v616
    %v3794 = vunpack.c.l.b16 %v617
    %v3795 = vunpack.c.h.b16 %v617
    %v3796 = vunpack.c.l.b16 %v618
    %v3797 = vunpack.c.h.b16 %v618
    %v3798 = vunpack.c.l.b16 %v619
    %v3799 = vunpack.c.h.b16 %v619
    %v3800 = vunpack.c.l.b16 %v620
    %v3801 = vunpack.c.h.b16 %v620
    %v3802 = vunpack.c.l.b16 %v621
    %v3803 = vunpack.c.h.b16 %v621
    %v3804 = vunpack.c.l.b16 %v622
    %v3805 = vunpack.c.h.b16 %v622
    %v3806 = vunpack.c.l.b16 %v623
    %v3807 = vunpack.c.h.b16 %v623
    %v3808 = vunpack.c.l.b16 %v624
    %v3809 = vunpack.c.h.b16 %v624
    %v3810 = vunpack.c.l.b16 %v625
    %v3811 = vunpack.c.h.b16 %v625
    %v3812 = vunpack.c.l.b16 %v626
    %v3813 = vunpack.c.h.b16 %v626
    %v3814 = vunpack.c.l.b16 %v627
    %v3815 = vunpack.c.h.b16 %v627
    %v3816 = vunpack.c.l.b16 %v628
    %v3817 = vunpack.c.h.b16 %v628
    %v3818 = vunpack.c.l.b16 %v629
    %v3819 = vunpack.c.h.b16 %v629
    %v3820 = vunpack.c.l.b16 %v630
    %v3821 = vunpack.c.h.b16 %v630
    %v3822 = vunpack.c.l.b16 %v631
    %v3823 = vunpack.c.h.b16 %v631
    %v3824 = vunpack.c.l.b16 %v632
    %v3825 = vunpack.c.h.b16 %v632
    %v3826 = vunpack.c.l.b16 %v633
    %v3827 = vunpack.c.h.b16 %v633
    %v3828 = vunpack.c.l.b16 %v634
    %v3829 = vunpack.c.h.b16 %v634
    %v3830 = vunpack.c.l.b16 %v635
    %v3831 = vunpack.c.h.b16 %v635
    %v3832 = vunpack.c.l.b16 %v636
    %v3833 = vunpack.c.h.b16 %v636
    %v3834 = vunpack.c.l.b16 %v637
    %v3835 = vunpack.c.h.b16 %v637
    %v3836 = vunpack.c.l.b16 %v638
    %v3837 = vunpack.c.h.b16 %v638
    %v3838 = vunpack.c.l.b16 %v639
    %v3839 = vunpack.c.h.b16 %v639
    %v3840 = vunpack.c.l.b16 %v640
    %v3841 = vunpack.c.h.b16 %v640
    %v3842 = vunpack.c.l.b16 %v641
    %v3843 = vunpack.c.h.b16 %v641
    %v3844 = vunpack.c.l.b16 %v642
    %v3845 = vunpack.c.h.b16 %v642
    %v3846 = vunpack.c.l.b16 %v643
    %v3847 = vunpack.c.h.b16 %v643
    %v3848 = vunpack.c.l.b16 %v644
    %v3849 = vunpack.c.h.b16 %v644
    %v3850 = vunpack.c.l.b16 %v645
    %v3851 = vunpack.c.h.b16 %v645
    %v3852 = vunpack.c.l.b16 %v646
    %v3853 = vunpack.c.h.b16 %v646
    %v3854 = vunpack.c.l.b16 %v647
    %v3855 = vunpack.c.h.b16 %v647
    %v3856 = vunpack.c.l.b16 %v648
    %v3857 = vunpack.c.h.b16 %v648
    %v3858 = vunpack.c.l.b16 %v649
    %v3859 = vunpack.c.h.b16 %v649
    %v3860 = vunpack.c.l.b16 %v650
    %v3861 = vunpack.c.h.b16 %v650
    %v3862 = vunpack.c.l.b16 %v651
    %v3863 = vunpack.c.h.b16 %v651
    %v3864 = vunpack.c.l.b16 %v652
    %v3865 = vunpack.c.h.b16 %v652
    %v3866 = vunpack.c.l.b16 %v653
    %v3867 = vunpack.c.h.b16 %v653
    %v3868 = vunpack.c.l.b16 %v654
    %v3869 = vunpack.c.h.b16 %v654
    %v3870 = vunpack.c.l.b16 %v655
    %v3871 = vunpack.c.h.b16 %v655
    %v3872 = vunpack.c.l.b16 %v656
    %v3873 = vunpack.c.h.b16 %v656
    %v3874 = vunpack.c.l.b16 %v657
    %v3875 = vunpack.c.h.b16 %v657
    %v3876 = vunpack.c.l.b16 %v658
    %v3877 = vunpack.c.h.b16 %v658
    %v3878 = vunpack.c.l.b16 %v659
    %v3879 = vunpack.c.h.b16 %v659
    %v3880 = vunpack.c.l.b16 %v660
    %v3881 = vunpack.c.h.b16 %v660
    %v3882 = vunpack.c.l.b16 %v661
    %v3883 = vunpack.c.h.b16 %v661
    %v3884 = vunpack.c.l.b16 %v662
    %v3885 = vunpack.c.h.b16 %v662
    %v3886 = vunpack.c.l.b16 %v663
    %v3887 = vunpack.c.h.b16 %v663
    %v3888 = vunpack.c.l.b16 %v664
    %v3889 = vunpack.c.h.b16 %v664
    %v3890 = vunpack.c.l.b16 %v665
    %v3891 = vunpack.c.h.b16 %v665
    %v3892 = vunpack.c.l.b16 %v666
    %v3893 = vunpack.c.h.b16 %v666
    %v3894 = vunpack.c.l.b16 %v667
    %v3895 = vunpack.c.h.b16 %v667
    %v3896 = vunpack.c.l.b16 %v668
    %v3897 = vunpack.c.h.b16 %v668
    %v3898 = vunpack.c.l.b16 %v669
    %v3899 = vunpack.c.h.b16 %v669
    %v3900 = vunpack.c.l.b16 %v670
    %v3901 = vunpack.c.h.b16 %v670
    %v3902 = vunpack.c.l.b16 %v671
    %v3903 = vunpack.c.h.b16 %v671
    %v3904 = vunpack.c.l.b16 %v672
    %v3905 = vunpack.c.h.b16 %v672
    %v3906 = vunpack.c.l.b16 %v673
    %v3907 = vunpack.c.h.b16 %v673
    %v3908 = vunpack.c.l.b16 %v674
    %v3909 = vunpack.c.h.b16 %v674
    %v3910 = vunpack.c.l.b16 %v675
    %v3911 = vunpack.c.h.b16 %v675
    %v3912 = vunpack.c.l.b16 %v676
    %v3913 = vunpack.c.h.b16 %v676
    %v3914 = vunpack.c.l.b16 %v677
    %v3915 = vunpack.c.h.b16 %v677
    %v3916 = vunpack.c.l.b16 %v678
    %v3917 = vunpack.c.h.b16 %v678
    %v3918 = vunpack.c.l.b16 %v679
    %v3919 = vunpack.c.h.b16 %v679
    %v3920 = vunpack.c.l.b16 %v680
    %v3921 = vunpack.c.h.b16 %v680
    %v3922 = vunpack.c.l.b16 %v681
    %v3923 = vunpack.c.h.b16 %v681
    %v3924 = vunpack.c.l.b16 %v682
    %v3925 = vunpack.c.h.b16 %v682
    %v3926 = vunpack.c.l.b16 %v683
    %v3927 = vunpack.c.h.b16 %v683
    %v3928 = vunpack.c.l.b16 %v684
    %v3929 = vunpack.c.h.b16 %v684
    %v3930 = vunpack.c.l.b16 %v685
    %v3931 = vunpack.c.h.b16 %v685
    %v3932 = vunpack.c.l.b16 %v686
    %v3933 = vunpack.c.h.b16 %v686
    %v3934 = vunpack.c.l.b16 %v687
    %v3935 = vunpack.c.h.b16 %v687
    %v3936 = vunpack.c.l.b16 %v688
    %v3937 = vunpack.c.h.b16 %v688
    %v3938 = vunpack.c.l.b16 %v689
    %v3939 = vunpack.c.h.b16 %v689
    %v3940 = vunpack.c.l.b16 %v690
    %v3941 = vunpack.c.h.b16 %v690
    %v3942 = vunpack.c.l.b16 %v691
    %v3943 = vunpack.c.h.b16 %v691
    %v3944 = vunpack.c.l.b16 %v692
    %v3945 = vunpack.c.h.b16 %v692
    %v3946 = vunpack.c.l.b16 %v693
    %v3947 = vunpack.c.h.b16 %v693
    %v3948 = vunpack.c.l.b16 %v694
    %v3949 = vunpack.c.h.b16 %v694
    %v3950 = vunpack.c.l.b16 %v695
    %v3951 = vunpack.c.h.b16 %v695
    %v3952 = vunpack.c.l.b16 %v696
    %v3953 = vunpack.c.h.b16 %v696
    %v3954 = vunpack.c.l.b16 %v697
    %v3955 = vunpack.c.h.b16 %v697
    %v3956 = vunpack.c.l.b16 %v698
    %v3957 = vunpack.c.h.b16 %v698
    %v3958 = vunpack.c.l.b16 %v699
    %v3959 = vunpack.c.h.b16 %v699
    %v3960 = vunpack.c.l.b16 %v700
    %v3961 = vunpack.c.h.b16 %v700
    %v3962 = vunpack.c.l.b16 %v701
    %v3963 = vunpack.c.h.b16 %v701
    %v3964 = vunpack.c.l.b16 %v702
    %v3965 = vunpack.c.h.b16 %v702
    %v3966 = vunpack.c.l.b16 %v703
    %v3967 = vunpack.c.h.b16 %v703
    %v3968 = vunpack.c.l.b16 %v704
    %v3969 = vunpack.c.h.b16 %v704
    %v3970 = vunpack.c.l.b16 %v705
    %v3971 = vunpack.c.h.b16 %v705
    %v3972 = vunpack.c.l.b16 %v706
    %v3973 = vunpack.c.h.b16 %v706
    %v3974 = vunpack.c.l.b16 %v707
    %v3975 = vunpack.c.h.b16 %v707
    %v3976 = vunpack.c.l.b16 %v708
    %v3977 = vunpack.c.h.b16 %v708
    %v3978 = vunpack.c.l.b16 %v709
    %v3979 = vunpack.c.h.b16 %v709
    %v3980 = vunpack.c.l.b16 %v710
    %v3981 = vunpack.c.h.b16 %v710
    %v3982 = vunpack.c.l.b16 %v711
    %v3983 = vunpack.c.h.b16 %v711
    %v3984 = vunpack.c.l.b16 %v712
    %v3985 = vunpack.c.h.b16 %v712
    %v3986 = vunpack.c.l.b16 %v713
    %v3987 = vunpack.c.h.b16 %v713
    %v3988 = vunpack.c.l.b16 %v714
    %v3989 = vunpack.c.h.b16 %v714
    %v3990 = vunpack.c.l.b16 %v715
    %v3991 = vunpack.c.h.b16 %v715
    %v3992 = vunpack.c.l.b16 %v716
    %v3993 = vunpack.c.h.b16 %v716
    %v3994 = vunpack.c.l.b16 %v717
    %v3995 = vunpack.c.h.b16 %v717
    %v3996 = vunpack.c.l.b16 %v718
    %v3997 = vunpack.c.h.b16 %v718
    %v3998 = vunpack.c.l.b16 %v719
    %v3999 = vunpack.c.h.b16 %v719
    %v4000 = vunpack.c.l.b16 %v720
    %v4001 = vunpack.c.h.b16 %v720
    %v4002 = vunpack.c.l.b16 %v721
    %v4003 = vunpack.c.h.b16 %v721
    %v4004 = vunpack.c.l.b16 %v722
    %v4005 = vunpack.c.h.b16 %v722
    %v4006 = vunpack.c.l.b16 %v723
    %v4007 = vunpack.c.h.b16 %v723
    %v4008 = vunpack.c.l.b16 %v724
    %v4009 = vunpack.c.h.b16 %v724
    %v4010 = vunpack.c.l.b16 %v725
    %v4011 = vunpack.c.h.b16 %v725
    %v4012 = vunpack.c.l.b16 %v726
    %v4013 = vunpack.c.h.b16 %v726
    %v4014 = vunpack.c.l.b16 %v727
    %v4015 = vunpack.c.h.b16 %v727
    %v4016 = vunpack.c.l.b16 %v728
    %v4017 = vunpack.c.h.b16 %v728
    %v4018 = vunpack.c.l.b16 %v729
    %v4019 = vunpack.c.h.b16 %v729
    %v4020 = vunpack.c.l.b16 %v730
    %v4021 = vunpack.c.h.b16 %v730
    %v4022 = vunpack.c.l.b16 %v731
    %v4023 = vunpack.c.h.b16 %v731
    %v4024 = vunpack.c.l.b16 %v732
    %v4025 = vunpack.c.h.b16 %v732
    %v4026 = vunpack.c.l.b16 %v733
    %v4027 = vunpack.c.h.b16 %v733
    %v4028 = vunpack.c.l.b16 %v734
    %v4029 = vunpack.c.h.b16 %v734
    %v4030 = vunpack.c.l.b16 %v735
    %v4031 = vunpack.c.h.b16 %v735
    %v4032 = vunpack.c.l.b16 %v736
    %v4033 = vunpack.c.h.b16 %v736
    %v4034 = vunpack.c.l.b16 %v737
    %v4035 = vunpack.c.h.b16 %v737
    %v4036 = vunpack.c.l.b16 %v738
    %v4037 = vunpack.c.h.b16 %v738
    %v4038 = vunpack.c.l.b16 %v739
    %v4039 = vunpack.c.h.b16 %v739
    %v4040 = vunpack.c.l.b16 %v740
    %v4041 = vunpack.c.h.b16 %v740
    %v4042 = vunpack.c.l.b16 %v741
    %v4043 = vunpack.c.h.b16 %v741
    %v4044 = vunpack.c.l.b16 %v742
    %v4045 = vunpack.c.h.b16 %v742
    %v4046 = vunpack.c.l.b16 %v743
    %v4047 = vunpack.c.h.b16 %v743
    %v4048 = vunpack.c.l.b16 %v744
    %v4049 = vunpack.c.h.b16 %v744
    %v4050 = vunpack.c.l.b16 %v745
    %v4051 = vunpack.c.h.b16 %v745
    %v4052 = vunpack.c.l.b16 %v746
    %v4053 = vunpack.c.h.b16 %v746
    %v4054 = vunpack.c.l.b16 %v747
    %v4055 = vunpack.c.h.b16 %v747
    %v4056 = vunpack.c.l.b16 %v748
    %v4057 = vunpack.c.h.b16 %v748
    %v4058 = vunpack.c.l.b16 %v749
    %v4059 = vunpack.c.h.b16 %v749
    %v4060 = vunpack.c.l.b16 %v750
    %v4061 = vunpack.c.h.b16 %v750
    %v4062 = vunpack.c.l.b16 %v751
    %v4063 = vunpack.c.h.b16 %v751
    %v4064 = vunpack.c.l.b16 %v752
    %v4065 = vunpack.c.h.b16 %v752
    %v4066 = vunpack.c.l.b16 %v753
    %v4067 = vunpack.c.h.b16 %v753
    %v4068 = vunpack.c.l.b16 %v754
    %v4069 = vunpack.c.h.b16 %v754
    %v4070 = vunpack.c.l.b16 %v755
    %v4071 = vunpack.c.h.b16 %v755
    %v4072 = vunpack.c.l.b16 %v756
    %v4073 = vunpack.c.h.b16 %v756
    %v4074 = vunpack.c.l.b16 %v757
    %v4075 = vunpack.c.h.b16 %v757
    %v4076 = vunpack.c.l.b16 %v758
    %v4077 = vunpack.c.h.b16 %v758
    %v4078 = vunpack.c.l.b16 %v759
    %v4079 = vunpack.c.h.b16 %v759
    %v4080 = vunpack.c.l.b16 %v760
    %v4081 = vunpack.c.h.b16 %v760
    %v4082 = vunpack.c.l.b16 %v761
    %v4083 = vunpack.c.h.b16 %v761
    %v4084 = vunpack.c.l.b16 %v762
    %v4085 = vunpack.c.h.b16 %v762
    %v4086 = vunpack.c.l.b16 %v763
    %v4087 = vunpack.c.h.b16 %v763
    %v4088 = vunpack.c.l.b16 %v764
    %v4089 = vunpack.c.h.b16 %v764
    %v4090 = vunpack.c.l.b16 %v765
    %v4091 = vunpack.c.h.b16 %v765
    %v4092 = vunpack.c.l.b16 %v766
    %v4093 = vunpack.c.h.b16 %v766
    %v4094 = vunpack.c.l.b16 %v767
    %v4095 = vunpack.c.h.b16 %v767
    %v4096 = vunpack.c.l.b16 %v768
    %v4097 = vunpack.c.h.b16 %v768
    %v4098 = vunpack.c.l.b16 %v769
    %v4099 = vunpack.c.h.b16 %v769
    %v4100 = vunpack.c.l.b16 %v770
    %v4101 = vunpack.c.h.b16 %v770
    %v4102 = vunpack.c.l.b16 %v771
    %v4103 = vunpack.c.h.b16 %v771
    %v4104 = vunpack.c.l.b16 %v772
    %v4105 = vunpack.c.h.b16 %v772
    %v4106 = vunpack.c.l.b16 %v773
    %v4107 = vunpack.c.h.b16 %v773
    %v4108 = vunpack.c.l.b16 %v774
    %v4109 = vunpack.c.h.b16 %v774
    %v4110 = vunpack.c.l.b16 %v775
    %v4111 = vunpack.c.h.b16 %v775
    %v4112 = vunpack.c.l.b16 %v776
    %v4113 = vunpack.c.h.b16 %v776
    %v4114 = vunpack.c.l.b16 %v777
    %v4115 = vunpack.c.h.b16 %v777
    %v4116 = vunpack.c.l.b16 %v778
    %v4117 = vunpack.c.h.b16 %v778
    %v4118 = vunpack.c.l.b16 %v779
    %v4119 = vunpack.c.h.b16 %v779
    %v4120 = vunpack.c.l.b16 %v780
    %v4121 = vunpack.c.h.b16 %v780
    %v4122 = vunpack.c.l.b16 %v781
    %v4123 = vunpack.c.h.b16 %v781
    %v4124 = vunpack.c.l.b16 %v782
    %v4125 = vunpack.c.h.b16 %v782
    %v4126 = vunpack.c.l.b16 %v783
    %v4127 = vunpack.c.h.b16 %v783
    %v4128 = vunpack.c.l.b16 %v784
    %v4129 = vunpack.c.h.b16 %v784
    %v4130 = vunpack.c.l.b16 %v785
    %v4131 = vunpack.c.h.b16 %v785
    %v4132 = vunpack.c.l.b16 %v786
    %v4133 = vunpack.c.h.b16 %v786
    %v4134 = vunpack.c.l.b16 %v787
    %v4135 = vunpack.c.h.b16 %v787
    %v4136 = vunpack.c.l.b16 %v788
    %v4137 = vunpack.c.h.b16 %v788
    %v4138 = vunpack.c.l.b16 %v789
    %v4139 = vunpack.c.h.b16 %v789
    %v4140 = vunpack.c.l.b16 %v790
    %v4141 = vunpack.c.h.b16 %v790
    %v4142 = vunpack.c.l.b16 %v791
    %v4143 = vunpack.c.h.b16 %v791
    %v4144 = vunpack.c.l.b16 %v792
    %v4145 = vunpack.c.h.b16 %v792
    %v4146 = vunpack.c.l.b16 %v793
    %v4147 = vunpack.c.h.b16 %v793
    %v4148 = vunpack.c.l.b16 %v794
    %v4149 = vunpack.c.h.b16 %v794
    %v4150 = vunpack.c.l.b16 %v795
    %v4151 = vunpack.c.h.b16 %v795
    %v4152 = vunpack.c.l.b16 %v796
    %v4153 = vunpack.c.h.b16 %v796
    %v4154 = vunpack.c.l.b16 %v797
    %v4155 = vunpack.c.h.b16 %v797
    %v4156 = vunpack.c.l.b16 %v798
    %v4157 = vunpack.c.h.b16 %v798
    %v4158 = vunpack.c.l.b16 %v799
    %v4159 = vunpack.c.h.b16 %v799
    %v4160 = vunpack.c.l.b16 %v800
    %v4161 = vunpack.c.h.b16 %v800
    %v4162 = vunpack.c.l.b16 %v801
    %v4163 = vunpack.c.h.b16 %v801
    %v4164 = vunpack.c.l.b16 %v802
    %v4165 = vunpack.c.h.b16 %v802
    %v4166 = vunpack.c.l.b16 %v803
    %v4167 = vunpack.c.h.b16 %v803
    %v4168 = vunpack.c.l.b16 %v804
    %v4169 = vunpack.c.h.b16 %v804
    %v4170 = vunpack.c.l.b16 %v805
    %v4171 = vunpack.c.h.b16 %v805
    %v4172 = vunpack.c.l.b16 %v806
    %v4173 = vunpack.c.h.b16 %v806
    %v4174 = vunpack.c.l.b16 %v807
    %v4175 = vunpack.c.h.b16 %v807
    %v4176 = vunpack.c.l.b16 %v808
    %v4177 = vunpack.c.h.b16 %v808
    %v4178 = vunpack.c.l.b16 %v809
    %v4179 = vunpack.c.h.b16 %v809
    %v4180 = vunpack.c.l.b16 %v810
    %v4181 = vunpack.c.h.b16 %v810
    %v4182 = vunpack.c.l.b16 %v811
    %v4183 = vunpack.c.h.b16 %v811
    %v4184 = vunpack.c.l.b16 %v812
    %v4185 = vunpack.c.h.b16 %v812
    %v4186 = vunpack.c.l.b16 %v813
    %v4187 = vunpack.c.h.b16 %v813
    %v4188 = vunpack.c.l.b16 %v814
    %v4189 = vunpack.c.h.b16 %v814
    %v4190 = vunpack.c.l.b16 %v815
    %v4191 = vunpack.c.h.b16 %v815
    %v4192 = vunpack.c.l.b16 %v816
    %v4193 = vunpack.c.h.b16 %v816
    %v4194 = vunpack.c.l.b16 %v817
    %v4195 = vunpack.c.h.b16 %v817
    %v4196 = vunpack.c.l.b16 %v818
    %v4197 = vunpack.c.h.b16 %v818
    %v4198 = vunpack.c.l.b16 %v819
    %v4199 = vunpack.c.h.b16 %v819
    %v4200 = vunpack.c.l.b16 %v820
    %v4201 = vunpack.c.h.b16 %v820
    %v4202 = vunpack.c.l.b16 %v821
    %v4203 = vunpack.c.h.b16 %v821
    %v4204 = vunpack.c.l.b16 %v822
    %v4205 = vunpack.c.h.b16 %v822
    %v4206 = vunpack.c.l.b16 %v823
    %v4207 = vunpack.c.h.b16 %v823
    %v4208 = vunpack.c.l.b16 %v824
    %v4209 = vunpack.c.h.b16 %v824
    %v4210 = vunpack.c.l.b16 %v825
    %v4211 = vunpack.c.h.b16 %v825
    %v4212 = vunpack.c.l.b16 %v826
    %v4213 = vunpack.c.h.b16 %v826
    %v4214 = vunpack.c.l.b16 %v827
    %v4215 = vunpack.c.h.b16 %v827
    %v4216 = vunpack.c.l.b16 %v828
    %v4217 = vunpack.c.h.b16 %v828
    %v4218 = vunpack.c.l.b16 %v829
    %v4219 = vunpack.c.h.b16 %v829
    %v4220 = vunpack.c.l.b16 %v830
    %v4221 = vunpack.c.h.b16 %v830
    %v4222 = vunpack.c.l.b16 %v831
    %v4223 = vunpack.c.h.b16 %v831
    %v4224 = vunpack.c.l.b16 %v832
    %v4225 = vunpack.c.h.b16 %v832
    %v4226 = vunpack.c.l.b16 %v833
    %v4227 = vunpack.c.h.b16 %v833
    %v4228 = vunpack.c.l.b16 %v834
    %v4229 = vunpack.c.h.b16 %v834
    %v4230 = vunpack.c.l.b16 %v835
    %v4231 = vunpack.c.h.b16 %v835
    %v4232 = vunpack.c.l.b16 %v836
    %v4233 = vunpack.c.h.b16 %v836
    %v4234 = vunpack.c.l.b16 %v837
    %v4235 = vunpack.c.h.b16 %v837
    %v4236 = vunpack.c.l.b16 %v838
    %v4237 = vunpack.c.h.b16 %v838
    %v4238 = vunpack.c.l.b16 %v839
    %v4239 = vunpack.c.h.b16 %v839
    %v4240 = vunpack.c.l.b16 %v840
    %v4241 = vunpack.c.h.b16 %v840
    %v4242 = vunpack.c.l.b16 %v841
    %v4243 = vunpack.c.h.b16 %v841
    %v4244 = vunpack.c.l.b16 %v842
    %v4245 = vunpack.c.h.b16 %v842
    %v4246 = vunpack.c.l.b16 %v843
    %v4247 = vunpack.c.h.b16 %v843
    %v4248 = vunpack.c.l.b16 %v844
    %v4249 = vunpack.c.h.b16 %v844
    %v4250 = vunpack.c.l.b16 %v845
    %v4251 = vunpack.c.h.b16 %v845
    %v4252 = vunpack.c.l.b16 %v846
    %v4253 = vunpack.c.h.b16 %v846
    %v4254 = vunpack.c.l.b16 %v847
    %v4255 = vunpack.c.h.b16 %v847
    %v4256 = vunpack.c.l.b16 %v848
    %v4257 = vunpack.c.h.b16 %v848
    %v4258 = vunpack.c.l.b16 %v849
    %v4259 = vunpack.c.h.b16 %v849
    %v4260 = vunpack.c.l.b16 %v850
    %v4261 = vunpack.c.h.b16 %v850
    %v4262 = vunpack.c.l.b16 %v851
    %v4263 = vunpack.c.h.b16 %v851
    %v4264 = vunpack.c.l.b16 %v852
    %v4265 = vunpack.c.h.b16 %v852
    %v4266 = vunpack.c.l.b16 %v853
    %v4267 = vunpack.c.h.b16 %v853
    %v4268 = vunpack.c.l.b16 %v854
    %v4269 = vunpack.c.h.b16 %v854
    %v4270 = vunpack.c.l.b16 %v855
    %v4271 = vunpack.c.h.b16 %v855
    %v4272 = vunpack.c.l.b16 %v856
    %v4273 = vunpack.c.h.b16 %v856
    %v4274 = vunpack.c.l.b16 %v857
    %v4275 = vunpack.c.h.b16 %v857
    %v4276 = vunpack.c.l.b16 %v858
    %v4277 = vunpack.c.h.b16 %v858
    %v4278 = vunpack.c.l.b16 %v859
    %v4279 = vunpack.c.h.b16 %v859
    %v4280 = vunpack.c.l.b16 %v860
    %v4281 = vunpack.c.h.b16 %v860
    %v4282 = vunpack.c.l.b16 %v861
    %v4283 = vunpack.c.h.b16 %v861
    %v4284 = vunpack.c.l.b16 %v862
    %v4285 = vunpack.c.h.b16 %v862
    %v4286 = vunpack.c.l.b16 %v863
    %v4287 = vunpack.c.h.b16 %v863
    %v4288 = vunpack.c.l.b16 %v864
    %v4289 = vunpack.c.h.b16 %v864
    %v4290 = vunpack.c.l.b16 %v865
    %v4291 = vunpack.c.h.b16 %v865
    %v4292 = vunpack.c.l.b16 %v866
    %v4293 = vunpack.c.h.b16 %v866
    %v4294 = vunpack.c.l.b16 %v867
    %v4295 = vunpack.c.h.b16 %v867
    %v4296 = vunpack.c.l.b16 %v868
    %v4297 = vunpack.c.h.b16 %v868
    %v4298 = vunpack.c.l.b16 %v869
    %v4299 = vunpack.c.h.b16 %v869
    %v4300 = vunpack.c.l.b16 %v870
    %v4301 = vunpack.c.h.b16 %v870
    %v4302 = vunpack.c.l.b16 %v871
    %v4303 = vunpack.c.h.b16 %v871
    %v4304 = vunpack.c.l.b16 %v872
    %v4305 = vunpack.c.h.b16 %v872
    %v4306 = vunpack.c.l.b16 %v873
    %v4307 = vunpack.c.h.b16 %v873
    %v4308 = vunpack.c.l.b16 %v874
    %v4309 = vunpack.c.h.b16 %v874
    %v4310 = vunpack.c.l.b16 %v875
    %v4311 = vunpack.c.h.b16 %v875
    %v4312 = vunpack.c.l.b16 %v876
    %v4313 = vunpack.c.h.b16 %v876
    %v4314 = vunpack.c.l.b16 %v877
    %v4315 = vunpack.c.h.b16 %v877
    %v4316 = vunpack.c.l.b16 %v878
    %v4317 = vunpack.c.h.b16 %v878
    %v4318 = vunpack.c.l.b16 %v879
    %v4319 = vunpack.c.h.b16 %v879
    %v4320 = vunpack.c.l.b16 %v880
    %v4321 = vunpack.c.h.b16 %v880
    %v4322 = vunpack.c.l.b16 %v881
    %v4323 = vunpack.c.h.b16 %v881
    %v4324 = vunpack.c.l.b16 %v882
    %v4325 = vunpack.c.h.b16 %v882
    %v4326 = vunpack.c.l.b16 %v883
    %v4327 = vunpack.c.h.b16 %v883
    %v4328 = vunpack.c.l.b16 %v884
    %v4329 = vunpack.c.h.b16 %v884
    %v4330 = vunpack.c.l.b16 %v885
    %v4331 = vunpack.c.h.b16 %v885
    %v4332 = vunpack.c.l.b16 %v886
    %v4333 = vunpack.c.h.b16 %v886
    %v4334 = vunpack.c.l.b16 %v887
    %v4335 = vunpack.c.h.b16 %v887
    %v4336 = vunpack.c.l.b16 %v888
    %v4337 = vunpack.c.h.b16 %v888
    %v4338 = vunpack.c.l.b16 %v889
    %v4339 = vunpack.c.h.b16 %v889
    %v4340 = vunpack.c.l.b16 %v890
    %v4341 = vunpack.c.h.b16 %v890
    %v4342 = vunpack.c.l.b16 %v891
    %v4343 = vunpack.c.h.b16 %v891
    %v4344 = vunpack.c.l.b16 %v892
    %v4345 = vunpack.c.h.b16 %v892
    %v4346 = vunpack.c.l.b16 %v893
    %v4347 = vunpack.c.h.b16 %v893
    %v4348 = vunpack.c.l.b16 %v894
    %v4349 = vunpack.c.h.b16 %v894
    %v4350 = vunpack.c.l.b16 %v895
    %v4351 = vunpack.c.h.b16 %v895
    %v4352 = vunpack.c.l.b16 %v896
    %v4353 = vunpack.c.h.b16 %v896
    %v4354 = vunpack.c.l.b16 %v897
    %v4355 = vunpack.c.h.b16 %v897
    %v4356 = vunpack.c.l.b16 %v898
    %v4357 = vunpack.c.h.b16 %v898
    %v4358 = vunpack.c.l.b16 %v899
    %v4359 = vunpack.c.h.b16 %v899
    %v4360 = vunpack.c.l.b16 %v900
    %v4361 = vunpack.c.h.b16 %v900
    %v4362 = vunpack.c.l.b16 %v901
    %v4363 = vunpack.c.h.b16 %v901
    %v4364 = vunpack.c.l.b16 %v902
    %v4365 = vunpack.c.h.b16 %v902
    %v4366 = vunpack.c.l.b16 %v903
    %v4367 = vunpack.c.h.b16 %v903
    %v4368 = vunpack.c.l.b16 %v904
    %v4369 = vunpack.c.h.b16 %v904
    %v4370 = vunpack.c.l.b16 %v905
    %v4371 = vunpack.c.h.b16 %v905
    %v4372 = vunpack.c.l.b16 %v906
    %v4373 = vunpack.c.h.b16 %v906
    %v4374 = vunpack.c.l.b16 %v907
    %v4375 = vunpack.c.h.b16 %v907
    %v4376 = vunpack.c.l.b16 %v908
    %v4377 = vunpack.c.h.b16 %v908
    %v4378 = vunpack.c.l.b16 %v909
    %v4379 = vunpack.c.h.b16 %v909
    %v4380 = vunpack.c.l.b16 %v910
    %v4381 = vunpack.c.h.b16 %v910
    %v4382 = vunpack.c.l.b16 %v911
    %v4383 = vunpack.c.h.b16 %v911
    %v4384 = vunpack.c.l.b16 %v912
    %v4385 = vunpack.c.h.b16 %v912
    %v4386 = vunpack.c.l.b16 %v913
    %v4387 = vunpack.c.h.b16 %v913
    %v4388 = vunpack.c.l.b16 %v914
    %v4389 = vunpack.c.h.b16 %v914
    %v4390 = vunpack.c.l.b16 %v915
    %v4391 = vunpack.c.h.b16 %v915
    %v4392 = vunpack.c.l.b16 %v916
    %v4393 = vunpack.c.h.b16 %v916
    %v4394 = vunpack.c.l.b16 %v917
    %v4395 = vunpack.c.h.b16 %v917
    %v4396 = vunpack.c.l.b16 %v918
    %v4397 = vunpack.c.h.b16 %v918
    %v4398 = vunpack.c.l.b16 %v919
    %v4399 = vunpack.c.h.b16 %v919
    %v4400 = vunpack.c.l.b16 %v920
    %v4401 = vunpack.c.h.b16 %v920
    %v4402 = vunpack.c.l.b16 %v921
    %v4403 = vunpack.c.h.b16 %v921
    %v4404 = vunpack.c.l.b16 %v922
    %v4405 = vunpack.c.h.b16 %v922
    %v4406 = vunpack.c.l.b16 %v923
    %v4407 = vunpack.c.h.b16 %v923
    %v4408 = vunpack.c.l.b16 %v924
    %v4409 = vunpack.c.h.b16 %v924
    %v4410 = vunpack.c.l.b16 %v925
    %v4411 = vunpack.c.h.b16 %v925
    %v4412 = vunpack.c.l.b16 %v926
    %v4413 = vunpack.c.h.b16 %v926
    %v4414 = vunpack.c.l.b16 %v927
    %v4415 = vunpack.c.h.b16 %v927
    %v4416 = vunpack.c.l.b16 %v928
    %v4417 = vunpack.c.h.b16 %v928
    %v4418 = vunpack.c.l.b16 %v929
    %v4419 = vunpack.c.h.b16 %v929
    %v4420 = vunpack.c.l.b16 %v930
    %v4421 = vunpack.c.h.b16 %v930
    %v4422 = vunpack.c.l.b16 %v931
    %v4423 = vunpack.c.h.b16 %v931
    %v4424 = vunpack.c.l.b16 %v932
    %v4425 = vunpack.c.h.b16 %v932
    %v4426 = vunpack.c.l.b16 %v933
    %v4427 = vunpack.c.h.b16 %v933
    %v4428 = vunpack.c.l.b16 %v934
    %v4429 = vunpack.c.h.b16 %v934
    %v4430 = vunpack.c.l.b16 %v935
    %v4431 = vunpack.c.h.b16 %v935
    %v4432 = vunpack.c.l.b16 %v936
    %v4433 = vunpack.c.h.b16 %v936
    %v4434 = vunpack.c.l.b16 %v937
    %v4435 = vunpack.c.h.b16 %v937
    %v4436 = vunpack.c.l.b16 %v938
    %v4437 = vunpack.c.h.b16 %v938
    %v4438 = vunpack.c.l.b16 %v939
    %v4439 = vunpack.c.h.b16 %v939
    %v4440 = vunpack.c.l.b16 %v940
    %v4441 = vunpack.c.h.b16 %v940
    %v4442 = vunpack.c.l.b16 %v941
    %v4443 = vunpack.c.h.b16 %v941
    %v4444 = vunpack.c.l.b16 %v942
    %v4445 = vunpack.c.h.b16 %v942
    %v4446 = vunpack.c.l.b16 %v943
    %v4447 = vunpack.c.h.b16 %v943
    %v4448 = vunpack.c.l.b16 %v944
    %v4449 = vunpack.c.h.b16 %v944
    %v4450 = vunpack.c.l.b16 %v945
    %v4451 = vunpack.c.h.b16 %v945
    %v4452 = vunpack.c.l.b16 %v946
    %v4453 = vunpack.c.h.b16 %v946
    %v4454 = vunpack.c.l.b16 %v947
    %v4455 = vunpack.c.h.b16 %v947
    %v4456 = vunpack.c.l.b16 %v948
    %v4457 = vunpack.c.h.b16 %v948
    %v4458 = vunpack.c.l.b16 %v949
    %v4459 = vunpack.c.h.b16 %v949
    %v4460 = vunpack.c.l.b16 %v950
    %v4461 = vunpack.c.h.b16 %v950
    %v4462 = vunpack.c.l.b16 %v951
    %v4463 = vunpack.c.h.b16 %v951
    %v4464 = vunpack.c.l.b16 %v952
    %v4465 = vunpack.c.h.b16 %v952
    %v4466 = vunpack.c.l.b16 %v953
    %v4467 = vunpack.c.h.b16 %v953
    %v4468 = vunpack.c.l.b16 %v954
    %v4469 = vunpack.c.h.b16 %v954
    %v4470 = vunpack.c.l.b16 %v955
    %v4471 = vunpack.c.h.b16 %v955
    %v4472 = vunpack.c.l.b16 %v956
    %v4473 = vunpack.c.h.b16 %v956
    %v4474 = vunpack.c.l.b16 %v957
    %v4475 = vunpack.c.h.b16 %v957
    %v4476 = vunpack.c.l.b16 %v958
    %v4477 = vunpack.c.h.b16 %v958
    %v4478 = vunpack.c.l.b16 %v959
    %v4479 = vunpack.c.h.b16 %v959
    %v4480 = vunpack.c.l.b16 %v960
    %v4481 = vunpack.c.h.b16 %v960
    %v4482 = vunpack.c.l.b16 %v961
    %v4483 = vunpack.c.h.b16 %v961
    %v4484 = vunpack.c.l.b16 %v962
    %v4485 = vunpack.c.h.b16 %v962
    %v4486 = vunpack.c.l.b16 %v963
    %v4487 = vunpack.c.h.b16 %v963
    %v4488 = vunpack.c.l.b16 %v964
    %v4489 = vunpack.c.h.b16 %v964
    %v4490 = vunpack.c.l.b16 %v965
    %v4491 = vunpack.c.h.b16 %v965
    %v4492 = vunpack.c.l.b16 %v966
    %v4493 = vunpack.c.h.b16 %v966
    %v4494 = vunpack.c.l.b16 %v967
    %v4495 = vunpack.c.h.b16 %v967
    %v4496 = vunpack.c.l.b16 %v968
    %v4497 = vunpack.c.h.b16 %v968
    %v4498 = vunpack.c.l.b16 %v969
    %v4499 = vunpack.c.h.b16 %v969
    %v4500 = vunpack.c.l.b16 %v970
    %v4501 = vunpack.c.h.b16 %v970
    %v4502 = vunpack.c.l.b16 %v971
    %v4503 = vunpack.c.h.b16 %v971
    %v4504 = vunpack.c.l.b16 %v972
    %v4505 = vunpack.c.h.b16 %v972
    %v4506 = vunpack.c.l.b16 %v973
    %v4507 = vunpack.c.h.b16 %v973
    %v4508 = vunpack.c.l.b16 %v974
    %v4509 = vunpack.c.h.b16 %v974
    %v4510 = vunpack.c.l.b16 %v975
    %v4511 = vunpack.c.h.b16 %v975
    %v4512 = vunpack.c.l.b16 %v976
    %v4513 = vunpack.c.h.b16 %v976
    %v4514 = vunpack.c.l.b16 %v977
    %v4515 = vunpack.c.h.b16 %v977
    %v4516 = vunpack.c.l.b16 %v978
    %v4517 = vunpack.c.h.b16 %v978
    %v4518 = vunpack.c.l.b16 %v979
    %v4519 = vunpack.c.h.b16 %v979
    %v4520 = vunpack.c.l.b16 %v980
    %v4521 = vunpack.c.h.b16 %v980
    %v4522 = vunpack.c.l.b16 %v981
    %v4523 = vunpack.c.h.b16 %v981
    %v4524 = vunpack.c.l.b16 %v982
    %v4525 = vunpack.c.h.b16 %v982
    %v4526 = vunpack.c.l.b16 %v983
    %v4527 = vunpack.c.h.b16 %v983
    %v4528 = vunpack.c.l.b16 %v984
    %v4529 = vunpack.c.h.b16 %v984
    %v4530 = vunpack.c.l.b16 %v985
    %v4531 = vunpack.c.h.b16 %v985
    %v4532 = vunpack.c.l.b16 %v986
    %v4533 = vunpack.c.h.b16 %v986
    %v4534 = vunpack.c.l.b16 %v987
    %v4535 = vunpack.c.h.b16 %v987
    %v4536 = vunpack.c.l.b16 %v988
    %v4537 = vunpack.c.h.b16 %v988
    %v4538 = vunpack.c.l.b16 %v989
    %v4539 = vunpack.c.h.b16 %v989
    %v4540 = vunpack.c.l.b16 %v990
    %v4541 = vunpack.c.h.b16 %v990
    %v4542 = vunpack.c.l.b16 %v991
    %v4543 = vunpack.c.h.b16 %v991
    %v4544 = vunpack.c.l.b16 %v992
    %v4545 = vunpack.c.h.b16 %v992
    %v4546 = vunpack.c.l.b16 %v993
    %v4547 = vunpack.c.h.b16 %v993
    %v4548 = vunpack.c.l.b16 %v994
    %v4549 = vunpack.c.h.b16 %v994
    %v4550 = vunpack.c.l.b16 %v995
    %v4551 = vunpack.c.h.b16 %v995
    %v4552 = vunpack.c.l.b16 %v996
    %v4553 = vunpack.c.h.b16 %v996
    %v4554 = vunpack.c.l.b16 %v997
    %v4555 = vunpack.c.h.b16 %v997
    %v4556 = vunpack.c.l.b16 %v998
    %v4557 = vunpack.c.h.b16 %v998
    %v4558 = vunpack.c.l.b16 %v999
    %v4559 = vunpack.c.h.b16 %v999
    %v4560 = vunpack.c.l.b16 %v1000
    %v4561 = vunpack.c.h.b16 %v1000
    %v4562 = vunpack.c.l.b16 %v1001
    %v4563 = vunpack.c.h.b16 %v1001
    %v4564 = vunpack.c.l.b16 %v1002
    %v4565 = vunpack.c.h.b16 %v1002
    %v4566 = vunpack.c.l.b16 %v1003
    %v4567 = vunpack.c.h.b16 %v1003
    %v4568 = vunpack.c.l.b16 %v1004
    %v4569 = vunpack.c.h.b16 %v1004
    %v4570 = vunpack.c.l.b16 %v1005
    %v4571 = vunpack.c.h.b16 %v1005
    %v4572 = vunpack.c.l.b16 %v1006
    %v4573 = vunpack.c.h.b16 %v1006
    %v4574 = vunpack.c.l.b16 %v1007
    %v4575 = vunpack.c.h.b16 %v1007
    %v4576 = vunpack.c.l.b16 %v1008
    %v4577 = vunpack.c.h.b16 %v1008
    %v4578 = vunpack.c.l.b16 %v1009
    %v4579 = vunpack.c.h.b16 %v1009
    %v4580 = vunpack.c.l.b16 %v1010
    %v4581 = vunpack.c.h.b16 %v1010
    %v4582 = vunpack.c.l.b16 %v1011
    %v4583 = vunpack.c.h.b16 %v1011
    %v4584 = vunpack.c.l.b16 %v1012
    %v4585 = vunpack.c.h.b16 %v1012
    %v4586 = vunpack.c.l.b16 %v1013
    %v4587 = vunpack.c.h.b16 %v1013
    %v4588 = vunpack.c.l.b16 %v1014
    %v4589 = vunpack.c.h.b16 %v1014
    %v4590 = vunpack.c.l.b16 %v1015
    %v4591 = vunpack.c.h.b16 %v1015
    %v4592 = vunpack.c.l.b16 %v1016
    %v4593 = vunpack.c.h.b16 %v1016
    %v4594 = vunpack.c.l.b16 %v1017
    %v4595 = vunpack.c.h.b16 %v1017
    %v4596 = vunpack.c.l.b16 %v1018
    %v4597 = vunpack.c.h.b16 %v1018
    %v4598 = vunpack.c.l.b16 %v1019
    %v4599 = vunpack.c.h.b16 %v1019
    %v4600 = vunpack.c.l.b16 %v1020
    %v4601 = vunpack.c.h.b16 %v1020
    %v4602 = vunpack.c.l.b16 %v1021
    %v4603 = vunpack.c.h.b16 %v1021
    %v4604 = vunpack.c.l.b16 %v1022
    %v4605 = vunpack.c.h.b16 %v1022
    %v4606 = vunpack.c.l.b16 %v1023
    %v4607 = vunpack.c.h.b16 %v1023
    %v4608 = vunpack.c.l.b16 %v1024
    %v4609 = vunpack.c.h.b16 %v1024
    %v4610 = vunpack.c.l.b16 %v1025
    %v4611 = vunpack.c.h.b16 %v1025
    %v4612 = vunpack.c.l.b16 %v1026
    %v4613 = vunpack.c.h.b16 %v1026
    %v4614 = vunpack.c.l.b16 %v1027
    %v4615 = vunpack.c.h.b16 %v1027
    %v4616 = vunpack.c.l.b16 %v1028
    %v4617 = vunpack.c.h.b16 %v1028
    %v4618 = vunpack.c.l.b16 %v1029
    %v4619 = vunpack.c.h.b16 %v1029
    %v4620 = vunpack.c.l.b16 %v1030
    %v4621 = vunpack.c.h.b16 %v1030
    %v4622 = vunpack.c.l.b16 %v1031
    %v4623 = vunpack.c.h.b16 %v1031
    %v4624 = vunpack.c.l.b16 %v1032
    %v4625 = vunpack.c.h.b16 %v1032
    %v4626 = vunpack.c.l.b16 %v1033
    %v4627 = vunpack.c.h.b16 %v1033
    %v4628 = vunpack.c.l.b16 %v1034
    %v4629 = vunpack.c.h.b16 %v1034
    %v4630 = vunpack.c.l.b16 %v1035
    %v4631 = vunpack.c.h.b16 %v1035
    %v4632 = vunpack.c.l.b16 %v1036
    %v4633 = vunpack.c.h.b16 %v1036
    %v4634 = vunpack.c.l.b16 %v1037
    %v4635 = vunpack.c.h.b16 %v1037
    %v4636 = vunpack.c.l.b16 %v1038
    %v4637 = vunpack.c.h.b16 %v1038
    %v4638 = vunpack.c.l.b16 %v1039
    %v4639 = vunpack.c.h.b16 %v1039
    %v4640 = vunpack.c.l.b16 %v1040
    %v4641 = vunpack.c.h.b16 %v1040
    %v4642 = vunpack.c.l.b16 %v1041
    %v4643 = vunpack.c.h.b16 %v1041
    %v4644 = vunpack.c.l.b16 %v1042
    %v4645 = vunpack.c.h.b16 %v1042
    %v4646 = vunpack.c.l.b16 %v1043
    %v4647 = vunpack.c.h.b16 %v1043
    %v4648 = vunpack.c.l.b16 %v1044
    %v4649 = vunpack.c.h.b16 %v1044
    %v4650 = vunpack.c.l.b16 %v1045
    %v4651 = vunpack.c.h.b16 %v1045
    %v4652 = vunpack.c.l.b16 %v1046
    %v4653 = vunpack.c.h.b16 %v1046
    %v4654 = vunpack.c.l.b16 %v1047
    %v4655 = vunpack.c.h.b16 %v1047
    %v4656 = vunpack.c.l.b16 %v1048
    %v4657 = vunpack.c.h.b16 %v1048
    %v4658 = vunpack.c.l.b16 %v1049
    %v4659 = vunpack.c.h.b16 %v1049
    %v4660 = vunpack.c.l.b16 %v1050
    %v4661 = vunpack.c.h.b16 %v1050
    %v4662 = vunpack.c.l.b16 %v1051
    %v4663 = vunpack.c.h.b16 %v1051
    %v4664 = vunpack.c.l.b16 %v1052
    %v4665 = vunpack.c.h.b16 %v1052
    %v4666 = vunpack.c.l.b16 %v1053
    %v4667 = vunpack.c.h.b16 %v1053
    %v4668 = vunpack.c.l.b16 %v1054
    %v4669 = vunpack.c.h.b16 %v1054
    %v4670 = vunpack.c.l.b16 %v1055
    %v4671 = vunpack.c.h.b16 %v1055
    %v4672 = vunpack.c.l.b16 %v1056
    %v4673 = vunpack.c.h.b16 %v1056
    %v4674 = vunpack.c.l.b16 %v1057
    %v4675 = vunpack.c.h.b16 %v1057
    %v4676 = vunpack.c.l.b16 %v1058
    %v4677 = vunpack.c.h.b16 %v1058
    %v4678 = vunpack.c.l.b16 %v1059
    %v4679 = vunpack.c.h.b16 %v1059
    %v4680 = vunpack.c.l.b16 %v1060
    %v4681 = vunpack.c.h.b16 %v1060
    %v4682 = vunpack.c.l.b16 %v1061
    %v4683 = vunpack.c.h.b16 %v1061
    %v4684 = vunpack.c.l.b16 %v1062
    %v4685 = vunpack.c.h.b16 %v1062
    %v4686 = vunpack.c.l.b16 %v1063
    %v4687 = vunpack.c.h.b16 %v1063
    %v4688 = vunpack.c.l.b16 %v1064
    %v4689 = vunpack.c.h.b16 %v1064
    %v4690 = vunpack.c.l.b16 %v1065
    %v4691 = vunpack.c.h.b16 %v1065
    %v4692 = vunpack.c.l.b16 %v1066
    %v4693 = vunpack.c.h.b16 %v1066
    %v4694 = vunpack.c.l.b16 %v1067
    %v4695 = vunpack.c.h.b16 %v1067
    %v4696 = vunpack.c.l.b16 %v1068
    %v4697 = vunpack.c.h.b16 %v1068
    %v4698 = vunpack.c.l.b16 %v1069
    %v4699 = vunpack.c.h.b16 %v1069
    %v4700 = vunpack.c.l.b16 %v1070
    %v4701 = vunpack.c.h.b16 %v1070
    %v4702 = vunpack.c.l.b16 %v1071
    %v4703 = vunpack.c.h.b16 %v1071
    %v4704 = vunpack.c.l.b16 %v1072
    %v4705 = vunpack.c.h.b16 %v1072
    %v4706 = vunpack.c.l.b16 %v1073
    %v4707 = vunpack.c.h.b16 %v1073
    %v4708 = vunpack.c.l.b16 %v1074
    %v4709 = vunpack.c.h.b16 %v1074
    %v4710 = vunpack.c.l.b16 %v1075
    %v4711 = vunpack.c.h.b16 %v1075
    %v4712 = vunpack.c.l.b16 %v1076
    %v4713 = vunpack.c.h.b16 %v1076
    %v4714 = vunpack.c.l.b16 %v1077
    %v4715 = vunpack.c.h.b16 %v1077
    %v4716 = vunpack.c.l.b16 %v1078
    %v4717 = vunpack.c.h.b16 %v1078
    %v4718 = vunpack.c.l.b16 %v1079
    %v4719 = vunpack.c.h.b16 %v1079
    %v4720 = vunpack.c.l.b16 %v1080
    %v4721 = vunpack.c.h.b16 %v1080
    %v4722 = vunpack.c.l.b16 %v1081
    %v4723 = vunpack.c.h.b16 %v1081
    %v4724 = vunpack.c.l.b16 %v1082
    %v4725 = vunpack.c.h.b16 %v1082
    %v4726 = vunpack.c.l.b16 %v1083
    %v4727 = vunpack.c.h.b16 %v1083
    %v4728 = vunpack.c.l.b16 %v1084
    %v4729 = vunpack.c.h.b16 %v1084
    %v4730 = vunpack.c.l.b16 %v1085
    %v4731 = vunpack.c.h.b16 %v1085
    %v4732 = vunpack.c.l.b16 %v1086
    %v4733 = vunpack.c.h.b16 %v1086
    %v4734 = vunpack.c.l.b16 %v1087
    %v4735 = vunpack.c.h.b16 %v1087
    %v4736 = vunpack.c.l.b16 %v1088
    %v4737 = vunpack.c.h.b16 %v1088
    %v4738 = vunpack.c.l.b16 %v1089
    %v4739 = vunpack.c.h.b16 %v1089
    %v4740 = vunpack.c.l.b16 %v1090
    %v4741 = vunpack.c.h.b16 %v1090
    %v4742 = vunpack.c.l.b16 %v1091
    %v4743 = vunpack.c.h.b16 %v1091
    %v4744 = vunpack.c.l.b16 %v1092
    %v4745 = vunpack.c.h.b16 %v1092
    %v4746 = vunpack.c.l.b16 %v1093
    %v4747 = vunpack.c.h.b16 %v1093
    %v4748 = vunpack.c.l.b16 %v1094
    %v4749 = vunpack.c.h.b16 %v1094
    %v4750 = vunpack.c.l.b16 %v1095
    %v4751 = vunpack.c.h.b16 %v1095
    %v4752 = vunpack.c.l.b16 %v1096
    %v4753 = vunpack.c.h.b16 %v1096
    %v4754 = vunpack.c.l.b16 %v1097
    %v4755 = vunpack.c.h.b16 %v1097
    %v4756 = vunpack.c.l.b16 %v1098
    %v4757 = vunpack.c.h.b16 %v1098
    %v4758 = vunpack.c.l.b16 %v1099
    %v4759 = vunpack.c.h.b16 %v1099
    %v4760 = vunpack.c.l.b16 %v1100
    %v4761 = vunpack.c.h.b16 %v1100
    %v4762 = vunpack.c.l.b16 %v1101
    %v4763 = vunpack.c.h.b16 %v1101
    %v4764 = vunpack.c.l.b16 %v1102
    %v4765 = vunpack.c.h.b16 %v1102
    %v4766 = vunpack.c.l.b16 %v1103
    %v4767 = vunpack.c.h.b16 %v1103
    %v4768 = vunpack.c.l.b16 %v1104
    %v4769 = vunpack.c.h.b16 %v1104
    %v4770 = vunpack.c.l.b16 %v1105
    %v4771 = vunpack.c.h.b16 %v1105
    %v4772 = vunpack.c.l.b16 %v1106
    %v4773 = vunpack.c.h.b16 %v1106
    %v4774 = vunpack.c.l.b16 %v1107
    %v4775 = vunpack.c.h.b16 %v1107
    %v4776 = vunpack.c.l.b16 %v1108
    %v4777 = vunpack.c.h.b16 %v1108
    %v4778 = vunpack.c.l.b16 %v1109
    %v4779 = vunpack.c.h.b16 %v1109
    %v4780 = vunpack.c.l.b16 %v1110
    %v4781 = vunpack.c.h.b16 %v1110
    %v4782 = vunpack.c.l.b16 %v1111
    %v4783 = vunpack.c.h.b16 %v1111
    %v4784 = vunpack.c.l.b16 %v1112
    %v4785 = vunpack.c.h.b16 %v1112
    %v4786 = vunpack.c.l.b16 %v1113
    %v4787 = vunpack.c.h.b16 %v1113
    %v4788 = vunpack.c.l.b16 %v1114
    %v4789 = vunpack.c.h.b16 %v1114
    %v4790 = vunpack.c.l.b16 %v1115
    %v4791 = vunpack.c.h.b16 %v1115
    %v4792 = vunpack.c.l.b16 %v1116
    %v4793 = vunpack.c.h.b16 %v1116
    %v4794 = vunpack.c.l.b16 %v1117
    %v4795 = vunpack.c.h.b16 %v1117
    %v4796 = vunpack.c.l.b16 %v1118
    %v4797 = vunpack.c.h.b16 %v1118
    %v4798 = vunpack.c.l.b16 %v1119
    %v4799 = vunpack.c.h.b16 %v1119
    %v4800 = vunpack.c.l.b16 %v1120
    %v4801 = vunpack.c.h.b16 %v1120
    %v4802 = vunpack.c.l.b16 %v1121
    %v4803 = vunpack.c.h.b16 %v1121
    %v4804 = vunpack.c.l.b16 %v1122
    %v4805 = vunpack.c.h.b16 %v1122
    %v4806 = vunpack.c.l.b16 %v1123
    %v4807 = vunpack.c.h.b16 %v1123
    %v4808 = vunpack.c.l.b16 %v1124
    %v4809 = vunpack.c.h.b16 %v1124
    %v4810 = vunpack.c.l.b16 %v1125
    %v4811 = vunpack.c.h.b16 %v1125
    %v4812 = vunpack.c.l.b16 %v1126
    %v4813 = vunpack.c.h.b16 %v1126
    %v4814 = vunpack.c.l.b16 %v1127
    %v4815 = vunpack.c.h.b16 %v1127
    %v4816 = vunpack.c.l.b16 %v1128
    %v4817 = vunpack.c.h.b16 %v1128
    %v4818 = vunpack.c.l.b16 %v1129
    %v4819 = vunpack.c.h.b16 %v1129
    %v4820 = vunpack.c.l.b16 %v1130
    %v4821 = vunpack.c.h.b16 %v1130
    %v4822 = vunpack.c.l.b16 %v1131
    %v4823 = vunpack.c.h.b16 %v1131
    %v4824 = vunpack.c.l.b16 %v1132
    %v4825 = vunpack.c.h.b16 %v1132
    %v4826 = vunpack.c.l.b16 %v1133
    %v4827 = vunpack.c.h.b16 %v1133
    %v4828 = vunpack.c.l.b16 %v1134
    %v4829 = vunpack.c.h.b16 %v1134
    %v4830 = vunpack.c.l.b16 %v1135
    %v4831 = vunpack.c.h.b16 %v1135
    %v4832 = vunpack.c.l.b16 %v1136
    %v4833 = vunpack.c.h.b16 %v1136
    %v4834 = vunpack.c.l.b16 %v1137
    %v4835 = vunpack.c.h.b16 %v1137
    %v4836 = vunpack.c.l.b16 %v1138
    %v4837 = vunpack.c.h.b16 %v1138
    %v4838 = vunpack.c.l.b16 %v1139
    %v4839 = vunpack.c.h.b16 %v1139
    %v4840 = vunpack.c.l.b16 %v1140
    %v4841 = vunpack.c.h.b16 %v1140
    %v4842 = vunpack.c.l.b16 %v1141
    %v4843 = vunpack.c.h.b16 %v1141
    %v4844 = vunpack.c.l.b16 %v1142
    %v4845 = vunpack.c.h.b16 %v1142
    %v4846 = vunpack.c.l.b16 %v1143
    %v4847 = vunpack.c.h.b16 %v1143
    %v4848 = vunpack.c.l.b16 %v1144
    %v4849 = vunpack.c.h.b16 %v1144
    %v4850 = vunpack.c.l.b16 %v1145
    %v4851 = vunpack.c.h.b16 %v1145
    %v4852 = vunpack.c.l.b16 %v1146
    %v4853 = vunpack.c.h.b16 %v1146
    %v4854 = vunpack.c.l.b16 %v1147
    %v4855 = vunpack.c.h.b16 %v1147
    %v4856 = vunpack.c.l.b16 %v1148
    %v4857 = vunpack.c.h.b16 %v1148
    %v4858 = vunpack.c.l.b16 %v1149
    %v4859 = vunpack.c.h.b16 %v1149
    %v4860 = vunpack.c.l.b16 %v1150
    %v4861 = vunpack.c.h.b16 %v1150
    %v4862 = vunpack.c.l.b16 %v1151
    %v4863 = vunpack.c.h.b16 %v1151
    %v4864 = vunpack.c.l.b16 %v1152
    %v4865 = vunpack.c.h.b16 %v1152
    %v4866 = vunpack.c.l.b16 %v1153
    %v4867 = vunpack.c.h.b16 %v1153
    %v4868 = vunpack.c.l.b16 %v1154
    %v4869 = vunpack.c.h.b16 %v1154
    %v4870 = vunpack.c.l.b16 %v1155
    %v4871 = vunpack.c.h.b16 %v1155
    %v4872 = vunpack.c.l.b16 %v1156
    %v4873 = vunpack.c.h.b16 %v1156
    %v4874 = vunpack.c.l.b16 %v1157
    %v4875 = vunpack.c.h.b16 %v1157
    %v4876 = vunpack.c.l.b16 %v1158
    %v4877 = vunpack.c.h.b16 %v1158
    %v4878 = vunpack.c.l.b16 %v1159
    %v4879 = vunpack.c.h.b16 %v1159
    %v4880 = vunpack.c.l.b16 %v1160
    %v4881 = vunpack.c.h.b16 %v1160
    %v4882 = vunpack.c.l.b16 %v1161
    %v4883 = vunpack.c.h.b16 %v1161
    %v4884 = vunpack.c.l.b16 %v1162
    %v4885 = vunpack.c.h.b16 %v1162
    %v4886 = vunpack.c.l.b16 %v1163
    %v4887 = vunpack.c.h.b16 %v1163
    %v4888 = vunpack.c.l.b16 %v1164
    %v4889 = vunpack.c.h.b16 %v1164
    %v4890 = vunpack.c.l.b16 %v1165
    %v4891 = vunpack.c.h.b16 %v1165
    %v4892 = vunpack.c.l.b16 %v1166
    %v4893 = vunpack.c.h.b16 %v1166
    %v4894 = vunpack.c.l.b16 %v1167
    %v4895 = vunpack.c.h.b16 %v1167
    %v4896 = vunpack.c.l.b16 %v1168
    %v4897 = vunpack.c.h.b16 %v1168
    %v4898 = vunpack.c.l.b16 %v1169
    %v4899 = vunpack.c.h.b16 %v1169
    %v4900 = vunpack.c.l.b16 %v1170
    %v4901 = vunpack.c.h.b16 %v1170
    %v4902 = vunpack.c.l.b16 %v1171
    %v4903 = vunpack.c.h.b16 %v1171
    %v4904 = vunpack.c.l.b16 %v1172
    %v4905 = vunpack.c.h.b16 %v1172
    %v4906 = vunpack.c.l.b16 %v1173
    %v4907 = vunpack.c.h.b16 %v1173
    %v4908 = vunpack.c.l.b16 %v1174
    %v4909 = vunpack.c.h.b16 %v1174
    %v4910 = vunpack.c.l.b16 %v1175
    %v4911 = vunpack.c.h.b16 %v1175
    %v4912 = vunpack.c.l.b16 %v1176
    %v4913 = vunpack.c.h.b16 %v1176
    %v4914 = vunpack.c.l.b16 %v1177
    %v4915 = vunpack.c.h.b16 %v1177
    %v4916 = vunpack.c.l.b16 %v1178
    %v4917 = vunpack.c.h.b16 %v1178
    %v4918 = vpack.c.b16 %v2618, %v2614
    %v4919 = vpack.c.b16 %v2619, %v2615
    %v4920 = vpack.c.b16 %v2620, %v2616
    %v4921 = vpack.c.b16 %v2621, %v2617
    %v4922 = vpack.c.b16 %v2626, %v2622
    %v4923 = vpack.c.b16 %v2627, %v2623
    %v4924 = vpack.c.b16 %v2628, %v2624
    %v4925 = vpack.c.b16 %v2629, %v2625
    %v4926 = vpack.c.b16 %v2634, %v2630
    %v4927 = vpack.c.b16 %v2635, %v2631
    %v4928 = vpack.c.b16 %v2636, %v2632
    %v4929 = vpack.c.b16 %v2637, %v2633
    %v4930 = vpack.c.b16 %v2642, %v2638
    %v4931 = vpack.c.b16 %v2643, %v2639
    %v4932 = vpack.c.b16 %v2644, %v2640
    %v4933 = vpack.c.b16 %v2645, %v2641
    %v4934 = vpack.c.b16 %v2650, %v2646
    %v4935 = vpack.c.b16 %v2651, %v2647
    %v4936 = vpack.c.b16 %v2652, %v2648
    %v4937 = vpack.c.b16 %v2653, %v2649
    %v4938 = vpack.c.b16 %v2658, %v2654
    %v4939 = vpack.c.b16 %v2659, %v2655
    %v4940 = vpack.c.b16 %v2660, %v2656
    %v4941 = vpack.c.b16 %v2661, %v2657
    %v4942 = vpack.c.b16 %v2666, %v2662
    %v4943 = vpack.c.b16 %v2667, %v2663
    %v4944 = vpack.c.b16 %v2668, %v2664
    %v4945 = vpack.c.b16 %v2669, %v2665
    %v4946 = vpack.c.b16 %v2674, %v2670
    %v4947 = vpack.c.b16 %v2675, %v2671
    %v4948 = vpack.c.b16 %v2676, %v2672
    %v4949 = vpack.c.b16 %v2677, %v2673
    %v4950 = vpack.c.b16 %v2682, %v2678
    %v4951 = vpack.c.b16 %v2683, %v2679
    %v4952 = vpack.c.b16 %v2684, %v2680
    %v4953 = vpack.c.b16 %v2685, %v2681
    %v4954 = vpack.c.b16 %v2690, %v2686
    %v4955 = vpack.c.b16 %v2691, %v2687
    %v4956 = vpack.c.b16 %v2692, %v2688
    %v4957 = vpack.c.b16 %v2693, %v2689
    %v4958 = vpack.c.b16 %v2698, %v2694
    %v4959 = vpack.c.b16 %v2699, %v2695
    %v4960 = vpack.c.b16 %v2700, %v2696
    %v4961 = vpack.c.b16 %v2701, %v2697
    %v4962 = vpack.c.b16 %v2706, %v2702
    %v4963 = vpack.c.b16 %v2707, %v2703
    %v4964 = vpack.c.b16 %v2708, %v2704
    %v4965 = vpack.c.b16 %v2709, %v2705
    %v4966 = vpack.c.b16 %v2714, %v2710
    %v4967 = vpack.c.b16 %v2715, %v2711
    %v4968 = vpack.c.b16 %v2716, %v2712
    %v4969 = vpack.c.b16 %v2717, %v2713
    %v4970 = vpack.c.b16 %v2722, %v2718
    %v4971 = vpack.c.b16 %v2723, %v2719
    %v4972 = vpack.c.b16 %v2724, %v2720
    %v4973 = vpack.c.b16 %v2725, %v2721
    %v4974 = vpack.c.b16 %v2730, %v2726
    %v4975 = vpack.c.b16 %v2731, %v2727
    %v4976 = vpack.c.b16 %v2732, %v2728
    %v4977 = vpack.c.b16 %v2733, %v2729
    %v4978 = vpack.c.b16 %v2738, %v2734
    %v4979 = vpack.c.b16 %v2739, %v2735
    %v4980 = vpack.c.b16 %v2740, %v2736
    %v4981 = vpack.c.b16 %v2741, %v2737
    %v4982 = vpack.c.b16 %v2746, %v2742
    %v4983 = vpack.c.b16 %v2747, %v2743
    %v4984 = vpack.c.b16 %v2748, %v2744
    %v4985 = vpack.c.b16 %v2749, %v2745
    %v4986 = vpack.c.b16 %v2754, %v2750
    %v4987 = vpack.c.b16 %v2755, %v2751
    %v4988 = vpack.c.b16 %v2756, %v2752
    %v4989 = vpack.c.b16 %v2757, %v2753
    %v4990 = vpack.c.b16 %v2762, %v2758
    %v4991 = vpack.c.b16 %v2763, %v2759
    %v4992 = vpack.c.b16 %v2764, %v2760
    %v4993 = vpack.c.b16 %v2765, %v2761
    %v4994 = vpack.c.b16 %v2770, %v2766
    %v4995 = vpack.c.b16 %v2771, %v2767
    %v4996 = vpack.c.b16 %v2772, %v2768
    %v4997 = vpack.c.b16 %v2773, %v2769
    %v4998 = vpack.c.b16 %v2778, %v2774
    %v4999 = vpack.c.b16 %v2779, %v2775
    %v5000 = vpack.c.b16 %v2780, %v2776
    %v5001 = vpack.c.b16 %v2781, %v2777
    %v5002 = vpack.c.b16 %v2786, %v2782
    %v5003 = vpack.c.b16 %v2787, %v2783
    %v5004 = vpack.c.b16 %v2788, %v2784
    %v5005 = vpack.c.b16 %v2789, %v2785
    %v5006 = vpack.c.b16 %v2794, %v2790
    %v5007 = vpack.c.b16 %v2795, %v2791
    %v5008 = vpack.c.b16 %v2796, %v2792
    %v5009 = vpack.c.b16 %v2797, %v2793
    %v5010 = vpack.c.b16 %v2802, %v2798
    %v5011 = vpack.c.b16 %v2803, %v2799
    %v5012 = vpack.c.b16 %v2804, %v2800
    %v5013 = vpack.c.b16 %v2805, %v2801
    %v5014 = vpack.c.b16 %v2810, %v2806
    %v5015 = vpack.c.b16 %v2811, %v2807
    %v5016 = vpack.c.b16 %v2812, %v2808
    %v5017 = vpack.c.b16 %v2813, %v2809
    %v5018 = vpack.c.b16 %v2818, %v2814
    %v5019 = vpack.c.b16 %v2819, %v2815
    %v5020 = vpack.c.b16 %v2820, %v2816
    %v5021 = vpack.c.b16 %v2821, %v2817
    %v5022 = vpack.c.b16 %v2826, %v2822
    %v5023 = vpack.c.b16 %v2827, %v2823
    %v5024 = vpack.c.b16 %v2828, %v2824
    %v5025 = vpack.c.b16 %v2829, %v2825
    %v5026 = vpack.c.b16 %v2834, %v2830
    %v5027 = vpack.c.b16 %v2835, %v2831
    %v5028 = vpack.c.b16 %v2836, %v2832
    %v5029 = vpack.c.b16 %v2837, %v2833
    %v5030 = vpack.c.b16 %v2842, %v2838
    %v5031 = vpack.c.b16 %v2843, %v2839
    %v5032 = vpack.c.b16 %v2844, %v2840
    %v5033 = vpack.c.b16 %v2845, %v2841
    %v5034 = vpack.c.b16 %v2850, %v2846
    %v5035 = vpack.c.b16 %v2851, %v2847
    %v5036 = vpack.c.b16 %v2852, %v2848
    %v5037 = vpack.c.b16 %v2853, %v2849
    %v5038 = vpack.c.b16 %v2858, %v2854
    %v5039 = vpack.c.b16 %v2859, %v2855
    %v5040 = vpack.c.b16 %v2860, %v2856
    %v5041 = vpack.c.b16 %v2861, %v2857
    %v5042 = vpack.c.b16 %v2866, %v2862
    %v5043 = vpack.c.b16 %v2867, %v2863
    %v5044 = vpack.c.b16 %v2868, %v2864
    %v5045 = vpack.c.b16 %v2869, %v2865
    %v5046 = vpack.c.b16 %v2874, %v2870
    %v5047 = vpack.c.b16 %v2875, %v2871
    %v5048 = vpack.c.b16 %v2876, %v2872
    %v5049 = vpack.c.b16 %v2877, %v2873
    %v5050 = vpack.c.b16 %v2882, %v2878
    %v5051 = vpack.c.b16 %v2883, %v2879
    %v5052 = vpack.c.b16 %v2884, %v2880
    %v5053 = vpack.c.b16 %v2885, %v2881
    %v5054 = vpack.c.b16 %v2890, %v2886
    %v5055 = vpack.c.b16 %v2891, %v2887
    %v5056 = vpack.c.b16 %v2892, %v2888
    %v5057 = vpack.c.b16 %v2893, %v2889
    %v5058 = vpack.c.b16 %v2898, %v2894
    %v5059 = vpack.c.b16 %v2899, %v2895
    %v5060 = vpack.c.b16 %v2900, %v2896
    %v5061 = vpack.c.b16 %v2901, %v2897
    %v5062 = vpack.c.b16 %v2906, %v2902
    %v5063 = vpack.c.b16 %v2907, %v2903
    %v5064 = vpack.c.b16 %v2908, %v2904
    %v5065 = vpack.c.b16 %v2909, %v2905
    %v5066 = vpack.c.b16 %v2914, %v2910
    %v5067 = vpack.c.b16 %v2915, %v2911
    %v5068 = vpack.c.b16 %v2916, %v2912
    %v5069 = vpack.c.b16 %v2917, %v2913
    %v5070 = vpack.c.b16 %v2922, %v2918
    %v5071 = vpack.c.b16 %v2923, %v2919
    %v5072 = vpack.c.b16 %v2924, %v2920
    %v5073 = vpack.c.b16 %v2925, %v2921
    %v5074 = vpack.c.b16 %v2930, %v2926
    %v5075 = vpack.c.b16 %v2931, %v2927
    %v5076 = vpack.c.b16 %v2932, %v2928
    %v5077 = vpack.c.b16 %v2933, %v2929
    %v5078 = vpack.c.b16 %v2938, %v2934
    %v5079 = vpack.c.b16 %v2939, %v2935
    %v5080 = vpack.c.b16 %v2940, %v2936
    %v5081 = vpack.c.b16 %v2941, %v2937
    %v5082 = vpack.c.b16 %v2946, %v2942
    %v5083 = vpack.c.b16 %v2947, %v2943
    %v5084 = vpack.c.b16 %v2948, %v2944
    %v5085 = vpack.c.b16 %v2949, %v2945
    %v5086 = vpack.c.b16 %v2954, %v2950
    %v5087 = vpack.c.b16 %v2955, %v2951
    %v5088 = vpack.c.b16 %v2956, %v2952
    %v5089 = vpack.c.b16 %v2957, %v2953
    %v5090 = vpack.c.b16 %v2962, %v2958
    %v5091 = vpack.c.b16 %v2963, %v2959
    %v5092 = vpack.c.b16 %v2964, %v2960
    %v5093 = vpack.c.b16 %v2965, %v2961
    %v5094 = vpack.c.b16 %v2970, %v2966
    %v5095 = vpack.c.b16 %v2971, %v2967
    %v5096 = vpack.c.b16 %v2972, %v2968
    %v5097 = vpack.c.b16 %v2973, %v2969
    %v5098 = vpack.c.b16 %v2978, %v2974
    %v5099 = vpack.c.b16 %v2979, %v2975
    %v5100 = vpack.c.b16 %v2980, %v2976
    %v5101 = vpack.c.b16 %v2981, %v2977
    %v5102 = vpack.c.b16 %v2986, %v2982
    %v5103 = vpack.c.b16 %v2987, %v2983
    %v5104 = vpack.c.b16 %v2988, %v2984
    %v5105 = vpack.c.b16 %v2989, %v2985
    %v5106 = vpack.c.b16 %v2994, %v2990
    %v5107 = vpack.c.b16 %v2995, %v2991
    %v5108 = vpack.c.b16 %v2996, %v2992
    %v5109 = vpack.c.b16 %v2997, %v2993
    %v5110 = vpack.c.b16 %v3002, %v2998
    %v5111 = vpack.c.b16 %v3003, %v2999
    %v5112 = vpack.c.b16 %v3004, %v3000
    %v5113 = vpack.c.b16 %v3005, %v3001
    %v5114 = vpack.c.b16 %v3010, %v3006
    %v5115 = vpack.c.b16 %v3011, %v3007
    %v5116 = vpack.c.b16 %v3012, %v3008
    %v5117 = vpack.c.b16 %v3013, %v3009
    %v5118 = vpack.c.b16 %v3018, %v3014
    %v5119 = vpack.c.b16 %v3019, %v3015
    %v5120 = vpack.c.b16 %v3020, %v3016
    %v5121 = vpack.c.b16 %v3021, %v3017
    %v5122 = vpack.c.b16 %v3026, %v3022
    %v5123 = vpack.c.b16 %v3027, %v3023
    %v5124 = vpack.c.b16 %v3028, %v3024
    %v5125 = vpack.c.b16 %v3029, %v3025
    %v5126 = vpack.c.b16 %v3034, %v3030
    %v5127 = vpack.c.b16 %v3035, %v3031
    %v5128 = vpack.c.b16 %v3036, %v3032
    %v5129 = vpack.c.b16 %v3037, %v3033
    %v5130 = vpack.c.b16 %v3042, %v3038
    %v5131 = vpack.c.b16 %v3043, %v3039
    %v5132 = vpack.c.b16 %v3044, %v3040
    %v5133 = vpack.c.b16 %v3045, %v3041
    %v5134 = vpack.c.b16 %v3050, %v3046
    %v5135 = vpack.c.b16 %v3051, %v3047
    %v5136 = vpack.c.b16 %v3052, %v3048
    %v5137 = vpack.c.b16 %v3053, %v3049
    %v5138 = vpack.c.b16 %v3058, %v3054
    %v5139 = vpack.c.b16 %v3059, %v3055
    %v5140 = vpack.c.b16 %v3060, %v3056
    %v5141 = vpack.c.b16 %v3061, %v3057
    %v5142 = vpack.c.b16 %v3066, %v3062
    %v5143 = vpack.c.b16 %v3067, %v3063
    %v5144 = vpack.c.b16 %v3068, %v3064
    %v5145 = vpack.c.b16 %v3069, %v3065
    %v5146 = vpack.c.b16 %v3074, %v3070
    %v5147 = vpack.c.b16 %v3075, %v3071
    %v5148 = vpack.c.b16 %v3076, %v3072
    %v5149 = vpack.c.b16 %v3077, %v3073
    %v5150 = vpack.c.b16 %v3082, %v3078
    %v5151 = vpack.c.b16 %v3083, %v3079
    %v5152 = vpack.c.b16 %v3084, %v3080
    %v5153 = vpack.c.b16 %v3085, %v3081
    %v5154 = vpack.c.b16 %v3090, %v3086
    %v5155 = vpack.c.b16 %v3091, %v3087
    %v5156 = vpack.c.b16 %v3092, %v3088
    %v5157 = vpack.c.b16 %v3093, %v3089
    %v5158 = vpack.c.b16 %v3098, %v3094
    %v5159 = vpack.c.b16 %v3099, %v3095
    %v5160 = vpack.c.b16 %v3100, %v3096
    %v5161 = vpack.c.b16 %v3101, %v3097
    %v5162 = vpack.c.b16 %v3106, %v3102
    %v5163 = vpack.c.b16 %v3107, %v3103
    %v5164 = vpack.c.b16 %v3108, %v3104
    %v5165 = vpack.c.b16 %v3109, %v3105
    %v5166 = vpack.c.b16 %v3114, %v3110
    %v5167 = vpack.c.b16 %v3115, %v3111
    %v5168 = vpack.c.b16 %v3116, %v3112
    %v5169 = vpack.c.b16 %v3117, %v3113
    %v5170 = vpack.c.b16 %v3122, %v3118
    %v5171 = vpack.c.b16 %v3123, %v3119
    %v5172 = vpack.c.b16 %v3124, %v3120
    %v5173 = vpack.c.b16 %v3125, %v3121
    %v5174 = vpack.c.b16 %v3130, %v3126
    %v5175 = vpack.c.b16 %v3131, %v3127
    %v5176 = vpack.c.b16 %v3132, %v3128
    %v5177 = vpack.c.b16 %v3133, %v3129
    %v5178 = vpack.c.b16 %v3138, %v3134
    %v5179 = vpack.c.b16 %v3139, %v3135
    %v5180 = vpack.c.b16 %v3140, %v3136
    %v5181 = vpack.c.b16 %v3141, %v3137
    %v5182 = vpack.c.b16 %v3146, %v3142
    %v5183 = vpack.c.b16 %v3147, %v3143
    %v5184 = vpack.c.b16 %v3148, %v3144
    %v5185 = vpack.c.b16 %v3149, %v3145
    %v5186 = vpack.c.b16 %v3154, %v3150
    %v5187 = vpack.c.b16 %v3155, %v3151
    %v5188 = vpack.c.b16 %v3156, %v3152
    %v5189 = vpack.c.b16 %v3157, %v3153
    %v5190 = vpack.c.b16 %v3162, %v3158
    %v5191 = vpack.c.b16 %v3163, %v3159
    %v5192 = vpack.c.b16 %v3164, %v3160
    %v5193 = vpack.c.b16 %v3165, %v3161
    %v5194 = vpack.c.b16 %v3170, %v3166
    %v5195 = vpack.c.b16 %v3171, %v3167
    %v5196 = vpack.c.b16 %v3172, %v3168
    %v5197 = vpack.c.b16 %v3173, %v3169
    %v5198 = vpack.c.b16 %v3178, %v3174
    %v5199 = vpack.c.b16 %v3179, %v3175
    %v5200 = vpack.c.b16 %v3180, %v3176
    %v5201 = vpack.c.b16 %v3181, %v3177
    %v5202 = vpack.c.b16 %v3186, %v3182
    %v5203 = vpack.c.b16 %v3187, %v3183
    %v5204 = vpack.c.b16 %v3188, %v3184
    %v5205 = vpack.c.b16 %v3189, %v3185
    %v5206 = vpack.c.b16 %v3194, %v3190
    %v5207 = vpack.c.b16 %v3195, %v3191
    %v5208 = vpack.c.b16 %v3196, %v3192
    %v5209 = vpack.c.b16 %v3197, %v3193
    %v5210 = vpack.c.b16 %v3202, %v3198
    %v5211 = vpack.c.b16 %v3203, %v3199
    %v5212 = vpack.c.b16 %v3204, %v3200
    %v5213 = vpack.c.b16 %v3205, %v3201
    %v5214 = vpack.c.b16 %v3210, %v3206
    %v5215 = vpack.c.b16 %v3211, %v3207
    %v5216 = vpack.c.b16 %v3212, %v3208
    %v5217 = vpack.c.b16 %v3213, %v3209
    %v5218 = vpack.c.b16 %v3218, %v3214
    %v5219 = vpack.c.b16 %v3219, %v3215
    %v5220 = vpack.c.b16 %v3220, %v3216
    %v5221 = vpack.c.b16 %v3221, %v3217
    %v5222 = vpack.c.b16 %v3226, %v3222
    %v5223 = vpack.c.b16 %v3227, %v3223
    %v5224 = vpack.c.b16 %v3228, %v3224
    %v5225 = vpack.c.b16 %v3229, %v3225
    %v5226 = vpack.c.b16 %v3234, %v3230
    %v5227 = vpack.c.b16 %v3235, %v3231
    %v5228 = vpack.c.b16 %v3236, %v3232
    %v5229 = vpack.c.b16 %v3237, %v3233
    %v5230 = vpack.c.b16 %v3242, %v3238
    %v5231 = vpack.c.b16 %v3243, %v3239
    %v5232 = vpack.c.b16 %v3244, %v3240
    %v5233 = vpack.c.b16 %v3245, %v3241
    %v5234 = vpack.c.b16 %v3250, %v3246
    %v5235 = vpack.c.b16 %v3251, %v3247
    %v5236 = vpack.c.b16 %v3252, %v3248
    %v5237 = vpack.c.b16 %v3253, %v3249
    %v5238 = vpack.c.b16 %v3258, %v3254
    %v5239 = vpack.c.b16 %v3259, %v3255
    %v5240 = vpack.c.b16 %v3260, %v3256
    %v5241 = vpack.c.b16 %v3261, %v3257
    %v5242 = vpack.c.b16 %v3266, %v3262
    %v5243 = vpack.c.b16 %v3267, %v3263
    %v5244 = vpack.c.b16 %v3268, %v3264
    %v5245 = vpack.c.b16 %v3269, %v3265
    %v5246 = vpack.c.b16 %v3274, %v3270
    %v5247 = vpack.c.b16 %v3275, %v3271
    %v5248 = vpack.c.b16 %v3276, %v3272
    %v5249 = vpack.c.b16 %v3277, %v3273
    %v5250 = vpack.c.b16 %v3282, %v3278
    %v5251 = vpack.c.b16 %v3283, %v3279
    %v5252 = vpack.c.b16 %v3284, %v3280
    %v5253 = vpack.c.b16 %v3285, %v3281
    %v5254 = vpack.c.b16 %v3290, %v3286
    %v5255 = vpack.c.b16 %v3291, %v3287
    %v5256 = vpack.c.b16 %v3292, %v3288
    %v5257 = vpack.c.b16 %v3293, %v3289
    %v5258 = vpack.c.b16 %v3298, %v3294
    %v5259 = vpack.c.b16 %v3299, %v3295
    %v5260 = vpack.c.b16 %v3300, %v3296
    %v5261 = vpack.c.b16 %v3301, %v3297
    %v5262 = vpack.c.b16 %v3306, %v3302
    %v5263 = vpack.c.b16 %v3307, %v3303
    %v5264 = vpack.c.b16 %v3308, %v3304
    %v5265 = vpack.c.b16 %v3309, %v3305
    %v5266 = vpack.c.b16 %v3314, %v3310
    %v5267 = vpack.c.b16 %v3315, %v3311
    %v5268 = vpack.c.b16 %v3316, %v3312
    %v5269 = vpack.c.b16 %v3317, %v3313
    %v5270 = vpack.c.b16 %v3322, %v3318
    %v5271 = vpack.c.b16 %v3323, %v3319
    %v5272 = vpack.c.b16 %v3324, %v3320
    %v5273 = vpack.c.b16 %v3325, %v3321
    %v5274 = vpack.c.b16 %v3330, %v3326
    %v5275 = vpack.c.b16 %v3331, %v3327
    %v5276 = vpack.c.b16 %v3332, %v3328
    %v5277 = vpack.c.b16 %v3333, %v3329
    %v5278 = vpack.c.b16 %v3338, %v3334
    %v5279 = vpack.c.b16 %v3339, %v3335
    %v5280 = vpack.c.b16 %v3340, %v3336
    %v5281 = vpack.c.b16 %v3341, %v3337
    %v5282 = vpack.c.b16 %v3346, %v3342
    %v5283 = vpack.c.b16 %v3347, %v3343
    %v5284 = vpack.c.b16 %v3348, %v3344
    %v5285 = vpack.c.b16 %v3349, %v3345
    %v5286 = vpack.c.b16 %v3354, %v3350
    %v5287 = vpack.c.b16 %v3355, %v3351
    %v5288 = vpack.c.b16 %v3356, %v3352
    %v5289 = vpack.c.b16 %v3357, %v3353
    %v5290 = vpack.c.b16 %v3362, %v3358
    %v5291 = vpack.c.b16 %v3363, %v3359
    %v5292 = vpack.c.b16 %v3364, %v3360
    %v5293 = vpack.c.b16 %v3365, %v3361
    %v5294 = vpack.c.b16 %v3370, %v3366
    %v5295 = vpack.c.b16 %v3371, %v3367
    %v5296 = vpack.c.b16 %v3372, %v3368
    %v5297 = vpack.c.b16 %v3373, %v3369
    %v5298 = vpack.c.b16 %v3378, %v3374
    %v5299 = vpack.c.b16 %v3379, %v3375
    %v5300 = vpack.c.b16 %v3380, %v3376
    %v5301 = vpack.c.b16 %v3381, %v3377
    %v5302 = vpack.c.b16 %v3386, %v3382
    %v5303 = vpack.c.b16 %v3387, %v3383
    %v5304 = vpack.c.b16 %v3388, %v3384
    %v5305 = vpack.c.b16 %v3389, %v3385
    %v5306 = vpack.c.b16 %v3394, %v3390
    %v5307 = vpack.c.b16 %v3395, %v3391
    %v5308 = vpack.c.b16 %v3396, %v3392
    %v5309 = vpack.c.b16 %v3397, %v3393
    %v5310 = vpack.c.b16 %v3402, %v3398
    %v5311 = vpack.c.b16 %v3403, %v3399
    %v5312 = vpack.c.b16 %v3404, %v3400
    %v5313 = vpack.c.b16 %v3405, %v3401
    %v5314 = vpack.c.b16 %v3410, %v3406
    %v5315 = vpack.c.b16 %v3411, %v3407
    %v5316 = vpack.c.b16 %v3412, %v3408
    %v5317 = vpack.c.b16 %v3413, %v3409
    %v5318 = vpack.c.b16 %v3418, %v3414
    %v5319 = vpack.c.b16 %v3419, %v3415
    %v5320 = vpack.c.b16 %v3420, %v3416
    %v5321 = vpack.c.b16 %v3421, %v3417
    %v5322 = vpack.c.b16 %v3426, %v3422
    %v5323 = vpack.c.b16 %v3427, %v3423
    %v5324 = vpack.c.b16 %v3428, %v3424
    %v5325 = vpack.c.b16 %v3429, %v3425
    %v5326 = vpack.c.b16 %v3434, %v3430
    %v5327 = vpack.c.b16 %v3435, %v3431
    %v5328 = vpack.c.b16 %v3436, %v3432
    %v5329 = vpack.c.b16 %v3437, %v3433
    %v5330 = vpack.c.b16 %v3442, %v3438
    %v5331 = vpack.c.b16 %v3443, %v3439
    %v5332 = vpack.c.b16 %v3444, %v3440
    %v5333 = vpack.c.b16 %v3445, %v3441
    %v5334 = vpack.c.b16 %v3450, %v3446
    %v5335 = vpack.c.b16 %v3451, %v3447
    %v5336 = vpack.c.b16 %v3452, %v3448
    %v5337 = vpack.c.b16 %v3453, %v3449
    %v5338 = vpack.c.b16 %v3458, %v3454
    %v5339 = vpack.c.b16 %v3459, %v3455
    %v5340 = vpack.c.b16 %v3460, %v3456
    %v5341 = vpack.c.b16 %v3461, %v3457
    %v5342 = vpack.c.b16 %v3466, %v3462
    %v5343 = vpack.c.b16 %v3467, %v3463
    %v5344 = vpack.c.b16 %v3468, %v3464
    %v5345 = vpack.c.b16 %v3469, %v3465
    %v5346 = vpack.c.b16 %v3474, %v3470
    %v5347 = vpack.c.b16 %v3475, %v3471
    %v5348 = vpack.c.b16 %v3476, %v3472
    %v5349 = vpack.c.b16 %v3477, %v3473
    %v5350 = vpack.c.b16 %v3482, %v3478
    %v5351 = vpack.c.b16 %v3483, %v3479
    %v5352 = vpack.c.b16 %v3484, %v3480
    %v5353 = vpack.c.b16 %v3485, %v3481
    %v5354 = vpack.c.b16 %v3490, %v3486
    %v5355 = vpack.c.b16 %v3491, %v3487
    %v5356 = vpack.c.b16 %v3492, %v3488
    %v5357 = vpack.c.b16 %v3493, %v3489
    %v5358 = vpack.c.b16 %v3498, %v3494
    %v5359 = vpack.c.b16 %v3499, %v3495
    %v5360 = vpack.c.b16 %v3500, %v3496
    %v5361 = vpack.c.b16 %v3501, %v3497
    %v5362 = vpack.c.b16 %v3506, %v3502
    %v5363 = vpack.c.b16 %v3507, %v3503
    %v5364 = vpack.c.b16 %v3508, %v3504
    %v5365 = vpack.c.b16 %v3509, %v3505
    %v5366 = vpack.c.b16 %v3514, %v3510
    %v5367 = vpack.c.b16 %v3515, %v3511
    %v5368 = vpack.c.b16 %v3516, %v3512
    %v5369 = vpack.c.b16 %v3517, %v3513
    %v5370 = vpack.c.b16 %v3522, %v3518
    %v5371 = vpack.c.b16 %v3523, %v3519
    %v5372 = vpack.c.b16 %v3524, %v3520
    %v5373 = vpack.c.b16 %v3525, %v3521
    %v5374 = vpack.c.b16 %v3530, %v3526
    %v5375 = vpack.c.b16 %v3531, %v3527
    %v5376 = vpack.c.b16 %v3532, %v3528
    %v5377 = vpack.c.b16 %v3533, %v3529
    %v5378 = vpack.c.b16 %v3538, %v3534
    %v5379 = vpack.c.b16 %v3539, %v3535
    %v5380 = vpack.c.b16 %v3540, %v3536
    %v5381 = vpack.c.b16 %v3541, %v3537
    %v5382 = vpack.c.b16 %v3546, %v3542
    %v5383 = vpack.c.b16 %v3547, %v3543
    %v5384 = vpack.c.b16 %v3548, %v3544
    %v5385 = vpack.c.b16 %v3549, %v3545
    %v5386 = vpack.c.b16 %v3554, %v3550
    %v5387 = vpack.c.b16 %v3555, %v3551
    %v5388 = vpack.c.b16 %v3556, %v3552
    %v5389 = vpack.c.b16 %v3557, %v3553
    %v5390 = vpack.c.b16 %v3562, %v3558
    %v5391 = vpack.c.b16 %v3563, %v3559
    %v5392 = vpack.c.b16 %v3564, %v3560
    %v5393 = vpack.c.b16 %v3565, %v3561
    %v5394 = vpack.c.b16 %v3570, %v3566
    %v5395 = vpack.c.b16 %v3571, %v3567
    %v5396 = vpack.c.b16 %v3572, %v3568
    %v5397 = vpack.c.b16 %v3573, %v3569
    %v5398 = vpack.c.b16 %v3578, %v3574
    %v5399 = vpack.c.b16 %v3579, %v3575
    %v5400 = vpack.c.b16 %v3580, %v3576
    %v5401 = vpack.c.b16 %v3581, %v3577
    %v5402 = vpack.c.b16 %v3586, %v3582
    %v5403 = vpack.c.b16 %v3587, %v3583
    %v5404 = vpack.c.b16 %v3588, %v3584
    %v5405 = vpack.c.b16 %v3589, %v3585
    %v5406 = vpack.c.b16 %v3594, %v3590
    %v5407 = vpack.c.b16 %v3595, %v3591
    %v5408 = vpack.c.b16 %v3596, %v3592
    %v5409 = vpack.c.b16 %v3597, %v3593
    %v5410 = vpack.c.b16 %v3602, %v3598
    %v5411 = vpack.c.b16 %v3603, %v3599
    %v5412 = vpack.c.b16 %v3604, %v3600
    %v5413 = vpack.c.b16 %v3605, %v3601
    %v5414 = vpack.c.b16 %v3610, %v3606
    %v5415 = vpack.c.b16 %v3611, %v3607
    %v5416 = vpack.c.b16 %v3612, %v3608
    %v5417 = vpack.c.b16 %v3613, %v3609
    %v5418 = vpack.c.b16 %v3618, %v3614
    %v5419 = vpack.c.b16 %v3619, %v3615
    %v5420 = vpack.c.b16 %v3620, %v3616
    %v5421 = vpack.c.b16 %v3621, %v3617
    %v5422 = vpack.c.b16 %v3626, %v3622
    %v5423 = vpack.c.b16 %v3627, %v3623
    %v5424 = vpack.c.b16 %v3628, %v3624
    %v5425 = vpack.c.b16 %v3629, %v3625
    %v5426 = vpack.c.b16 %v3634, %v3630
    %v5427 = vpack.c.b16 %v3635, %v3631
    %v5428 = vpack.c.b16 %v3636, %v3632
    %v5429 = vpack.c.b16 %v3637, %v3633
    %v5430 = vpack.c.b16 %v3642, %v3638
    %v5431 = vpack.c.b16 %v3643, %v3639
    %v5432 = vpack.c.b16 %v3644, %v3640
    %v5433 = vpack.c.b16 %v3645, %v3641
    %v5434 = vpack.c.b16 %v3650, %v3646
    %v5435 = vpack.c.b16 %v3651, %v3647
    %v5436 = vpack.c.b16 %v3652, %v3648
    %v5437 = vpack.c.b16 %v3653, %v3649
    %v5438 = vpack.c.b16 %v3658, %v3654
    %v5439 = vpack.c.b16 %v3659, %v3655
    %v5440 = vpack.c.b16 %v3660, %v3656
    %v5441 = vpack.c.b16 %v3661, %v3657
    %v5442 = vpack.c.b16 %v3666, %v3662
    %v5443 = vpack.c.b16 %v3667, %v3663
    %v5444 = vpack.c.b16 %v3668, %v3664
    %v5445 = vpack.c.b16 %v3669, %v3665
    %v5446 = vpack.c.b16 %v3674, %v3670
    %v5447 = vpack.c.b16 %v3675, %v3671
    %v5448 = vpack.c.b16 %v3676, %v3672
    %v5449 = vpack.c.b16 %v3677, %v3673
    %v5450 = vpack.c.b16 %v3682, %v3678
    %v5451 = vpack.c.b16 %v3683, %v3679
    %v5452 = vpack.c.b16 %v3684, %v3680
    %v5453 = vpack.c.b16 %v3685, %v3681
    %v5454 = vpack.c.b16 %v3690, %v3686
    %v5455 = vpack.c.b16 %v3691, %v3687
    %v5456 = vpack.c.b16 %v3692, %v3688
    %v5457 = vpack.c.b16 %v3693, %v3689
    %v5458 = vpack.c.b16 %v3698, %v3694
    %v5459 = vpack.c.b16 %v3699, %v3695
    %v5460 = vpack.c.b16 %v3700, %v3696
    %v5461 = vpack.c.b16 %v3701, %v3697
    %v5462 = vpack.c.b16 %v3706, %v3702
    %v5463 = vpack.c.b16 %v3707, %v3703
    %v5464 = vpack.c.b16 %v3708, %v3704
    %v5465 = vpack.c.b16 %v3709, %v3705
    %v5466 = vpack.c.b16 %v3714, %v3710
    %v5467 = vpack.c.b16 %v3715, %v3711
    %v5468 = vpack.c.b16 %v3716, %v3712
    %v5469 = vpack.c.b16 %v3717, %v3713
    %v5470 = vpack.c.b16 %v3722, %v3718
    %v5471 = vpack.c.b16 %v3723, %v3719
    %v5472 = vpack.c.b16 %v3724, %v3720
    %v5473 = vpack.c.b16 %v3725, %v3721
    %v5474 = vpack.c.b16 %v3730, %v3726
    %v5475 = vpack.c.b16 %v3731, %v3727
    %v5476 = vpack.c.b16 %v3732, %v3728
    %v5477 = vpack.c.b16 %v3733, %v3729
    %v5478 = vpack.c.b16 %v3738, %v3734
    %v5479 = vpack.c.b16 %v3739, %v3735
    %v5480 = vpack.c.b16 %v3740, %v3736
    %v5481 = vpack.c.b16 %v3741, %v3737
    %v5482 = vpack.c.b16 %v3746, %v3742
    %v5483 = vpack.c.b16 %v3747, %v3743
    %v5484 = vpack.c.b16 %v3748, %v3744
    %v5485 = vpack.c.b16 %v3749, %v3745
    %v5486 = vpack.c.b16 %v3754, %v3750
    %v5487 = vpack.c.b16 %v3755, %v3751
    %v5488 = vpack.c.b16 %v3756, %v3752
    %v5489 = vpack.c.b16 %v3757, %v3753
    %v5490 = vpack.c.b16 %v3762, %v3758
    %v5491 = vpack.c.b16 %v3763, %v3759
    %v5492 = vpack.c.b16 %v3764, %v3760
    %v5493 = vpack.c.b16 %v3765, %v3761
    %v5494 = vpack.c.b16 %v3770, %v3766
    %v5495 = vpack.c.b16 %v3771, %v3767
    %v5496 = vpack.c.b16 %v3772, %v3768
    %v5497 = vpack.c.b16 %v3773, %v3769
    %v5498 = vpack.c.b16 %v3778, %v3774
    %v5499 = vpack.c.b16 %v3779, %v3775
    %v5500 = vpack.c.b16 %v3780, %v3776
    %v5501 = vpack.c.b16 %v3781, %v3777
    %v5502 = vpack.c.b16 %v3786, %v3782
    %v5503 = vpack.c.b16 %v3787, %v3783
    %v5504 = vpack.c.b16 %v3788, %v3784
    %v5505 = vpack.c.b16 %v3789, %v3785
    %v5506 = vpack.c.b16 %v3794, %v3790
    %v5507 = vpack.c.b16 %v3795, %v3791
    %v5508 = vpack.c.b16 %v3796, %v3792
    %v5509 = vpack.c.b16 %v3797, %v3793
    %v5510 = vpack.c.b16 %v3802, %v3798
    %v5511 = vpack.c.b16 %v3803, %v3799
    %v5512 = vpack.c.b16 %v3804, %v3800
    %v5513 = vpack.c.b16 %v3805, %v3801
    %v5514 = vpack.c.b16 %v3810, %v3806
    %v5515 = vpack.c.b16 %v3811, %v3807
    %v5516 = vpack.c.b16 %v3812, %v3808
    %v5517 = vpack.c.b16 %v3813, %v3809
    %v5518 = vpack.c.b16 %v3818, %v3814
    %v5519 = vpack.c.b16 %v3819, %v3815
    %v5520 = vpack.c.b16 %v3820, %v3816
    %v5521 = vpack.c.b16 %v3821, %v3817
    %v5522 = vpack.c.b16 %v3826, %v3822
    %v5523 = vpack.c.b16 %v3827, %v3823
    %v5524 = vpack.c.b16 %v3828, %v3824
    %v5525 = vpack.c.b16 %v3829, %v3825
    %v5526 = vpack.c.b16 %v3834, %v3830
    %v5527 = vpack.c.b16 %v3835, %v3831
    %v5528 = vpack.c.b16 %v3836, %v3832
    %v5529 = vpack.c.b16 %v3837, %v3833
    %v5530 = vpack.c.b16 %v3842, %v3838
    %v5531 = vpack.c.b16 %v3843, %v3839
    %v5532 = vpack.c.b16 %v3844, %v3840
    %v5533 = vpack.c.b16 %v3845, %v3841
    %v5534 = vpack.c.b16 %v3850, %v3846
    %v5535 = vpack.c.b16 %v3851, %v3847
    %v5536 = vpack.c.b16 %v3852, %v3848
    %v5537 = vpack.c.b16 %v3853, %v3849
    %v5538 = vpack.c.b16 %v3858, %v3854
    %v5539 = vpack.c.b16 %v3859, %v3855
    %v5540 = vpack.c.b16 %v3860, %v3856
    %v5541 = vpack.c.b16 %v3861, %v3857
    %v5542 = vpack.c.b16 %v3866, %v3862
    %v5543 = vpack.c.b16 %v3867, %v3863
    %v5544 = vpack.c.b16 %v3868, %v3864
    %v5545 = vpack.c.b16 %v3869, %v3865
    %v5546 = vpack.c.b16 %v3874, %v3870
    %v5547 = vpack.c.b16 %v3875, %v3871
    %v5548 = vpack.c.b16 %v3876, %v3872
    %v5549 = vpack.c.b16 %v3877, %v3873
    %v5550 = vpack.c.b16 %v3882, %v3878
    %v5551 = vpack.c.b16 %v3883, %v3879
    %v5552 = vpack.c.b16 %v3884, %v3880
    %v5553 = vpack.c.b16 %v3885, %v3881
    %v5554 = vpack.c.b16 %v3890, %v3886
    %v5555 = vpack.c.b16 %v3891, %v3887
    %v5556 = vpack.c.b16 %v3892, %v3888
    %v5557 = vpack.c.b16 %v3893, %v3889
    %v5558 = vpack.c.b16 %v3898, %v3894
    %v5559 = vpack.c.b16 %v3899, %v3895
    %v5560 = vpack.c.b16 %v3900, %v3896
    %v5561 = vpack.c.b16 %v3901, %v3897
    %v5562 = vpack.c.b16 %v3906, %v3902
    %v5563 = vpack.c.b16 %v3907, %v3903
    %v5564 = vpack.c.b16 %v3908, %v3904
    %v5565 = vpack.c.b16 %v3909, %v3905
    %v5566 = vpack.c.b16 %v3914, %v3910
    %v5567 = vpack.c.b16 %v3915, %v3911
    %v5568 = vpack.c.b16 %v3916, %v3912
    %v5569 = vpack.c.b16 %v3917, %v3913
    %v5570 = vpack.c.b16 %v3922, %v3918
    %v5571 = vpack.c.b16 %v3923, %v3919
    %v5572 = vpack.c.b16 %v3924, %v3920
    %v5573 = vpack.c.b16 %v3925, %v3921
    %v5574 = vpack.c.b16 %v3930, %v3926
    %v5575 = vpack.c.b16 %v3931, %v3927
    %v5576 = vpack.c.b16 %v3932, %v3928
    %v5577 = vpack.c.b16 %v3933, %v3929
    %v5578 = vpack.c.b16 %v3938, %v3934
    %v5579 = vpack.c.b16 %v3939, %v3935
    %v5580 = vpack.c.b16 %v3940, %v3936
    %v5581 = vpack.c.b16 %v3941, %v3937
    %v5582 = vpack.c.b16 %v3946, %v3942
    %v5583 = vpack.c.b16 %v3947, %v3943
    %v5584 = vpack.c.b16 %v3948, %v3944
    %v5585 = vpack.c.b16 %v3949, %v3945
    %v5586 = vpack.c.b16 %v3954, %v3950
    %v5587 = vpack.c.b16 %v3955, %v3951
    %v5588 = vpack.c.b16 %v3956, %v3952
    %v5589 = vpack.c.b16 %v3957, %v3953
    %v5590 = vpack.c.b16 %v3962, %v3958
    %v5591 = vpack.c.b16 %v3963, %v3959
    %v5592 = vpack.c.b16 %v3964, %v3960
    %v5593 = vpack.c.b16 %v3965, %v3961
    %v5594 = vpack.c.b16 %v3970, %v3966
    %v5595 = vpack.c.b16 %v3971, %v3967
    %v5596 = vpack.c.b16 %v3972, %v3968
    %v5597 = vpack.c.b16 %v3973, %v3969
    %v5598 = vpack.c.b16 %v3978, %v3974
    %v5599 = vpack.c.b16 %v3979, %v3975
    %v5600 = vpack.c.b16 %v3980, %v3976
    %v5601 = vpack.c.b16 %v3981, %v3977
    %v5602 = vpack.c.b16 %v3986, %v3982
    %v5603 = vpack.c.b16 %v3987, %v3983
    %v5604 = vpack.c.b16 %v3988, %v3984
    %v5605 = vpack.c.b16 %v3989, %v3985
    %v5606 = vpack.c.b16 %v3994, %v3990
    %v5607 = vpack.c.b16 %v3995, %v3991
    %v5608 = vpack.c.b16 %v3996, %v3992
    %v5609 = vpack.c.b16 %v3997, %v3993
    %v5610 = vpack.c.b16 %v4002, %v3998
    %v5611 = vpack.c.b16 %v4003, %v3999
    %v5612 = vpack.c.b16 %v4004, %v4000
    %v5613 = vpack.c.b16 %v4005, %v4001
    %v5614 = vpack.c.b16 %v4010, %v4006
    %v5615 = vpack.c.b16 %v4011, %v4007
    %v5616 = vpack.c.b16 %v4012, %v4008
    %v5617 = vpack.c.b16 %v4013, %v4009
    %v5618 = vpack.c.b16 %v4018, %v4014
    %v5619 = vpack.c.b16 %v4019, %v4015
    %v5620 = vpack.c.b16 %v4020, %v4016
    %v5621 = vpack.c.b16 %v4021, %v4017
    %v5622 = vpack.c.b16 %v4026, %v4022
    %v5623 = vpack.c.b16 %v4027, %v4023
    %v5624 = vpack.c.b16 %v4028, %v4024
    %v5625 = vpack.c.b16 %v4029, %v4025
    %v5626 = vpack.c.b16 %v4034, %v4030
    %v5627 = vpack.c.b16 %v4035, %v4031
    %v5628 = vpack.c.b16 %v4036, %v4032
    %v5629 = vpack.c.b16 %v4037, %v4033
    %v5630 = vpack.c.b16 %v4042, %v4038
    %v5631 = vpack.c.b16 %v4043, %v4039
    %v5632 = vpack.c.b16 %v4044, %v4040
    %v5633 = vpack.c.b16 %v4045, %v4041
    %v5634 = vpack.c.b16 %v4050, %v4046
    %v5635 = vpack.c.b16 %v4051, %v4047
    %v5636 = vpack.c.b16 %v4052, %v4048
    %v5637 = vpack.c.b16 %v4053, %v4049
    %v5638 = vpack.c.b16 %v4058, %v4054
    %v5639 = vpack.c.b16 %v4059, %v4055
    %v5640 = vpack.c.b16 %v4060, %v4056
    %v5641 = vpack.c.b16 %v4061, %v4057
    %v5642 = vpack.c.b16 %v4066, %v4062
    %v5643 = vpack.c.b16 %v4067, %v4063
    %v5644 = vpack.c.b16 %v4068, %v4064
    %v5645 = vpack.c.b16 %v4069, %v4065
    %v5646 = vpack.c.b16 %v4074, %v4070
    %v5647 = vpack.c.b16 %v4075, %v4071
    %v5648 = vpack.c.b16 %v4076, %v4072
    %v5649 = vpack.c.b16 %v4077, %v4073
    %v5650 = vpack.c.b16 %v4082, %v4078
    %v5651 = vpack.c.b16 %v4083, %v4079
    %v5652 = vpack.c.b16 %v4084, %v4080
    %v5653 = vpack.c.b16 %v4085, %v4081
    %v5654 = vpack.c.b16 %v4090, %v4086
    %v5655 = vpack.c.b16 %v4091, %v4087
    %v5656 = vpack.c.b16 %v4092, %v4088
    %v5657 = vpack.c.b16 %v4093, %v4089
    %v5658 = vpack.c.b16 %v4098, %v4094
    %v5659 = vpack.c.b16 %v4099, %v4095
    %v5660 = vpack.c.b16 %v4100, %v4096
    %v5661 = vpack.c.b16 %v4101, %v4097
    %v5662 = vpack.c.b16 %v4106, %v4102
    %v5663 = vpack.c.b16 %v4107, %v4103
    %v5664 = vpack.c.b16 %v4108, %v4104
    %v5665 = vpack.c.b16 %v4109, %v4105
    %v5666 = vpack.c.b16 %v4114, %v4110
    %v5667 = vpack.c.b16 %v4115, %v4111
    %v5668 = vpack.c.b16 %v4116, %v4112
    %v5669 = vpack.c.b16 %v4117, %v4113
    %v5670 = vpack.c.b16 %v4122, %v4118
    %v5671 = vpack.c.b16 %v4123, %v4119
    %v5672 = vpack.c.b16 %v4124, %v4120
    %v5673 = vpack.c.b16 %v4125, %v4121
    %v5674 = vpack.c.b16 %v4130, %v4126
    %v5675 = vpack.c.b16 %v4131, %v4127
    %v5676 = vpack.c.b16 %v4132, %v4128
    %v5677 = vpack.c.b16 %v4133, %v4129
    %v5678 = vpack.c.b16 %v4138, %v4134
    %v5679 = vpack.c.b16 %v4139, %v4135
    %v5680 = vpack.c.b16 %v4140, %v4136
    %v5681 = vpack.c.b16 %v4141, %v4137
    %v5682 = vpack.c.b16 %v4146, %v4142
    %v5683 = vpack.c.b16 %v4147, %v4143
    %v5684 = vpack.c.b16 %v4148, %v4144
    %v5685 = vpack.c.b16 %v4149, %v4145
    %v5686 = vpack.c.b16 %v4154, %v4150
    %v5687 = vpack.c.b16 %v4155, %v4151
    %v5688 = vpack.c.b16 %v4156, %v4152
    %v5689 = vpack.c.b16 %v4157, %v4153
    %v5690 = vpack.c.b16 %v4162, %v4158
    %v5691 = vpack.c.b16 %v4163, %v4159
    %v5692 = vpack.c.b16 %v4164, %v4160
    %v5693 = vpack.c.b16 %v4165, %v4161
    %v5694 = vpack.c.b16 %v4170, %v4166
    %v5695 = vpack.c.b16 %v4171, %v4167
    %v5696 = vpack.c.b16 %v4172, %v4168
    %v5697 = vpack.c.b16 %v4173, %v4169
    %v5698 = vpack.c.b16 %v4178, %v4174
    %v5699 = vpack.c.b16 %v4179, %v4175
    %v5700 = vpack.c.b16 %v4180, %v4176
    %v5701 = vpack.c.b16 %v4181, %v4177
    %v5702 = vpack.c.b16 %v4186, %v4182
    %v5703 = vpack.c.b16 %v4187, %v4183
    %v5704 = vpack.c.b16 %v4188, %v4184
    %v5705 = vpack.c.b16 %v4189, %v4185
    %v5706 = vpack.c.b16 %v4194, %v4190
    %v5707 = vpack.c.b16 %v4195, %v4191
    %v5708 = vpack.c.b16 %v4196, %v4192
    %v5709 = vpack.c.b16 %v4197, %v4193
    %v5710 = vpack.c.b16 %v4202, %v4198
    %v5711 = vpack.c.b16 %v4203, %v4199
    %v5712 = vpack.c.b16 %v4204, %v4200
    %v5713 = vpack.c.b16 %v4205, %v4201
    %v5714 = vpack.c.b16 %v4210, %v4206
    %v5715 = vpack.c.b16 %v4211, %v4207
    %v5716 = vpack.c.b16 %v4212, %v4208
    %v5717 = vpack.c.b16 %v4213, %v4209
    %v5718 = vpack.c.b16 %v4218, %v4214
    %v5719 = vpack.c.b16 %v4219, %v4215
    %v5720 = vpack.c.b16 %v4220, %v4216
    %v5721 = vpack.c.b16 %v4221, %v4217
    %v5722 = vpack.c.b16 %v4226, %v4222
    %v5723 = vpack.c.b16 %v4227, %v4223
    %v5724 = vpack.c.b16 %v4228, %v4224
    %v5725 = vpack.c.b16 %v4229, %v4225
    %v5726 = vpack.c.b16 %v4234, %v4230
    %v5727 = vpack.c.b16 %v4235, %v4231
    %v5728 = vpack.c.b16 %v4236, %v4232
    %v5729 = vpack.c.b16 %v4237, %v4233
    %v5730 = vpack.c.b16 %v4242, %v4238
    %v5731 = vpack.c.b16 %v4243, %v4239
    %v5732 = vpack.c.b16 %v4244, %v4240
    %v5733 = vpack.c.b16 %v4245, %v4241
    %v5734 = vpack.c.b16 %v4250, %v4246
    %v5735 = vpack.c.b16 %v4251, %v4247
    %v5736 = vpack.c.b16 %v4252, %v4248
    %v5737 = vpack.c.b16 %v4253, %v4249
    %v5738 = vpack.c.b16 %v4258, %v4254
    %v5739 = vpack.c.b16 %v4259, %v4255
    %v5740 = vpack.c.b16 %v4260, %v4256
    %v5741 = vpack.c.b16 %v4261, %v4257
    %v5742 = vpack.c.b16 %v4266, %v4262
    %v5743 = vpack.c.b16 %v4267, %v4263
    %v5744 = vpack.c.b16 %v4268, %v4264
    %v5745 = vpack.c.b16 %v4269, %v4265
    %v5746 = vpack.c.b16 %v4274, %v4270
    %v5747 = vpack.c.b16 %v4275, %v4271
    %v5748 = vpack.c.b16 %v4276, %v4272
    %v5749 = vpack.c.b16 %v4277, %v4273
    %v5750 = vpack.c.b16 %v4282, %v4278
    %v5751 = vpack.c.b16 %v4283, %v4279
    %v5752 = vpack.c.b16 %v4284, %v4280
    %v5753 = vpack.c.b16 %v4285, %v4281
    %v5754 = vpack.c.b16 %v4290, %v4286
    %v5755 = vpack.c.b16 %v4291, %v4287
    %v5756 = vpack.c.b16 %v4292, %v4288
    %v5757 = vpack.c.b16 %v4293, %v4289
    %v5758 = vpack.c.b16 %v4298, %v4294
    %v5759 = vpack.c.b16 %v4299, %v4295
    %v5760 = vpack.c.b16 %v4300, %v4296
    %v5761 = vpack.c.b16 %v4301, %v4297
    %v5762 = vpack.c.b16 %v4306, %v4302
    %v5763 = vpack.c.b16 %v4307, %v4303
    %v5764 = vpack.c.b16 %v4308, %v4304
    %v5765 = vpack.c.b16 %v4309, %v4305
    %v5766 = vpack.c.b16 %v4314, %v4310
    %v5767 = vpack.c.b16 %v4315, %v4311
    %v5768 = vpack.c.b16 %v4316, %v4312
    %v5769 = vpack.c.b16 %v4317, %v4313
    %v5770 = vpack.c.b16 %v4322, %v4318
    %v5771 = vpack.c.b16 %v4323, %v4319
    %v5772 = vpack.c.b16 %v4324, %v4320
    %v5773 = vpack.c.b16 %v4325, %v4321
    %v5774 = vpack.c.b16 %v4330, %v4326
    %v5775 = vpack.c.b16 %v4331, %v4327
    %v5776 = vpack.c.b16 %v4332, %v4328
    %v5777 = vpack.c.b16 %v4333, %v4329
    %v5778 = vpack.c.b16 %v4338, %v4334
    %v5779 = vpack.c.b16 %v4339, %v4335
    %v5780 = vpack.c.b16 %v4340, %v4336
    %v5781 = vpack.c.b16 %v4341, %v4337
    %v5782 = vpack.c.b16 %v4346, %v4342
    %v5783 = vpack.c.b16 %v4347, %v4343
    %v5784 = vpack.c.b16 %v4348, %v4344
    %v5785 = vpack.c.b16 %v4349, %v4345
    %v5786 = vpack.c.b16 %v4354, %v4350
    %v5787 = vpack.c.b16 %v4355, %v4351
    %v5788 = vpack.c.b16 %v4356, %v4352
    %v5789 = vpack.c.b16 %v4357, %v4353
    %v5790 = vpack.c.b16 %v4362, %v4358
    %v5791 = vpack.c.b16 %v4363, %v4359
    %v5792 = vpack.c.b16 %v4364, %v4360
    %v5793 = vpack.c.b16 %v4365, %v4361
    %v5794 = vpack.c.b16 %v4370, %v4366
    %v5795 = vpack.c.b16 %v4371, %v4367
    %v5796 = vpack.c.b16 %v4372, %v4368
    %v5797 = vpack.c.b16 %v4373, %v4369
    %v5798 = vpack.c.b16 %v4378, %v4374
    %v5799 = vpack.c.b16 %v4379, %v4375
    %v5800 = vpack.c.b16 %v4380, %v4376
    %v5801 = vpack.c.b16 %v4381, %v4377
    %v5802 = vpack.c.b16 %v4386, %v4382
    %v5803 = vpack.c.b16 %v4387, %v4383
    %v5804 = vpack.c.b16 %v4388, %v4384
    %v5805 = vpack.c.b16 %v4389, %v4385
    %v5806 = vpack.c.b16 %v4394, %v4390
    %v5807 = vpack.c.b16 %v4395, %v4391
    %v5808 = vpack.c.b16 %v4396, %v4392
    %v5809 = vpack.c.b16 %v4397, %v4393
    %v5810 = vpack.c.b16 %v4402, %v4398
    %v5811 = vpack.c.b16 %v4403, %v4399
    %v5812 = vpack.c.b16 %v4404, %v4400
    %v5813 = vpack.c.b16 %v4405, %v4401
    %v5814 = vpack.c.b16 %v4410, %v4406
    %v5815 = vpack.c.b16 %v4411, %v4407
    %v5816 = vpack.c.b16 %v4412, %v4408
    %v5817 = vpack.c.b16 %v4413, %v4409
    %v5818 = vpack.c.b16 %v4418, %v4414
    %v5819 = vpack.c.b16 %v4419, %v4415
    %v5820 = vpack.c.b16 %v4420, %v4416
    %v5821 = vpack.c.b16 %v4421, %v4417
    %v5822 = vpack.c.b16 %v4426, %v4422
    %v5823 = vpack.c.b16 %v4427, %v4423
    %v5824 = vpack.c.b16 %v4428, %v4424
    %v5825 = vpack.c.b16 %v4429, %v4425
    %v5826 = vpack.c.b16 %v4434, %v4430
    %v5827 = vpack.c.b16 %v4435, %v4431
    %v5828 = vpack.c.b16 %v4436, %v4432
    %v5829 = vpack.c.b16 %v4437, %v4433
    %v5830 = vpack.c.b16 %v4442, %v4438
    %v5831 = vpack.c.b16 %v4443, %v4439
    %v5832 = vpack.c.b16 %v4444, %v4440
    %v5833 = vpack.c.b16 %v4445, %v4441
    %v5834 = vpack.c.b16 %v4450, %v4446
    %v5835 = vpack.c.b16 %v4451, %v4447
    %v5836 = vpack.c.b16 %v4452, %v4448
    %v5837 = vpack.c.b16 %v4453, %v4449
    %v5838 = vpack.c.b16 %v4458, %v4454
    %v5839 = vpack.c.b16 %v4459, %v4455
    %v5840 = vpack.c.b16 %v4460, %v4456
    %v5841 = vpack.c.b16 %v4461, %v4457
    %v5842 = vpack.c.b16 %v4466, %v4462
    %v5843 = vpack.c.b16 %v4467, %v4463
    %v5844 = vpack.c.b16 %v4468, %v4464
    %v5845 = vpack.c.b16 %v4469, %v4465
    %v5846 = vpack.c.b16 %v4474, %v4470
    %v5847 = vpack.c.b16 %v4475, %v4471
    %v5848 = vpack.c.b16 %v4476, %v4472
    %v5849 = vpack.c.b16 %v4477, %v4473
    %v5850 = vpack.c.b16 %v4482, %v4478
    %v5851 = vpack.c.b16 %v4483, %v4479
    %v5852 = vpack.c.b16 %v4484, %v4480
    %v5853 = vpack.c.b16 %v4485, %v4481
    %v5854 = vpack.c.b16 %v4490, %v4486
    %v5855 = vpack.c.b16 %v4491, %v4487
    %v5856 = vpack.c.b16 %v4492, %v4488
    %v5857 = vpack.c.b16 %v4493, %v4489
    %v5858 = vpack.c.b16 %v4498, %v4494
    %v5859 = vpack.c.b16 %v4499, %v4495
    %v5860 = vpack.c.b16 %v4500, %v4496
    %v5861 = vpack.c.b16 %v4501, %v4497
    %v5862 = vpack.c.b16 %v4506, %v4502
    %v5863 = vpack.c.b16 %v4507, %v4503
    %v5864 = vpack.c.b16 %v4508, %v4504
    %v5865 = vpack.c.b16 %v4509, %v4505
    %v5866 = vpack.c.b16 %v4514, %v4510
    %v5867 = vpack.c.b16 %v4515, %v4511
    %v5868 = vpack.c.b16 %v4516, %v4512
    %v5869 = vpack.c.b16 %v4517, %v4513
    %v5870 = vpack.c.b16 %v4522, %v4518
    %v5871 = vpack.c.b16 %v4523, %v4519
    %v5872 = vpack.c.b16 %v4524, %v4520
    %v5873 = vpack.c.b16 %v4525, %v4521
    %v5874 = vpack.c.b16 %v4530, %v4526
    %v5875 = vpack.c.b16 %v4531, %v4527
    %v5876 = vpack.c.b16 %v4532, %v4528
    %v5877 = vpack.c.b16 %v4533, %v4529
    %v5878 = vpack.c.b16 %v4538, %v4534
    %v5879 = vpack.c.b16 %v4539, %v4535
    %v5880 = vpack.c.b16 %v4540, %v4536
    %v5881 = vpack.c.b16 %v4541, %v4537
    %v5882 = vpack.c.b16 %v4546, %v4542
    %v5883 = vpack.c.b16 %v4547, %v4543
    %v5884 = vpack.c.b16 %v4548, %v4544
    %v5885 = vpack.c.b16 %v4549, %v4545
    %v5886 = vpack.c.b16 %v4554, %v4550
    %v5887 = vpack.c.b16 %v4555, %v4551
    %v5888 = vpack.c.b16 %v4556, %v4552
    %v5889 = vpack.c.b16 %v4557, %v4553
    %v5890 = vpack.c.b16 %v4562, %v4558
    %v5891 = vpack.c.b16 %v4563, %v4559
    %v5892 = vpack.c.b16 %v4564, %v4560
    %v5893 = vpack.c.b16 %v4565, %v4561
    %v5894 = vpack.c.b16 %v4570, %v4566
    %v5895 = vpack.c.b16 %v4571, %v4567
    %v5896 = vpack.c.b16 %v4572, %v4568
    %v5897 = vpack.c.b16 %v4573, %v4569
    %v5898 = vpack.c.b16 %v4578, %v4574
    %v5899 = vpack.c.b16 %v4579, %v4575
    %v5900 = vpack.c.b16 %v4580, %v4576
    %v5901 = vpack.c.b16 %v4581, %v4577
    %v5902 = vpack.c.b16 %v4586, %v4582
    %v5903 = vpack.c.b16 %v4587, %v4583
    %v5904 = vpack.c.b16 %v4588, %v4584
    %v5905 = vpack.c.b16 %v4589, %v4585
    %v5906 = vpack.c.b16 %v4594, %v4590
    %v5907 = vpack.c.b16 %v4595, %v4591
    %v5908 = vpack.c.b16 %v4596, %v4592
    %v5909 = vpack.c.b16 %v4597, %v4593
    %v5910 = vpack.c.b16 %v4602, %v4598
    %v5911 = vpack.c.b16 %v4603, %v4599
    %v5912 = vpack.c.b16 %v4604, %v4600
    %v5913 = vpack.c.b16 %v4605, %v4601
    %v5914 = vpack.c.b16 %v4610, %v4606
    %v5915 = vpack.c.b16 %v4611, %v4607
    %v5916 = vpack.c.b16 %v4612, %v4608
    %v5917 = vpack.c.b16 %v4613, %v4609
    %v5918 = vpack.c.b16 %v4618, %v4614
    %v5919 = vpack.c.b16 %v4619, %v4615
    %v5920 = vpack.c.b16 %v4620, %v4616
    %v5921 = vpack.c.b16 %v4621, %v4617
    %v5922 = vpack.c.b16 %v4626, %v4622
    %v5923 = vpack.c.b16 %v4627, %v4623
    %v5924 = vpack.c.b16 %v4628, %v4624
    %v5925 = vpack.c.b16 %v4629, %v4625
    %v5926 = vpack.c.b16 %v4634, %v4630
    %v5927 = vpack.c.b16 %v4635, %v4631
    %v5928 = vpack.c.b16 %v4636, %v4632
    %v5929 = vpack.c.b16 %v4637, %v4633
    %v5930 = vpack.c.b16 %v4642, %v4638
    %v5931 = vpack.c.b16 %v4643, %v4639
    %v5932 = vpack.c.b16 %v4644, %v4640
    %v5933 = vpack.c.b16 %v4645, %v4641
    %v5934 = vpack.c.b16 %v4650, %v4646
    %v5935 = vpack.c.b16 %v4651, %v4647
    %v5936 = vpack.c.b16 %v4652, %v4648
    %v5937 = vpack.c.b16 %v4653, %v4649
    %v5938 = vpack.c.b16 %v4658, %v4654
    %v5939 = vpack.c.b16 %v4659, %v4655
    %v5940 = vpack.c.b16 %v4660, %v4656
    %v5941 = vpack.c.b16 %v4661, %v4657
    %v5942 = vpack.c.b16 %v4666, %v4662
    %v5943 = vpack.c.b16 %v4667, %v4663
    %v5944 = vpack.c.b16 %v4668, %v4664
    %v5945 = vpack.c.b16 %v4669, %v4665
    %v5946 = vpack.c.b16 %v4674, %v4670
    %v5947 = vpack.c.b16 %v4675, %v4671
    %v5948 = vpack.c.b16 %v4676, %v4672
    %v5949 = vpack.c.b16 %v4677, %v4673
    %v5950 = vpack.c.b16 %v4682, %v4678
    %v5951 = vpack.c.b16 %v4683, %v4679
    %v5952 = vpack.c.b16 %v4684, %v4680
    %v5953 = vpack.c.b16 %v4685, %v4681
    %v5954 = vpack.c.b16 %v4690, %v4686
    %v5955 = vpack.c.b16 %v4691, %v4687
    %v5956 = vpack.c.b16 %v4692, %v4688
    %v5957 = vpack.c.b16 %v4693, %v4689
    %v5958 = vpack.c.b16 %v4698, %v4694
    %v5959 = vpack.c.b16 %v4699, %v4695
    %v5960 = vpack.c.b16 %v4700, %v4696
    %v5961 = vpack.c.b16 %v4701, %v4697
    %v5962 = vpack.c.b16 %v4706, %v4702
    %v5963 = vpack.c.b16 %v4707, %v4703
    %v5964 = vpack.c.b16 %v4708, %v4704
    %v5965 = vpack.c.b16 %v4709, %v4705
    %v5966 = vpack.c.b16 %v4714, %v4710
    %v5967 = vpack.c.b16 %v4715, %v4711
    %v5968 = vpack.c.b16 %v4716, %v4712
    %v5969 = vpack.c.b16 %v4717, %v4713
    %v5970 = vpack.c.b16 %v4722, %v4718
    %v5971 = vpack.c.b16 %v4723, %v4719
    %v5972 = vpack.c.b16 %v4724, %v4720
    %v5973 = vpack.c.b16 %v4725, %v4721
    %v5974 = vpack.c.b16 %v4730, %v4726
    %v5975 = vpack.c.b16 %v4731, %v4727
    %v5976 = vpack.c.b16 %v4732, %v4728
    %v5977 = vpack.c.b16 %v4733, %v4729
    %v5978 = vpack.c.b16 %v4738, %v4734
    %v5979 = vpack.c.b16 %v4739, %v4735
    %v5980 = vpack.c.b16 %v4740, %v4736
    %v5981 = vpack.c.b16 %v4741, %v4737
    %v5982 = vpack.c.b16 %v4746, %v4742
    %v5983 = vpack.c.b16 %v4747, %v4743
    %v5984 = vpack.c.b16 %v4748, %v4744
    %v5985 = vpack.c.b16 %v4749, %v4745
    %v5986 = vpack.c.b16 %v4754, %v4750
    %v5987 = vpack.c.b16 %v4755, %v4751
    %v5988 = vpack.c.b16 %v4756, %v4752
    %v5989 = vpack.c.b16 %v4757, %v4753
    %v5990 = vpack.c.b16 %v4762, %v4758
    %v5991 = vpack.c.b16 %v4763, %v4759
    %v5992 = vpack.c.b16 %v4764, %v4760
    %v5993 = vpack.c.b16 %v4765, %v4761
    %v5994 = vpack.c.b16 %v4770, %v4766
    %v5995 = vpack.c.b16 %v4771, %v4767
    %v5996 = vpack.c.b16 %v4772, %v4768
    %v5997 = vpack.c.b16 %v4773, %v4769
    %v5998 = vpack.c.b16 %v4778, %v4774
    %v5999 = vpack.c.b16 %v4779, %v4775
    %v6000 = vpack.c.b16 %v4780, %v4776
    %v6001 = vpack.c.b16 %v4781, %v4777
    %v6002 = vpack.c.b16 %v4786, %v4782
    %v6003 = vpack.c.b16 %v4787, %v4783
    %v6004 = vpack.c.b16 %v4788, %v4784
    %v6005 = vpack.c.b16 %v4789, %v4785
    %v6006 = vpack.c.b16 %v4794, %v4790
    %v6007 = vpack.c.b16 %v4795, %v4791
    %v6008 = vpack.c.b16 %v4796, %v4792
    %v6009 = vpack.c.b16 %v4797, %v4793
    %v6010 = vpack.c.b16 %v4802, %v4798
    %v6011 = vpack.c.b16 %v4803, %v4799
    %v6012 = vpack.c.b16 %v4804, %v4800
    %v6013 = vpack.c.b16 %v4805, %v4801
    %v6014 = vpack.c.b16 %v4810, %v4806
    %v6015 = vpack.c.b16 %v4811, %v4807
    %v6016 = vpack.c.b16 %v4812, %v4808
    %v6017 = vpack.c.b16 %v4813, %v4809
    %v6018 = vpack.c.b16 %v4818, %v4814
    %v6019 = vpack.c.b16 %v4819, %v4815
    %v6020 = vpack.c.b16 %v4820, %v4816
    %v6021 = vpack.c.b16 %v4821, %v4817
    %v6022 = vpack.c.b16 %v4826, %v4822
    %v6023 = vpack.c.b16 %v4827, %v4823
    %v6024 = vpack.c.b16 %v4828, %v4824
    %v6025 = vpack.c.b16 %v4829, %v4825
    %v6026 = vpack.c.b16 %v4834, %v4830
    %v6027 = vpack.c.b16 %v4835, %v4831
    %v6028 = vpack.c.b16 %v4836, %v4832
    %v6029 = vpack.c.b16 %v4837, %v4833
    %v6030 = vpack.c.b16 %v4842, %v4838
    %v6031 = vpack.c.b16 %v4843, %v4839
    %v6032 = vpack.c.b16 %v4844, %v4840
    %v6033 = vpack.c.b16 %v4845, %v4841
    %v6034 = vpack.c.b16 %v4850, %v4846
    %v6035 = vpack.c.b16 %v4851, %v4847
    %v6036 = vpack.c.b16 %v4852, %v4848
    %v6037 = vpack.c.b16 %v4853, %v4849
    %v6038 = vpack.c.b16 %v4858, %v4854
    %v6039 = vpack.c.b16 %v4859, %v4855
    %v6040 = vpack.c.b16 %v4860, %v4856
    %v6041 = vpack.c.b16 %v4861, %v4857
    %v6042 = vpack.c.b16 %v4866, %v4862
    %v6043 = vpack.c.b16 %v4867, %v4863
    %v6044 = vpack.c.b16 %v4868, %v4864
    %v6045 = vpack.c.b16 %v4869, %v4865
    %v6046 = vpack.c.b16 %v4874, %v4870
    %v6047 = vpack.c.b16 %v4875, %v4871
    %v6048 = vpack.c.b16 %v4876, %v4872
    %v6049 = vpack.c.b16 %v4877, %v4873
    %v6050 = vpack.c.b16 %v4882, %v4878
    %v6051 = vpack.c.b16 %v4883, %v4879
    %v6052 = vpack.c.b16 %v4884, %v4880
    %v6053 = vpack.c.b16 %v4885, %v4881
    %v6054 = vpack.c.b16 %v4890, %v4886
    %v6055 = vpack.c.b16 %v4891, %v4887
    %v6056 = vpack.c.b16 %v4892, %v4888
    %v6057 = vpack.c.b16 %v4893, %v4889
    %v6058 = vpack.c.b16 %v4898, %v4894
    %v6059 = vpack.c.b16 %v4899, %v4895
    %v6060 = vpack.c.b16 %v4900, %v4896
    %v6061 = vpack.c.b16 %v4901, %v4897
    %v6062 = vpack.c.b16 %v4906, %v4902
    %v6063 = vpack.c.b16 %v4907, %v4903
    %v6064 = vpack.c.b16 %v4908, %v4904
    %v6065 = vpack.c.b16 %v4909, %v4905
    %v6066 = vpack.c.b16 %v4914, %v4910
    %v6067 = vpack.c.b16 %v4915, %v4911
    %v6068 = vpack.c.b16 %v4916, %v4912
    %v6069 = vpack.c.b16 %v4917, %v4913
    %7222 = vmatprep.subr.bf16.mxu0 %v4919
    %7223 = vmatpush1.bf16.msra.mxu0 %v4918
    %7224 = vmatprep.subr.bf16.mxu0 %v4923
    %7225 = vmatpush1.bf16.msra.mxu0 %v4922
    %7226 = vmatprep.subr.bf16.mxu0 %v4927
    %7227 = vmatpush1.bf16.msra.mxu0 %v4926
    %7228 = vmatprep.subr.bf16.mxu0 %v4931
    %7229 = vmatpush1.bf16.msra.mxu0 %v4930
    %7230 = vmatprep.subr.bf16.mxu0 %v4935
    %7231 = vmatpush1.bf16.msra.mxu0 %v4934
    %7232 = vmatprep.subr.bf16.mxu0 %v4939
    %7233 = vmatpush1.bf16.msra.mxu0 %v4938
    %7234 = vmatprep.subr.bf16.mxu0 %v4943
    %7235 = vmatpush1.bf16.msra.mxu0 %v4942
    %7236 = vmatprep.subr.bf16.mxu0 %v4947
    %7237 = vmatpush1.bf16.msra.mxu0 %v4946
    %7238 = vmatprep.subr.bf16.mxu0 %v4951
    %7239 = vmatpush1.bf16.msra.mxu0 %v4950
    %7240 = vmatprep.subr.bf16.mxu0 %v4955
    %7241 = vmatpush1.bf16.msra.mxu0 %v4954
    %7242 = vmatprep.subr.bf16.mxu0 %v4959
    %7243 = vmatpush1.bf16.msra.mxu0 %v4958
    %7244 = vmatprep.subr.bf16.mxu0 %v4963
    %7245 = vmatpush1.bf16.msra.mxu0 %v4962
    %7246 = vmatprep.subr.bf16.mxu0 %v4967
    %7247 = vmatpush1.bf16.msra.mxu0 %v4966
    %7248 = vmatprep.subr.bf16.mxu0 %v4971
    %7249 = vmatpush1.bf16.msra.mxu0 %v4970
    %7250 = vmatprep.subr.bf16.mxu0 %v4975
    %7251 = vmatpush1.bf16.msra.mxu0 %v4974
    %7252 = vmatprep.subr.bf16.mxu0 %v4979
    %7253 = vmatpush1.bf16.msra.mxu0 %v4978
    %7254 = vmatprep.mubr.bf16.mxu0 %v1243
    %7255 = vmatmul.mubr.bf16.gmra.mrb[0].mxu0 %v1229
    %v7256 = vpop.f32.mrb[0].mxu0
    %v7257 = vadd.f32 %v1184, %v7256
    %v7258 = vpop.f32.mrb[0].mxu0
    %v7259 = vadd.f32 %v1188, %v7258
    %v7260 = vpop.f32.mrb[0].mxu0
    %v7261 = vpop.f32.mrb[0].mxu0
    %7262 = vdwg.mxu0
    %7263 = vmatprep.subr.bf16.mxu0 %v4983
    %7264 = vmatpush1.bf16.msra.mxu0 %v4982
    %7265 = vmatprep.subr.bf16.mxu0 %v4987
    %7266 = vmatpush1.bf16.msra.mxu0 %v4986
    %7267 = vmatprep.subr.bf16.mxu0 %v4991
    %7268 = vmatpush1.bf16.msra.mxu0 %v4990
    %7269 = vmatprep.subr.bf16.mxu0 %v4995
    %7270 = vmatpush1.bf16.msra.mxu0 %v4994
    %7271 = vmatprep.subr.bf16.mxu0 %v4999
    %7272 = vmatpush1.bf16.msra.mxu0 %v4998
    %7273 = vmatprep.subr.bf16.mxu0 %v5003
    %7274 = vmatpush1.bf16.msra.mxu0 %v5002
    %7275 = vmatprep.subr.bf16.mxu0 %v5007
    %7276 = vmatpush1.bf16.msra.mxu0 %v5006
    %7277 = vmatprep.subr.bf16.mxu0 %v5011
    %7278 = vmatpush1.bf16.msra.mxu0 %v5010
    %7279 = vmatprep.subr.bf16.mxu0 %v5015
    %7280 = vmatpush1.bf16.msra.mxu0 %v5014
    %7281 = vmatprep.subr.bf16.mxu0 %v5019
    %7282 = vmatpush1.bf16.msra.mxu0 %v5018
    %7283 = vmatprep.subr.bf16.mxu0 %v5023
    %7284 = vmatpush1.bf16.msra.mxu0 %v5022
    %7285 = vmatprep.subr.bf16.mxu0 %v5027
    %7286 = vmatpush1.bf16.msra.mxu0 %v5026
    %7287 = vmatprep.subr.bf16.mxu0 %v5031
    %7288 = vmatpush1.bf16.msra.mxu0 %v5030
    %7289 = vmatprep.subr.bf16.mxu0 %v5035
    %7290 = vmatpush1.bf16.msra.mxu0 %v5034
    %7291 = vmatprep.subr.bf16.mxu0 %v5039
    %7292 = vmatpush1.bf16.msra.mxu0 %v5038
    %7293 = vmatprep.subr.bf16.mxu0 %v5043
    %7294 = vmatpush1.bf16.msra.mxu0 %v5042
    %7295 = vmatprep.mubr.bf16.mxu0 %v1253
    %7296 = vmatmul.mubr.bf16.gmra.mrb[0].mxu0 %v1251
    %v7297 = vpop.f32.mrb[0].mxu0
    %v7298 = vadd.f32 %v7257, %v7297
    %v7299 = vpop.f32.mrb[0].mxu0
    %v7300 = vadd.f32 %v7259, %v7299
    %v7301 = vpop.f32.mrb[0].mxu0
    %v7302 = vpop.f32.mrb[0].mxu0
    %7303 = vdwg.mxu0
    %7304 = vmatprep.subr.bf16.mxu0 %v5047
    %7305 = vmatpush1.bf16.msra.mxu0 %v5046
    %7306 = vmatprep.subr.bf16.mxu0 %v5051
    %7307 = vmatpush1.bf16.msra.mxu0 %v5050
    %7308 = vmatprep.subr.bf16.mxu0 %v5055
    %7309 = vmatpush1.bf16.msra.mxu0 %v5054
    %7310 = vmatprep.subr.bf16.mxu0 %v5059
    %7311 = vmatpush1.bf16.msra.mxu0 %v5058
    %7312 = vmatprep.subr.bf16.mxu0 %v5063
    %7313 = vmatpush1.bf16.msra.mxu0 %v5062
    %7314 = vmatprep.subr.bf16.mxu0 %v5067
    %7315 = vmatpush1.bf16.msra.mxu0 %v5066
    %7316 = vmatprep.subr.bf16.mxu0 %v5071
    %7317 = vmatpush1.bf16.msra.mxu0 %v5070
    %7318 = vmatprep.subr.bf16.mxu0 %v5075
    %7319 = vmatpush1.bf16.msra.mxu0 %v5074
    %7320 = vmatprep.subr.bf16.mxu0 %v5079
    %7321 = vmatpush1.bf16.msra.mxu0 %v5078
    %7322 = vmatprep.subr.bf16.mxu0 %v5083
    %7323 = vmatpush1.bf16.msra.mxu0 %v5082
    %7324 = vmatprep.subr.bf16.mxu0 %v5087
    %7325 = vmatpush1.bf16.msra.mxu0 %v5086
    %7326 = vmatprep.subr.bf16.mxu0 %v5091
    %7327 = vmatpush1.bf16.msra.mxu0 %v5090
    %7328 = vmatprep.subr.bf16.mxu0 %v5095
    %7329 = vmatpush1.bf16.msra.mxu0 %v5094
    %7330 = vmatprep.subr.bf16.mxu0 %v5099
    %7331 = vmatpush1.bf16.msra.mxu0 %v5098
    %7332 = vmatprep.subr.bf16.mxu0 %v5103
    %7333 = vmatpush1.bf16.msra.mxu0 %v5102
    %7334 = vmatprep.subr.bf16.mxu0 %v5107
    %7335 = vmatpush1.bf16.msra.mxu0 %v5106
    %7336 = vmatprep.mubr.bf16.mxu0 %v1250
    %7337 = vmatmul.mubr.bf16.gmra.mrb[0].mxu0 %v1236
    %v7338 = vpop.f32.mrb[0].mxu0
    %v7339 = vadd.f32 %v7298, %v7338
    %v7340 = vpop.f32.mrb[0].mxu0
    %v7341 = vadd.f32 %v7300, %v7340
    %v7342 = vpop.f32.mrb[0].mxu0
    %v7343 = vpop.f32.mrb[0].mxu0
    %7344 = vdwg.mxu0
    %7345 = vmatprep.subr.bf16.mxu0 %v5111
    %7346 = vmatpush1.bf16.msra.mxu0 %v5110
    %7347 = vmatprep.subr.bf16.mxu0 %v5115
    %7348 = vmatpush1.bf16.msra.mxu0 %v5114
    %7349 = vmatprep.subr.bf16.mxu0 %v5119
    %7350 = vmatpush1.bf16.msra.mxu0 %v5118
    %7351 = vmatprep.subr.bf16.mxu0 %v5123
    %7352 = vmatpush1.bf16.msra.mxu0 %v5122
    %7353 = vmatprep.subr.bf16.mxu0 %v5127
    %7354 = vmatpush1.bf16.msra.mxu0 %v5126
    %7355 = vmatprep.subr.bf16.mxu0 %v5131
    %7356 = vmatpush1.bf16.msra.mxu0 %v5130
    %7357 = vmatprep.subr.bf16.mxu0 %v5135
    %7358 = vmatpush1.bf16.msra.mxu0 %v5134
    %7359 = vmatprep.subr.bf16.mxu0 %v5139
    %7360 = vmatpush1.bf16.msra.mxu0 %v5138
    %7361 = vmatprep.subr.bf16.mxu0 %v5143
    %7362 = vmatpush1.bf16.msra.mxu0 %v5142
    %7363 = vmatprep.subr.bf16.mxu0 %v5147
    %7364 = vmatpush1.bf16.msra.mxu0 %v5146
    %7365 = vmatprep.subr.bf16.mxu0 %v5151
    %7366 = vmatpush1.bf16.msra.mxu0 %v5150
    %7367 = vmatprep.subr.bf16.mxu0 %v5155
    %7368 = vmatpush1.bf16.msra.mxu0 %v5154
    %7369 = vmatprep.subr.bf16.mxu0 %v5159
    %7370 = vmatpush1.bf16.msra.mxu0 %v5158
    %7371 = vmatprep.subr.bf16.mxu0 %v5163
    %7372 = vmatpush1.bf16.msra.mxu0 %v5162
    %7373 = vmatprep.subr.bf16.mxu0 %v5167
    %7374 = vmatpush1.bf16.msra.mxu0 %v5166
    %7375 = vmatprep.subr.bf16.mxu0 %v5171
    %7376 = vmatpush1.bf16.msra.mxu0 %v5170
    %7377 = vmatprep.mubr.bf16.mxu0 %v1254
    %7378 = vmatmul.mubr.bf16.gmra.mrb[0].mxu0 %v1252
    %v7379 = vpop.f32.mrb[0].mxu0
    %v7380 = vadd.f32 %v7339, %v7379
    %v7381 = vpop.f32.mrb[0].mxu0
    %v7382 = vadd.f32 %v7341, %v7381
    %v7383 = vpop.f32.mrb[0].mxu0
    %v7384 = vpop.f32.mrb[0].mxu0
    %7385 = vdwg.mxu0
    %7386 = vmatprep.subr.bf16.mxu0 %v5175
    %7387 = vmatpush1.bf16.msra.mxu0 %v5174
    %7388 = vmatprep.subr.bf16.mxu0 %v5179
    %7389 = vmatpush1.bf16.msra.mxu0 %v5178
    %7390 = vmatprep.subr.bf16.mxu0 %v5183
    %7391 = vmatpush1.bf16.msra.mxu0 %v5182
    %7392 = vmatprep.subr.bf16.mxu0 %v5187
    %7393 = vmatpush1.bf16.msra.mxu0 %v5186
    %7394 = vmatprep.subr.bf16.mxu0 %v5191
    %7395 = vmatpush1.bf16.msra.mxu0 %v5190
    %7396 = vmatprep.subr.bf16.mxu0 %v5195
    %7397 = vmatpush1.bf16.msra.mxu0 %v5194
    %7398 = vmatprep.subr.bf16.mxu0 %v5199
    %7399 = vmatpush1.bf16.msra.mxu0 %v5198
    %7400 = vmatprep.subr.bf16.mxu0 %v5203
    %7401 = vmatpush1.bf16.msra.mxu0 %v5202
    %7402 = vmatprep.subr.bf16.mxu0 %v5207
    %7403 = vmatpush1.bf16.msra.mxu0 %v5206
    %7404 = vmatprep.subr.bf16.mxu0 %v5211
    %7405 = vmatpush1.bf16.msra.mxu0 %v5210
    %7406 = vmatprep.subr.bf16.mxu0 %v5215
    %7407 = vmatpush1.bf16.msra.mxu0 %v5214
    %7408 = vmatprep.subr.bf16.mxu0 %v5219
    %7409 = vmatpush1.bf16.msra.mxu0 %v5218
    %7410 = vmatprep.subr.bf16.mxu0 %v5223
    %7411 = vmatpush1.bf16.msra.mxu0 %v5222
    %7412 = vmatprep.subr.bf16.mxu0 %v5227
    %7413 = vmatpush1.bf16.msra.mxu0 %v5226
    %7414 = vmatprep.subr.bf16.mxu0 %v5231
    %7415 = vmatpush1.bf16.msra.mxu0 %v5230
    %7416 = vmatprep.subr.bf16.mxu0 %v5235
    %7417 = vmatpush1.bf16.msra.mxu0 %v5234
    %7418 = vmatprep.mubr.bf16.mxu0 %v1292
    %7419 = vmatmul.mubr.bf16.gmra.mrb[0].mxu0 %v1278
    %v7420 = vpop.f32.mrb[0].mxu0
    %v7421 = vadd.f32 %v7380, %v7420
    %v7422 = vpop.f32.mrb[0].mxu0
    %v7423 = vadd.f32 %v7382, %v7422
    %v7424 = vpop.f32.mrb[0].mxu0
    %v7425 = vpop.f32.mrb[0].mxu0
    %7426 = vdwg.mxu0
    %7427 = vmatprep.subr.bf16.mxu0 %v5239
    %7428 = vmatpush1.bf16.msra.mxu0 %v5238
    %7429 = vmatprep.subr.bf16.mxu0 %v5243
    %7430 = vmatpush1.bf16.msra.mxu0 %v5242
    %7431 = vmatprep.subr.bf16.mxu0 %v5247
    %7432 = vmatpush1.bf16.msra.mxu0 %v5246
    %7433 = vmatprep.subr.bf16.mxu0 %v5251
    %7434 = vmatpush1.bf16.msra.mxu0 %v5250
    %7435 = vmatprep.subr.bf16.mxu0 %v5255
    %7436 = vmatpush1.bf16.msra.mxu0 %v5254
    %7437 = vmatprep.subr.bf16.mxu0 %v5259
    %7438 = vmatpush1.bf16.msra.mxu0 %v5258
    %7439 = vmatprep.subr.bf16.mxu0 %v5263
    %7440 = vmatpush1.bf16.msra.mxu0 %v5262
    %7441 = vmatprep.subr.bf16.mxu0 %v5267
    %7442 = vmatpush1.bf16.msra.mxu0 %v5266
    %7443 = vmatprep.subr.bf16.mxu0 %v5271
    %7444 = vmatpush1.bf16.msra.mxu0 %v5270
    %7445 = vmatprep.subr.bf16.mxu0 %v5275
    %7446 = vmatpush1.bf16.msra.mxu0 %v5274
    %7447 = vmatprep.subr.bf16.mxu0 %v5279
    %7448 = vmatpush1.bf16.msra.mxu0 %v5278
    %7449 = vmatprep.subr.bf16.mxu0 %v5283
    %7450 = vmatpush1.bf16.msra.mxu0 %v5282
    %7451 = vmatprep.subr.bf16.mxu0 %v5287
    %7452 = vmatpush1.bf16.msra.mxu0 %v5286
    %7453 = vmatprep.subr.bf16.mxu0 %v5291
    %7454 = vmatpush1.bf16.msra.mxu0 %v5290
    %7455 = vmatprep.subr.bf16.mxu0 %v5295
    %7456 = vmatpush1.bf16.msra.mxu0 %v5294
    %7457 = vmatprep.subr.bf16.mxu0 %v5299
    %7458 = vmatpush1.bf16.msra.mxu0 %v5298
    %7459 = vmatprep.mubr.bf16.mxu0 %v1302
    %7460 = vmatmul.mubr.bf16.gmra.mrb[0].mxu0 %v1300
    %v7461 = vpop.f32.mrb[0].mxu0
    %v7462 = vadd.f32 %v7421, %v7461
    %v7463 = vpop.f32.mrb[0].mxu0
    %v7464 = vadd.f32 %v7423, %v7463
    %v7465 = vpop.f32.mrb[0].mxu0
    %v7466 = vpop.f32.mrb[0].mxu0
    %7467 = vdwg.mxu0
    %7468 = vmatprep.subr.bf16.mxu0 %v5303
    %7469 = vmatpush1.bf16.msra.mxu0 %v5302
    %7470 = vmatprep.subr.bf16.mxu0 %v5307
    %7471 = vmatpush1.bf16.msra.mxu0 %v5306
    %7472 = vmatprep.subr.bf16.mxu0 %v5311
    %7473 = vmatpush1.bf16.msra.mxu0 %v5310
    %7474 = vmatprep.subr.bf16.mxu0 %v5315
    %7475 = vmatpush1.bf16.msra.mxu0 %v5314
    %7476 = vmatprep.subr.bf16.mxu0 %v5319
    %7477 = vmatpush1.bf16.msra.mxu0 %v5318
    %7478 = vmatprep.subr.bf16.mxu0 %v5323
    %7479 = vmatpush1.bf16.msra.mxu0 %v5322
    %7480 = vmatprep.subr.bf16.mxu0 %v5327
    %7481 = vmatpush1.bf16.msra.mxu0 %v5326
    %7482 = vmatprep.subr.bf16.mxu0 %v5331
    %7483 = vmatpush1.bf16.msra.mxu0 %v5330
    %7484 = vmatprep.subr.bf16.mxu0 %v5335
    %7485 = vmatpush1.bf16.msra.mxu0 %v5334
    %7486 = vmatprep.subr.bf16.mxu0 %v5339
    %7487 = vmatpush1.bf16.msra.mxu0 %v5338
    %7488 = vmatprep.subr.bf16.mxu0 %v5343
    %7489 = vmatpush1.bf16.msra.mxu0 %v5342
    %7490 = vmatprep.subr.bf16.mxu0 %v5347
    %7491 = vmatpush1.bf16.msra.mxu0 %v5346
    %7492 = vmatprep.subr.bf16.mxu0 %v5351
    %7493 = vmatpush1.bf16.msra.mxu0 %v5350
    %7494 = vmatprep.subr.bf16.mxu0 %v5355
    %7495 = vmatpush1.bf16.msra.mxu0 %v5354
    %7496 = vmatprep.subr.bf16.mxu0 %v5359
    %7497 = vmatpush1.bf16.msra.mxu0 %v5358
    %7498 = vmatprep.subr.bf16.mxu0 %v5363
    %7499 = vmatpush1.bf16.msra.mxu0 %v5362
    %7500 = vmatprep.mubr.bf16.mxu0 %v1299
    %7501 = vmatmul.mubr.bf16.gmra.mrb[0].mxu0 %v1285
    %v7502 = vpop.f32.mrb[0].mxu0
    %v7503 = vadd.f32 %v7462, %v7502
    %v7504 = vpop.f32.mrb[0].mxu0
    %v7505 = vadd.f32 %v7464, %v7504
    %v7506 = vpop.f32.mrb[0].mxu0
    %v7507 = vpop.f32.mrb[0].mxu0
    %7508 = vdwg.mxu0
    %7509 = vmatprep.subr.bf16.mxu0 %v5367
    %7510 = vmatpush1.bf16.msra.mxu0 %v5366
    %7511 = vmatprep.subr.bf16.mxu0 %v5371
    %7512 = vmatpush1.bf16.msra.mxu0 %v5370
    %7513 = vmatprep.subr.bf16.mxu0 %v5375
    %7514 = vmatpush1.bf16.msra.mxu0 %v5374
    %7515 = vmatprep.subr.bf16.mxu0 %v5379
    %7516 = vmatpush1.bf16.msra.mxu0 %v5378
    %7517 = vmatprep.subr.bf16.mxu0 %v5383
    %7518 = vmatpush1.bf16.msra.mxu0 %v5382
    %7519 = vmatprep.subr.bf16.mxu0 %v5387
    %7520 = vmatpush1.bf16.msra.mxu0 %v5386
    %7521 = vmatprep.subr.bf16.mxu0 %v5391
    %7522 = vmatpush1.bf16.msra.mxu0 %v5390
    %7523 = vmatprep.subr.bf16.mxu0 %v5395
    %7524 = vmatpush1.bf16.msra.mxu0 %v5394
    %7525 = vmatprep.subr.bf16.mxu0 %v5399
    %7526 = vmatpush1.bf16.msra.mxu0 %v5398
    %7527 = vmatprep.subr.bf16.mxu0 %v5403
    %7528 = vmatpush1.bf16.msra.mxu0 %v5402
    %7529 = vmatprep.subr.bf16.mxu0 %v5407
    %7530 = vmatpush1.bf16.msra.mxu0 %v5406
    %7531 = vmatprep.subr.bf16.mxu0 %v5411
    %7532 = vmatpush1.bf16.msra.mxu0 %v5410
    %7533 = vmatprep.subr.bf16.mxu0 %v5415
    %7534 = vmatpush1.bf16.msra.mxu0 %v5414
    %7535 = vmatprep.subr.bf16.mxu0 %v5419
    %7536 = vmatpush1.bf16.msra.mxu0 %v5418
    %7537 = vmatprep.subr.bf16.mxu0 %v5423
    %7538 = vmatpush1.bf16.msra.mxu0 %v5422
    %7539 = vmatprep.subr.bf16.mxu0 %v5427
    %7540 = vmatpush1.bf16.msra.mxu0 %v5426
    %7541 = vmatprep.mubr.bf16.mxu0 %v1303
    %7542 = vmatmul.mubr.bf16.gmra.mrb[0].mxu0 %v1301
    %v7543 = vpop.f32.mrb[0].mxu0
    %v7544 = vadd.f32 %v7503, %v7543
    %v7545 = vpop.f32.mrb[0].mxu0
    %v7546 = vadd.f32 %v7505, %v7545
    %v7547 = vpop.f32.mrb[0].mxu0
    %v7548 = vpop.f32.mrb[0].mxu0
    %7549 = vdwg.mxu0
    %7550 = vmatprep.subr.bf16.mxu0 %v5431
    %7551 = vmatpush1.bf16.msra.mxu0 %v5430
    %7552 = vmatprep.subr.bf16.mxu0 %v5435
    %7553 = vmatpush1.bf16.msra.mxu0 %v5434
    %7554 = vmatprep.subr.bf16.mxu0 %v5439
    %7555 = vmatpush1.bf16.msra.mxu0 %v5438
    %7556 = vmatprep.subr.bf16.mxu0 %v5443
    %7557 = vmatpush1.bf16.msra.mxu0 %v5442
    %7558 = vmatprep.subr.bf16.mxu0 %v5447
    %7559 = vmatpush1.bf16.msra.mxu0 %v5446
    %7560 = vmatprep.subr.bf16.mxu0 %v5451
    %7561 = vmatpush1.bf16.msra.mxu0 %v5450
    %7562 = vmatprep.subr.bf16.mxu0 %v5455
    %7563 = vmatpush1.bf16.msra.mxu0 %v5454
    %7564 = vmatprep.subr.bf16.mxu0 %v5459
    %7565 = vmatpush1.bf16.msra.mxu0 %v5458
    %7566 = vmatprep.subr.bf16.mxu0 %v5463
    %7567 = vmatpush1.bf16.msra.mxu0 %v5462
    %7568 = vmatprep.subr.bf16.mxu0 %v5467
    %7569 = vmatpush1.bf16.msra.mxu0 %v5466
    %7570 = vmatprep.subr.bf16.mxu0 %v5471
    %7571 = vmatpush1.bf16.msra.mxu0 %v5470
    %7572 = vmatprep.subr.bf16.mxu0 %v5475
    %7573 = vmatpush1.bf16.msra.mxu0 %v5474
    %7574 = vmatprep.subr.bf16.mxu0 %v5479
    %7575 = vmatpush1.bf16.msra.mxu0 %v5478
    %7576 = vmatprep.subr.bf16.mxu0 %v5483
    %7577 = vmatpush1.bf16.msra.mxu0 %v5482
    %7578 = vmatprep.subr.bf16.mxu0 %v5487
    %7579 = vmatpush1.bf16.msra.mxu0 %v5486
    %7580 = vmatprep.subr.bf16.mxu0 %v5491
    %7581 = vmatpush1.bf16.msra.mxu0 %v5490
    %7582 = vmatprep.mubr.bf16.mxu0 %v1341
    %7583 = vmatmul.mubr.bf16.gmra.mrb[0].mxu0 %v1327
    %v7584 = vpop.f32.mrb[0].mxu0
    %v7585 = vadd.f32 %v7544, %v7584
    %v7586 = vpop.f32.mrb[0].mxu0
    %v7587 = vadd.f32 %v7546, %v7586
    %v7588 = vpop.f32.mrb[0].mxu0
    %v7589 = vpop.f32.mrb[0].mxu0
    %7590 = vdwg.mxu0
    %7591 = vmatprep.subr.bf16.mxu0 %v5495
    %7592 = vmatpush1.bf16.msra.mxu0 %v5494
    %7593 = vmatprep.subr.bf16.mxu0 %v5499
    %7594 = vmatpush1.bf16.msra.mxu0 %v5498
    %7595 = vmatprep.subr.bf16.mxu0 %v5503
    %7596 = vmatpush1.bf16.msra.mxu0 %v5502
    %7597 = vmatprep.subr.bf16.mxu0 %v5507
    %7598 = vmatpush1.bf16.msra.mxu0 %v5506
    %7599 = vmatprep.subr.bf16.mxu0 %v5511
    %7600 = vmatpush1.bf16.msra.mxu0 %v5510
    %7601 = vmatprep.subr.bf16.mxu0 %v5515
    %7602 = vmatpush1.bf16.msra.mxu0 %v5514
    %7603 = vmatprep.subr.bf16.mxu0 %v5519
    %7604 = vmatpush1.bf16.msra.mxu0 %v5518
    %7605 = vmatprep.subr.bf16.mxu0 %v5523
    %7606 = vmatpush1.bf16.msra.mxu0 %v5522
    %7607 = vmatprep.subr.bf16.mxu0 %v5527
    %7608 = vmatpush1.bf16.msra.mxu0 %v5526
    %7609 = vmatprep.subr.bf16.mxu0 %v5531
    %7610 = vmatpush1.bf16.msra.mxu0 %v5530
    %7611 = vmatprep.subr.bf16.mxu0 %v5535
    %7612 = vmatpush1.bf16.msra.mxu0 %v5534
    %7613 = vmatprep.subr.bf16.mxu0 %v5539
    %7614 = vmatpush1.bf16.msra.mxu0 %v5538
    %7615 = vmatprep.subr.bf16.mxu0 %v5543
    %7616 = vmatpush1.bf16.msra.mxu0 %v5542
    %7617 = vmatprep.subr.bf16.mxu0 %v5547
    %7618 = vmatpush1.bf16.msra.mxu0 %v5546
    %7619 = vmatprep.subr.bf16.mxu0 %v5551
    %7620 = vmatpush1.bf16.msra.mxu0 %v5550
    %7621 = vmatprep.subr.bf16.mxu0 %v5555
    %7622 = vmatpush1.bf16.msra.mxu0 %v5554
    %7623 = vmatprep.mubr.bf16.mxu0 %v1351
    %7624 = vmatmul.mubr.bf16.gmra.mrb[0].mxu0 %v1349
    %v7625 = vpop.f32.mrb[0].mxu0
    %v7626 = vadd.f32 %v7585, %v7625
    %v7627 = vpop.f32.mrb[0].mxu0
    %v7628 = vadd.f32 %v7587, %v7627
    %v7629 = vpop.f32.mrb[0].mxu0
    %v7630 = vpop.f32.mrb[0].mxu0
    %7631 = vdwg.mxu0
    %7632 = vmatprep.subr.bf16.mxu0 %v5559
    %7633 = vmatpush1.bf16.msra.mxu0 %v5558
    %7634 = vmatprep.subr.bf16.mxu0 %v5563
    %7635 = vmatpush1.bf16.msra.mxu0 %v5562
    %7636 = vmatprep.subr.bf16.mxu0 %v5567
    %7637 = vmatpush1.bf16.msra.mxu0 %v5566
    %7638 = vmatprep.subr.bf16.mxu0 %v5571
    %7639 = vmatpush1.bf16.msra.mxu0 %v5570
    %7640 = vmatprep.subr.bf16.mxu0 %v5575
    %7641 = vmatpush1.bf16.msra.mxu0 %v5574
    %7642 = vmatprep.subr.bf16.mxu0 %v5579
    %7643 = vmatpush1.bf16.msra.mxu0 %v5578
    %7644 = vmatprep.subr.bf16.mxu0 %v5583
    %7645 = vmatpush1.bf16.msra.mxu0 %v5582
    %7646 = vmatprep.subr.bf16.mxu0 %v5587
    %7647 = vmatpush1.bf16.msra.mxu0 %v5586
    %7648 = vmatprep.subr.bf16.mxu0 %v5591
    %7649 = vmatpush1.bf16.msra.mxu0 %v5590
    %7650 = vmatprep.subr.bf16.mxu0 %v5595
    %7651 = vmatpush1.bf16.msra.mxu0 %v5594
    %7652 = vmatprep.subr.bf16.mxu0 %v5599
    %7653 = vmatpush1.bf16.msra.mxu0 %v5598
    %7654 = vmatprep.subr.bf16.mxu0 %v5603
    %7655 = vmatpush1.bf16.msra.mxu0 %v5602
    %7656 = vmatprep.subr.bf16.mxu0 %v5607
    %7657 = vmatpush1.bf16.msra.mxu0 %v5606
    %7658 = vmatprep.subr.bf16.mxu0 %v5611
    %7659 = vmatpush1.bf16.msra.mxu0 %v5610
    %7660 = vmatprep.subr.bf16.mxu0 %v5615
    %7661 = vmatpush1.bf16.msra.mxu0 %v5614
    %7662 = vmatprep.subr.bf16.mxu0 %v5619
    %7663 = vmatpush1.bf16.msra.mxu0 %v5618
    %7664 = vmatprep.mubr.bf16.mxu0 %v1348
    %7665 = vmatmul.mubr.bf16.gmra.mrb[0].mxu0 %v1334
    %v7666 = vpop.f32.mrb[0].mxu0
    %v7667 = vadd.f32 %v7626, %v7666
    %v7668 = vpop.f32.mrb[0].mxu0
    %v7669 = vadd.f32 %v7628, %v7668
    %v7670 = vpop.f32.mrb[0].mxu0
    %v7671 = vpop.f32.mrb[0].mxu0
    %7672 = vdwg.mxu0
    %7673 = vmatprep.subr.bf16.mxu0 %v5623
    %7674 = vmatpush1.bf16.msra.mxu0 %v5622
    %7675 = vmatprep.subr.bf16.mxu0 %v5627
    %7676 = vmatpush1.bf16.msra.mxu0 %v5626
    %7677 = vmatprep.subr.bf16.mxu0 %v5631
    %7678 = vmatpush1.bf16.msra.mxu0 %v5630
    %7679 = vmatprep.subr.bf16.mxu0 %v5635
    %7680 = vmatpush1.bf16.msra.mxu0 %v5634
    %7681 = vmatprep.subr.bf16.mxu0 %v5639
    %7682 = vmatpush1.bf16.msra.mxu0 %v5638
    %7683 = vmatprep.subr.bf16.mxu0 %v5643
    %7684 = vmatpush1.bf16.msra.mxu0 %v5642
    %7685 = vmatprep.subr.bf16.mxu0 %v5647
    %7686 = vmatpush1.bf16.msra.mxu0 %v5646
    %7687 = vmatprep.subr.bf16.mxu0 %v5651
    %7688 = vmatpush1.bf16.msra.mxu0 %v5650
    %7689 = vmatprep.subr.bf16.mxu0 %v5655
    %7690 = vmatpush1.bf16.msra.mxu0 %v5654
    %7691 = vmatprep.subr.bf16.mxu0 %v5659
    %7692 = vmatpush1.bf16.msra.mxu0 %v5658
    %7693 = vmatprep.subr.bf16.mxu0 %v5663
    %7694 = vmatpush1.bf16.msra.mxu0 %v5662
    %7695 = vmatprep.subr.bf16.mxu0 %v5667
    %7696 = vmatpush1.bf16.msra.mxu0 %v5666
    %7697 = vmatprep.subr.bf16.mxu0 %v5671
    %7698 = vmatpush1.bf16.msra.mxu0 %v5670
    %7699 = vmatprep.subr.bf16.mxu0 %v5675
    %7700 = vmatpush1.bf16.msra.mxu0 %v5674
    %7701 = vmatprep.subr.bf16.mxu0 %v5679
    %7702 = vmatpush1.bf16.msra.mxu0 %v5678
    %7703 = vmatprep.subr.bf16.mxu0 %v5683
    %7704 = vmatpush1.bf16.msra.mxu0 %v5682
    %7705 = vmatprep.mubr.bf16.mxu0 %v1352
    %7706 = vmatmul.mubr.bf16.gmra.mrb[0].mxu0 %v1350
    %v7707 = vpop.f32.mrb[0].mxu0
    %v7708 = vadd.f32 %v7667, %v7707
    %v7709 = vpop.f32.mrb[0].mxu0
    %v7710 = vadd.f32 %v7669, %v7709
    %v7711 = vpop.f32.mrb[0].mxu0
    %v7712 = vpop.f32.mrb[0].mxu0
    %7713 = vdwg.mxu0
    %7714 = vmatprep.subr.bf16.mxu0 %v5687
    %7715 = vmatpush1.bf16.msra.mxu0 %v5686
    %7716 = vmatprep.subr.bf16.mxu0 %v5691
    %7717 = vmatpush1.bf16.msra.mxu0 %v5690
    %7718 = vmatprep.subr.bf16.mxu0 %v5695
    %7719 = vmatpush1.bf16.msra.mxu0 %v5694
    %7720 = vmatprep.subr.bf16.mxu0 %v5699
    %7721 = vmatpush1.bf16.msra.mxu0 %v5698
    %7722 = vmatprep.subr.bf16.mxu0 %v5703
    %7723 = vmatpush1.bf16.msra.mxu0 %v5702
    %7724 = vmatprep.subr.bf16.mxu0 %v5707
    %7725 = vmatpush1.bf16.msra.mxu0 %v5706
    %7726 = vmatprep.subr.bf16.mxu0 %v5711
    %7727 = vmatpush1.bf16.msra.mxu0 %v5710
    %7728 = vmatprep.subr.bf16.mxu0 %v5715
    %7729 = vmatpush1.bf16.msra.mxu0 %v5714
    %7730 = vmatprep.subr.bf16.mxu0 %v5719
    %7731 = vmatpush1.bf16.msra.mxu0 %v5718
    %7732 = vmatprep.subr.bf16.mxu0 %v5723
    %7733 = vmatpush1.bf16.msra.mxu0 %v5722
    %7734 = vmatprep.subr.bf16.mxu0 %v5727
    %7735 = vmatpush1.bf16.msra.mxu0 %v5726
    %7736 = vmatprep.subr.bf16.mxu0 %v5731
    %7737 = vmatpush1.bf16.msra.mxu0 %v5730
    %7738 = vmatprep.subr.bf16.mxu0 %v5735
    %7739 = vmatpush1.bf16.msra.mxu0 %v5734
    %7740 = vmatprep.subr.bf16.mxu0 %v5739
    %7741 = vmatpush1.bf16.msra.mxu0 %v5738
    %7742 = vmatprep.subr.bf16.mxu0 %v5743
    %7743 = vmatpush1.bf16.msra.mxu0 %v5742
    %7744 = vmatprep.subr.bf16.mxu0 %v5747
    %7745 = vmatpush1.bf16.msra.mxu0 %v5746
    %7746 = vmatprep.mubr.bf16.mxu0 %v1390
    %7747 = vmatmul.mubr.bf16.gmra.mrb[0].mxu0 %v1376
    %v7748 = vpop.f32.mrb[0].mxu0
    %v7749 = vadd.f32 %v7708, %v7748
    %v7750 = vpop.f32.mrb[0].mxu0
    %v7751 = vadd.f32 %v7710, %v7750
    %v7752 = vpop.f32.mrb[0].mxu0
    %v7753 = vpop.f32.mrb[0].mxu0
    %7754 = vdwg.mxu0
    %7755 = vmatprep.subr.bf16.mxu0 %v5751
    %7756 = vmatpush1.bf16.msra.mxu0 %v5750
    %7757 = vmatprep.subr.bf16.mxu0 %v5755
    %7758 = vmatpush1.bf16.msra.mxu0 %v5754
    %7759 = vmatprep.subr.bf16.mxu0 %v5759
    %7760 = vmatpush1.bf16.msra.mxu0 %v5758
    %7761 = vmatprep.subr.bf16.mxu0 %v5763
    %7762 = vmatpush1.bf16.msra.mxu0 %v5762
    %7763 = vmatprep.subr.bf16.mxu0 %v5767
    %7764 = vmatpush1.bf16.msra.mxu0 %v5766
    %7765 = vmatprep.subr.bf16.mxu0 %v5771
    %7766 = vmatpush1.bf16.msra.mxu0 %v5770
    %7767 = vmatprep.subr.bf16.mxu0 %v5775
    %7768 = vmatpush1.bf16.msra.mxu0 %v5774
    %7769 = vmatprep.subr.bf16.mxu0 %v5779
    %7770 = vmatpush1.bf16.msra.mxu0 %v5778
    %7771 = vmatprep.subr.bf16.mxu0 %v5783
    %7772 = vmatpush1.bf16.msra.mxu0 %v5782
    %7773 = vmatprep.subr.bf16.mxu0 %v5787
    %7774 = vmatpush1.bf16.msra.mxu0 %v5786
    %7775 = vmatprep.subr.bf16.mxu0 %v5791
    %7776 = vmatpush1.bf16.msra.mxu0 %v5790
    %7777 = vmatprep.subr.bf16.mxu0 %v5795
    %7778 = vmatpush1.bf16.msra.mxu0 %v5794
    %7779 = vmatprep.subr.bf16.mxu0 %v5799
    %7780 = vmatpush1.bf16.msra.mxu0 %v5798
    %7781 = vmatprep.subr.bf16.mxu0 %v5803
    %7782 = vmatpush1.bf16.msra.mxu0 %v5802
    %7783 = vmatprep.subr.bf16.mxu0 %v5807
    %7784 = vmatpush1.bf16.msra.mxu0 %v5806
    %7785 = vmatprep.subr.bf16.mxu0 %v5811
    %7786 = vmatpush1.bf16.msra.mxu0 %v5810
    %7787 = vmatprep.mubr.bf16.mxu0 %v1400
    %7788 = vmatmul.mubr.bf16.gmra.mrb[0].mxu0 %v1398
    %v7789 = vpop.f32.mrb[0].mxu0
    %v7790 = vadd.f32 %v7749, %v7789
    %v7791 = vpop.f32.mrb[0].mxu0
    %v7792 = vadd.f32 %v7751, %v7791
    %v7793 = vpop.f32.mrb[0].mxu0
    %v7794 = vpop.f32.mrb[0].mxu0
    %7795 = vdwg.mxu0
    %7796 = vmatprep.subr.bf16.mxu0 %v5815
    %7797 = vmatpush1.bf16.msra.mxu0 %v5814
    %7798 = vmatprep.subr.bf16.mxu0 %v5819
    %7799 = vmatpush1.bf16.msra.mxu0 %v5818
    %7800 = vmatprep.subr.bf16.mxu0 %v5823
    %7801 = vmatpush1.bf16.msra.mxu0 %v5822
    %7802 = vmatprep.subr.bf16.mxu0 %v5827
    %7803 = vmatpush1.bf16.msra.mxu0 %v5826
    %7804 = vmatprep.subr.bf16.mxu0 %v5831
    %7805 = vmatpush1.bf16.msra.mxu0 %v5830
    %7806 = vmatprep.subr.bf16.mxu0 %v5835
    %7807 = vmatpush1.bf16.msra.mxu0 %v5834
    %7808 = vmatprep.subr.bf16.mxu0 %v5839
    %7809 = vmatpush1.bf16.msra.mxu0 %v5838
    %7810 = vmatprep.subr.bf16.mxu0 %v5843
    %7811 = vmatpush1.bf16.msra.mxu0 %v5842
    %7812 = vmatprep.subr.bf16.mxu0 %v5847
    %7813 = vmatpush1.bf16.msra.mxu0 %v5846
    %7814 = vmatprep.subr.bf16.mxu0 %v5851
    %7815 = vmatpush1.bf16.msra.mxu0 %v5850
    %7816 = vmatprep.subr.bf16.mxu0 %v5855
    %7817 = vmatpush1.bf16.msra.mxu0 %v5854
    %7818 = vmatprep.subr.bf16.mxu0 %v5859
    %7819 = vmatpush1.bf16.msra.mxu0 %v5858
    %7820 = vmatprep.subr.bf16.mxu0 %v5863
    %7821 = vmatpush1.bf16.msra.mxu0 %v5862
    %7822 = vmatprep.subr.bf16.mxu0 %v5867
    %7823 = vmatpush1.bf16.msra.mxu0 %v5866
    %7824 = vmatprep.subr.bf16.mxu0 %v5871
    %7825 = vmatpush1.bf16.msra.mxu0 %v5870
    %7826 = vmatprep.subr.bf16.mxu0 %v5875
    %7827 = vmatpush1.bf16.msra.mxu0 %v5874
    %7828 = vmatprep.mubr.bf16.mxu0 %v1397
    %7829 = vmatmul.mubr.bf16.gmra.mrb[0].mxu0 %v1383
    %v7830 = vpop.f32.mrb[0].mxu0
    %v7831 = vadd.f32 %v7790, %v7830
    %v7832 = vpop.f32.mrb[0].mxu0
    %v7833 = vadd.f32 %v7792, %v7832
    %v7834 = vpop.f32.mrb[0].mxu0
    %v7835 = vpop.f32.mrb[0].mxu0
    %7836 = vdwg.mxu0
    %7837 = vmatprep.subr.bf16.mxu0 %v5879
    %7838 = vmatpush1.bf16.msra.mxu0 %v5878
    %7839 = vmatprep.subr.bf16.mxu0 %v5883
    %7840 = vmatpush1.bf16.msra.mxu0 %v5882
    %7841 = vmatprep.subr.bf16.mxu0 %v5887
    %7842 = vmatpush1.bf16.msra.mxu0 %v5886
    %7843 = vmatprep.subr.bf16.mxu0 %v5891
    %7844 = vmatpush1.bf16.msra.mxu0 %v5890
    %7845 = vmatprep.subr.bf16.mxu0 %v5895
    %7846 = vmatpush1.bf16.msra.mxu0 %v5894
    %7847 = vmatprep.subr.bf16.mxu0 %v5899
    %7848 = vmatpush1.bf16.msra.mxu0 %v5898
    %7849 = vmatprep.subr.bf16.mxu0 %v5903
    %7850 = vmatpush1.bf16.msra.mxu0 %v5902
    %7851 = vmatprep.subr.bf16.mxu0 %v5907
    %7852 = vmatpush1.bf16.msra.mxu0 %v5906
    %7853 = vmatprep.subr.bf16.mxu0 %v5911
    %7854 = vmatpush1.bf16.msra.mxu0 %v5910
    %7855 = vmatprep.subr.bf16.mxu0 %v5915
    %7856 = vmatpush1.bf16.msra.mxu0 %v5914
    %7857 = vmatprep.subr.bf16.mxu0 %v5919
    %7858 = vmatpush1.bf16.msra.mxu0 %v5918
    %7859 = vmatprep.subr.bf16.mxu0 %v5923
    %7860 = vmatpush1.bf16.msra.mxu0 %v5922
    %7861 = vmatprep.subr.bf16.mxu0 %v5927
    %7862 = vmatpush1.bf16.msra.mxu0 %v5926
    %7863 = vmatprep.subr.bf16.mxu0 %v5931
    %7864 = vmatpush1.bf16.msra.mxu0 %v5930
    %7865 = vmatprep.subr.bf16.mxu0 %v5935
    %7866 = vmatpush1.bf16.msra.mxu0 %v5934
    %7867 = vmatprep.subr.bf16.mxu0 %v5939
    %7868 = vmatpush1.bf16.msra.mxu0 %v5938
    %7869 = vmatprep.mubr.bf16.mxu0 %v1401
    %7870 = vmatmul.mubr.bf16.gmra.mrb[0].mxu0 %v1399
    %v7871 = vpop.f32.mrb[0].mxu0
    %v7872 = vadd.f32 %v7831, %v7871
    %v7873 = vpop.f32.mrb[0].mxu0
    %v7874 = vadd.f32 %v7833, %v7873
    %v7875 = vpop.f32.mrb[0].mxu0
    %v7876 = vpop.f32.mrb[0].mxu0
    %7877 = vdwg.mxu0
    %7878 = vmatprep.subr.bf16.mxu0 %v5943
    %7879 = vmatpush1.bf16.msra.mxu0 %v5942
    %7880 = vmatprep.subr.bf16.mxu0 %v5947
    %7881 = vmatpush1.bf16.msra.mxu0 %v5946
    %7882 = vmatprep.subr.bf16.mxu0 %v5951
    %7883 = vmatpush1.bf16.msra.mxu0 %v5950
    %7884 = vmatprep.subr.bf16.mxu0 %v5955
    %7885 = vmatpush1.bf16.msra.mxu0 %v5954
    %7886 = vmatprep.subr.bf16.mxu0 %v5959
    %7887 = vmatpush1.bf16.msra.mxu0 %v5958
    %7888 = vmatprep.subr.bf16.mxu0 %v5963
    %7889 = vmatpush1.bf16.msra.mxu0 %v5962
    %7890 = vmatprep.subr.bf16.mxu0 %v5967
    %7891 = vmatpush1.bf16.msra.mxu0 %v5966
    %7892 = vmatprep.subr.bf16.mxu0 %v5971
    %7893 = vmatpush1.bf16.msra.mxu0 %v5970
    %7894 = vmatprep.subr.bf16.mxu0 %v5975
    %7895 = vmatpush1.bf16.msra.mxu0 %v5974
    %7896 = vmatprep.subr.bf16.mxu0 %v5979
    %7897 = vmatpush1.bf16.msra.mxu0 %v5978
    %7898 = vmatprep.subr.bf16.mxu0 %v5983
    %7899 = vmatpush1.bf16.msra.mxu0 %v5982
    %7900 = vmatprep.subr.bf16.mxu0 %v5987
    %7901 = vmatpush1.bf16.msra.mxu0 %v5986
    %7902 = vmatprep.subr.bf16.mxu0 %v5991
    %7903 = vmatpush1.bf16.msra.mxu0 %v5990
    %7904 = vmatprep.subr.bf16.mxu0 %v5995
    %7905 = vmatpush1.bf16.msra.mxu0 %v5994
    %7906 = vmatprep.subr.bf16.mxu0 %v5999
    %7907 = vmatpush1.bf16.msra.mxu0 %v5998
    %7908 = vmatprep.subr.bf16.mxu0 %v6003
    %7909 = vmatpush1.bf16.msra.mxu0 %v6002
    %7910 = vmatprep.mubr.bf16.mxu0 %v1423
    %7911 = vmatmul.mubr.bf16.gmra.mrb[0].mxu0 %v1416
    %v7912 = vpop.f32.mrb[0].mxu0
    %v7913 = vadd.f32 %v7872, %v7912
    %v7914 = vpop.f32.mrb[0].mxu0
    %v7915 = vadd.f32 %v7874, %v7914
    %v7916 = vpop.f32.mrb[0].mxu0
    %v7917 = vpop.f32.mrb[0].mxu0
    %7918 = vdwg.mxu0
    %7919 = vmatprep.subr.bf16.mxu0 %v6007
    %7920 = vmatpush1.bf16.msra.mxu0 %v6006
    %7921 = vmatprep.subr.bf16.mxu0 %v6011
    %7922 = vmatpush1.bf16.msra.mxu0 %v6010
    %7923 = vmatprep.subr.bf16.mxu0 %v6015
    %7924 = vmatpush1.bf16.msra.mxu0 %v6014
    %7925 = vmatprep.subr.bf16.mxu0 %v6019
    %7926 = vmatpush1.bf16.msra.mxu0 %v6018
    %7927 = vmatprep.subr.bf16.mxu0 %v6023
    %7928 = vmatpush1.bf16.msra.mxu0 %v6022
    %7929 = vmatprep.subr.bf16.mxu0 %v6027
    %7930 = vmatpush1.bf16.msra.mxu0 %v6026
    %7931 = vmatprep.subr.bf16.mxu0 %v6031
    %7932 = vmatpush1.bf16.msra.mxu0 %v6030
    %7933 = vmatprep.subr.bf16.mxu0 %v6035
    %7934 = vmatpush1.bf16.msra.mxu0 %v6034
    %7935 = vmatprep.subr.bf16.mxu0 %v6039
    %7936 = vmatpush1.bf16.msra.mxu0 %v6038
    %7937 = vmatprep.subr.bf16.mxu0 %v6043
    %7938 = vmatpush1.bf16.msra.mxu0 %v6042
    %7939 = vmatprep.subr.bf16.mxu0 %v6047
    %7940 = vmatpush1.bf16.msra.mxu0 %v6046
    %7941 = vmatprep.subr.bf16.mxu0 %v6051
    %7942 = vmatpush1.bf16.msra.mxu0 %v6050
    %7943 = vmatprep.subr.bf16.mxu0 %v6055
    %7944 = vmatpush1.bf16.msra.mxu0 %v6054
    %7945 = vmatprep.subr.bf16.mxu0 %v6059
    %7946 = vmatpush1.bf16.msra.mxu0 %v6058
    %7947 = vmatprep.subr.bf16.mxu0 %v6063
    %7948 = vmatpush1.bf16.msra.mxu0 %v6062
    %7949 = vmatprep.subr.bf16.mxu0 %v6067
    %7950 = vmatpush1.bf16.msra.mxu0 %v6066
    %7951 = vmatprep.mubr.bf16.mxu0 %v1425
    %7952 = vmatmul.mubr.bf16.gmra.mrb[0].mxu0 %v1424
    %v7953 = vpop.f32.mrb[0].mxu0
    %v7954 = vadd.f32 %v7913, %v7953
    %v7955 = vpop.f32.mrb[0].mxu0
    %v7956 = vadd.f32 %v7915, %v7955
    %v7957 = vpop.f32.mrb[0].mxu0
    %v7958 = vpop.f32.mrb[0].mxu0
    %7959 = vdwg.mxu0
    %7960 = vmatprep.subr.bf16.mxu0 %v4921
    %7961 = vmatpush1.bf16.msra.mxu0 %v4920
    %7962 = vmatprep.subr.bf16.mxu0 %v4925
    %7963 = vmatpush1.bf16.msra.mxu0 %v4924
    %7964 = vmatprep.subr.bf16.mxu0 %v4929
    %7965 = vmatpush1.bf16.msra.mxu0 %v4928
    %7966 = vmatprep.subr.bf16.mxu0 %v4933
    %7967 = vmatpush1.bf16.msra.mxu0 %v4932
    %7968 = vmatprep.subr.bf16.mxu0 %v4937
    %7969 = vmatpush1.bf16.msra.mxu0 %v4936
    %7970 = vmatprep.subr.bf16.mxu0 %v4941
    %7971 = vmatpush1.bf16.msra.mxu0 %v4940
    %7972 = vmatprep.subr.bf16.mxu0 %v4945
    %7973 = vmatpush1.bf16.msra.mxu0 %v4944
    %7974 = vmatprep.subr.bf16.mxu0 %v4949
    %7975 = vmatpush1.bf16.msra.mxu0 %v4948
    %7976 = vmatprep.subr.bf16.mxu0 %v4953
    %7977 = vmatpush1.bf16.msra.mxu0 %v4952
    %7978 = vmatprep.subr.bf16.mxu0 %v4957
    %7979 = vmatpush1.bf16.msra.mxu0 %v4956
    %7980 = vmatprep.subr.bf16.mxu0 %v4961
    %7981 = vmatpush1.bf16.msra.mxu0 %v4960
    %7982 = vmatprep.subr.bf16.mxu0 %v4965
    %7983 = vmatpush1.bf16.msra.mxu0 %v4964
    %7984 = vmatprep.subr.bf16.mxu0 %v4969
    %7985 = vmatpush1.bf16.msra.mxu0 %v4968
    %7986 = vmatprep.subr.bf16.mxu0 %v4973
    %7987 = vmatpush1.bf16.msra.mxu0 %v4972
    %7988 = vmatprep.subr.bf16.mxu0 %v4977
    %7989 = vmatpush1.bf16.msra.mxu0 %v4976
    %7990 = vmatprep.subr.bf16.mxu0 %v4981
    %7991 = vmatpush1.bf16.msra.mxu0 %v4980
    %7992 = vmatprep.mubr.bf16.mxu0 %v1243
    %7993 = vmatmul.mubr.bf16.gmra.mrb[0].mxu0 %v1229
    %v7994 = vpop.f32.mrb[0].mxu0
    %v7995 = vadd.f32 %v1192, %v7994
    %v7996 = vpop.f32.mrb[0].mxu0
    %v7997 = vadd.f32 %v1196, %v7996
    %v7998 = vpop.f32.mrb[0].mxu0
    %v7999 = vpop.f32.mrb[0].mxu0
    %8000 = vdwg.mxu0
    %8001 = vmatprep.subr.bf16.mxu0 %v4985
    %8002 = vmatpush1.bf16.msra.mxu0 %v4984
    %8003 = vmatprep.subr.bf16.mxu0 %v4989
    %8004 = vmatpush1.bf16.msra.mxu0 %v4988
    %8005 = vmatprep.subr.bf16.mxu0 %v4993
    %8006 = vmatpush1.bf16.msra.mxu0 %v4992
    %8007 = vmatprep.subr.bf16.mxu0 %v4997
    %8008 = vmatpush1.bf16.msra.mxu0 %v4996
    %8009 = vmatprep.subr.bf16.mxu0 %v5001
    %8010 = vmatpush1.bf16.msra.mxu0 %v5000
    %8011 = vmatprep.subr.bf16.mxu0 %v5005
    %8012 = vmatpush1.bf16.msra.mxu0 %v5004
    %8013 = vmatprep.subr.bf16.mxu0 %v5009
    %8014 = vmatpush1.bf16.msra.mxu0 %v5008
    %8015 = vmatprep.subr.bf16.mxu0 %v5013
    %8016 = vmatpush1.bf16.msra.mxu0 %v5012
    %8017 = vmatprep.subr.bf16.mxu0 %v5017
    %8018 = vmatpush1.bf16.msra.mxu0 %v5016
    %8019 = vmatprep.subr.bf16.mxu0 %v5021
    %8020 = vmatpush1.bf16.msra.mxu0 %v5020
    %8021 = vmatprep.subr.bf16.mxu0 %v5025
    %8022 = vmatpush1.bf16.msra.mxu0 %v5024
    %8023 = vmatprep.subr.bf16.mxu0 %v5029
    %8024 = vmatpush1.bf16.msra.mxu0 %v5028
    %8025 = vmatprep.subr.bf16.mxu0 %v5033
    %8026 = vmatpush1.bf16.msra.mxu0 %v5032
    %8027 = vmatprep.subr.bf16.mxu0 %v5037
    %8028 = vmatpush1.bf16.msra.mxu0 %v5036
    %8029 = vmatprep.subr.bf16.mxu0 %v5041
    %8030 = vmatpush1.bf16.msra.mxu0 %v5040
    %8031 = vmatprep.subr.bf16.mxu0 %v5045
    %8032 = vmatpush1.bf16.msra.mxu0 %v5044
    %8033 = vmatprep.mubr.bf16.mxu0 %v1253
    %8034 = vmatmul.mubr.bf16.gmra.mrb[0].mxu0 %v1251
    %v8035 = vpop.f32.mrb[0].mxu0
    %v8036 = vadd.f32 %v7995, %v8035
    %v8037 = vpop.f32.mrb[0].mxu0
    %v8038 = vadd.f32 %v7997, %v8037
    %v8039 = vpop.f32.mrb[0].mxu0
    %v8040 = vpop.f32.mrb[0].mxu0
    %8041 = vdwg.mxu0
    %8042 = vmatprep.subr.bf16.mxu0 %v5049
    %8043 = vmatpush1.bf16.msra.mxu0 %v5048
    %8044 = vmatprep.subr.bf16.mxu0 %v5053
    %8045 = vmatpush1.bf16.msra.mxu0 %v5052
    %8046 = vmatprep.subr.bf16.mxu0 %v5057
    %8047 = vmatpush1.bf16.msra.mxu0 %v5056
    %8048 = vmatprep.subr.bf16.mxu0 %v5061
    %8049 = vmatpush1.bf16.msra.mxu0 %v5060
    %8050 = vmatprep.subr.bf16.mxu0 %v5065
    %8051 = vmatpush1.bf16.msra.mxu0 %v5064
    %8052 = vmatprep.subr.bf16.mxu0 %v5069
    %8053 = vmatpush1.bf16.msra.mxu0 %v5068
    %8054 = vmatprep.subr.bf16.mxu0 %v5073
    %8055 = vmatpush1.bf16.msra.mxu0 %v5072
    %8056 = vmatprep.subr.bf16.mxu0 %v5077
    %8057 = vmatpush1.bf16.msra.mxu0 %v5076
    %8058 = vmatprep.subr.bf16.mxu0 %v5081
    %8059 = vmatpush1.bf16.msra.mxu0 %v5080
    %8060 = vmatprep.subr.bf16.mxu0 %v5085
    %8061 = vmatpush1.bf16.msra.mxu0 %v5084
    %8062 = vmatprep.subr.bf16.mxu0 %v5089
    %8063 = vmatpush1.bf16.msra.mxu0 %v5088
    %8064 = vmatprep.subr.bf16.mxu0 %v5093
    %8065 = vmatpush1.bf16.msra.mxu0 %v5092
    %8066 = vmatprep.subr.bf16.mxu0 %v5097
    %8067 = vmatpush1.bf16.msra.mxu0 %v5096
    %8068 = vmatprep.subr.bf16.mxu0 %v5101
    %8069 = vmatpush1.bf16.msra.mxu0 %v5100
    %8070 = vmatprep.subr.bf16.mxu0 %v5105
    %8071 = vmatpush1.bf16.msra.mxu0 %v5104
    %8072 = vmatprep.subr.bf16.mxu0 %v5109
    %8073 = vmatpush1.bf16.msra.mxu0 %v5108
    %8074 = vmatprep.mubr.bf16.mxu0 %v1250
    %8075 = vmatmul.mubr.bf16.gmra.mrb[0].mxu0 %v1236
    %v8076 = vpop.f32.mrb[0].mxu0
    %v8077 = vadd.f32 %v8036, %v8076
    %v8078 = vpop.f32.mrb[0].mxu0
    %v8079 = vadd.f32 %v8038, %v8078
    %v8080 = vpop.f32.mrb[0].mxu0
    %v8081 = vpop.f32.mrb[0].mxu0
    %8082 = vdwg.mxu0
    %8083 = vmatprep.subr.bf16.mxu0 %v5113
    %8084 = vmatpush1.bf16.msra.mxu0 %v5112
    %8085 = vmatprep.subr.bf16.mxu0 %v5117
    %8086 = vmatpush1.bf16.msra.mxu0 %v5116
    %8087 = vmatprep.subr.bf16.mxu0 %v5121
    %8088 = vmatpush1.bf16.msra.mxu0 %v5120
    %8089 = vmatprep.subr.bf16.mxu0 %v5125
    %8090 = vmatpush1.bf16.msra.mxu0 %v5124
    %8091 = vmatprep.subr.bf16.mxu0 %v5129
    %8092 = vmatpush1.bf16.msra.mxu0 %v5128
    %8093 = vmatprep.subr.bf16.mxu0 %v5133
    %8094 = vmatpush1.bf16.msra.mxu0 %v5132
    %8095 = vmatprep.subr.bf16.mxu0 %v5137
    %8096 = vmatpush1.bf16.msra.mxu0 %v5136
    %8097 = vmatprep.subr.bf16.mxu0 %v5141
    %8098 = vmatpush1.bf16.msra.mxu0 %v5140
    %8099 = vmatprep.subr.bf16.mxu0 %v5145
    %8100 = vmatpush1.bf16.msra.mxu0 %v5144
    %8101 = vmatprep.subr.bf16.mxu0 %v5149
    %8102 = vmatpush1.bf16.msra.mxu0 %v5148
    %8103 = vmatprep.subr.bf16.mxu0 %v5153
    %8104 = vmatpush1.bf16.msra.mxu0 %v5152
    %8105 = vmatprep.subr.bf16.mxu0 %v5157
    %8106 = vmatpush1.bf16.msra.mxu0 %v5156
    %8107 = vmatprep.subr.bf16.mxu0 %v5161
    %8108 = vmatpush1.bf16.msra.mxu0 %v5160
    %8109 = vmatprep.subr.bf16.mxu0 %v5165
    %8110 = vmatpush1.bf16.msra.mxu0 %v5164
    %8111 = vmatprep.subr.bf16.mxu0 %v5169
    %8112 = vmatpush1.bf16.msra.mxu0 %v5168
    %8113 = vmatprep.subr.bf16.mxu0 %v5173
    %8114 = vmatpush1.bf16.msra.mxu0 %v5172
    %8115 = vmatprep.mubr.bf16.mxu0 %v1254
    %8116 = vmatmul.mubr.bf16.gmra.mrb[0].mxu0 %v1252
    %v8117 = vpop.f32.mrb[0].mxu0
    %v8118 = vadd.f32 %v8077, %v8117
    %v8119 = vpop.f32.mrb[0].mxu0
    %v8120 = vadd.f32 %v8079, %v8119
    %v8121 = vpop.f32.mrb[0].mxu0
    %v8122 = vpop.f32.mrb[0].mxu0
    %8123 = vdwg.mxu0
    %8124 = vmatprep.subr.bf16.mxu0 %v5177
    %8125 = vmatpush1.bf16.msra.mxu0 %v5176
    %8126 = vmatprep.subr.bf16.mxu0 %v5181
    %8127 = vmatpush1.bf16.msra.mxu0 %v5180
    %8128 = vmatprep.subr.bf16.mxu0 %v5185
    %8129 = vmatpush1.bf16.msra.mxu0 %v5184
    %8130 = vmatprep.subr.bf16.mxu0 %v5189
    %8131 = vmatpush1.bf16.msra.mxu0 %v5188
    %8132 = vmatprep.subr.bf16.mxu0 %v5193
    %8133 = vmatpush1.bf16.msra.mxu0 %v5192
    %8134 = vmatprep.subr.bf16.mxu0 %v5197
    %8135 = vmatpush1.bf16.msra.mxu0 %v5196
    %8136 = vmatprep.subr.bf16.mxu0 %v5201
    %8137 = vmatpush1.bf16.msra.mxu0 %v5200
    %8138 = vmatprep.subr.bf16.mxu0 %v5205
    %8139 = vmatpush1.bf16.msra.mxu0 %v5204
    %8140 = vmatprep.subr.bf16.mxu0 %v5209
    %8141 = vmatpush1.bf16.msra.mxu0 %v5208
    %8142 = vmatprep.subr.bf16.mxu0 %v5213
    %8143 = vmatpush1.bf16.msra.mxu0 %v5212
    %8144 = vmatprep.subr.bf16.mxu0 %v5217
    %8145 = vmatpush1.bf16.msra.mxu0 %v5216
    %8146 = vmatprep.subr.bf16.mxu0 %v5221
    %8147 = vmatpush1.bf16.msra.mxu0 %v5220
    %8148 = vmatprep.subr.bf16.mxu0 %v5225
    %8149 = vmatpush1.bf16.msra.mxu0 %v5224
    %8150 = vmatprep.subr.bf16.mxu0 %v5229
    %8151 = vmatpush1.bf16.msra.mxu0 %v5228
    %8152 = vmatprep.subr.bf16.mxu0 %v5233
    %8153 = vmatpush1.bf16.msra.mxu0 %v5232
    %8154 = vmatprep.subr.bf16.mxu0 %v5237
    %8155 = vmatpush1.bf16.msra.mxu0 %v5236
    %8156 = vmatprep.mubr.bf16.mxu0 %v1292
    %8157 = vmatmul.mubr.bf16.gmra.mrb[0].mxu0 %v1278
    %v8158 = vpop.f32.mrb[0].mxu0
    %v8159 = vadd.f32 %v8118, %v8158
    %v8160 = vpop.f32.mrb[0].mxu0
    %v8161 = vadd.f32 %v8120, %v8160
    %v8162 = vpop.f32.mrb[0].mxu0
    %v8163 = vpop.f32.mrb[0].mxu0
    %8164 = vdwg.mxu0
    %8165 = vmatprep.subr.bf16.mxu0 %v5241
    %8166 = vmatpush1.bf16.msra.mxu0 %v5240
    %8167 = vmatprep.subr.bf16.mxu0 %v5245
    %8168 = vmatpush1.bf16.msra.mxu0 %v5244
    %8169 = vmatprep.subr.bf16.mxu0 %v5249
    %8170 = vmatpush1.bf16.msra.mxu0 %v5248
    %8171 = vmatprep.subr.bf16.mxu0 %v5253
    %8172 = vmatpush1.bf16.msra.mxu0 %v5252
    %8173 = vmatprep.subr.bf16.mxu0 %v5257
    %8174 = vmatpush1.bf16.msra.mxu0 %v5256
    %8175 = vmatprep.subr.bf16.mxu0 %v5261
    %8176 = vmatpush1.bf16.msra.mxu0 %v5260
    %8177 = vmatprep.subr.bf16.mxu0 %v5265
    %8178 = vmatpush1.bf16.msra.mxu0 %v5264
    %8179 = vmatprep.subr.bf16.mxu0 %v5269
    %8180 = vmatpush1.bf16.msra.mxu0 %v5268
    %8181 = vmatprep.subr.bf16.mxu0 %v5273
    %8182 = vmatpush1.bf16.msra.mxu0 %v5272
    %8183 = vmatprep.subr.bf16.mxu0 %v5277
    %8184 = vmatpush1.bf16.msra.mxu0 %v5276
    %8185 = vmatprep.subr.bf16.mxu0 %v5281
    %8186 = vmatpush1.bf16.msra.mxu0 %v5280
    %8187 = vmatprep.subr.bf16.mxu0 %v5285
    %8188 = vmatpush1.bf16.msra.mxu0 %v5284
    %8189 = vmatprep.subr.bf16.mxu0 %v5289
    %8190 = vmatpush1.bf16.msra.mxu0 %v5288
    %8191 = vmatprep.subr.bf16.mxu0 %v5293
    %8192 = vmatpush1.bf16.msra.mxu0 %v5292
    %8193 = vmatprep.subr.bf16.mxu0 %v5297
    %8194 = vmatpush1.bf16.msra.mxu0 %v5296
    %8195 = vmatprep.subr.bf16.mxu0 %v5301
    %8196 = vmatpush1.bf16.msra.mxu0 %v5300
    %8197 = vmatprep.mubr.bf16.mxu0 %v1302
    %8198 = vmatmul.mubr.bf16.gmra.mrb[0].mxu0 %v1300
    %v8199 = vpop.f32.mrb[0].mxu0
    %v8200 = vadd.f32 %v8159, %v8199
    %v8201 = vpop.f32.mrb[0].mxu0
    %v8202 = vadd.f32 %v8161, %v8201
    %v8203 = vpop.f32.mrb[0].mxu0
    %v8204 = vpop.f32.mrb[0].mxu0
    %8205 = vdwg.mxu0
    %8206 = vmatprep.subr.bf16.mxu0 %v5305
    %8207 = vmatpush1.bf16.msra.mxu0 %v5304
    %8208 = vmatprep.subr.bf16.mxu0 %v5309
    %8209 = vmatpush1.bf16.msra.mxu0 %v5308
    %8210 = vmatprep.subr.bf16.mxu0 %v5313
    %8211 = vmatpush1.bf16.msra.mxu0 %v5312
    %8212 = vmatprep.subr.bf16.mxu0 %v5317
    %8213 = vmatpush1.bf16.msra.mxu0 %v5316
    %8214 = vmatprep.subr.bf16.mxu0 %v5321
    %8215 = vmatpush1.bf16.msra.mxu0 %v5320
    %8216 = vmatprep.subr.bf16.mxu0 %v5325
    %8217 = vmatpush1.bf16.msra.mxu0 %v5324
    %8218 = vmatprep.subr.bf16.mxu0 %v5329
    %8219 = vmatpush1.bf16.msra.mxu0 %v5328
    %8220 = vmatprep.subr.bf16.mxu0 %v5333
    %8221 = vmatpush1.bf16.msra.mxu0 %v5332
    %8222 = vmatprep.subr.bf16.mxu0 %v5337
    %8223 = vmatpush1.bf16.msra.mxu0 %v5336
    %8224 = vmatprep.subr.bf16.mxu0 %v5341
    %8225 = vmatpush1.bf16.msra.mxu0 %v5340
    %8226 = vmatprep.subr.bf16.mxu0 %v5345
    %8227 = vmatpush1.bf16.msra.mxu0 %v5344
    %8228 = vmatprep.subr.bf16.mxu0 %v5349
    %8229 = vmatpush1.bf16.msra.mxu0 %v5348
    %8230 = vmatprep.subr.bf16.mxu0 %v5353
    %8231 = vmatpush1.bf16.msra.mxu0 %v5352
    %8232 = vmatprep.subr.bf16.mxu0 %v5357
    %8233 = vmatpush1.bf16.msra.mxu0 %v5356
    %8234 = vmatprep.subr.bf16.mxu0 %v5361
    %8235 = vmatpush1.bf16.msra.mxu0 %v5360
    %8236 = vmatprep.subr.bf16.mxu0 %v5365
    %8237 = vmatpush1.bf16.msra.mxu0 %v5364
    %8238 = vmatprep.mubr.bf16.mxu0 %v1299
    %8239 = vmatmul.mubr.bf16.gmra.mrb[0].mxu0 %v1285
    %v8240 = vpop.f32.mrb[0].mxu0
    %v8241 = vadd.f32 %v8200, %v8240
    %v8242 = vpop.f32.mrb[0].mxu0
    %v8243 = vadd.f32 %v8202, %v8242
    %v8244 = vpop.f32.mrb[0].mxu0
    %v8245 = vpop.f32.mrb[0].mxu0
    %8246 = vdwg.mxu0
    %8247 = vmatprep.subr.bf16.mxu0 %v5369
    %8248 = vmatpush1.bf16.msra.mxu0 %v5368
    %8249 = vmatprep.subr.bf16.mxu0 %v5373
    %8250 = vmatpush1.bf16.msra.mxu0 %v5372
    %8251 = vmatprep.subr.bf16.mxu0 %v5377
    %8252 = vmatpush1.bf16.msra.mxu0 %v5376
    %8253 = vmatprep.subr.bf16.mxu0 %v5381
    %8254 = vmatpush1.bf16.msra.mxu0 %v5380
    %8255 = vmatprep.subr.bf16.mxu0 %v5385
    %8256 = vmatpush1.bf16.msra.mxu0 %v5384
    %8257 = vmatprep.subr.bf16.mxu0 %v5389
    %8258 = vmatpush1.bf16.msra.mxu0 %v5388
    %8259 = vmatprep.subr.bf16.mxu0 %v5393
    %8260 = vmatpush1.bf16.msra.mxu0 %v5392
    %8261 = vmatprep.subr.bf16.mxu0 %v5397
    %8262 = vmatpush1.bf16.msra.mxu0 %v5396
    %8263 = vmatprep.subr.bf16.mxu0 %v5401
    %8264 = vmatpush1.bf16.msra.mxu0 %v5400
    %8265 = vmatprep.subr.bf16.mxu0 %v5405
    %8266 = vmatpush1.bf16.msra.mxu0 %v5404
    %8267 = vmatprep.subr.bf16.mxu0 %v5409
    %8268 = vmatpush1.bf16.msra.mxu0 %v5408
    %8269 = vmatprep.subr.bf16.mxu0 %v5413
    %8270 = vmatpush1.bf16.msra.mxu0 %v5412
    %8271 = vmatprep.subr.bf16.mxu0 %v5417
    %8272 = vmatpush1.bf16.msra.mxu0 %v5416
    %8273 = vmatprep.subr.bf16.mxu0 %v5421
    %8274 = vmatpush1.bf16.msra.mxu0 %v5420
    %8275 = vmatprep.subr.bf16.mxu0 %v5425
    %8276 = vmatpush1.bf16.msra.mxu0 %v5424
    %8277 = vmatprep.subr.bf16.mxu0 %v5429
    %8278 = vmatpush1.bf16.msra.mxu0 %v5428
    %8279 = vmatprep.mubr.bf16.mxu0 %v1303
    %8280 = vmatmul.mubr.bf16.gmra.mrb[0].mxu0 %v1301
    %v8281 = vpop.f32.mrb[0].mxu0
    %v8282 = vadd.f32 %v8241, %v8281
    %v8283 = vpop.f32.mrb[0].mxu0
    %v8284 = vadd.f32 %v8243, %v8283
    %v8285 = vpop.f32.mrb[0].mxu0
    %v8286 = vpop.f32.mrb[0].mxu0
    %8287 = vdwg.mxu0
    %8288 = vmatprep.subr.bf16.mxu0 %v5433
    %8289 = vmatpush1.bf16.msra.mxu0 %v5432
    %8290 = vmatprep.subr.bf16.mxu0 %v5437
    %8291 = vmatpush1.bf16.msra.mxu0 %v5436
    %8292 = vmatprep.subr.bf16.mxu0 %v5441
    %8293 = vmatpush1.bf16.msra.mxu0 %v5440
    %8294 = vmatprep.subr.bf16.mxu0 %v5445
    %8295 = vmatpush1.bf16.msra.mxu0 %v5444
    %8296 = vmatprep.subr.bf16.mxu0 %v5449
    %8297 = vmatpush1.bf16.msra.mxu0 %v5448
    %8298 = vmatprep.subr.bf16.mxu0 %v5453
    %8299 = vmatpush1.bf16.msra.mxu0 %v5452
    %8300 = vmatprep.subr.bf16.mxu0 %v5457
    %8301 = vmatpush1.bf16.msra.mxu0 %v5456
    %8302 = vmatprep.subr.bf16.mxu0 %v5461
    %8303 = vmatpush1.bf16.msra.mxu0 %v5460
    %8304 = vmatprep.subr.bf16.mxu0 %v5465
    %8305 = vmatpush1.bf16.msra.mxu0 %v5464
    %8306 = vmatprep.subr.bf16.mxu0 %v5469
    %8307 = vmatpush1.bf16.msra.mxu0 %v5468
    %8308 = vmatprep.subr.bf16.mxu0 %v5473
    %8309 = vmatpush1.bf16.msra.mxu0 %v5472
    %8310 = vmatprep.subr.bf16.mxu0 %v5477
    %8311 = vmatpush1.bf16.msra.mxu0 %v5476
    %8312 = vmatprep.subr.bf16.mxu0 %v5481
    %8313 = vmatpush1.bf16.msra.mxu0 %v5480
    %8314 = vmatprep.subr.bf16.mxu0 %v5485
    %8315 = vmatpush1.bf16.msra.mxu0 %v5484
    %8316 = vmatprep.subr.bf16.mxu0 %v5489
    %8317 = vmatpush1.bf16.msra.mxu0 %v5488
    %8318 = vmatprep.subr.bf16.mxu0 %v5493
    %8319 = vmatpush1.bf16.msra.mxu0 %v5492
    %8320 = vmatprep.mubr.bf16.mxu0 %v1341
    %8321 = vmatmul.mubr.bf16.gmra.mrb[0].mxu0 %v1327
    %v8322 = vpop.f32.mrb[0].mxu0
    %v8323 = vadd.f32 %v8282, %v8322
    %v8324 = vpop.f32.mrb[0].mxu0
    %v8325 = vadd.f32 %v8284, %v8324
    %v8326 = vpop.f32.mrb[0].mxu0
    %v8327 = vpop.f32.mrb[0].mxu0
    %8328 = vdwg.mxu0
    %8329 = vmatprep.subr.bf16.mxu0 %v5497
    %8330 = vmatpush1.bf16.msra.mxu0 %v5496
    %8331 = vmatprep.subr.bf16.mxu0 %v5501
    %8332 = vmatpush1.bf16.msra.mxu0 %v5500
    %8333 = vmatprep.subr.bf16.mxu0 %v5505
    %8334 = vmatpush1.bf16.msra.mxu0 %v5504
    %8335 = vmatprep.subr.bf16.mxu0 %v5509
    %8336 = vmatpush1.bf16.msra.mxu0 %v5508
    %8337 = vmatprep.subr.bf16.mxu0 %v5513
    %8338 = vmatpush1.bf16.msra.mxu0 %v5512
    %8339 = vmatprep.subr.bf16.mxu0 %v5517
    %8340 = vmatpush1.bf16.msra.mxu0 %v5516
    %8341 = vmatprep.subr.bf16.mxu0 %v5521
    %8342 = vmatpush1.bf16.msra.mxu0 %v5520
    %8343 = vmatprep.subr.bf16.mxu0 %v5525
    %8344 = vmatpush1.bf16.msra.mxu0 %v5524
    %8345 = vmatprep.subr.bf16.mxu0 %v5529
    %8346 = vmatpush1.bf16.msra.mxu0 %v5528
    %8347 = vmatprep.subr.bf16.mxu0 %v5533
    %8348 = vmatpush1.bf16.msra.mxu0 %v5532
    %8349 = vmatprep.subr.bf16.mxu0 %v5537
    %8350 = vmatpush1.bf16.msra.mxu0 %v5536
    %8351 = vmatprep.subr.bf16.mxu0 %v5541
    %8352 = vmatpush1.bf16.msra.mxu0 %v5540
    %8353 = vmatprep.subr.bf16.mxu0 %v5545
    %8354 = vmatpush1.bf16.msra.mxu0 %v5544
    %8355 = vmatprep.subr.bf16.mxu0 %v5549
    %8356 = vmatpush1.bf16.msra.mxu0 %v5548
    %8357 = vmatprep.subr.bf16.mxu0 %v5553
    %8358 = vmatpush1.bf16.msra.mxu0 %v5552
    %8359 = vmatprep.subr.bf16.mxu0 %v5557
    %8360 = vmatpush1.bf16.msra.mxu0 %v5556
    %8361 = vmatprep.mubr.bf16.mxu0 %v1351
    %8362 = vmatmul.mubr.bf16.gmra.mrb[0].mxu0 %v1349
    %v8363 = vpop.f32.mrb[0].mxu0
    %v8364 = vadd.f32 %v8323, %v8363
    %v8365 = vpop.f32.mrb[0].mxu0
    %v8366 = vadd.f32 %v8325, %v8365
    %v8367 = vpop.f32.mrb[0].mxu0
    %v8368 = vpop.f32.mrb[0].mxu0
    %8369 = vdwg.mxu0
    %8370 = vmatprep.subr.bf16.mxu0 %v5561
    %8371 = vmatpush1.bf16.msra.mxu0 %v5560
    %8372 = vmatprep.subr.bf16.mxu0 %v5565
    %8373 = vmatpush1.bf16.msra.mxu0 %v5564
    %8374 = vmatprep.subr.bf16.mxu0 %v5569
    %8375 = vmatpush1.bf16.msra.mxu0 %v5568
    %8376 = vmatprep.subr.bf16.mxu0 %v5573
    %8377 = vmatpush1.bf16.msra.mxu0 %v5572
    %8378 = vmatprep.subr.bf16.mxu0 %v5577
    %8379 = vmatpush1.bf16.msra.mxu0 %v5576
    %8380 = vmatprep.subr.bf16.mxu0 %v5581
    %8381 = vmatpush1.bf16.msra.mxu0 %v5580
    %8382 = vmatprep.subr.bf16.mxu0 %v5585
    %8383 = vmatpush1.bf16.msra.mxu0 %v5584
    %8384 = vmatprep.subr.bf16.mxu0 %v5589
    %8385 = vmatpush1.bf16.msra.mxu0 %v5588
    %8386 = vmatprep.subr.bf16.mxu0 %v5593
    %8387 = vmatpush1.bf16.msra.mxu0 %v5592
    %8388 = vmatprep.subr.bf16.mxu0 %v5597
    %8389 = vmatpush1.bf16.msra.mxu0 %v5596
    %8390 = vmatprep.subr.bf16.mxu0 %v5601
    %8391 = vmatpush1.bf16.msra.mxu0 %v5600
    %8392 = vmatprep.subr.bf16.mxu0 %v5605
    %8393 = vmatpush1.bf16.msra.mxu0 %v5604
    %8394 = vmatprep.subr.bf16.mxu0 %v5609
    %8395 = vmatpush1.bf16.msra.mxu0 %v5608
    %8396 = vmatprep.subr.bf16.mxu0 %v5613
    %8397 = vmatpush1.bf16.msra.mxu0 %v5612
    %8398 = vmatprep.subr.bf16.mxu0 %v5617
    %8399 = vmatpush1.bf16.msra.mxu0 %v5616
    %8400 = vmatprep.subr.bf16.mxu0 %v5621
    %8401 = vmatpush1.bf16.msra.mxu0 %v5620
    %8402 = vmatprep.mubr.bf16.mxu0 %v1348
    %8403 = vmatmul.mubr.bf16.gmra.mrb[0].mxu0 %v1334
    %v8404 = vpop.f32.mrb[0].mxu0
    %v8405 = vadd.f32 %v8364, %v8404
    %v8406 = vpop.f32.mrb[0].mxu0
    %v8407 = vadd.f32 %v8366, %v8406
    %v8408 = vpop.f32.mrb[0].mxu0
    %v8409 = vpop.f32.mrb[0].mxu0
    %8410 = vdwg.mxu0
    %8411 = vmatprep.subr.bf16.mxu0 %v5625
    %8412 = vmatpush1.bf16.msra.mxu0 %v5624
    %8413 = vmatprep.subr.bf16.mxu0 %v5629
    %8414 = vmatpush1.bf16.msra.mxu0 %v5628
    %8415 = vmatprep.subr.bf16.mxu0 %v5633
    %8416 = vmatpush1.bf16.msra.mxu0 %v5632
    %8417 = vmatprep.subr.bf16.mxu0 %v5637
    %8418 = vmatpush1.bf16.msra.mxu0 %v5636
    %8419 = vmatprep.subr.bf16.mxu0 %v5641
    %8420 = vmatpush1.bf16.msra.mxu0 %v5640
    %8421 = vmatprep.subr.bf16.mxu0 %v5645
    %8422 = vmatpush1.bf16.msra.mxu0 %v5644
    %8423 = vmatprep.subr.bf16.mxu0 %v5649
    %8424 = vmatpush1.bf16.msra.mxu0 %v5648
    %8425 = vmatprep.subr.bf16.mxu0 %v5653
    %8426 = vmatpush1.bf16.msra.mxu0 %v5652
    %8427 = vmatprep.subr.bf16.mxu0 %v5657
    %8428 = vmatpush1.bf16.msra.mxu0 %v5656
    %8429 = vmatprep.subr.bf16.mxu0 %v5661
    %8430 = vmatpush1.bf16.msra.mxu0 %v5660
    %8431 = vmatprep.subr.bf16.mxu0 %v5665
    %8432 = vmatpush1.bf16.msra.mxu0 %v5664
    %8433 = vmatprep.subr.bf16.mxu0 %v5669
    %8434 = vmatpush1.bf16.msra.mxu0 %v5668
    %8435 = vmatprep.subr.bf16.mxu0 %v5673
    %8436 = vmatpush1.bf16.msra.mxu0 %v5672
    %8437 = vmatprep.subr.bf16.mxu0 %v5677
    %8438 = vmatpush1.bf16.msra.mxu0 %v5676
    %8439 = vmatprep.subr.bf16.mxu0 %v5681
    %8440 = vmatpush1.bf16.msra.mxu0 %v5680
    %8441 = vmatprep.subr.bf16.mxu0 %v5685
    %8442 = vmatpush1.bf16.msra.mxu0 %v5684
    %8443 = vmatprep.mubr.bf16.mxu0 %v1352
    %8444 = vmatmul.mubr.bf16.gmra.mrb[0].mxu0 %v1350
    %v8445 = vpop.f32.mrb[0].mxu0
    %v8446 = vadd.f32 %v8405, %v8445
    %v8447 = vpop.f32.mrb[0].mxu0
    %v8448 = vadd.f32 %v8407, %v8447
    %v8449 = vpop.f32.mrb[0].mxu0
    %v8450 = vpop.f32.mrb[0].mxu0
    %8451 = vdwg.mxu0
    %8452 = vmatprep.subr.bf16.mxu0 %v5689
    %8453 = vmatpush1.bf16.msra.mxu0 %v5688
    %8454 = vmatprep.subr.bf16.mxu0 %v5693
    %8455 = vmatpush1.bf16.msra.mxu0 %v5692
    %8456 = vmatprep.subr.bf16.mxu0 %v5697
    %8457 = vmatpush1.bf16.msra.mxu0 %v5696
    %8458 = vmatprep.subr.bf16.mxu0 %v5701
    %8459 = vmatpush1.bf16.msra.mxu0 %v5700
    %8460 = vmatprep.subr.bf16.mxu0 %v5705
    %8461 = vmatpush1.bf16.msra.mxu0 %v5704
    %8462 = vmatprep.subr.bf16.mxu0 %v5709
    %8463 = vmatpush1.bf16.msra.mxu0 %v5708
    %8464 = vmatprep.subr.bf16.mxu0 %v5713
    %8465 = vmatpush1.bf16.msra.mxu0 %v5712
    %8466 = vmatprep.subr.bf16.mxu0 %v5717
    %8467 = vmatpush1.bf16.msra.mxu0 %v5716
    %8468 = vmatprep.subr.bf16.mxu0 %v5721
    %8469 = vmatpush1.bf16.msra.mxu0 %v5720
    %8470 = vmatprep.subr.bf16.mxu0 %v5725
    %8471 = vmatpush1.bf16.msra.mxu0 %v5724
    %8472 = vmatprep.subr.bf16.mxu0 %v5729
    %8473 = vmatpush1.bf16.msra.mxu0 %v5728
    %8474 = vmatprep.subr.bf16.mxu0 %v5733
    %8475 = vmatpush1.bf16.msra.mxu0 %v5732
    %8476 = vmatprep.subr.bf16.mxu0 %v5737
    %8477 = vmatpush1.bf16.msra.mxu0 %v5736
    %8478 = vmatprep.subr.bf16.mxu0 %v5741
    %8479 = vmatpush1.bf16.msra.mxu0 %v5740
    %8480 = vmatprep.subr.bf16.mxu0 %v5745
    %8481 = vmatpush1.bf16.msra.mxu0 %v5744
    %8482 = vmatprep.subr.bf16.mxu0 %v5749
    %8483 = vmatpush1.bf16.msra.mxu0 %v5748
    %8484 = vmatprep.mubr.bf16.mxu0 %v1390
    %8485 = vmatmul.mubr.bf16.gmra.mrb[0].mxu0 %v1376
    %v8486 = vpop.f32.mrb[0].mxu0
    %v8487 = vadd.f32 %v8446, %v8486
    %v8488 = vpop.f32.mrb[0].mxu0
    %v8489 = vadd.f32 %v8448, %v8488
    %v8490 = vpop.f32.mrb[0].mxu0
    %v8491 = vpop.f32.mrb[0].mxu0
    %8492 = vdwg.mxu0
    %8493 = vmatprep.subr.bf16.mxu0 %v5753
    %8494 = vmatpush1.bf16.msra.mxu0 %v5752
    %8495 = vmatprep.subr.bf16.mxu0 %v5757
    %8496 = vmatpush1.bf16.msra.mxu0 %v5756
    %8497 = vmatprep.subr.bf16.mxu0 %v5761
    %8498 = vmatpush1.bf16.msra.mxu0 %v5760
    %8499 = vmatprep.subr.bf16.mxu0 %v5765
    %8500 = vmatpush1.bf16.msra.mxu0 %v5764
    %8501 = vmatprep.subr.bf16.mxu0 %v5769
    %8502 = vmatpush1.bf16.msra.mxu0 %v5768
    %8503 = vmatprep.subr.bf16.mxu0 %v5773
    %8504 = vmatpush1.bf16.msra.mxu0 %v5772
    %8505 = vmatprep.subr.bf16.mxu0 %v5777
    %8506 = vmatpush1.bf16.msra.mxu0 %v5776
    %8507 = vmatprep.subr.bf16.mxu0 %v5781
    %8508 = vmatpush1.bf16.msra.mxu0 %v5780
    %8509 = vmatprep.subr.bf16.mxu0 %v5785
    %8510 = vmatpush1.bf16.msra.mxu0 %v5784
    %8511 = vmatprep.subr.bf16.mxu0 %v5789
    %8512 = vmatpush1.bf16.msra.mxu0 %v5788
    %8513 = vmatprep.subr.bf16.mxu0 %v5793
    %8514 = vmatpush1.bf16.msra.mxu0 %v5792
    %8515 = vmatprep.subr.bf16.mxu0 %v5797
    %8516 = vmatpush1.bf16.msra.mxu0 %v5796
    %8517 = vmatprep.subr.bf16.mxu0 %v5801
    %8518 = vmatpush1.bf16.msra.mxu0 %v5800
    %8519 = vmatprep.subr.bf16.mxu0 %v5805
    %8520 = vmatpush1.bf16.msra.mxu0 %v5804
    %8521 = vmatprep.subr.bf16.mxu0 %v5809
    %8522 = vmatpush1.bf16.msra.mxu0 %v5808
    %8523 = vmatprep.subr.bf16.mxu0 %v5813
    %8524 = vmatpush1.bf16.msra.mxu0 %v5812
    %8525 = vmatprep.mubr.bf16.mxu0 %v1400
    %8526 = vmatmul.mubr.bf16.gmra.mrb[0].mxu0 %v1398
    %v8527 = vpop.f32.mrb[0].mxu0
    %v8528 = vadd.f32 %v8487, %v8527
    %v8529 = vpop.f32.mrb[0].mxu0
    %v8530 = vadd.f32 %v8489, %v8529
    %v8531 = vpop.f32.mrb[0].mxu0
    %v8532 = vpop.f32.mrb[0].mxu0
    %8533 = vdwg.mxu0
    %8534 = vmatprep.subr.bf16.mxu0 %v5817
    %8535 = vmatpush1.bf16.msra.mxu0 %v5816
    %8536 = vmatprep.subr.bf16.mxu0 %v5821
    %8537 = vmatpush1.bf16.msra.mxu0 %v5820
    %8538 = vmatprep.subr.bf16.mxu0 %v5825
    %8539 = vmatpush1.bf16.msra.mxu0 %v5824
    %8540 = vmatprep.subr.bf16.mxu0 %v5829
    %8541 = vmatpush1.bf16.msra.mxu0 %v5828
    %8542 = vmatprep.subr.bf16.mxu0 %v5833
    %8543 = vmatpush1.bf16.msra.mxu0 %v5832
    %8544 = vmatprep.subr.bf16.mxu0 %v5837
    %8545 = vmatpush1.bf16.msra.mxu0 %v5836
    %8546 = vmatprep.subr.bf16.mxu0 %v5841
    %8547 = vmatpush1.bf16.msra.mxu0 %v5840
    %8548 = vmatprep.subr.bf16.mxu0 %v5845
    %8549 = vmatpush1.bf16.msra.mxu0 %v5844
    %8550 = vmatprep.subr.bf16.mxu0 %v5849
    %8551 = vmatpush1.bf16.msra.mxu0 %v5848
    %8552 = vmatprep.subr.bf16.mxu0 %v5853
    %8553 = vmatpush1.bf16.msra.mxu0 %v5852
    %8554 = vmatprep.subr.bf16.mxu0 %v5857
    %8555 = vmatpush1.bf16.msra.mxu0 %v5856
    %8556 = vmatprep.subr.bf16.mxu0 %v5861
    %8557 = vmatpush1.bf16.msra.mxu0 %v5860
    %8558 = vmatprep.subr.bf16.mxu0 %v5865
    %8559 = vmatpush1.bf16.msra.mxu0 %v5864
    %8560 = vmatprep.subr.bf16.mxu0 %v5869
    %8561 = vmatpush1.bf16.msra.mxu0 %v5868
    %8562 = vmatprep.subr.bf16.mxu0 %v5873
    %8563 = vmatpush1.bf16.msra.mxu0 %v5872
    %8564 = vmatprep.subr.bf16.mxu0 %v5877
    %8565 = vmatpush1.bf16.msra.mxu0 %v5876
    %8566 = vmatprep.mubr.bf16.mxu0 %v1397
    %8567 = vmatmul.mubr.bf16.gmra.mrb[0].mxu0 %v1383
    %v8568 = vpop.f32.mrb[0].mxu0
    %v8569 = vadd.f32 %v8528, %v8568
    %v8570 = vpop.f32.mrb[0].mxu0
    %v8571 = vadd.f32 %v8530, %v8570
    %v8572 = vpop.f32.mrb[0].mxu0
    %v8573 = vpop.f32.mrb[0].mxu0
    %8574 = vdwg.mxu0
    %8575 = vmatprep.subr.bf16.mxu0 %v5881
    %8576 = vmatpush1.bf16.msra.mxu0 %v5880
    %8577 = vmatprep.subr.bf16.mxu0 %v5885
    %8578 = vmatpush1.bf16.msra.mxu0 %v5884
    %8579 = vmatprep.subr.bf16.mxu0 %v5889
    %8580 = vmatpush1.bf16.msra.mxu0 %v5888
    %8581 = vmatprep.subr.bf16.mxu0 %v5893
    %8582 = vmatpush1.bf16.msra.mxu0 %v5892
    %8583 = vmatprep.subr.bf16.mxu0 %v5897
    %8584 = vmatpush1.bf16.msra.mxu0 %v5896
    %8585 = vmatprep.subr.bf16.mxu0 %v5901
    %8586 = vmatpush1.bf16.msra.mxu0 %v5900
    %8587 = vmatprep.subr.bf16.mxu0 %v5905
    %8588 = vmatpush1.bf16.msra.mxu0 %v5904
    %8589 = vmatprep.subr.bf16.mxu0 %v5909
    %8590 = vmatpush1.bf16.msra.mxu0 %v5908
    %8591 = vmatprep.subr.bf16.mxu0 %v5913
    %8592 = vmatpush1.bf16.msra.mxu0 %v5912
    %8593 = vmatprep.subr.bf16.mxu0 %v5917
    %8594 = vmatpush1.bf16.msra.mxu0 %v5916
    %8595 = vmatprep.subr.bf16.mxu0 %v5921
    %8596 = vmatpush1.bf16.msra.mxu0 %v5920
    %8597 = vmatprep.subr.bf16.mxu0 %v5925
    %8598 = vmatpush1.bf16.msra.mxu0 %v5924
    %8599 = vmatprep.subr.bf16.mxu0 %v5929
    %8600 = vmatpush1.bf16.msra.mxu0 %v5928
    %8601 = vmatprep.subr.bf16.mxu0 %v5933
    %8602 = vmatpush1.bf16.msra.mxu0 %v5932
    %8603 = vmatprep.subr.bf16.mxu0 %v5937
    %8604 = vmatpush1.bf16.msra.mxu0 %v5936
    %8605 = vmatprep.subr.bf16.mxu0 %v5941
    %8606 = vmatpush1.bf16.msra.mxu0 %v5940
    %8607 = vmatprep.mubr.bf16.mxu0 %v1401
    %8608 = vmatmul.mubr.bf16.gmra.mrb[0].mxu0 %v1399
    %v8609 = vpop.f32.mrb[0].mxu0
    %v8610 = vadd.f32 %v8569, %v8609
    %v8611 = vpop.f32.mrb[0].mxu0
    %v8612 = vadd.f32 %v8571, %v8611
    %v8613 = vpop.f32.mrb[0].mxu0
    %v8614 = vpop.f32.mrb[0].mxu0
    %8615 = vdwg.mxu0
    %8616 = vmatprep.subr.bf16.mxu0 %v5945
    %8617 = vmatpush1.bf16.msra.mxu0 %v5944
    %8618 = vmatprep.subr.bf16.mxu0 %v5949
    %8619 = vmatpush1.bf16.msra.mxu0 %v5948
    %8620 = vmatprep.subr.bf16.mxu0 %v5953
    %8621 = vmatpush1.bf16.msra.mxu0 %v5952
    %8622 = vmatprep.subr.bf16.mxu0 %v5957
    %8623 = vmatpush1.bf16.msra.mxu0 %v5956
    %8624 = vmatprep.subr.bf16.mxu0 %v5961
    %8625 = vmatpush1.bf16.msra.mxu0 %v5960
    %8626 = vmatprep.subr.bf16.mxu0 %v5965
    %8627 = vmatpush1.bf16.msra.mxu0 %v5964
    %8628 = vmatprep.subr.bf16.mxu0 %v5969
    %8629 = vmatpush1.bf16.msra.mxu0 %v5968
    %8630 = vmatprep.subr.bf16.mxu0 %v5973
    %8631 = vmatpush1.bf16.msra.mxu0 %v5972
    %8632 = vmatprep.subr.bf16.mxu0 %v5977
    %8633 = vmatpush1.bf16.msra.mxu0 %v5976
    %8634 = vmatprep.subr.bf16.mxu0 %v5981
    %8635 = vmatpush1.bf16.msra.mxu0 %v5980
    %8636 = vmatprep.subr.bf16.mxu0 %v5985
    %8637 = vmatpush1.bf16.msra.mxu0 %v5984
    %8638 = vmatprep.subr.bf16.mxu0 %v5989
    %8639 = vmatpush1.bf16.msra.mxu0 %v5988
    %8640 = vmatprep.subr.bf16.mxu0 %v5993
    %8641 = vmatpush1.bf16.msra.mxu0 %v5992
    %8642 = vmatprep.subr.bf16.mxu0 %v5997
    %8643 = vmatpush1.bf16.msra.mxu0 %v5996
    %8644 = vmatprep.subr.bf16.mxu0 %v6001
    %8645 = vmatpush1.bf16.msra.mxu0 %v6000
    %8646 = vmatprep.subr.bf16.mxu0 %v6005
    %8647 = vmatpush1.bf16.msra.mxu0 %v6004
    %8648 = vmatprep.mubr.bf16.mxu0 %v1423
    %8649 = vmatmul.mubr.bf16.gmra.mrb[0].mxu0 %v1416
    %v8650 = vpop.f32.mrb[0].mxu0
    %v8651 = vadd.f32 %v8610, %v8650
    %v8652 = vpop.f32.mrb[0].mxu0
    %v8653 = vadd.f32 %v8612, %v8652
    %v8654 = vpop.f32.mrb[0].mxu0
    %v8655 = vpop.f32.mrb[0].mxu0
    %8656 = vdwg.mxu0
    %8657 = vmatprep.subr.bf16.mxu0 %v6009
    %8658 = vmatpush1.bf16.msra.mxu0 %v6008
    %8659 = vmatprep.subr.bf16.mxu0 %v6013
    %8660 = vmatpush1.bf16.msra.mxu0 %v6012
    %8661 = vmatprep.subr.bf16.mxu0 %v6017
    %8662 = vmatpush1.bf16.msra.mxu0 %v6016
    %8663 = vmatprep.subr.bf16.mxu0 %v6021
    %8664 = vmatpush1.bf16.msra.mxu0 %v6020
    %8665 = vmatprep.subr.bf16.mxu0 %v6025
    %8666 = vmatpush1.bf16.msra.mxu0 %v6024
    %8667 = vmatprep.subr.bf16.mxu0 %v6029
    %8668 = vmatpush1.bf16.msra.mxu0 %v6028
    %8669 = vmatprep.subr.bf16.mxu0 %v6033
    %8670 = vmatpush1.bf16.msra.mxu0 %v6032
    %8671 = vmatprep.subr.bf16.mxu0 %v6037
    %8672 = vmatpush1.bf16.msra.mxu0 %v6036
    %8673 = vmatprep.subr.bf16.mxu0 %v6041
    %8674 = vmatpush1.bf16.msra.mxu0 %v6040
    %8675 = vmatprep.subr.bf16.mxu0 %v6045
    %8676 = vmatpush1.bf16.msra.mxu0 %v6044
    %8677 = vmatprep.subr.bf16.mxu0 %v6049
    %8678 = vmatpush1.bf16.msra.mxu0 %v6048
    %8679 = vmatprep.subr.bf16.mxu0 %v6053
    %8680 = vmatpush1.bf16.msra.mxu0 %v6052
    %8681 = vmatprep.subr.bf16.mxu0 %v6057
    %8682 = vmatpush1.bf16.msra.mxu0 %v6056
    %8683 = vmatprep.subr.bf16.mxu0 %v6061
    %8684 = vmatpush1.bf16.msra.mxu0 %v6060
    %8685 = vmatprep.subr.bf16.mxu0 %v6065
    %8686 = vmatpush1.bf16.msra.mxu0 %v6064
    %8687 = vmatprep.subr.bf16.mxu0 %v6069
    %8688 = vmatpush1.bf16.msra.mxu0 %v6068
    %8689 = vmatprep.mubr.bf16.mxu0 %v1425
    %8690 = vmatmul.mubr.bf16.gmra.mrb[0].mxu0 %v1424
    %v8691 = vpop.f32.mrb[0].mxu0
    %v8692 = vadd.f32 %v8651, %v8691
    %v8693 = vpop.f32.mrb[0].mxu0
    %v8694 = vadd.f32 %v8653, %v8693
    %v8695 = vpop.f32.mrb[0].mxu0
    %v8696 = vpop.f32.mrb[0].mxu0
    %8697 = vdwg.mxu0
    %v8698 = vmax.f32 %v7954, 0.0
    %v8699 = vmax.f32 %v7956, 0.0
    %v8700 = vmax.f32 %v8692, 0.0
    %v8701 = vmax.f32 %v8694, 0.0
    %v8702 = vpack.c.bf16 %v8698, %v8698
    %v8703 = vpack.c.bf16 %v8699, %v8699
    %v8704 = vpack.c.bf16 %v8700, %v8700
    %v8705 = vpack.c.bf16 %v8701, %v8701
    %v8706 = vld [vmem:[%s3] sm:$0xf]
    %v8707 = vld [vmem:[%s3 + $0x4] sm:$0xf]
    %v8708 = vld [vmem:[%s3 + $0x8] sm:$0xf]
    %v8709 = vld [vmem:[%s3 + $0xc] sm:$0xf]
    %v8710 = vld [vmem:[%s3 + $0x10] sm:$0xf]
    %v8711 = vld [vmem:[%s3 + $0x14] sm:$0xf]
    %v8712 = vld [vmem:[%s3 + $0x18] sm:$0xf]
    %v8713 = vld [vmem:[%s3 + $0x1c] sm:$0xf]
    %v8714 = vld [vmem:[%s3 + $0x20] sm:$0xf]
    %v8715 = vld [vmem:[%s3 + $0x24] sm:$0xf]
    %v8716 = vld [vmem:[%s3 + $0x28] sm:$0xf]
    %v8717 = vld [vmem:[%s3 + $0x2c] sm:$0xf]
    %v8718 = vld [vmem:[%s3 + $0x30] sm:$0xf]
    %v8719 = vld [vmem:[%s3 + $0x34] sm:$0xf]
    %v8720 = vld [vmem:[%s3 + $0x38] sm:$0xf]
    %v8721 = vld [vmem:[%s3 + $0x3c] sm:$0xf]
    %v8722 = vld [vmem:[%s3 + $0x40] sm:$0xf]
    %v8723 = vld [vmem:[%s3 + $0x44] sm:$0xf]
    %v8724 = vld [vmem:[%s3 + $0x48] sm:$0xf]
    %v8725 = vld [vmem:[%s3 + $0x4c] sm:$0xf]
    %v8726 = vld [vmem:[%s3 + $0x50] sm:$0xf]
    %v8727 = vld [vmem:[%s3 + $0x54] sm:$0xf]
    %v8728 = vld [vmem:[%s3 + $0x58] sm:$0xf]
    %v8729 = vld [vmem:[%s3 + $0x5c] sm:$0xf]
    %v8730 = vld [vmem:[%s3 + $0x60] sm:$0xf]
    %v8731 = vld [vmem:[%s3 + $0x64] sm:$0xf]
    %v8732 = vld [vmem:[%s3 + $0x68] sm:$0xf]
    %v8733 = vld [vmem:[%s3 + $0x6c] sm:$0xf]
    %v8734 = vld [vmem:[%s3 + $0x70] sm:$0xf]
    %v8735 = vld [vmem:[%s3 + $0x74] sm:$0xf]
    %v8736 = vld [vmem:[%s3 + $0x78] sm:$0xf]
    %v8737 = vld [vmem:[%s3 + $0x7c] sm:$0xf]
    %v8738 = vld [vmem:[%s3 + $0x80] sm:$0xf]
    %v8739 = vld [vmem:[%s3 + $0x84] sm:$0xf]
    %v8740 = vld [vmem:[%s3 + $0x88] sm:$0xf]
    %v8741 = vld [vmem:[%s3 + $0x8c] sm:$0xf]
    %v8742 = vld [vmem:[%s3 + $0x90] sm:$0xf]
    %v8743 = vld [vmem:[%s3 + $0x94] sm:$0xf]
    %v8744 = vld [vmem:[%s3 + $0x98] sm:$0xf]
    %v8745 = vld [vmem:[%s3 + $0x9c] sm:$0xf]
    %v8746 = vld [vmem:[%s3 + $0xa0] sm:$0xf]
    %v8747 = vld [vmem:[%s3 + $0xa4] sm:$0xf]
    %v8748 = vld [vmem:[%s3 + $0xa8] sm:$0xf]
    %v8749 = vld [vmem:[%s3 + $0xac] sm:$0xf]
    %v8750 = vld [vmem:[%s3 + $0xb0] sm:$0xf]
    %v8751 = vld [vmem:[%s3 + $0xb4] sm:$0xf]
    %v8752 = vld [vmem:[%s3 + $0xb8] sm:$0xf]
    %v8753 = vld [vmem:[%s3 + $0xbc] sm:$0xf]
    %v8754 = vld [vmem:[%s3 + $0xc0] sm:$0xf]
    %v8755 = vld [vmem:[%s3 + $0xc4] sm:$0xf]
    %v8756 = vld [vmem:[%s3 + $0xc8] sm:$0xf]
    %v8757 = vld [vmem:[%s3 + $0xcc] sm:$0xf]
    %v8758 = vld [vmem:[%s3 + $0xd0] sm:$0xf]
    %v8759 = vld [vmem:[%s3 + $0xd4] sm:$0xf]
    %v8760 = vld [vmem:[%s3 + $0xd8] sm:$0xf]
    %v8761 = vld [vmem:[%s3 + $0xdc] sm:$0xf]
    %v8762 = vld [vmem:[%s3 + $0xe0] sm:$0xf]
    %v8763 = vld [vmem:[%s3 + $0xe4] sm:$0xf]
    %v8764 = vld [vmem:[%s3 + $0xe8] sm:$0xf]
    %v8765 = vld [vmem:[%s3 + $0xec] sm:$0xf]
    %v8766 = vld [vmem:[%s3 + $0xf0] sm:$0xf]
    %v8767 = vld [vmem:[%s3 + $0xf4] sm:$0xf]
    %v8768 = vld [vmem:[%s3 + $0xf8] sm:$0xf]
    %v8769 = vld [vmem:[%s3 + $0xfc] sm:$0xf]
    %v8770 = vld [vmem:[%s4] sm:$0x1]
    %v8772 = vlaneseq
    %v8773 = vshrl.u32 %v8772, 7
    %v8774 = vsub.s32 0, %v8773
    %v8775 = vrot.slane %v8770, %v8774
    %v8841 = vunpack.c.l.b16 %v8706
    %v8842 = vunpack.c.l.b16 %v8707
    %v8843 = vunpack.c.l.b16 %v8708
    %v8844 = vunpack.c.l.b16 %v8709
    %v8845 = vunpack.c.l.b16 %v8710
    %v8846 = vunpack.c.l.b16 %v8711
    %v8847 = vunpack.c.l.b16 %v8712
    %v8848 = vunpack.c.l.b16 %v8713
    %v8849 = vunpack.c.l.b16 %v8714
    %v8850 = vunpack.c.l.b16 %v8715
    %v8851 = vunpack.c.l.b16 %v8716
    %v8852 = vunpack.c.l.b16 %v8717
    %v8853 = vunpack.c.l.b16 %v8718
    %v8854 = vunpack.c.l.b16 %v8719
    %v8855 = vunpack.c.l.b16 %v8720
    %v8856 = vunpack.c.l.b16 %v8721
    %v8857 = vunpack.c.l.b16 %v8722
    %v8858 = vunpack.c.l.b16 %v8723
    %v8859 = vunpack.c.l.b16 %v8724
    %v8860 = vunpack.c.l.b16 %v8725
    %v8861 = vunpack.c.l.b16 %v8726
    %v8862 = vunpack.c.l.b16 %v8727
    %v8863 = vunpack.c.l.b16 %v8728
    %v8864 = vunpack.c.l.b16 %v8729
    %v8865 = vunpack.c.l.b16 %v8730
    %v8866 = vunpack.c.l.b16 %v8731
    %v8867 = vunpack.c.l.b16 %v8732
    %v8868 = vunpack.c.l.b16 %v8733
    %v8869 = vunpack.c.l.b16 %v8734
    %v8870 = vunpack.c.l.b16 %v8735
    %v8871 = vunpack.c.l.b16 %v8736
    %v8872 = vunpack.c.l.b16 %v8737
    %v8873 = vunpack.c.l.b16 %v8738
    %v8874 = vunpack.c.l.b16 %v8739
    %v8875 = vunpack.c.l.b16 %v8740
    %v8876 = vunpack.c.l.b16 %v8741
    %v8877 = vunpack.c.l.b16 %v8742
    %v8878 = vunpack.c.l.b16 %v8743
    %v8879 = vunpack.c.l.b16 %v8744
    %v8880 = vunpack.c.l.b16 %v8745
    %v8881 = vunpack.c.l.b16 %v8746
    %v8882 = vunpack.c.l.b16 %v8747
    %v8883 = vunpack.c.l.b16 %v8748
    %v8884 = vunpack.c.l.b16 %v8749
    %v8885 = vunpack.c.l.b16 %v8750
    %v8886 = vunpack.c.l.b16 %v8751
    %v8887 = vunpack.c.l.b16 %v8752
    %v8888 = vunpack.c.l.b16 %v8753
    %v8889 = vunpack.c.l.b16 %v8754
    %v8890 = vunpack.c.l.b16 %v8755
    %v8891 = vunpack.c.l.b16 %v8756
    %v8892 = vunpack.c.l.b16 %v8757
    %v8893 = vunpack.c.l.b16 %v8758
    %v8894 = vunpack.c.l.b16 %v8759
    %v8895 = vunpack.c.l.b16 %v8760
    %v8896 = vunpack.c.l.b16 %v8761
    %v8897 = vunpack.c.l.b16 %v8762
    %v8898 = vunpack.c.l.b16 %v8763
    %v8899 = vunpack.c.l.b16 %v8764
    %v8900 = vunpack.c.l.b16 %v8765
    %v8901 = vunpack.c.l.b16 %v8766
    %v8902 = vunpack.c.l.b16 %v8767
    %v8903 = vunpack.c.l.b16 %v8768
    %v8904 = vunpack.c.l.b16 %v8769
    %v8905 = vpack.c.b16 %v8842, %v8841
    %v8906 = vpack.c.b16 %v8844, %v8843
    %v8907 = vpack.c.b16 %v8846, %v8845
    %v8908 = vpack.c.b16 %v8848, %v8847
    %v8909 = vpack.c.b16 %v8850, %v8849
    %v8910 = vpack.c.b16 %v8852, %v8851
    %v8911 = vpack.c.b16 %v8854, %v8853
    %v8912 = vpack.c.b16 %v8856, %v8855
    %v8913 = vpack.c.b16 %v8858, %v8857
    %v8914 = vpack.c.b16 %v8860, %v8859
    %v8915 = vpack.c.b16 %v8862, %v8861
    %v8916 = vpack.c.b16 %v8864, %v8863
    %v8917 = vpack.c.b16 %v8866, %v8865
    %v8918 = vpack.c.b16 %v8868, %v8867
    %v8919 = vpack.c.b16 %v8870, %v8869
    %v8920 = vpack.c.b16 %v8872, %v8871
    %v8921 = vpack.c.b16 %v8874, %v8873
    %v8922 = vpack.c.b16 %v8876, %v8875
    %v8923 = vpack.c.b16 %v8878, %v8877
    %v8924 = vpack.c.b16 %v8880, %v8879
    %v8925 = vpack.c.b16 %v8882, %v8881
    %v8926 = vpack.c.b16 %v8884, %v8883
    %v8927 = vpack.c.b16 %v8886, %v8885
    %v8928 = vpack.c.b16 %v8888, %v8887
    %v8929 = vpack.c.b16 %v8890, %v8889
    %v8930 = vpack.c.b16 %v8892, %v8891
    %v8931 = vpack.c.b16 %v8894, %v8893
    %v8932 = vpack.c.b16 %v8896, %v8895
    %v8933 = vpack.c.b16 %v8898, %v8897
    %v8934 = vpack.c.b16 %v8900, %v8899
    %v8935 = vpack.c.b16 %v8902, %v8901
    %v8936 = vpack.c.b16 %v8904, %v8903
    %8969 = vmatprep.subr.bf16.mxu0 0
    %8970 = vmatpush1.bf16.msra.mxu0 %v8905
    %8971 = vmatprep.subr.bf16.mxu0 0
    %8972 = vmatpush1.bf16.msra.mxu0 %v8906
    %8973 = vmatprep.subr.bf16.mxu0 0
    %8974 = vmatpush1.bf16.msra.mxu0 %v8907
    %8975 = vmatprep.subr.bf16.mxu0 0
    %8976 = vmatpush1.bf16.msra.mxu0 %v8908
    %8977 = vmatprep.subr.bf16.mxu0 0
    %8978 = vmatpush1.bf16.msra.mxu0 %v8909
    %8979 = vmatprep.subr.bf16.mxu0 0
    %8980 = vmatpush1.bf16.msra.mxu0 %v8910
    %8981 = vmatprep.subr.bf16.mxu0 0
    %8982 = vmatpush1.bf16.msra.mxu0 %v8911
    %8983 = vmatprep.subr.bf16.mxu0 0
    %8984 = vmatpush1.bf16.msra.mxu0 %v8912
    %8985 = vmatprep.subr.bf16.mxu0 0
    %8986 = vmatpush1.bf16.msra.mxu0 %v8913
    %8987 = vmatprep.subr.bf16.mxu0 0
    %8988 = vmatpush1.bf16.msra.mxu0 %v8914
    %8989 = vmatprep.subr.bf16.mxu0 0
    %8990 = vmatpush1.bf16.msra.mxu0 %v8915
    %8991 = vmatprep.subr.bf16.mxu0 0
    %8992 = vmatpush1.bf16.msra.mxu0 %v8916
    %8993 = vmatprep.subr.bf16.mxu0 0
    %8994 = vmatpush1.bf16.msra.mxu0 %v8917
    %8995 = vmatprep.subr.bf16.mxu0 0
    %8996 = vmatpush1.bf16.msra.mxu0 %v8918
    %8997 = vmatprep.subr.bf16.mxu0 0
    %8998 = vmatpush1.bf16.msra.mxu0 %v8919
    %8999 = vmatprep.subr.bf16.mxu0 0
    %9000 = vmatpush1.bf16.msra.mxu0 %v8920
    %9001 = vmatprep.mubr.bf16.mxu0 %v8703
    %9002 = vmatmul.mubr.bf16.gmra.mrb[0].mxu0 %v8702
    %v9003 = vpop.f32.mrb[0].mxu0
    %v9004 = vadd.f32 %v8775, %v9003
    %v9005 = vpop.f32.mrb[0].mxu0
    %v9006 = vpop.f32.mrb[0].mxu0
    %v9007 = vpop.f32.mrb[0].mxu0
    %9008 = vdwg.mxu0
    %9009 = vmatprep.subr.bf16.mxu0 0
    %9010 = vmatpush1.bf16.msra.mxu0 %v8921
    %9011 = vmatprep.subr.bf16.mxu0 0
    %9012 = vmatpush1.bf16.msra.mxu0 %v8922
    %9013 = vmatprep.subr.bf16.mxu0 0
    %9014 = vmatpush1.bf16.msra.mxu0 %v8923
    %9015 = vmatprep.subr.bf16.mxu0 0
    %9016 = vmatpush1.bf16.msra.mxu0 %v8924
    %9017 = vmatprep.subr.bf16.mxu0 0
    %9018 = vmatpush1.bf16.msra.mxu0 %v8925
    %9019 = vmatprep.subr.bf16.mxu0 0
    %9020 = vmatpush1.bf16.msra.mxu0 %v8926
    %9021 = vmatprep.subr.bf16.mxu0 0
    %9022 = vmatpush1.bf16.msra.mxu0 %v8927
    %9023 = vmatprep.subr.bf16.mxu0 0
    %9024 = vmatpush1.bf16.msra.mxu0 %v8928
    %9025 = vmatprep.subr.bf16.mxu0 0
    %9026 = vmatpush1.bf16.msra.mxu0 %v8929
    %9027 = vmatprep.subr.bf16.mxu0 0
    %9028 = vmatpush1.bf16.msra.mxu0 %v8930
    %9029 = vmatprep.subr.bf16.mxu0 0
    %9030 = vmatpush1.bf16.msra.mxu0 %v8931
    %9031 = vmatprep.subr.bf16.mxu0 0
    %9032 = vmatpush1.bf16.msra.mxu0 %v8932
    %9033 = vmatprep.subr.bf16.mxu0 0
    %9034 = vmatpush1.bf16.msra.mxu0 %v8933
    %9035 = vmatprep.subr.bf16.mxu0 0
    %9036 = vmatpush1.bf16.msra.mxu0 %v8934
    %9037 = vmatprep.subr.bf16.mxu0 0
    %9038 = vmatpush1.bf16.msra.mxu0 %v8935
    %9039 = vmatprep.subr.bf16.mxu0 0
    %9040 = vmatpush1.bf16.msra.mxu0 %v8936
    %9041 = vmatprep.mubr.bf16.mxu0 %v8705
    %9042 = vmatmul.mubr.bf16.gmra.mrb[0].mxu0 %v8704
    %v9043 = vpop.f32.mrb[0].mxu0
    %v9044 = vadd.f32 %v9004, %v9043
    %v9045 = vpop.f32.mrb[0].mxu0
    %v9046 = vpop.f32.mrb[0].mxu0
    %v9047 = vpop.f32.mrb[0].mxu0
    %9048 = vdwg.mxu0
    %v9049 = vmax.f32 %v9044, 0.0
    %vm9050 = vcmask 148480
    %9051 = vst.msk [vmem:[#allocation2] sm:$0x3] %vm9050, %v9049
    // Predicated region
    $region22: #{double_cnn_forward.5} parent=1 // pred_check
      _
    $region23: #{double_cnn_forward.5} parent=1 // pred_check_branch
      %9053 = sbr.rel (0) target = $region25
    $region24: #{double_cnn_forward.5} parent=1 // pred_region
      %s9055 = ssub.s32 32, 32
      %9056 = vsyncadd [#allocation3], %s9055
      %s9058 = sshll.u32 [#allocation2], 4
      %s9059 = int_to_ptr.vmem [resolvable:$true] %s9058
      %9061 = dma.vmem_to_hbm [thread:$0]  %s9059, 32, %s5, [#allocation3]
    $region25: #{double_cnn_forward.5} parent=1 // pred_fallthru
      _
    // Predicated region
    $region26: #{double_cnn_forward.5} parent=1 // pred_check
      _
    $region27: #{double_cnn_forward.5} parent=1 // pred_check_branch
      %9063 = sbr.rel (0) target = $region29
    $region28: #{double_cnn_forward.5} parent=1 // pred_region
      %9064 = dma.done [#allocation3], 32
    $region29: #{double_cnn_forward.5} parent=1 // pred_fallthru
      _
    %9065 = vsyncpa [#allocation3], 1

</llo_original>
